<compile_context>
chip_gen: v6e
topology: v6e:2x2x1
jax: 0.10.0
libtpu: 0.0.40
codegen_flags: <defaults>
</compile_context>

<pallas_src>
import functools

import jax
import jax.numpy as jnp
from jax.experimental import pallas as pl
from jax.experimental.pallas import tpu as pltpu


def _pick_tile(n, candidates):
    """Largest candidate that divides n (candidates chosen per call-site to stay
    well under the per-chip scoped-VMEM budget with double buffering)."""
    for c in candidates:
        if n % c == 0:
            return c
    return n


# --------------------------------------------------------------------------
# Kernel 1: RGCN aggregation as a K-tiled matmul with f32 accumulator.
#   out = A_basis_flat @ basis_flat + root + bias
#   grid = (rows "parallel", K "arbitrary"); emits f32 and bf16 copies of kg.
# --------------------------------------------------------------------------
def rgcn_kernel(a_ref, w_ref, root_ref, bias_ref, out_ref, out_bf_ref, acc_ref):
    k = pl.program_id(1)

    @pl.when(k == 0)
    def _():
        acc_ref[...] = jnp.zeros_like(acc_ref)

    acc_ref[...] += jnp.dot(a_ref[...], w_ref[...],
                            preferred_element_type=jnp.float32)

    @pl.when(k == pl.num_programs(1) - 1)
    def _():
        res = acc_ref[...] + root_ref[...] + bias_ref[...]
        out_ref[...] = res
        out_bf_ref[...] = res.astype(jnp.bfloat16)


def rgcn_dense(a_flat, w_flat, root, bias):
    E, K = a_flat.shape
    D = w_flat.shape[1]
    # Tiles sized so (2 buffers per input) x (a + w + root blocks) stays far below
    # the default scoped-VMEM limit even on v7x (64 MiB physical / 32 MiB scoped).
    tm = _pick_tile(E, (512, 256, 128, 64, 32, 16, 8))
    tk = _pick_tile(K, (512, 256, 128, 64, 32, 16, 8))
    return pl.pallas_call(
        rgcn_kernel,
        out_shape=(
            jax.ShapeDtypeStruct((E, D), jnp.float32),
            jax.ShapeDtypeStruct((E, D), jnp.bfloat16),
        ),
        grid=(E // tm, K // tk),
        in_specs=[
            pl.BlockSpec((tm, tk), lambda i, k: (i, k)),
            pl.BlockSpec((tk, D), lambda i, k: (k, 0)),
            pl.BlockSpec((tm, D), lambda i, k: (i, 0)),
            pl.BlockSpec((1, D), lambda i, k: (0, 0)),
        ],
        out_specs=(
            pl.BlockSpec((tm, D), lambda i, k: (i, 0)),
            pl.BlockSpec((tm, D), lambda i, k: (i, 0)),
        ),
        scratch_shapes=[pltpu.VMEM((tm, D), jnp.float32)],
        compiler_params=pltpu.CompilerParams(
            dimension_semantics=("parallel", "arbitrary")),
    )(a_flat, w_flat, root, bias)


# --------------------------------------------------------------------------
# Kernel 2: user embedding (gather via per-row HBM DMAs + attention pooling +
#           LLM reasoning branch + gate fusion).  Batch-sized, gridless.
# --------------------------------------------------------------------------
def user_kernel(ce_ref, mask_ref, x_ref, kg_hbm, wa_ref, ba_ref,
                w1_ref, b1_ref, w2_ref, b2_ref,
                wgh_ref, wgx_ref, bg_ref, wal_ref, bal_ref,
                wg1_ref, wg2_ref, bgate_ref,
                user_out, user_bf_out, ents, sems):
    B, L = mask_ref.shape
    BL, D = ents.shape
    bf = jnp.bfloat16

    # --- gather kg rows for the context entities: concurrent per-row DMAs ------
    # ids live in SMEM; kg stays in HBM (memory_space=pl.ANY) -- it is never
    # fully VMEM-resident just for the gather.
    # TODO(synk): for large B*L switch to a batched/segmented DMA gather loop.
    copies = []
    for j in range(BL):
        idx = ce_ref[j]
        cp = pltpu.make_async_copy(kg_hbm.at[pl.ds(idx, 1)],
                                   ents.at[pl.ds(j, 1)],
                                   sems.at[j])
        cp.start()
        copies.append(cp)
    for cp in copies:
        cp.wait()
    h = ents[...]                                                    # (B*L, D) f32

    # --- SelfAttentionModule: masked tanh-attention pooling --------------------
    t = jnp.tanh(jnp.dot(h.astype(bf), wa_ref[...],
                         preferred_element_type=jnp.float32))        # (B*L, item)
    # N=1 projection as VPU mul + lane reduce (no degenerate MXU matmul).
    scores = jnp.sum(t * ba_ref[...], axis=-1, keepdims=True)        # (B*L, 1)
    scores = scores.reshape(B, L)
    scores = jnp.where(mask_ref[...] > 0, scores, -1e9)
    scores = scores - jnp.max(scores, axis=-1, keepdims=True)
    p = jnp.exp(scores)
    alpha = p / jnp.sum(p, axis=-1, keepdims=True)                   # (B, L)
    # L is small; at production L replace with einsum 'bl,bld->bd' (MXU).
    user_kg = jnp.sum(alpha[:, :, None] * h.reshape(B, L, D), axis=1)  # (B, D)
    # Rows with no valid context entity get a zero kg representation.
    has_ent = (jnp.sum(mask_ref[...], axis=-1, keepdims=True) > 0).astype(jnp.float32)
    user_kg = user_kg * has_ent

    # --- Feedforward + folded GatedResidual + llm_align ------------------------
    x = x_ref[...]                                                   # (B, Dl) f32
    h1 = jnp.maximum(
        jnp.dot(x.astype(bf), w1_ref[...], preferred_element_type=jnp.float32)
        + b1_ref[...], 0.0)
    h2 = jnp.dot(h1.astype(bf), w2_ref[...],
                 preferred_element_type=jnp.float32) + b2_ref[...]
    # gate_pre = h2 @ (wa + wc) + x @ (wb - wc) + bg  (weights pre-folded in glue).
    gate_pre = (jnp.sum(h2 * wgh_ref[...], axis=-1, keepdims=True)
                + jnp.sum(x * wgx_ref[...], axis=-1, keepdims=True)
                + bg_ref[...])                                       # (B, 1)
    gate = jax.nn.sigmoid(gate_pre)
    ctx = gate * h2 + (1.0 - gate) * x
    ctx_kg = jnp.dot(ctx.astype(bf), wal_ref[...],
                     preferred_element_type=jnp.float32) + bal_ref[...]  # (B, D)

    # --- GateFusion -------------------------------------------------------------
    fgate = jax.nn.sigmoid(
        jnp.dot(user_kg.astype(bf), wg1_ref[...], preferred_element_type=jnp.float32)
        + jnp.dot(ctx_kg.astype(bf), wg2_ref[...], preferred_element_type=jnp.float32)
        + bgate_ref[...])
    user = fgate * user_kg + (1.0 - fgate) * ctx_kg
    user_out[...] = user
    user_bf_out[...] = user.astype(bf)


def kbrd_user(ce_flat, ent_mask, llm_embeds, kg_f32, params):
    B, L = ent_mask.shape
    D = kg_f32.shape[1]
    bf = jnp.bfloat16
    # Fold GatedResidual: gate_pre = h2 @ (wa + wc) + x @ (wb - wc) + bg.
    wgh = (params["gres_wa"] + params["gres_wc"]).reshape(1, -1)
    wgx = (params["gres_wb"] - params["gres_wc"]).reshape(1, -1)
    args = (
        ce_flat,                                     # (B*L,) int32 SMEM ids
        ent_mask,                                    # (B, L) f32
        llm_embeds,                                  # (B, Dl) f32
        kg_f32,                                      # (E, D) f32, stays in HBM
        params["attn_wa"].astype(bf),                # (D, item)
        params["attn_ba"].reshape(1, -1),            # (1, item)
        params["ffn_w1"].astype(bf), params["ffn_b1"],
        params["ffn_w2"].astype(bf), params["ffn_b2"],
        wgh, wgx, params["gres_bg"],
        params["align_w"].astype(bf), params["align_b"],
        params["gate_w1"].astype(bf), params["gate_w2"].astype(bf), params["gate_b"],
    )
    in_specs = ([pl.BlockSpec(memory_space=pltpu.MemorySpace.SMEM),
                 pl.BlockSpec(memory_space=pltpu.MemorySpace.VMEM),
                 pl.BlockSpec(memory_space=pltpu.MemorySpace.VMEM),
                 pl.BlockSpec(memory_space=pl.ANY)]
                + [pl.BlockSpec(memory_space=pltpu.MemorySpace.VMEM)] * (len(args) - 4))
    return pl.pallas_call(
        user_kernel,
        out_shape=(
            jax.ShapeDtypeStruct((B, D), jnp.float32),   # user embedding (f32)
            jax.ShapeDtypeStruct((B, D), jnp.bfloat16),  # user embedding (bf16)
        ),
        in_specs=in_specs,
        out_specs=(
            pl.BlockSpec(memory_space=pltpu.MemorySpace.VMEM),
            pl.BlockSpec(memory_space=pltpu.MemorySpace.VMEM),
        ),
        scratch_shapes=[pltpu.VMEM((B * L, D), jnp.float32),
                        pltpu.SemaphoreType.DMA((B * L,))],
    )(*args)


# --------------------------------------------------------------------------
# Kernel 3: sims = user @ kg^T + rec_bias, tiled over lane-dense entity tiles.
# --------------------------------------------------------------------------
def sims_kernel(user_ref, kgt_ref, bias_ref, sims_ref):
    sims_ref[...] = (
        jnp.dot(user_ref[...], kgt_ref[...], preferred_element_type=jnp.float32)
        + bias_ref[...]
    )


def kbrd_sims(user_bf, kg_t_bf, rec_bias):
    B, D = user_bf.shape
    E = kg_t_bf.shape[1]
    # Lane-dense entity tile (multiple of 128); large tiles keep stores unmasked
    # and the kg stream pipelined / sharded across TensorCores.
    tE = _pick_tile(E, (2048, 1024, 512, 256, 128))
    return pl.pallas_call(
        sims_kernel,
        out_shape=jax.ShapeDtypeStruct((B, E), jnp.float32),
        grid=(E // tE,),
        in_specs=[
            pl.BlockSpec((B, D), lambda i: (0, 0)),
            pl.BlockSpec((D, tE), lambda i: (0, i)),
            pl.BlockSpec((1, tE), lambda i: (0, i)),
        ],
        out_specs=pl.BlockSpec((B, tE), lambda i: (0, i)),
        compiler_params=pltpu.CompilerParams(dimension_semantics=("parallel",)),
    )(user_bf, kg_t_bf, rec_bias)


# --------------------------------------------------------------------------
# Glue: parameter construction, dense adjacency, and orchestration.
# --------------------------------------------------------------------------
def init_params(key, *, n_entity, n_relation, n_bases, kg_dim, item_dim, llm_dim):
    ks = jax.random.split(key, 16)
    s = 0.02
    p = {}
    # RGCNConv (basis decomposition): weight[r] = sum_b comp[r,b] * basis[b]
    p["rgcn_basis"] = s * jax.random.normal(ks[0], (n_bases, n_entity, kg_dim), jnp.float32)
    p["rgcn_comp"] = s * jax.random.normal(ks[1], (n_relation, n_bases), jnp.float32)
    p["rgcn_root"] = s * jax.random.normal(ks[2], (n_entity, kg_dim), jnp.float32)
    p["rgcn_bias"] = jnp.zeros((1, kg_dim), jnp.float32)
    # SelfAttentionModule(kg_dim, item_dim)
    p["attn_wa"] = s * jax.random.normal(ks[3], (kg_dim, item_dim), jnp.float32)
    p["attn_ba"] = s * jax.random.normal(ks[4], (item_dim, 1), jnp.float32)
    # Feedforward(llm_dim, llm_dim // 2, llm_dim)
    hid = llm_dim // 2
    p["ffn_w1"] = s * jax.random.normal(ks[5], (llm_dim, hid), jnp.float32)
    p["ffn_b1"] = jnp.zeros((1, hid), jnp.float32)
    p["ffn_w2"] = s * jax.random.normal(ks[6], (hid, llm_dim), jnp.float32)
    p["ffn_b2"] = jnp.zeros((1, llm_dim), jnp.float32)
    # GatedResidual(llm_dim): scalar gate from [h, x, h - x]
    p["gres_wa"] = s * jax.random.normal(ks[7], (llm_dim, 1), jnp.float32)
    p["gres_wb"] = s * jax.random.normal(ks[8], (llm_dim, 1), jnp.float32)
    p["gres_wc"] = s * jax.random.normal(ks[9], (llm_dim, 1), jnp.float32)
    p["gres_bg"] = jnp.zeros((1, 1), jnp.float32)
    # llm_align: Linear(llm_dim, kg_dim)
    p["align_w"] = s * jax.random.normal(ks[10], (llm_dim, kg_dim), jnp.float32)
    p["align_b"] = jnp.zeros((1, kg_dim), jnp.float32)
    # GateFusion(kg_dim, kg_dim)
    p["gate_w1"] = s * jax.random.normal(ks[11], (kg_dim, kg_dim), jnp.float32)
    p["gate_w2"] = s * jax.random.normal(ks[12], (kg_dim, kg_dim), jnp.float32)
    p["gate_b"] = jnp.zeros((1, kg_dim), jnp.float32)
    # rec_layer = Linear(item_dim, n_entity) -- only its bias is used in forward
    p["rec_bias"] = s * jax.random.normal(ks[13], (1, n_entity), jnp.float32)
    return p


def build_dense_adjacency(edge_idx, edge_type, n_entity, n_relation):
    """Per-relation normalized dense adjacency replicating scatter-mean aggregation."""
    src = edge_idx[0]
    dst = edge_idx[1]
    a = jnp.zeros((n_relation, n_entity, n_entity), jnp.float32)
    a = a.at[edge_type, dst, src].add(1.0)
    deg = jnp.sum(a, axis=-1, keepdims=True)
    return a / jnp.maximum(deg, 1.0)


@functools.partial(jax.jit, static_argnames=("n_entity", "n_relation"))
def kbrd_forward(params, edge_idx, edge_type, context_entities, llm_embeds,
                 *, n_entity, n_relation):
    kg_dim = params["rgcn_root"].shape[1]
    n_bases = params["rgcn_basis"].shape[0]

    # --- encoder_user_kg: RGCN as one big-K matmul (basis folded into adjacency) ---
    a_norm = build_dense_adjacency(edge_idx, edge_type, n_entity, n_relation)   # (R,E,E)
    a_basis = jnp.einsum("rb,rij->bij", params["rgcn_comp"], a_norm)            # (nb,E,E)
    a_flat = a_basis.transpose(1, 0, 2).reshape(n_entity, n_bases * n_entity)
    w_flat = params["rgcn_basis"].reshape(n_bases * n_entity, kg_dim)
    # bf16 operands with f32 accumulation; normalization (1/deg) loses ~3 decimal
    # digits in bf16 -- acceptable for this model, verify vs. reference if needed.
    kg_f32, kg_bf = rgcn_dense(
        a_flat.astype(jnp.bfloat16), w_flat.astype(jnp.bfloat16),
        params["rgcn_root"], params["rgcn_bias"])

    # --- user embedding: gather + attention pooling + llm reasoning + gate fusion ---
    ent_mask = (context_entities != 0).astype(jnp.float32)    # pad entity id == 0
    ce_flat = context_entities.reshape(-1).astype(jnp.int32)
    user_f32, user_bf = kbrd_user(ce_flat, ent_mask, llm_embeds, kg_f32, params)

    # --- sims = F.linear(user, kg_embedding, rec_bias), entity-tiled ---
    kg_t_bf = kg_bf.T                                          # (D, E), built once
    sims = kbrd_sims(user_bf, kg_t_bf, params["rec_bias"])
    return sims, user_f32, kg_f32


if __name__ == "__main__":
    # Small, MXU/VPU-friendly shapes consistent with the module's forward.
    N_ENTITY = 512
    N_RELATION = 4
    N_BASES = 2
    KG_DIM = 128
    ITEM_DIM = 128
    LLM_DIM = 256          # scaled down from the module's hardcoded 4096
    N_EDGES = 1024
    BATCH = 2
    N_CTX_ENT = 8

    key = jax.random.PRNGKey(0)
    k_param, k_src, k_dst, k_rel, k_ctx, k_llm = jax.random.split(key, 6)

    params = init_params(
        k_param, n_entity=N_ENTITY, n_relation=N_RELATION, n_bases=N_BASES,
        kg_dim=KG_DIM, item_dim=ITEM_DIM, llm_dim=LLM_DIM,
    )

    edge_idx = jnp.stack([
        jax.random.randint(k_src, (N_EDGES,), 0, N_ENTITY, jnp.int32),
        jax.random.randint(k_dst, (N_EDGES,), 0, N_ENTITY, jnp.int32),
    ])                                                         # [2, n_edges]
    edge_type = jax.random.randint(k_rel, (N_EDGES,), 0, N_RELATION, jnp.int32)

    context_entities = jax.random.randint(
        k_ctx, (BATCH, N_CTX_ENT), 1, N_ENTITY, jnp.int32
    )
    context_entities = context_entities.at[:, -2:].set(0)      # trailing padding
    llm_embeds = jax.random.normal(k_llm, (BATCH, LLM_DIM), jnp.float32)

    sims, user_emb, kg_emb = kbrd_forward(
        params, edge_idx, edge_type, context_entities, llm_embeds,
        n_entity=N_ENTITY, n_relation=N_RELATION,
    )
    jax.block_until_ready(sims)

    assert sims.shape == (BATCH, N_ENTITY)
    assert user_emb.shape == (BATCH, KG_DIM)
    assert kg_emb.shape == (N_ENTITY, KG_DIM)
    assert bool(jnp.all(jnp.isfinite(sims)))
    print("KERNEL_OK")
</pallas_src>

<mosaic_0001>
module attributes {stable_mosaic.version = 11 : i64} {
  func.func private @main(%arg0: i32) attributes {dimension_semantics = [#tpu.dimension_semantics<core_parallel>], iteration_bounds = array<i64: 2>, tpu.core_type = #tpu.core_type<sc_scalar_subcore>, window_params = []} {
    return
  }
}

module attributes {stable_mosaic.version = 11 : i64} {
  func.func private @main(%arg0: i32) attributes {dimension_semantics = [#tpu.dimension_semantics<core_parallel>], iteration_bounds = array<i64: 2>, tpu.core_type = #tpu.core_type<sc_scalar_subcore>, window_params = []} {
    return
  }
}

module attributes {stable_mosaic.version = 11 : i64} {
  func.func @rgcn_kernel(%arg0: i32, %arg1: i32, %arg2: memref<512x512xbf16, #tpu.memory_space<vmem>>, %arg3: memref<512x128xbf16, #tpu.memory_space<vmem>>, %arg4: memref<512x128xf32, #tpu.memory_space<vmem>>, %arg5: memref<1x128xf32, #tpu.memory_space<vmem>>, %arg6: memref<512x128xf32, #tpu.memory_space<vmem>>, %arg7: memref<512x128xbf16, #tpu.memory_space<vmem>>, %arg8: memref<512x128xf32, #tpu.memory_space<vmem>>) attributes {dimension_semantics = [#tpu.dimension_semantics<parallel>, #tpu.dimension_semantics<arbitrary>], iteration_bounds = array<i64: 1, 2>, scalar_prefetch = 0 : i64, scratch_operands = 1 : i64, tpu.core_type = #tpu.core_type<tc>, window_params = [{transform_indices = @transform_0, window_bounds = array<i64: 512, 512>}, {transform_indices = @transform_1, window_bounds = array<i64: 512, 128>}, {transform_indices = @transform_2, window_bounds = array<i64: 512, 128>}, {pipeline_mode = #tpu.pipeline_mode<synchronous>, transform_indices = @transform_3, window_bounds = array<i64: 1, 128>}, {transform_indices = @transform_4, window_bounds = array<i64: 512, 128>}, {transform_indices = @transform_5, window_bounds = array<i64: 512, 128>}]} {
    %c0_i32 = arith.constant 0 : i32
    %0 = arith.cmpi eq, %arg1, %c0_i32 : i32
    %1 = arith.extui %0 : i1 to i32
    %c0_i32_0 = arith.constant 0 : i32
    %2 = arith.cmpi ne, %1, %c0_i32_0 : i32
    scf.if %2 {
      %cst_9 = arith.constant 0.000000e+00 : f32
      %12 = vector.broadcast %cst_9 : f32 to vector<512x128xf32>
      %c0_10 = arith.constant 0 : index
      %c0_11 = arith.constant 0 : index
      %13 = vector.load %arg8[%c0_10, %c0_11] : memref<512x128xf32, #tpu.memory_space<vmem>>, vector<512x128xf32>
      tpu.vector_store %arg8[%c0_10, %c0_11], %12 {strides = array<i32>} : memref<512x128xf32, #tpu.memory_space<vmem>>, vector<512x128xf32>,
    } else {
    }
    %c0 = arith.constant 0 : index
    %c0_1 = arith.constant 0 : index
    %3 = vector.load %arg8[%c0, %c0_1] : memref<512x128xf32, #tpu.memory_space<vmem>>, vector<512x128xf32>
    %c0_2 = arith.constant 0 : index
    %c0_3 = arith.constant 0 : index
    %4 = vector.load %arg2[%c0_2, %c0_3] : memref<512x512xbf16, #tpu.memory_space<vmem>>, vector<512x512xbf16>
    %c0_4 = arith.constant 0 : index
    %c0_5 = arith.constant 0 : index
    %5 = vector.load %arg3[%c0_4, %c0_5] : memref<512x128xbf16, #tpu.memory_space<vmem>>, vector<512x128xbf16>
    %cst = arith.constant dense<0.000000e+00> : vector<512x128xf32>
    %6 = tpu.matmul %4, %5, %cst {dimension_numbers = #tpu.dot_dimension_numbers<[1], [0], [0], [1], [0, 0, 1, 1], [], []>} : vector<512x512xbf16>, vector<512x128xbf16>, vector<512x128xf32> -> vector<512x128xf32>
    %7 = arith.addf %3, %6 : vector<512x128xf32>
    %c0_6 = arith.constant 0 : index
    %c0_7 = arith.constant 0 : index
    %8 = vector.load %arg8[%c0_6, %c0_7] : memref<512x128xf32, #tpu.memory_space<vmem>>, vector<512x128xf32>
    tpu.vector_store %arg8[%c0_6, %c0_7], %7 {strides = array<i32>} : memref<512x128xf32, #tpu.memory_space<vmem>>, vector<512x128xf32>,
    %c1_i32 = arith.constant 1 : i32
    %9 = arith.cmpi eq, %arg1, %c1_i32 : i32
    %10 = arith.extui %9 : i1 to i32
    %c0_i32_8 = arith.constant 0 : i32
    %11 = arith.cmpi ne, %10, %c0_i32_8 : i32
    scf.if %11 {
      %c0_9 = arith.constant 0 : index
      %c0_10 = arith.constant 0 : index
      %12 = vector.load %arg8[%c0_9, %c0_10] : memref<512x128xf32, #tpu.memory_space<vmem>>, vector<512x128xf32>
      %c0_11 = arith.constant 0 : index
      %c0_12 = arith.constant 0 : index
      %13 = vector.load %arg4[%c0_11, %c0_12] : memref<512x128xf32, #tpu.memory_space<vmem>>, vector<512x128xf32>
      %14 = arith.addf %12, %13 : vector<512x128xf32>
      %c0_13 = arith.constant 0 : index
      %c0_14 = arith.constant 0 : index
      %15 = vector.load %arg5[%c0_13, %c0_14] : memref<1x128xf32, #tpu.memory_space<vmem>>, vector<1x128xf32>
      %16 = vector.broadcast %15 : vector<1x128xf32> to vector<512x128xf32>
      %17 = arith.addf %14, %16 : vector<512x128xf32>
      %c0_15 = arith.constant 0 : index
      %c0_16 = arith.constant 0 : index
      %18 = vector.load %arg6[%c0_15, %c0_16] : memref<512x128xf32, #tpu.memory_space<vmem>>, vector<512x128xf32>
      tpu.vector_store %arg6[%c0_15, %c0_16], %17 {strides = array<i32>} : memref<512x128xf32, #tpu.memory_space<vmem>>, vector<512x128xf32>,
      %19 = arith.truncf %17 : vector<512x128xf32> to vector<512x128xbf16>
      %c0_17 = arith.constant 0 : index
      %c0_18 = arith.constant 0 : index
      %20 = vector.load %arg7[%c0_17, %c0_18] : memref<512x128xbf16, #tpu.memory_space<vmem>>, vector<512x128xbf16>
      tpu.vector_store %arg7[%c0_17, %c0_18], %19 {strides = array<i32>} : memref<512x128xbf16, #tpu.memory_space<vmem>>, vector<512x128xbf16>,
    } else {
    }
    return
  }
  func.func @transform_0(%arg0: i32, %arg1: i32) -> (i32, i32) {
    %c0_i32 = arith.constant 0 : i32
    return %arg0, %arg1 : i32, i32
  }
  func.func @transform_1(%arg0: i32, %arg1: i32) -> (i32, i32) {
    %c0_i32 = arith.constant 0 : i32
    %c0_i32_0 = arith.constant 0 : i32
    return %arg1, %c0_i32 : i32, i32
  }
  func.func @transform_2(%arg0: i32, %arg1: i32) -> (i32, i32) {
    %c0_i32 = arith.constant 0 : i32
    %c0_i32_0 = arith.constant 0 : i32
    return %arg0, %c0_i32 : i32, i32
  }
  func.func @transform_3(%arg0: i32, %arg1: i32) -> (i32, i32) {
    %c0_i32 = arith.constant 0 : i32
    %c0_i32_0 = arith.constant 0 : i32
    %c0_i32_1 = arith.constant 0 : i32
    return %c0_i32, %c0_i32_0 : i32, i32
  }
  func.func @transform_4(%arg0: i32, %arg1: i32) -> (i32, i32) {
    %c0_i32 = arith.constant 0 : i32
    %c0_i32_0 = arith.constant 0 : i32
    return %arg0, %c0_i32 : i32, i32
  }
  func.func @transform_5(%arg0: i32, %arg1: i32) -> (i32, i32) {
    %c0_i32 = arith.constant 0 : i32
    %c0_i32_0 = arith.constant 0 : i32
    return %arg0, %c0_i32 : i32, i32
  }
}

module attributes {stable_mosaic.version = 11 : i64} {
  func.func @user_kernel(%arg0: memref<16xi32, #tpu.memory_space<smem>>, %arg1: memref<2x8xf32, #tpu.memory_space<vmem>>, %arg2: memref<2x256xf32, #tpu.memory_space<vmem>>, %arg3: memref<512x128xf32, #tpu.memory_space<any>>, %arg4: memref<128x128xbf16, #tpu.memory_space<vmem>>, %arg5: memref<1x128xf32, #tpu.memory_space<vmem>>, %arg6: memref<256x128xbf16, #tpu.memory_space<vmem>>, %arg7: memref<1x128xf32, #tpu.memory_space<vmem>>, %arg8: memref<128x256xbf16, #tpu.memory_space<vmem>>, %arg9: memref<1x256xf32, #tpu.memory_space<vmem>>, %arg10: memref<1x256xf32, #tpu.memory_space<vmem>>, %arg11: memref<1x256xf32, #tpu.memory_space<vmem>>, %arg12: memref<1x1xf32, #tpu.memory_space<vmem>>, %arg13: memref<256x128xbf16, #tpu.memory_space<vmem>>, %arg14: memref<1x128xf32, #tpu.memory_space<vmem>>, %arg15: memref<128x128xbf16, #tpu.memory_space<vmem>>, %arg16: memref<128x128xbf16, #tpu.memory_space<vmem>>, %arg17: memref<1x128xf32, #tpu.memory_space<vmem>>, %arg18: memref<2x128xf32, #tpu.memory_space<vmem>>, %arg19: memref<2x128xbf16, #tpu.memory_space<vmem>>, %arg20: memref<16x128xf32, #tpu.memory_space<vmem>>, %arg21: memref<16x!tpu.dma_semaphore, #tpu.memory_space<semaphore_mem>>) attributes {dimension_semantics = [], scalar_prefetch = 0 : i64, scratch_operands = 2 : i64, tpu.core_type = #tpu.core_type<tc>} {
    %c0 = arith.constant 0 : index
    %0 = memref.load %arg0[%c0] : memref<16xi32, #tpu.memory_space<smem>>
    %c0_i32 = arith.constant 0 : i32
    %c0_i32_0 = arith.constant 0 : i32
    %1 = tpu.memref_slice %arg3[%0, %c0_i32_0] : memref<512x128xf32, #tpu.memory_space<any>> -> memref<1x128xf32, #tpu.memory_space<any>>
    %c0_i32_1 = arith.constant 0 : i32
    %c0_i32_2 = arith.constant 0 : i32
    %2 = tpu.memref_slice %arg20[%c0_i32_1, %c0_i32_2] : memref<16x128xf32, #tpu.memory_space<vmem>> -> memref<1x128xf32, #tpu.memory_space<vmem>>
    %3 = tpu.memref_slice %arg21[%c0_i32] : memref<16x!tpu.dma_semaphore, #tpu.memory_space<semaphore_mem>> -> memref<1x!tpu.dma_semaphore, #tpu.memory_space<semaphore_mem>>
    %4 = tpu.memref_squeeze %3 : memref<1x!tpu.dma_semaphore, #tpu.memory_space<semaphore_mem>> -> memref<!tpu.dma_semaphore, #tpu.memory_space<semaphore_mem>>
    tpu.enqueue_dma source(%1 : memref<1x128xf32, #tpu.memory_space<any>>) target(%2 : memref<1x128xf32, #tpu.memory_space<vmem>>) target_semaphore(%4 : memref<!tpu.dma_semaphore, #tpu.memory_space<semaphore_mem>>)
    %c1 = arith.constant 1 : index
    %5 = memref.load %arg0[%c1] : memref<16xi32, #tpu.memory_space<smem>>
    %c1_i32 = arith.constant 1 : i32
    %c0_i32_3 = arith.constant 0 : i32
    %6 = tpu.memref_slice %arg3[%5, %c0_i32_3] : memref<512x128xf32, #tpu.memory_space<any>> -> memref<1x128xf32, #tpu.memory_space<any>>
    %c1_i32_4 = arith.constant 1 : i32
    %c0_i32_5 = arith.constant 0 : i32
    %7 = tpu.memref_slice %arg20[%c1_i32_4, %c0_i32_5] : memref<16x128xf32, #tpu.memory_space<vmem>> -> memref<1x128xf32, #tpu.memory_space<vmem>>
    %8 = tpu.memref_slice %arg21[%c1_i32] : memref<16x!tpu.dma_semaphore, #tpu.memory_space<semaphore_mem>> -> memref<1x!tpu.dma_semaphore, #tpu.memory_space<semaphore_mem>>
    %9 = tpu.memref_squeeze %8 : memref<1x!tpu.dma_semaphore, #tpu.memory_space<semaphore_mem>> -> memref<!tpu.dma_semaphore, #tpu.memory_space<semaphore_mem>>
    tpu.enqueue_dma source(%6 : memref<1x128xf32, #tpu.memory_space<any>>) target(%7 : memref<1x128xf32, #tpu.memory_space<vmem>>) target_semaphore(%9 : memref<!tpu.dma_semaphore, #tpu.memory_space<semaphore_mem>>)
    %c2 = arith.constant 2 : index
    %10 = memref.load %arg0[%c2] : memref<16xi32, #tpu.memory_space<smem>>
    %c2_i32 = arith.constant 2 : i32
    %c0_i32_6 = arith.constant 0 : i32
    %11 = tpu.memref_slice %arg3[%10, %c0_i32_6] : memref<512x128xf32, #tpu.memory_space<any>> -> memref<1x128xf32, #tpu.memory_space<any>>
    %c2_i32_7 = arith.constant 2 : i32
    %c0_i32_8 = arith.constant 0 : i32
    %12 = tpu.memref_slice %arg20[%c2_i32_7, %c0_i32_8] : memref<16x128xf32, #tpu.memory_space<vmem>> -> memref<1x128xf32, #tpu.memory_space<vmem>>
    %13 = tpu.memref_slice %arg21[%c2_i32] : memref<16x!tpu.dma_semaphore, #tpu.memory_space<semaphore_mem>> -> memref<1x!tpu.dma_semaphore, #tpu.memory_space<semaphore_mem>>
    %14 = tpu.memref_squeeze %13 : memref<1x!tpu.dma_semaphore, #tpu.memory_space<semaphore_mem>> -> memref<!tpu.dma_semaphore, #tpu.memory_space<semaphore_mem>>
    tpu.enqueue_dma source(%11 : memref<1x128xf32, #tpu.memory_space<any>>) target(%12 : memref<1x128xf32, #tpu.memory_space<vmem>>) target_semaphore(%14 : memref<!tpu.dma_semaphore, #tpu.memory_space<semaphore_mem>>)
    %c3 = arith.constant 3 : index
    %15 = memref.load %arg0[%c3] : memref<16xi32, #tpu.memory_space<smem>>
    %c3_i32 = arith.constant 3 : i32
    %c0_i32_9 = arith.constant 0 : i32
    %16 = tpu.memref_slice %arg3[%15, %c0_i32_9] : memref<512x128xf32, #tpu.memory_space<any>> -> memref<1x128xf32, #tpu.memory_space<any>>
    %c3_i32_10 = arith.constant 3 : i32
    %c0_i32_11 = arith.constant 0 : i32
    %17 = tpu.memref_slice %arg20[%c3_i32_10, %c0_i32_11] : memref<16x128xf32, #tpu.memory_space<vmem>> -> memref<1x128xf32, #tpu.memory_space<vmem>>
    %18 = tpu.memref_slice %arg21[%c3_i32] : memref<16x!tpu.dma_semaphore, #tpu.memory_space<semaphore_mem>> -> memref<1x!tpu.dma_semaphore, #tpu.memory_space<semaphore_mem>>
    %19 = tpu.memref_squeeze %18 : memref<1x!tpu.dma_semaphore, #tpu.memory_space<semaphore_mem>> -> memref<!tpu.dma_semaphore, #tpu.memory_space<semaphore_mem>>
    tpu.enqueue_dma source(%16 : memref<1x128xf32, #tpu.memory_space<any>>) target(%17 : memref<1x128xf32, #tpu.memory_space<vmem>>) target_semaphore(%19 : memref<!tpu.dma_semaphore, #tpu.memory_space<semaphore_mem>>)
    %c4 = arith.constant 4 : index
    %20 = memref.load %arg0[%c4] : memref<16xi32, #tpu.memory_space<smem>>
    %c4_i32 = arith.constant 4 : i32
    %c0_i32_12 = arith.constant 0 : i32
    %21 = tpu.memref_slice %arg3[%20, %c0_i32_12] : memref<512x128xf32, #tpu.memory_space<any>> -> memref<1x128xf32, #tpu.memory_space<any>>
    %c4_i32_13 = arith.constant 4 : i32
    %c0_i32_14 = arith.constant 0 : i32
    %22 = tpu.memref_slice %arg20[%c4_i32_13, %c0_i32_14] : memref<16x128xf32, #tpu.memory_space<vmem>> -> memref<1x128xf32, #tpu.memory_space<vmem>>
    %23 = tpu.memref_slice %arg21[%c4_i32] : memref<16x!tpu.dma_semaphore, #tpu.memory_space<semaphore_mem>> -> memref<1x!tpu.dma_semaphore, #tpu.memory_space<semaphore_mem>>
    %24 = tpu.memref_squeeze %23 : memref<1x!tpu.dma_semaphore, #tpu.memory_space<semaphore_mem>> -> memref<!tpu.dma_semaphore, #tpu.memory_space<semaphore_mem>>
    tpu.enqueue_dma source(%21 : memref<1x128xf32, #tpu.memory_space<any>>) target(%22 : memref<1x128xf32, #tpu.memory_space<vmem>>) target_semaphore(%24 : memref<!tpu.dma_semaphore, #tpu.memory_space<semaphore_mem>>)
    %c5 = arith.constant 5 : index
    %25 = memref.load %arg0[%c5] : memref<16xi32, #tpu.memory_space<smem>>
    %c5_i32 = arith.constant 5 : i32
    %c0_i32_15 = arith.constant 0 : i32
    %26 = tpu.memref_slice %arg3[%25, %c0_i32_15] : memref<512x128xf32, #tpu.memory_space<any>> -> memref<1x128xf32, #tpu.memory_space<any>>
    %c5_i32_16 = arith.constant 5 : i32
    %c0_i32_17 = arith.constant 0 : i32
    %27 = tpu.memref_slice %arg20[%c5_i32_16, %c0_i32_17] : memref<16x128xf32, #tpu.memory_space<vmem>> -> memref<1x128xf32, #tpu.memory_space<vmem>>
    %28 = tpu.memref_slice %arg21[%c5_i32] : memref<16x!tpu.dma_semaphore, #tpu.memory_space<semaphore_mem>> -> memref<1x!tpu.dma_semaphore, #tpu.memory_space<semaphore_mem>>
    %29 = tpu.memref_squeeze %28 : memref<1x!tpu.dma_semaphore, #tpu.memory_space<semaphore_mem>> -> memref<!tpu.dma_semaphore, #tpu.memory_space<semaphore_mem>>
    tpu.enqueue_dma source(%26 : memref<1x128xf32, #tpu.memory_space<any>>) target(%27 : memref<1x128xf32, #tpu.memory_space<vmem>>) target_semaphore(%29 : memref<!tpu.dma_semaphore, #tpu.memory_space<semaphore_mem>>)
    %c6 = arith.constant 6 : index
    %30 = memref.load %arg0[%c6] : memref<16xi32, #tpu.memory_space<smem>>
    %c6_i32 = arith.constant 6 : i32
    %c0_i32_18 = arith.constant 0 : i32
    %31 = tpu.memref_slice %arg3[%30, %c0_i32_18] : memref<512x128xf32, #tpu.memory_space<any>> -> memref<1x128xf32, #tpu.memory_space<any>>
    %c6_i32_19 = arith.constant 6 : i32
    %c0_i32_20 = arith.constant 0 : i32
    %32 = tpu.memref_slice %arg20[%c6_i32_19, %c0_i32_20] : memref<16x128xf32, #tpu.memory_space<vmem>> -> memref<1x128xf32, #tpu.memory_space<vmem>>
    %33 = tpu.memref_slice %arg21[%c6_i32] : memref<16x!tpu.dma_semaphore, #tpu.memory_space<semaphore_mem>> -> memref<1x!tpu.dma_semaphore, #tpu.memory_space<semaphore_mem>>
    %34 = tpu.memref_squeeze %33 : memref<1x!tpu.dma_semaphore, #tpu.memory_space<semaphore_mem>> -> memref<!tpu.dma_semaphore, #tpu.memory_space<semaphore_mem>>
    tpu.enqueue_dma source(%31 : memref<1x128xf32, #tpu.memory_space<any>>) target(%32 : memref<1x128xf32, #tpu.memory_space<vmem>>) target_semaphore(%34 : memref<!tpu.dma_semaphore, #tpu.memory_space<semaphore_mem>>)
    %c7 = arith.constant 7 : index
    %35 = memref.load %arg0[%c7] : memref<16xi32, #tpu.memory_space<smem>>
    %c7_i32 = arith.constant 7 : i32
    %c0_i32_21 = arith.constant 0 : i32
    %36 = tpu.memref_slice %arg3[%35, %c0_i32_21] : memref<512x128xf32, #tpu.memory_space<any>> -> memref<1x128xf32, #tpu.memory_space<any>>
    %c7_i32_22 = arith.constant 7 : i32
    %c0_i32_23 = arith.constant 0 : i32
    %37 = tpu.memref_slice %arg20[%c7_i32_22, %c0_i32_23] : memref<16x128xf32, #tpu.memory_space<vmem>> -> memref<1x128xf32, #tpu.memory_space<vmem>>
    %38 = tpu.memref_slice %arg21[%c7_i32] : memref<16x!tpu.dma_semaphore, #tpu.memory_space<semaphore_mem>> -> memref<1x!tpu.dma_semaphore, #tpu.memory_space<semaphore_mem>>
    %39 = tpu.memref_squeeze %38 : memref<1x!tpu.dma_semaphore, #tpu.memory_space<semaphore_mem>> -> memref<!tpu.dma_semaphore, #tpu.memory_space<semaphore_mem>>
    tpu.enqueue_dma source(%36 : memref<1x128xf32, #tpu.memory_space<any>>) target(%37 : memref<1x128xf32, #tpu.memory_space<vmem>>) target_semaphore(%39 : memref<!tpu.dma_semaphore, #tpu.memory_space<semaphore_mem>>)
    %c8 = arith.constant 8 : index
    %40 = memref.load %arg0[%c8] : memref<16xi32, #tpu.memory_space<smem>>
    %c8_i32 = arith.constant 8 : i32
    %c0_i32_24 = arith.constant 0 : i32
    %41 = tpu.memref_slice %arg3[%40, %c0_i32_24] : memref<512x128xf32, #tpu.memory_space<any>> -> memref<1x128xf32, #tpu.memory_space<any>>
    %c8_i32_25 = arith.constant 8 : i32
    %c0_i32_26 = arith.constant 0 : i32
    %42 = tpu.memref_slice %arg20[%c8_i32_25, %c0_i32_26] : memref<16x128xf32, #tpu.memory_space<vmem>> -> memref<1x128xf32, #tpu.memory_space<vmem>>
    %43 = tpu.memref_slice %arg21[%c8_i32] : memref<16x!tpu.dma_semaphore, #tpu.memory_space<semaphore_mem>> -> memref<1x!tpu.dma_semaphore, #tpu.memory_space<semaphore_mem>>
    %44 = tpu.memref_squeeze %43 : memref<1x!tpu.dma_semaphore, #tpu.memory_space<semaphore_mem>> -> memref<!tpu.dma_semaphore, #tpu.memory_space<semaphore_mem>>
    tpu.enqueue_dma source(%41 : memref<1x128xf32, #tpu.memory_space<any>>) target(%42 : memref<1x128xf32, #tpu.memory_space<vmem>>) target_semaphore(%44 : memref<!tpu.dma_semaphore, #tpu.memory_space<semaphore_mem>>)
    %c9 = arith.constant 9 : index
    %45 = memref.load %arg0[%c9] : memref<16xi32, #tpu.memory_space<smem>>
    %c9_i32 = arith.constant 9 : i32
    %c0_i32_27 = arith.constant 0 : i32
    %46 = tpu.memref_slice %arg3[%45, %c0_i32_27] : memref<512x128xf32, #tpu.memory_space<any>> -> memref<1x128xf32, #tpu.memory_space<any>>
    %c9_i32_28 = arith.constant 9 : i32
    %c0_i32_29 = arith.constant 0 : i32
    %47 = tpu.memref_slice %arg20[%c9_i32_28, %c0_i32_29] : memref<16x128xf32, #tpu.memory_space<vmem>> -> memref<1x128xf32, #tpu.memory_space<vmem>>
    %48 = tpu.memref_slice %arg21[%c9_i32] : memref<16x!tpu.dma_semaphore, #tpu.memory_space<semaphore_mem>> -> memref<1x!tpu.dma_semaphore, #tpu.memory_space<semaphore_mem>>
    %49 = tpu.memref_squeeze %48 : memref<1x!tpu.dma_semaphore, #tpu.memory_space<semaphore_mem>> -> memref<!tpu.dma_semaphore, #tpu.memory_space<semaphore_mem>>
    tpu.enqueue_dma source(%46 : memref<1x128xf32, #tpu.memory_space<any>>) target(%47 : memref<1x128xf32, #tpu.memory_space<vmem>>) target_semaphore(%49 : memref<!tpu.dma_semaphore, #tpu.memory_space<semaphore_mem>>)
    %c10 = arith.constant 10 : index
    %50 = memref.load %arg0[%c10] : memref<16xi32, #tpu.memory_space<smem>>
    %c10_i32 = arith.constant 10 : i32
    %c0_i32_30 = arith.constant 0 : i32
    %51 = tpu.memref_slice %arg3[%50, %c0_i32_30] : memref<512x128xf32, #tpu.memory_space<any>> -> memref<1x128xf32, #tpu.memory_space<any>>
    %c10_i32_31 = arith.constant 10 : i32
    %c0_i32_32 = arith.constant 0 : i32
    %52 = tpu.memref_slice %arg20[%c10_i32_31, %c0_i32_32] : memref<16x128xf32, #tpu.memory_space<vmem>> -> memref<1x128xf32, #tpu.memory_space<vmem>>
    %53 = tpu.memref_slice %arg21[%c10_i32] : memref<16x!tpu.dma_semaphore, #tpu.memory_space<semaphore_mem>> -> memref<1x!tpu.dma_semaphore, #tpu.memory_space<semaphore_mem>>
    %54 = tpu.memref_squeeze %53 : memref<1x!tpu.dma_semaphore, #tpu.memory_space<semaphore_mem>> -> memref<!tpu.dma_semaphore, #tpu.memory_space<semaphore_mem>>
    tpu.enqueue_dma source(%51 : memref<1x128xf32, #tpu.memory_space<any>>) target(%52 : memref<1x128xf32, #tpu.memory_space<vmem>>) target_semaphore(%54 : memref<!tpu.dma_semaphore, #tpu.memory_space<semaphore_mem>>)
    %c11 = arith.constant 11 : index
    %55 = memref.load %arg0[%c11] : memref<16xi32, #tpu.memory_space<smem>>
    %c11_i32 = arith.constant 11 : i32
    %c0_i32_33 = arith.constant 0 : i32
    %56 = tpu.memref_slice %arg3[%55, %c0_i32_33] : memref<512x128xf32, #tpu.memory_space<any>> -> memref<1x128xf32, #tpu.memory_space<any>>
    %c11_i32_34 = arith.constant 11 : i32
    %c0_i32_35 = arith.constant 0 : i32
    %57 = tpu.memref_slice %arg20[%c11_i32_34, %c0_i32_35] : memref<16x128xf32, #tpu.memory_space<vmem>> -> memref<1x128xf32, #tpu.memory_space<vmem>>
    %58 = tpu.memref_slice %arg21[%c11_i32] : memref<16x!tpu.dma_semaphore, #tpu.memory_space<semaphore_mem>> -> memref<1x!tpu.dma_semaphore, #tpu.memory_space<semaphore_mem>>
    %59 = tpu.memref_squeeze %58 : memref<1x!tpu.dma_semaphore, #tpu.memory_space<semaphore_mem>> -> memref<!tpu.dma_semaphore, #tpu.memory_space<semaphore_mem>>
    tpu.enqueue_dma source(%56 : memref<1x128xf32, #tpu.memory_space<any>>) target(%57 : memref<1x128xf32, #tpu.memory_space<vmem>>) target_semaphore(%59 : memref<!tpu.dma_semaphore, #tpu.memory_space<semaphore_mem>>)
    %c12 = arith.constant 12 : index
    %60 = memref.load %arg0[%c12] : memref<16xi32, #tpu.memory_space<smem>>
    %c12_i32 = arith.constant 12 : i32
    %c0_i32_36 = arith.constant 0 : i32
    %61 = tpu.memref_slice %arg3[%60, %c0_i32_36] : memref<512x128xf32, #tpu.memory_space<any>> -> memref<1x128xf32, #tpu.memory_space<any>>
    %c12_i32_37 = arith.constant 12 : i32
    %c0_i32_38 = arith.constant 0 : i32
    %62 = tpu.memref_slice %arg20[%c12_i32_37, %c0_i32_38] : memref<16x128xf32, #tpu.memory_space<vmem>> -> memref<1x128xf32, #tpu.memory_space<vmem>>
    %63 = tpu.memref_slice %arg21[%c12_i32] : memref<16x!tpu.dma_semaphore, #tpu.memory_space<semaphore_mem>> -> memref<1x!tpu.dma_semaphore, #tpu.memory_space<semaphore_mem>>
    %64 = tpu.memref_squeeze %63 : memref<1x!tpu.dma_semaphore, #tpu.memory_space<semaphore_mem>> -> memref<!tpu.dma_semaphore, #tpu.memory_space<semaphore_mem>>
    tpu.enqueue_dma source(%61 : memref<1x128xf32, #tpu.memory_space<any>>) target(%62 : memref<1x128xf32, #tpu.memory_space<vmem>>) target_semaphore(%64 : memref<!tpu.dma_semaphore, #tpu.memory_space<semaphore_mem>>)
    %c13 = arith.constant 13 : index
    %65 = memref.load %arg0[%c13] : memref<16xi32, #tpu.memory_space<smem>>
    %c13_i32 = arith.constant 13 : i32
    %c0_i32_39 = arith.constant 0 : i32
    %66 = tpu.memref_slice %arg3[%65, %c0_i32_39] : memref<512x128xf32, #tpu.memory_space<any>> -> memref<1x128xf32, #tpu.memory_space<any>>
    %c13_i32_40 = arith.constant 13 : i32
    %c0_i32_41 = arith.constant 0 : i32
    %67 = tpu.memref_slice %arg20[%c13_i32_40, %c0_i32_41] : memref<16x128xf32, #tpu.memory_space<vmem>> -> memref<1x128xf32, #tpu.memory_space<vmem>>
    %68 = tpu.memref_slice %arg21[%c13_i32] : memref<16x!tpu.dma_semaphore, #tpu.memory_space<semaphore_mem>> -> memref<1x!tpu.dma_semaphore, #tpu.memory_space<semaphore_mem>>
    %69 = tpu.memref_squeeze %68 : memref<1x!tpu.dma_semaphore, #tpu.memory_space<semaphore_mem>> -> memref<!tpu.dma_semaphore, #tpu.memory_space<semaphore_mem>>
    tpu.enqueue_dma source(%66 : memref<1x128xf32, #tpu.memory_space<any>>) target(%67 : memref<1x128xf32, #tpu.memory_space<vmem>>) target_semaphore(%69 : memref<!tpu.dma_semaphore, #tpu.memory_space<semaphore_mem>>)
    %c14 = arith.constant 14 : index
    %70 = memref.load %arg0[%c14] : memref<16xi32, #tpu.memory_space<smem>>
    %c14_i32 = arith.constant 14 : i32
    %c0_i32_42 = arith.constant 0 : i32
    %71 = tpu.memref_slice %arg3[%70, %c0_i32_42] : memref<512x128xf32, #tpu.memory_space<any>> -> memref<1x128xf32, #tpu.memory_space<any>>
    %c14_i32_43 = arith.constant 14 : i32
    %c0_i32_44 = arith.constant 0 : i32
    %72 = tpu.memref_slice %arg20[%c14_i32_43, %c0_i32_44] : memref<16x128xf32, #tpu.memory_space<vmem>> -> memref<1x128xf32, #tpu.memory_space<vmem>>
    %73 = tpu.memref_slice %arg21[%c14_i32] : memref<16x!tpu.dma_semaphore, #tpu.memory_space<semaphore_mem>> -> memref<1x!tpu.dma_semaphore, #tpu.memory_space<semaphore_mem>>
    %74 = tpu.memref_squeeze %73 : memref<1x!tpu.dma_semaphore, #tpu.memory_space<semaphore_mem>> -> memref<!tpu.dma_semaphore, #tpu.memory_space<semaphore_mem>>
    tpu.enqueue_dma source(%71 : memref<1x128xf32, #tpu.memory_space<any>>) target(%72 : memref<1x128xf32, #tpu.memory_space<vmem>>) target_semaphore(%74 : memref<!tpu.dma_semaphore, #tpu.memory_space<semaphore_mem>>)
    %c15 = arith.constant 15 : index
    %75 = memref.load %arg0[%c15] : memref<16xi32, #tpu.memory_space<smem>>
    %c15_i32 = arith.constant 15 : i32
    %c0_i32_45 = arith.constant 0 : i32
    %76 = tpu.memref_slice %arg3[%75, %c0_i32_45] : memref<512x128xf32, #tpu.memory_space<any>> -> memref<1x128xf32, #tpu.memory_space<any>>
    %c15_i32_46 = arith.constant 15 : i32
    %c0_i32_47 = arith.constant 0 : i32
    %77 = tpu.memref_slice %arg20[%c15_i32_46, %c0_i32_47] : memref<16x128xf32, #tpu.memory_space<vmem>> -> memref<1x128xf32, #tpu.memory_space<vmem>>
    %78 = tpu.memref_slice %arg21[%c15_i32] : memref<16x!tpu.dma_semaphore, #tpu.memory_space<semaphore_mem>> -> memref<1x!tpu.dma_semaphore, #tpu.memory_space<semaphore_mem>>
    %79 = tpu.memref_squeeze %78 : memref<1x!tpu.dma_semaphore, #tpu.memory_space<semaphore_mem>> -> memref<!tpu.dma_semaphore, #tpu.memory_space<semaphore_mem>>
    tpu.enqueue_dma source(%76 : memref<1x128xf32, #tpu.memory_space<any>>) target(%77 : memref<1x128xf32, #tpu.memory_space<vmem>>) target_semaphore(%79 : memref<!tpu.dma_semaphore, #tpu.memory_space<semaphore_mem>>)
    %c0_i32_48 = arith.constant 0 : i32
    %c0_i32_49 = arith.constant 0 : i32
    %80 = tpu.memref_slice %arg3[%0, %c0_i32_49] : memref<512x128xf32, #tpu.memory_space<any>> -> memref<1x128xf32, #tpu.memory_space<any>>
    %c0_i32_50 = arith.constant 0 : i32
    %c0_i32_51 = arith.constant 0 : i32
    %81 = tpu.memref_slice %arg20[%c0_i32_50, %c0_i32_51] : memref<16x128xf32, #tpu.memory_space<vmem>> -> memref<1x128xf32, #tpu.memory_space<vmem>>
    %82 = tpu.memref_slice %arg21[%c0_i32_48] : memref<16x!tpu.dma_semaphore, #tpu.memory_space<semaphore_mem>> -> memref<1x!tpu.dma_semaphore, #tpu.memory_space<semaphore_mem>>
    %83 = tpu.memref_squeeze %82 : memref<1x!tpu.dma_semaphore, #tpu.memory_space<semaphore_mem>> -> memref<!tpu.dma_semaphore, #tpu.memory_space<semaphore_mem>>
    tpu.wait_dma2 semaphore(%83 : memref<!tpu.dma_semaphore, #tpu.memory_space<semaphore_mem>>) src(%80 : memref<1x128xf32, #tpu.memory_space<any>>) dst(%81 : memref<1x128xf32, #tpu.memory_space<vmem>>)
    %c1_i32_52 = arith.constant 1 : i32
    %c0_i32_53 = arith.constant 0 : i32
    %84 = tpu.memref_slice %arg3[%5, %c0_i32_53] : memref<512x128xf32, #tpu.memory_space<any>> -> memref<1x128xf32, #tpu.memory_space<any>>
    %c1_i32_54 = arith.constant 1 : i32
    %c0_i32_55 = arith.constant 0 : i32
    %85 = tpu.memref_slice %arg20[%c1_i32_54, %c0_i32_55] : memref<16x128xf32, #tpu.memory_space<vmem>> -> memref<1x128xf32, #tpu.memory_space<vmem>>
    %86 = tpu.memref_slice %arg21[%c1_i32_52] : memref<16x!tpu.dma_semaphore, #tpu.memory_space<semaphore_mem>> -> memref<1x!tpu.dma_semaphore, #tpu.memory_space<semaphore_mem>>
    %87 = tpu.memref_squeeze %86 : memref<1x!tpu.dma_semaphore, #tpu.memory_space<semaphore_mem>> -> memref<!tpu.dma_semaphore, #tpu.memory_space<semaphore_mem>>
    tpu.wait_dma2 semaphore(%87 : memref<!tpu.dma_semaphore, #tpu.memory_space<semaphore_mem>>) src(%84 : memref<1x128xf32, #tpu.memory_space<any>>) dst(%85 : memref<1x128xf32, #tpu.memory_space<vmem>>)
    %c2_i32_56 = arith.constant 2 : i32
    %c0_i32_57 = arith.constant 0 : i32
    %88 = tpu.memref_slice %arg3[%10, %c0_i32_57] : memref<512x128xf32, #tpu.memory_space<any>> -> memref<1x128xf32, #tpu.memory_space<any>>
    %c2_i32_58 = arith.constant 2 : i32
    %c0_i32_59 = arith.constant 0 : i32
    %89 = tpu.memref_slice %arg20[%c2_i32_58, %c0_i32_59] : memref<16x128xf32, #tpu.memory_space<vmem>> -> memref<1x128xf32, #tpu.memory_space<vmem>>
    %90 = tpu.memref_slice %arg21[%c2_i32_56] : memref<16x!tpu.dma_semaphore, #tpu.memory_space<semaphore_mem>> -> memref<1x!tpu.dma_semaphore, #tpu.memory_space<semaphore_mem>>
    %91 = tpu.memref_squeeze %90 : memref<1x!tpu.dma_semaphore, #tpu.memory_space<semaphore_mem>> -> memref<!tpu.dma_semaphore, #tpu.memory_space<semaphore_mem>>
    tpu.wait_dma2 semaphore(%91 : memref<!tpu.dma_semaphore, #tpu.memory_space<semaphore_mem>>) src(%88 : memref<1x128xf32, #tpu.memory_space<any>>) dst(%89 : memref<1x128xf32, #tpu.memory_space<vmem>>)
    %c3_i32_60 = arith.constant 3 : i32
    %c0_i32_61 = arith.constant 0 : i32
    %92 = tpu.memref_slice %arg3[%15, %c0_i32_61] : memref<512x128xf32, #tpu.memory_space<any>> -> memref<1x128xf32, #tpu.memory_space<any>>
    %c3_i32_62 = arith.constant 3 : i32
    %c0_i32_63 = arith.constant 0 : i32
    %93 = tpu.memref_slice %arg20[%c3_i32_62, %c0_i32_63] : memref<16x128xf32, #tpu.memory_space<vmem>> -> memref<1x128xf32, #tpu.memory_space<vmem>>
    %94 = tpu.memref_slice %arg21[%c3_i32_60] : memref<16x!tpu.dma_semaphore, #tpu.memory_space<semaphore_mem>> -> memref<1x!tpu.dma_semaphore, #tpu.memory_space<semaphore_mem>>
    %95 = tpu.memref_squeeze %94 : memref<1x!tpu.dma_semaphore, #tpu.memory_space<semaphore_mem>> -> memref<!tpu.dma_semaphore, #tpu.memory_space<semaphore_mem>>
    tpu.wait_dma2 semaphore(%95 : memref<!tpu.dma_semaphore, #tpu.memory_space<semaphore_mem>>) src(%92 : memref<1x128xf32, #tpu.memory_space<any>>) dst(%93 : memref<1x128xf32, #tpu.memory_space<vmem>>)
    %c4_i32_64 = arith.constant 4 : i32
    %c0_i32_65 = arith.constant 0 : i32
    %96 = tpu.memref_slice %arg3[%20, %c0_i32_65] : memref<512x128xf32, #tpu.memory_space<any>> -> memref<1x128xf32, #tpu.memory_space<any>>
    %c4_i32_66 = arith.constant 4 : i32
    %c0_i32_67 = arith.constant 0 : i32
    %97 = tpu.memref_slice %arg20[%c4_i32_66, %c0_i32_67] : memref<16x128xf32, #tpu.memory_space<vmem>> -> memref<1x128xf32, #tpu.memory_space<vmem>>
    %98 = tpu.memref_slice %arg21[%c4_i32_64] : memref<16x!tpu.dma_semaphore, #tpu.memory_space<semaphore_mem>> -> memref<1x!tpu.dma_semaphore, #tpu.memory_space<semaphore_mem>>
    %99 = tpu.memref_squeeze %98 : memref<1x!tpu.dma_semaphore, #tpu.memory_space<semaphore_mem>> -> memref<!tpu.dma_semaphore, #tpu.memory_space<semaphore_mem>>
    tpu.wait_dma2 semaphore(%99 : memref<!tpu.dma_semaphore, #tpu.memory_space<semaphore_mem>>) src(%96 : memref<1x128xf32, #tpu.memory_space<any>>) dst(%97 : memref<1x128xf32, #tpu.memory_space<vmem>>)
    %c5_i32_68 = arith.constant 5 : i32
    %c0_i32_69 = arith.constant 0 : i32
    %100 = tpu.memref_slice %arg3[%25, %c0_i32_69] : memref<512x128xf32, #tpu.memory_space<any>> -> memref<1x128xf32, #tpu.memory_space<any>>
    %c5_i32_70 = arith.constant 5 : i32
    %c0_i32_71 = arith.constant 0 : i32
    %101 = tpu.memref_slice %arg20[%c5_i32_70, %c0_i32_71] : memref<16x128xf32, #tpu.memory_space<vmem>> -> memref<1x128xf32, #tpu.memory_space<vmem>>
    %102 = tpu.memref_slice %arg21[%c5_i32_68] : memref<16x!tpu.dma_semaphore, #tpu.memory_space<semaphore_mem>> -> memref<1x!tpu.dma_semaphore, #tpu.memory_space<semaphore_mem>>
    %103 = tpu.memref_squeeze %102 : memref<1x!tpu.dma_semaphore, #tpu.memory_space<semaphore_mem>> -> memref<!tpu.dma_semaphore, #tpu.memory_space<semaphore_mem>>
    tpu.wait_dma2 semaphore(%103 : memref<!tpu.dma_semaphore, #tpu.memory_space<semaphore_mem>>) src(%100 : memref<1x128xf32, #tpu.memory_space<any>>) dst(%101 : memref<1x128xf32, #tpu.memory_space<vmem>>)
    %c6_i32_72 = arith.constant 6 : i32
    %c0_i32_73 = arith.constant 0 : i32
    %104 = tpu.memref_slice %arg3[%30, %c0_i32_73] : memref<512x128xf32, #tpu.memory_space<any>> -> memref<1x128xf32, #tpu.memory_space<any>>
    %c6_i32_74 = arith.constant 6 : i32
    %c0_i32_75 = arith.constant 0 : i32
    %105 = tpu.memref_slice %arg20[%c6_i32_74, %c0_i32_75] : memref<16x128xf32, #tpu.memory_space<vmem>> -> memref<1x128xf32, #tpu.memory_space<vmem>>
    %106 = tpu.memref_slice %arg21[%c6_i32_72] : memref<16x!tpu.dma_semaphore, #tpu.memory_space<semaphore_mem>> -> memref<1x!tpu.dma_semaphore, #tpu.memory_space<semaphore_mem>>
    %107 = tpu.memref_squeeze %106 : memref<1x!tpu.dma_semaphore, #tpu.memory_space<semaphore_mem>> -> memref<!tpu.dma_semaphore, #tpu.memory_space<semaphore_mem>>
    tpu.wait_dma2 semaphore(%107 : memref<!tpu.dma_semaphore, #tpu.memory_space<semaphore_mem>>) src(%104 : memref<1x128xf32, #tpu.memory_space<any>>) dst(%105 : memref<1x128xf32, #tpu.memory_space<vmem>>)
    %c7_i32_76 = arith.constant 7 : i32
    %c0_i32_77 = arith.constant 0 : i32
    %108 = tpu.memref_slice %arg3[%35, %c0_i32_77] : memref<512x128xf32, #tpu.memory_space<any>> -> memref<1x128xf32, #tpu.memory_space<any>>
    %c7_i32_78 = arith.constant 7 : i32
    %c0_i32_79 = arith.constant 0 : i32
    %109 = tpu.memref_slice %arg20[%c7_i32_78, %c0_i32_79] : memref<16x128xf32, #tpu.memory_space<vmem>> -> memref<1x128xf32, #tpu.memory_space<vmem>>
    %110 = tpu.memref_slice %arg21[%c7_i32_76] : memref<16x!tpu.dma_semaphore, #tpu.memory_space<semaphore_mem>> -> memref<1x!tpu.dma_semaphore, #tpu.memory_space<semaphore_mem>>
    %111 = tpu.memref_squeeze %110 : memref<1x!tpu.dma_semaphore, #tpu.memory_space<semaphore_mem>> -> memref<!tpu.dma_semaphore, #tpu.memory_space<semaphore_mem>>
    tpu.wait_dma2 semaphore(%111 : memref<!tpu.dma_semaphore, #tpu.memory_space<semaphore_mem>>) src(%108 : memref<1x128xf32, #tpu.memory_space<any>>) dst(%109 : memref<1x128xf32, #tpu.memory_space<vmem>>)
    %c8_i32_80 = arith.constant 8 : i32
    %c0_i32_81 = arith.constant 0 : i32
    %112 = tpu.memref_slice %arg3[%40, %c0_i32_81] : memref<512x128xf32, #tpu.memory_space<any>> -> memref<1x128xf32, #tpu.memory_space<any>>
    %c8_i32_82 = arith.constant 8 : i32
    %c0_i32_83 = arith.constant 0 : i32
    %113 = tpu.memref_slice %arg20[%c8_i32_82, %c0_i32_83] : memref<16x128xf32, #tpu.memory_space<vmem>> -> memref<1x128xf32, #tpu.memory_space<vmem>>
    %114 = tpu.memref_slice %arg21[%c8_i32_80] : memref<16x!tpu.dma_semaphore, #tpu.memory_space<semaphore_mem>> -> memref<1x!tpu.dma_semaphore, #tpu.memory_space<semaphore_mem>>
    %115 = tpu.memref_squeeze %114 : memref<1x!tpu.dma_semaphore, #tpu.memory_space<semaphore_mem>> -> memref<!tpu.dma_semaphore, #tpu.memory_space<semaphore_mem>>
    tpu.wait_dma2 semaphore(%115 : memref<!tpu.dma_semaphore, #tpu.memory_space<semaphore_mem>>) src(%112 : memref<1x128xf32, #tpu.memory_space<any>>) dst(%113 : memref<1x128xf32, #tpu.memory_space<vmem>>)
    %c9_i32_84 = arith.constant 9 : i32
    %c0_i32_85 = arith.constant 0 : i32
    %116 = tpu.memref_slice %arg3[%45, %c0_i32_85] : memref<512x128xf32, #tpu.memory_space<any>> -> memref<1x128xf32, #tpu.memory_space<any>>
    %c9_i32_86 = arith.constant 9 : i32
    %c0_i32_87 = arith.constant 0 : i32
    %117 = tpu.memref_slice %arg20[%c9_i32_86, %c0_i32_87] : memref<16x128xf32, #tpu.memory_space<vmem>> -> memref<1x128xf32, #tpu.memory_space<vmem>>
    %118 = tpu.memref_slice %arg21[%c9_i32_84] : memref<16x!tpu.dma_semaphore, #tpu.memory_space<semaphore_mem>> -> memref<1x!tpu.dma_semaphore, #tpu.memory_space<semaphore_mem>>
    %119 = tpu.memref_squeeze %118 : memref<1x!tpu.dma_semaphore, #tpu.memory_space<semaphore_mem>> -> memref<!tpu.dma_semaphore, #tpu.memory_space<semaphore_mem>>
    tpu.wait_dma2 semaphore(%119 : memref<!tpu.dma_semaphore, #tpu.memory_space<semaphore_mem>>) src(%116 : memref<1x128xf32, #tpu.memory_space<any>>) dst(%117 : memref<1x128xf32, #tpu.memory_space<vmem>>)
    %c10_i32_88 = arith.constant 10 : i32
    %c0_i32_89 = arith.constant 0 : i32
    %120 = tpu.memref_slice %arg3[%50, %c0_i32_89] : memref<512x128xf32, #tpu.memory_space<any>> -> memref<1x128xf32, #tpu.memory_space<any>>
    %c10_i32_90 = arith.constant 10 : i32
    %c0_i32_91 = arith.constant 0 : i32
    %121 = tpu.memref_slice %arg20[%c10_i32_90, %c0_i32_91] : memref<16x128xf32, #tpu.memory_space<vmem>> -> memref<1x128xf32, #tpu.memory_space<vmem>>
    %122 = tpu.memref_slice %arg21[%c10_i32_88] : memref<16x!tpu.dma_semaphore, #tpu.memory_space<semaphore_mem>> -> memref<1x!tpu.dma_semaphore, #tpu.memory_space<semaphore_mem>>
    %123 = tpu.memref_squeeze %122 : memref<1x!tpu.dma_semaphore, #tpu.memory_space<semaphore_mem>> -> memref<!tpu.dma_semaphore, #tpu.memory_space<semaphore_mem>>
    tpu.wait_dma2 semaphore(%123 : memref<!tpu.dma_semaphore, #tpu.memory_space<semaphore_mem>>) src(%120 : memref<1x128xf32, #tpu.memory_space<any>>) dst(%121 : memref<1x128xf32, #tpu.memory_space<vmem>>)
    %c11_i32_92 = arith.constant 11 : i32
    %c0_i32_93 = arith.constant 0 : i32
    %124 = tpu.memref_slice %arg3[%55, %c0_i32_93] : memref<512x128xf32, #tpu.memory_space<any>> -> memref<1x128xf32, #tpu.memory_space<any>>
    %c11_i32_94 = arith.constant 11 : i32
    %c0_i32_95 = arith.constant 0 : i32
    %125 = tpu.memref_slice %arg20[%c11_i32_94, %c0_i32_95] : memref<16x128xf32, #tpu.memory_space<vmem>> -> memref<1x128xf32, #tpu.memory_space<vmem>>
    %126 = tpu.memref_slice %arg21[%c11_i32_92] : memref<16x!tpu.dma_semaphore, #tpu.memory_space<semaphore_mem>> -> memref<1x!tpu.dma_semaphore, #tpu.memory_space<semaphore_mem>>
    %127 = tpu.memref_squeeze %126 : memref<1x!tpu.dma_semaphore, #tpu.memory_space<semaphore_mem>> -> memref<!tpu.dma_semaphore, #tpu.memory_space<semaphore_mem>>
    tpu.wait_dma2 semaphore(%127 : memref<!tpu.dma_semaphore, #tpu.memory_space<semaphore_mem>>) src(%124 : memref<1x128xf32, #tpu.memory_space<any>>) dst(%125 : memref<1x128xf32, #tpu.memory_space<vmem>>)
    %c12_i32_96 = arith.constant 12 : i32
    %c0_i32_97 = arith.constant 0 : i32
    %128 = tpu.memref_slice %arg3[%60, %c0_i32_97] : memref<512x128xf32, #tpu.memory_space<any>> -> memref<1x128xf32, #tpu.memory_space<any>>
    %c12_i32_98 = arith.constant 12 : i32
    %c0_i32_99 = arith.constant 0 : i32
    %129 = tpu.memref_slice %arg20[%c12_i32_98, %c0_i32_99] : memref<16x128xf32, #tpu.memory_space<vmem>> -> memref<1x128xf32, #tpu.memory_space<vmem>>
    %130 = tpu.memref_slice %arg21[%c12_i32_96] : memref<16x!tpu.dma_semaphore, #tpu.memory_space<semaphore_mem>> -> memref<1x!tpu.dma_semaphore, #tpu.memory_space<semaphore_mem>>
    %131 = tpu.memref_squeeze %130 : memref<1x!tpu.dma_semaphore, #tpu.memory_space<semaphore_mem>> -> memref<!tpu.dma_semaphore, #tpu.memory_space<semaphore_mem>>
    tpu.wait_dma2 semaphore(%131 : memref<!tpu.dma_semaphore, #tpu.memory_space<semaphore_mem>>) src(%128 : memref<1x128xf32, #tpu.memory_space<any>>) dst(%129 : memref<1x128xf32, #tpu.memory_space<vmem>>)
    %c13_i32_100 = arith.constant 13 : i32
    %c0_i32_101 = arith.constant 0 : i32
    %132 = tpu.memref_slice %arg3[%65, %c0_i32_101] : memref<512x128xf32, #tpu.memory_space<any>> -> memref<1x128xf32, #tpu.memory_space<any>>
    %c13_i32_102 = arith.constant 13 : i32
    %c0_i32_103 = arith.constant 0 : i32
    %133 = tpu.memref_slice %arg20[%c13_i32_102, %c0_i32_103] : memref<16x128xf32, #tpu.memory_space<vmem>> -> memref<1x128xf32, #tpu.memory_space<vmem>>
    %134 = tpu.memref_slice %arg21[%c13_i32_100] : memref<16x!tpu.dma_semaphore, #tpu.memory_space<semaphore_mem>> -> memref<1x!tpu.dma_semaphore, #tpu.memory_space<semaphore_mem>>
    %135 = tpu.memref_squeeze %134 : memref<1x!tpu.dma_semaphore, #tpu.memory_space<semaphore_mem>> -> memref<!tpu.dma_semaphore, #tpu.memory_space<semaphore_mem>>
    tpu.wait_dma2 semaphore(%135 : memref<!tpu.dma_semaphore, #tpu.memory_space<semaphore_mem>>) src(%132 : memref<1x128xf32, #tpu.memory_space<any>>) dst(%133 : memref<1x128xf32, #tpu.memory_space<vmem>>)
    %c14_i32_104 = arith.constant 14 : i32
    %c0_i32_105 = arith.constant 0 : i32
    %136 = tpu.memref_slice %arg3[%70, %c0_i32_105] : memref<512x128xf32, #tpu.memory_space<any>> -> memref<1x128xf32, #tpu.memory_space<any>>
    %c14_i32_106 = arith.constant 14 : i32
    %c0_i32_107 = arith.constant 0 : i32
    %137 = tpu.memref_slice %arg20[%c14_i32_106, %c0_i32_107] : memref<16x128xf32, #tpu.memory_space<vmem>> -> memref<1x128xf32, #tpu.memory_space<vmem>>
    %138 = tpu.memref_slice %arg21[%c14_i32_104] : memref<16x!tpu.dma_semaphore, #tpu.memory_space<semaphore_mem>> -> memref<1x!tpu.dma_semaphore, #tpu.memory_space<semaphore_mem>>
    %139 = tpu.memref_squeeze %138 : memref<1x!tpu.dma_semaphore, #tpu.memory_space<semaphore_mem>> -> memref<!tpu.dma_semaphore, #tpu.memory_space<semaphore_mem>>
    tpu.wait_dma2 semaphore(%139 : memref<!tpu.dma_semaphore, #tpu.memory_space<semaphore_mem>>) src(%136 : memref<1x128xf32, #tpu.memory_space<any>>) dst(%137 : memref<1x128xf32, #tpu.memory_space<vmem>>)
    %c15_i32_108 = arith.constant 15 : i32
    %c0_i32_109 = arith.constant 0 : i32
    %140 = tpu.memref_slice %arg3[%75, %c0_i32_109] : memref<512x128xf32, #tpu.memory_space<any>> -> memref<1x128xf32, #tpu.memory_space<any>>
    %c15_i32_110 = arith.constant 15 : i32
    %c0_i32_111 = arith.constant 0 : i32
    %141 = tpu.memref_slice %arg20[%c15_i32_110, %c0_i32_111] : memref<16x128xf32, #tpu.memory_space<vmem>> -> memref<1x128xf32, #tpu.memory_space<vmem>>
    %142 = tpu.memref_slice %arg21[%c15_i32_108] : memref<16x!tpu.dma_semaphore, #tpu.memory_space<semaphore_mem>> -> memref<1x!tpu.dma_semaphore, #tpu.memory_space<semaphore_mem>>
    %143 = tpu.memref_squeeze %142 : memref<1x!tpu.dma_semaphore, #tpu.memory_space<semaphore_mem>> -> memref<!tpu.dma_semaphore, #tpu.memory_space<semaphore_mem>>
    tpu.wait_dma2 semaphore(%143 : memref<!tpu.dma_semaphore, #tpu.memory_space<semaphore_mem>>) src(%140 : memref<1x128xf32, #tpu.memory_space<any>>) dst(%141 : memref<1x128xf32, #tpu.memory_space<vmem>>)
    %c0_112 = arith.constant 0 : index
    %c0_113 = arith.constant 0 : index
    %144 = vector.load %arg20[%c0_112, %c0_113] : memref<16x128xf32, #tpu.memory_space<vmem>>, vector<16x128xf32>
    %145 = arith.truncf %144 : vector<16x128xf32> to vector<16x128xbf16>
    %c0_114 = arith.constant 0 : index
    %c0_115 = arith.constant 0 : index
    %146 = vector.load %arg4[%c0_114, %c0_115] : memref<128x128xbf16, #tpu.memory_space<vmem>>, vector<128x128xbf16>
    %cst = arith.constant dense<0.000000e+00> : vector<16x128xf32>
    %147 = tpu.matmul %145, %146, %cst {dimension_numbers = #tpu.dot_dimension_numbers<[1], [0], [0], [1], [0, 0, 1, 1], [], []>} : vector<16x128xbf16>, vector<128x128xbf16>, vector<16x128xf32> -> vector<16x128xf32>
    %148 = math.tanh %147 : vector<16x128xf32>
    %c0_116 = arith.constant 0 : index
    %c0_117 = arith.constant 0 : index
    %149 = vector.load %arg5[%c0_116, %c0_117] : memref<1x128xf32, #tpu.memory_space<vmem>>, vector<1x128xf32>
    %150 = vector.broadcast %149 : vector<1x128xf32> to vector<16x128xf32>
    %151 = arith.mulf %148, %150 : vector<16x128xf32>
    %cst_118 = arith.constant dense<0.000000e+00> : vector<16xf32>
    %152 = vector.multi_reduction <add>, %151, %cst_118 [1] : vector<16x128xf32> to vector<16xf32>
    %153 = vector.shape_cast %152 : vector<16xf32> to vector<16x1xf32>
    %154 = vector.shape_cast %153 : vector<16x1xf32> to vector<2x8xf32>
    %c0_119 = arith.constant 0 : index
    %c0_120 = arith.constant 0 : index
    %155 = vector.load %arg1[%c0_119, %c0_120] : memref<2x8xf32, #tpu.memory_space<vmem>>, vector<2x8xf32>
    %cst_121 = arith.constant 0.000000e+00 : f32
    %156 = vector.broadcast %cst_121 : f32 to vector<2x8xf32>
    %157 = arith.cmpf ogt, %155, %156 : vector<2x8xf32>
    %cst_122 = arith.constant -1.000000e+09 : f32
    %158 = vector.broadcast %cst_122 : f32 to vector<2x8xf32>
    %159 = arith.select %157, %154, %158 : vector<2x8xi1>, vector<2x8xf32>
    %cst_123 = arith.constant dense<0xFF800000> : vector<2xf32>
    %160 = vector.multi_reduction <maximumf>, %159, %cst_123 [1] : vector<2x8xf32> to vector<2xf32>
    %161 = vector.shape_cast %160 : vector<2xf32> to vector<2x1xf32>
    %162 = vector.broadcast %161 : vector<2x1xf32> to vector<2x8xf32>
    %163 = arith.subf %159, %162 : vector<2x8xf32>
    %164 = math.exp %163 : vector<2x8xf32>
    %cst_124 = arith.constant dense<0.000000e+00> : vector<2xf32>
    %165 = vector.multi_reduction <add>, %164, %cst_124 [1] : vector<2x8xf32> to vector<2xf32>
    %166 = vector.shape_cast %165 : vector<2xf32> to vector<2x1xf32>
    %167 = vector.broadcast %166 : vector<2x1xf32> to vector<2x8xf32>
    %168 = arith.divf %164, %167 : vector<2x8xf32>
    %169 = vector.shape_cast %168 : vector<2x8xf32> to vector<2x8x1xf32>
    %170 = vector.shape_cast %144 : vector<16x128xf32> to vector<2x8x128xf32>
    %171 = vector.broadcast %169 : vector<2x8x1xf32> to vector<2x8x128xf32>
    %172 = arith.mulf %171, %170 : vector<2x8x128xf32>
    %cst_125 = arith.constant dense<0.000000e+00> : vector<2x128xf32>
    %173 = vector.multi_reduction <add>, %172, %cst_125 [1] : vector<2x8x128xf32> to vector<2x128xf32>
    %c0_126 = arith.constant 0 : index
    %c0_127 = arith.constant 0 : index
    %174 = vector.load %arg1[%c0_126, %c0_127] : memref<2x8xf32, #tpu.memory_space<vmem>>, vector<2x8xf32>
    %cst_128 = arith.constant dense<0.000000e+00> : vector<2xf32>
    %175 = vector.multi_reduction <add>, %174, %cst_128 [1] : vector<2x8xf32> to vector<2xf32>
    %176 = vector.shape_cast %175 : vector<2xf32> to vector<2x1xf32>
    %cst_129 = arith.constant 0.000000e+00 : f32
    %177 = vector.broadcast %cst_129 : f32 to vector<2x1xf32>
    %178 = arith.cmpf ogt, %176, %177 : vector<2x1xf32>
    %179 = arith.extui %178 : vector<2x1xi1> to vector<2x1xi32>
    %180 = arith.sitofp %179 : vector<2x1xi32> to vector<2x1xf32>
    %181 = vector.broadcast %180 : vector<2x1xf32> to vector<2x128xf32>
    %182 = arith.mulf %173, %181 : vector<2x128xf32>
    %c0_130 = arith.constant 0 : index
    %c0_131 = arith.constant 0 : index
    %183 = vector.load %arg2[%c0_130, %c0_131] : memref<2x256xf32, #tpu.memory_space<vmem>>, vector<2x256xf32>
    %184 = arith.truncf %183 : vector<2x256xf32> to vector<2x256xbf16>
    %c0_132 = arith.constant 0 : index
    %c0_133 = arith.constant 0 : index
    %185 = vector.load %arg6[%c0_132, %c0_133] : memref<256x128xbf16, #tpu.memory_space<vmem>>, vector<256x128xbf16>
    %cst_134 = arith.constant dense<0.000000e+00> : vector<2x128xf32>
    %186 = tpu.matmul %184, %185, %cst_134 {dimension_numbers = #tpu.dot_dimension_numbers<[1], [0], [0], [1], [0, 0, 1, 1], [], []>} : vector<2x256xbf16>, vector<256x128xbf16>, vector<2x128xf32> -> vector<2x128xf32>
    %c0_135 = arith.constant 0 : index
    %c0_136 = arith.constant 0 : index
    %187 = vector.load %arg7[%c0_135, %c0_136] : memref<1x128xf32, #tpu.memory_space<vmem>>, vector<1x128xf32>
    %188 = vector.broadcast %187 : vector<1x128xf32> to vector<2x128xf32>
    %189 = arith.addf %186, %188 : vector<2x128xf32>
    %cst_137 = arith.constant 0.000000e+00 : f32
    %190 = vector.broadcast %cst_137 : f32 to vector<2x128xf32>
    %191 = arith.maximumf %189, %190 : vector<2x128xf32>
    %192 = arith.truncf %191 : vector<2x128xf32> to vector<2x128xbf16>
    %c0_138 = arith.constant 0 : index
    %c0_139 = arith.constant 0 : index
    %193 = vector.load %arg8[%c0_138, %c0_139] : memref<128x256xbf16, #tpu.memory_space<vmem>>, vector<128x256xbf16>
    %cst_140 = arith.constant dense<0.000000e+00> : vector<2x256xf32>
    %194 = tpu.matmul %192, %193, %cst_140 {dimension_numbers = #tpu.dot_dimension_numbers<[1], [0], [0], [1], [0, 0, 1, 1], [], []>} : vector<2x128xbf16>, vector<128x256xbf16>, vector<2x256xf32> -> vector<2x256xf32>
    %c0_141 = arith.constant 0 : index
    %c0_142 = arith.constant 0 : index
    %195 = vector.load %arg9[%c0_141, %c0_142] : memref<1x256xf32, #tpu.memory_space<vmem>>, vector<1x256xf32>
    %196 = vector.broadcast %195 : vector<1x256xf32> to vector<2x256xf32>
    %197 = arith.addf %194, %196 : vector<2x256xf32>
    %c0_143 = arith.constant 0 : index
    %c0_144 = arith.constant 0 : index
    %198 = vector.load %arg10[%c0_143, %c0_144] : memref<1x256xf32, #tpu.memory_space<vmem>>, vector<1x256xf32>
    %199 = vector.broadcast %198 : vector<1x256xf32> to vector<2x256xf32>
    %200 = arith.mulf %197, %199 : vector<2x256xf32>
    %cst_145 = arith.constant dense<0.000000e+00> : vector<2xf32>
    %201 = vector.multi_reduction <add>, %200, %cst_145 [1] : vector<2x256xf32> to vector<2xf32>
    %202 = vector.shape_cast %201 : vector<2xf32> to vector<2x1xf32>
    %c0_146 = arith.constant 0 : index
    %c0_147 = arith.constant 0 : index
    %203 = vector.load %arg11[%c0_146, %c0_147] : memref<1x256xf32, #tpu.memory_space<vmem>>, vector<1x256xf32>
    %204 = vector.broadcast %203 : vector<1x256xf32> to vector<2x256xf32>
    %205 = arith.mulf %183, %204 : vector<2x256xf32>
    %cst_148 = arith.constant dense<0.000000e+00> : vector<2xf32>
    %206 = vector.multi_reduction <add>, %205, %cst_148 [1] : vector<2x256xf32> to vector<2xf32>
    %207 = vector.shape_cast %206 : vector<2xf32> to vector<2x1xf32>
    %208 = arith.addf %202, %207 : vector<2x1xf32>
    %c0_149 = arith.constant 0 : index
    %c0_150 = arith.constant 0 : index
    %209 = vector.load %arg12[%c0_149, %c0_150] : memref<1x1xf32, #tpu.memory_space<vmem>>, vector<1x1xf32>
    %210 = vector.broadcast %209 : vector<1x1xf32> to vector<2x1xf32>
    %211 = arith.addf %208, %210 : vector<2x1xf32>
    %212 = arith.negf %211 : vector<2x1xf32>
    %213 = math.exp %212 : vector<2x1xf32>
    %cst_151 = arith.constant 1.000000e+00 : f32
    %214 = vector.broadcast %cst_151 : f32 to vector<2x1xf32>
    %215 = arith.addf %214, %213 : vector<2x1xf32>
    %216 = arith.divf %214, %215 : vector<2x1xf32>
    %217 = vector.broadcast %216 : vector<2x1xf32> to vector<2x256xf32>
    %218 = arith.mulf %217, %197 : vector<2x256xf32>
    %cst_152 = arith.constant 1.000000e+00 : f32
    %219 = vector.broadcast %cst_152 : f32 to vector<2x1xf32>
    %220 = arith.subf %219, %216 : vector<2x1xf32>
    %221 = vector.broadcast %220 : vector<2x1xf32> to vector<2x256xf32>
    %222 = arith.mulf %221, %183 : vector<2x256xf32>
    %223 = arith.addf %218, %222 : vector<2x256xf32>
    %224 = arith.truncf %223 : vector<2x256xf32> to vector<2x256xbf16>
    %c0_153 = arith.constant 0 : index
    %c0_154 = arith.constant 0 : index
    %225 = vector.load %arg13[%c0_153, %c0_154] : memref<256x128xbf16, #tpu.memory_space<vmem>>, vector<256x128xbf16>
    %cst_155 = arith.constant dense<0.000000e+00> : vector<2x128xf32>
    %226 = tpu.matmul %224, %225, %cst_155 {dimension_numbers = #tpu.dot_dimension_numbers<[1], [0], [0], [1], [0, 0, 1, 1], [], []>} : vector<2x256xbf16>, vector<256x128xbf16>, vector<2x128xf32> -> vector<2x128xf32>
    %c0_156 = arith.constant 0 : index
    %c0_157 = arith.constant 0 : index
    %227 = vector.load %arg14[%c0_156, %c0_157] : memref<1x128xf32, #tpu.memory_space<vmem>>, vector<1x128xf32>
    %228 = vector.broadcast %227 : vector<1x128xf32> to vector<2x128xf32>
    %229 = arith.addf %226, %228 : vector<2x128xf32>
    %230 = arith.truncf %182 : vector<2x128xf32> to vector<2x128xbf16>
    %c0_158 = arith.constant 0 : index
    %c0_159 = arith.constant 0 : index
    %231 = vector.load %arg15[%c0_158, %c0_159] : memref<128x128xbf16, #tpu.memory_space<vmem>>, vector<128x128xbf16>
    %cst_160 = arith.constant dense<0.000000e+00> : vector<2x128xf32>
    %232 = tpu.matmul %230, %231, %cst_160 {dimension_numbers = #tpu.dot_dimension_numbers<[1], [0], [0], [1], [0, 0, 1, 1], [], []>} : vector<2x128xbf16>, vector<128x128xbf16>, vector<2x128xf32> -> vector<2x128xf32>
    %233 = arith.truncf %229 : vector<2x128xf32> to vector<2x128xbf16>
    %c0_161 = arith.constant 0 : index
    %c0_162 = arith.constant 0 : index
    %234 = vector.load %arg16[%c0_161, %c0_162] : memref<128x128xbf16, #tpu.memory_space<vmem>>, vector<128x128xbf16>
    %cst_163 = arith.constant dense<0.000000e+00> : vector<2x128xf32>
    %235 = tpu.matmul %233, %234, %cst_163 {dimension_numbers = #tpu.dot_dimension_numbers<[1], [0], [0], [1], [0, 0, 1, 1], [], []>} : vector<2x128xbf16>, vector<128x128xbf16>, vector<2x128xf32> -> vector<2x128xf32>
    %236 = arith.addf %232, %235 : vector<2x128xf32>
    %c0_164 = arith.constant 0 : index
    %c0_165 = arith.constant 0 : index
    %237 = vector.load %arg17[%c0_164, %c0_165] : memref<1x128xf32, #tpu.memory_space<vmem>>, vector<1x128xf32>
    %238 = vector.broadcast %237 : vector<1x128xf32> to vector<2x128xf32>
    %239 = arith.addf %236, %238 : vector<2x128xf32>
    %240 = arith.negf %239 : vector<2x128xf32>
    %241 = math.exp %240 : vector<2x128xf32>
    %cst_166 = arith.constant 1.000000e+00 : f32
    %242 = vector.broadcast %cst_166 : f32 to vector<2x128xf32>
    %243 = arith.addf %242, %241 : vector<2x128xf32>
    %244 = arith.divf %242, %243 : vector<2x128xf32>
    %245 = arith.mulf %244, %182 : vector<2x128xf32>
    %cst_167 = arith.constant 1.000000e+00 : f32
    %246 = vector.broadcast %cst_167 : f32 to vector<2x128xf32>
    %247 = arith.subf %246, %244 : vector<2x128xf32>
    %248 = arith.mulf %247, %229 : vector<2x128xf32>
    %249 = arith.addf %245, %248 : vector<2x128xf32>
    %c0_168 = arith.constant 0 : index
    %c0_169 = arith.constant 0 : index
    %250 = vector.load %arg18[%c0_168, %c0_169] : memref<2x128xf32, #tpu.memory_space<vmem>>, vector<2x128xf32>
    tpu.vector_store %arg18[%c0_168, %c0_169], %249 {strides = array<i32>} : memref<2x128xf32, #tpu.memory_space<vmem>>, vector<2x128xf32>,
    %251 = arith.truncf %249 : vector<2x128xf32> to vector<2x128xbf16>
    %c0_170 = arith.constant 0 : index
    %c0_171 = arith.constant 0 : index
    %252 = vector.load %arg19[%c0_170, %c0_171] : memref<2x128xbf16, #tpu.memory_space<vmem>>, vector<2x128xbf16>
    tpu.vector_store %arg19[%c0_170, %c0_171], %251 {strides = array<i32>} : memref<2x128xbf16, #tpu.memory_space<vmem>>, vector<2x128xbf16>,
    return
  }
}

module attributes {stable_mosaic.version = 11 : i64} {
  func.func @sims_kernel(%arg0: i32, %arg1: memref<2x128xbf16, #tpu.memory_space<vmem>>, %arg2: memref<128x512xbf16, #tpu.memory_space<vmem>>, %arg3: memref<1x512xf32, #tpu.memory_space<vmem>>, %arg4: memref<2x512xf32, #tpu.memory_space<vmem>>) attributes {dimension_semantics = [#tpu.dimension_semantics<parallel>], iteration_bounds = array<i64: 1>, scalar_prefetch = 0 : i64, scratch_operands = 0 : i64, tpu.core_type = #tpu.core_type<tc>, window_params = [{pipeline_mode = #tpu.pipeline_mode<synchronous>, transform_indices = @transform_0, window_bounds = array<i64: 2, 128>}, {transform_indices = @transform_1, window_bounds = array<i64: 128, 512>}, {transform_indices = @transform_2, window_bounds = array<i64: 1, 512>}, {transform_indices = @transform_3, window_bounds = array<i64: 2, 512>}]} {
    %c0 = arith.constant 0 : index
    %c0_0 = arith.constant 0 : index
    %0 = vector.load %arg1[%c0, %c0_0] : memref<2x128xbf16, #tpu.memory_space<vmem>>, vector<2x128xbf16>
    %c0_1 = arith.constant 0 : index
    %c0_2 = arith.constant 0 : index
    %1 = vector.load %arg2[%c0_1, %c0_2] : memref<128x512xbf16, #tpu.memory_space<vmem>>, vector<128x512xbf16>
    %cst = arith.constant dense<0.000000e+00> : vector<2x512xf32>
    %2 = tpu.matmul %0, %1, %cst {dimension_numbers = #tpu.dot_dimension_numbers<[1], [0], [0], [1], [0, 0, 1, 1], [], []>} : vector<2x128xbf16>, vector<128x512xbf16>, vector<2x512xf32> -> vector<2x512xf32>
    %c0_3 = arith.constant 0 : index
    %c0_4 = arith.constant 0 : index
    %3 = vector.load %arg3[%c0_3, %c0_4] : memref<1x512xf32, #tpu.memory_space<vmem>>, vector<1x512xf32>
    %4 = vector.broadcast %3 : vector<1x512xf32> to vector<2x512xf32>
    %5 = arith.addf %2, %4 : vector<2x512xf32>
    %c0_5 = arith.constant 0 : index
    %c0_6 = arith.constant 0 : index
    %6 = vector.load %arg4[%c0_5, %c0_6] : memref<2x512xf32, #tpu.memory_space<vmem>>, vector<2x512xf32>
    tpu.vector_store %arg4[%c0_5, %c0_6], %5 {strides = array<i32>} : memref<2x512xf32, #tpu.memory_space<vmem>>, vector<2x512xf32>,
    return
  }
  func.func @transform_0(%arg0: i32) -> (i32, i32) {
    %c0_i32 = arith.constant 0 : i32
    %c0_i32_0 = arith.constant 0 : i32
    %c0_i32_1 = arith.constant 0 : i32
    return %c0_i32, %c0_i32_0 : i32, i32
  }
  func.func @transform_1(%arg0: i32) -> (i32, i32) {
    %c0_i32 = arith.constant 0 : i32
    %c0_i32_0 = arith.constant 0 : i32
    return %c0_i32, %arg0 : i32, i32
  }
  func.func @transform_2(%arg0: i32) -> (i32, i32) {
    %c0_i32 = arith.constant 0 : i32
    %c0_i32_0 = arith.constant 0 : i32
    return %c0_i32, %arg0 : i32, i32
  }
  func.func @transform_3(%arg0: i32) -> (i32, i32) {
    %c0_i32 = arith.constant 0 : i32
    %c0_i32_0 = arith.constant 0 : i32
    return %c0_i32, %arg0 : i32, i32
  }
}

</mosaic_0001>

<llo_original>
// kernel: kbrd_forward.3
$region0: #{kbrd_forward.3}
  #allocation0 [shape = 'u32[]', space=smem, size = 0x4, offset = 0x4, fixed_abs, tag = 'smem constant byte address 0x4 - core index']
  #allocation1 [shape = 'u32[144,128]{1,0:T(1,128)}', space=vmem, size = 0x12000, scoped, tag = 'internal scratch']
  #allocation2 [shape = 'f32[512,128]{1,0:T(8,128)}', space=vmem, size = 0x40000, scoped, tag = 'scratch operand']
  %s0 = inlined_call_operand.vmem [shape: bf16[512,1024], index: 0, kind: input, shape index: {}]
  %s1 = inlined_call_operand.vmem [shape: bf16[1024,128], index: 1, kind: input, shape index: {}]
  %s2 = inlined_call_operand.vmem [shape: f32[512,128], index: 2, kind: input, shape index: {}]
  %s3 = inlined_call_operand.vmem [shape: f32[1,128], index: 3, kind: input, shape index: {}]
  %s4 = inlined_call_operand.vmem [shape: f32[512,128], index: 4, kind: output, shape index: {0}]
  %s5 = inlined_call_operand.vmem [shape: bf16[512,128], index: 5, kind: output, shape index: {1}]
  %6 = xla_tuple %s4, %s5
  %s7 = sld [smem:[#allocation0]]
  $region88: #{kbrd_forward.3} parent=0
    _
  %s9 = ssub.s32 1, %s7
  %s10 = scalar_select 0, %s9, %s7
  $region1: #{kbrd_forward.3} parent=0
    #allocation3 [shape = 'u8[1048576]{0}', space=vmem, size = 0x100000, scoped, tag = 'input window, operand 0']
    loop: start=0, step=1, limit=4
    $region2: #{kbrd_forward.3} parent=1 // loop_pre_header
      _
    $region3: #{kbrd_forward.3} parent=1 // loop_header
      %s12 = sphi 0, %s16
      %p13 = scmp.ge.s32.totalorder %s12, 4
      %s19 = sphi 0, %s31
      %s20 = sphi 0, %s27
      %s21 = sphi 0, %s19
      %s22 = sphi 0, %s20
      %s23 = sphi 0, %s21
      %s24 = sphi 0, %s22
      %s36 = sphi 0, %s38
      %s39 = sphi 0, %s36
      %s40 = sphi 0, %s39
      %s56 = sphi 0, %s40
      %s62 = sphi 0, %s64
      %s65 = sphi 0, %s62
      %s66 = sphi 0, %s65
      %s82 = sphi 0, %s66
      %s88 = sphi 0, %s90
      %s91 = sphi 0, %s88
      %s92 = sphi 0, %s91
      %s108 = sphi 0, %s92
      %s112 = sphi 0, %s112
      %s114 = sphi 0, %s112
      %s115 = sphi 0, %s114
      %s129 = sphi 0, %s115
      %s135 = sphi 0, %s137
      %s138 = sphi 0, %s135
      %s139 = sphi 0, %s138
      %s155 = sphi 0, %s139
      %s161 = sphi 0, %s163
      %s164 = sphi 0, %s161
      %s165 = sphi 0, %s164
      %s181 = sphi 0, %s165
    $region4: #{kbrd_forward.3} parent=1 // loop_header_branch
      %15 = sbr.rel (%p13) target = $region8
    $region5: #{kbrd_forward.3} parent=1 // loop_body
      %s17 = ssub.s32 %s12, 1
      %s18 = ssub.s32 %s12, 2
      %s25 = sadd.s32 1, %s20
      %p26 = scmp.ge.s32.totalorder %s25, 2
      %s27 = scalar_select %p26, 0, %s25
      %s28 = sadd.s32 1, %s19
      %s29 = scalar_select %p26, %s28, %s19
      %p30 = scmp.ge.s32.totalorder %s29, 1
      %s31 = scalar_select %p30, 0, %s29
      %s32 = ssub.s32 %s19, %s31
      %s33 = ssub.s32 %s20, %s27
      %s34 = sor.u32 %s32, %s33
      %p35 = scmp.eq.s32.totalorder %s34, 0
      %s37 = sadd.s32 %s36, 1
      %s38 = scalar_select %p35, %s36, %s37
      %p41 = pneg %p35
      %p42 = scmp.eq.s32.totalorder %s12, 1
      %p43 = por %p41, %p42
      %p44 = scmp.ne.s32.totalorder %s36, %s39
      %p45 = scmp.eq.s32.totalorder %s12, 0
      %p46 = por %p44, %p45
      %p47 = scmp.ne.s32.totalorder %s36, %s39
      %p48 = scmp.eq.s32.totalorder %s17, 1
      %p49 = por %p47, %p48
      %p50 = scmp.ne.s32.totalorder %s39, %s40
      %p51 = scmp.eq.s32.totalorder %s17, 0
      %p52 = por %p50, %p51
      %p53 = scmp.ne.s32.totalorder %s39, %s40
      %p54 = scmp.eq.s32.totalorder %s18, 1
      %p55 = por %p53, %p54
      %p57 = scmp.ne.s32.totalorder %s40, %s56
      %p58 = scmp.eq.s32.totalorder %s18, 0
      %p59 = por %p57, %p58
      %s60 = ssub.s32 %s20, %s27
      %p61 = scmp.eq.s32.totalorder %s60, 0
      %s63 = sadd.s32 %s62, 1
      %s64 = scalar_select %p61, %s62, %s63
      %p67 = pneg %p61
      %p68 = scmp.eq.s32.totalorder %s12, 1
      %p69 = por %p67, %p68
      %p70 = scmp.ne.s32.totalorder %s62, %s65
      %p71 = scmp.eq.s32.totalorder %s12, 0
      %p72 = por %p70, %p71
      %p73 = scmp.ne.s32.totalorder %s62, %s65
      %p74 = scmp.eq.s32.totalorder %s17, 1
      %p75 = por %p73, %p74
      %p76 = scmp.ne.s32.totalorder %s65, %s66
      %p77 = scmp.eq.s32.totalorder %s17, 0
      %p78 = por %p76, %p77
      %p79 = scmp.ne.s32.totalorder %s65, %s66
      %p80 = scmp.eq.s32.totalorder %s18, 1
      %p81 = por %p79, %p80
      %p83 = scmp.ne.s32.totalorder %s66, %s82
      %p84 = scmp.eq.s32.totalorder %s18, 0
      %p85 = por %p83, %p84
      %s86 = ssub.s32 %s19, %s31
      %p87 = scmp.eq.s32.totalorder %s86, 0
      %s89 = sadd.s32 %s88, 1
      %s90 = scalar_select %p87, %s88, %s89
      %p93 = pneg %p87
      %p94 = scmp.eq.s32.totalorder %s12, 1
      %p95 = por %p93, %p94
      %p96 = scmp.ne.s32.totalorder %s88, %s91
      %p97 = scmp.eq.s32.totalorder %s12, 0
      %p98 = por %p96, %p97
      %p99 = scmp.ne.s32.totalorder %s88, %s91
      %p100 = scmp.eq.s32.totalorder %s17, 1
      %p101 = por %p99, %p100
      %p102 = scmp.ne.s32.totalorder %s91, %s92
      %p103 = scmp.eq.s32.totalorder %s17, 0
      %p104 = por %p102, %p103
      %p105 = scmp.ne.s32.totalorder %s91, %s92
      %p106 = scmp.eq.s32.totalorder %s18, 1
      %p107 = por %p105, %p106
      %p109 = scmp.ne.s32.totalorder %s92, %s108
      %p110 = scmp.eq.s32.totalorder %s18, 0
      %p111 = por %p109, %p110
      %s113 = sadd.s32 %s112, 1
      %p116 = scmp.eq.s32.totalorder %s12, 1
      %p117 = scmp.ne.s32.totalorder %s112, %s114
      %p118 = scmp.eq.s32.totalorder %s12, 0
      %p119 = por %p117, %p118
      %p120 = scmp.ne.s32.totalorder %s112, %s114
      %p121 = scmp.eq.s32.totalorder %s17, 1
      %p122 = por %p120, %p121
      %p123 = scmp.ne.s32.totalorder %s114, %s115
      %p124 = scmp.eq.s32.totalorder %s17, 0
      %p125 = por %p123, %p124
      %p126 = scmp.ne.s32.totalorder %s114, %s115
      %p127 = scmp.eq.s32.totalorder %s18, 1
      %p128 = por %p126, %p127
      %p130 = scmp.ne.s32.totalorder %s115, %s129
      %p131 = scmp.eq.s32.totalorder %s18, 0
      %p132 = por %p130, %p131
      %s133 = ssub.s32 %s19, %s31
      %p134 = scmp.eq.s32.totalorder %s133, 0
      %s136 = sadd.s32 %s135, 1
      %s137 = scalar_select %p134, %s135, %s136
      %p140 = pneg %p134
      %p141 = scmp.eq.s32.totalorder %s12, 1
      %p142 = por %p140, %p141
      %p143 = scmp.ne.s32.totalorder %s135, %s138
      %p144 = scmp.eq.s32.totalorder %s12, 0
      %p145 = por %p143, %p144
      %p146 = scmp.ne.s32.totalorder %s135, %s138
      %p147 = scmp.eq.s32.totalorder %s17, 1
      %p148 = por %p146, %p147
      %p149 = scmp.ne.s32.totalorder %s138, %s139
      %p150 = scmp.eq.s32.totalorder %s17, 0
      %p151 = por %p149, %p150
      %p152 = scmp.ne.s32.totalorder %s138, %s139
      %p153 = scmp.eq.s32.totalorder %s18, 1
      %p154 = por %p152, %p153
      %p156 = scmp.ne.s32.totalorder %s139, %s155
      %p157 = scmp.eq.s32.totalorder %s18, 0
      %p158 = por %p156, %p157
      %s159 = ssub.s32 %s19, %s31
      %p160 = scmp.eq.s32.totalorder %s159, 0
      %s162 = sadd.s32 %s161, 1
      %s163 = scalar_select %p160, %s161, %s162
      %p166 = pneg %p160
      %p167 = scmp.eq.s32.totalorder %s12, 1
      %p168 = por %p166, %p167
      %p169 = scmp.ne.s32.totalorder %s161, %s164
      %p170 = scmp.eq.s32.totalorder %s12, 0
      %p171 = por %p169, %p170
      %p172 = scmp.ne.s32.totalorder %s161, %s164
      %p173 = scmp.eq.s32.totalorder %s17, 1
      %p174 = por %p172, %p173
      %p175 = scmp.ne.s32.totalorder %s164, %s165
      %p176 = scmp.eq.s32.totalorder %s17, 0
      %p177 = por %p175, %p176
      %p178 = scmp.ne.s32.totalorder %s164, %s165
      %p179 = scmp.eq.s32.totalorder %s18, 1
      %p180 = por %p178, %p179
      %p182 = scmp.ne.s32.totalorder %s165, %s181
      %p183 = scmp.eq.s32.totalorder %s18, 0
      %p184 = por %p182, %p183
      %p185 = scmp.le.s32.totalorder 1, %s12
      %p186 = scmp.lt.s32.totalorder %s12, 3
      %p187 = pnand %p185, %p186
      %p188 = pneg %p187
      // Predicated region
      $region9: #{kbrd_forward.3} parent=5 // pred_check
        _
      $region10: #{kbrd_forward.3} parent=5 // pred_check_branch
        %190 = sbr.rel (%p187) target = $region12
      $region11: #{kbrd_forward.3} parent=5 // pred_region
        %s191 = ssub.s32 %s12, 1
        // Predicated region
        $region13: #{kbrd_forward.3} parent=11 // pred_check
          %p192 = pneg %p104
        $region14: #{kbrd_forward.3} parent=11 // pred_check_branch
          %194 = sbr.rel (%p192) target = $region16
        $region15: #{kbrd_forward.3} parent=11 // pred_region
          %s195 = smul.u32 64, %s21
          %p196 = scmp.lt.s32.totalorder %s195, 63
          %s197 = scalar_select %p196, %s195, 63
          %s198 = smul.addr %s197, 8
          %s199 = scalar_lea.vmem %s2, %s198
          %s200 = smul.u32 64, %s21
        $region16: #{kbrd_forward.3} parent=11 // pred_fallthru
          _
        // Predicated region
        $region17: #{kbrd_forward.3} parent=11 // pred_check
          %p201 = pneg %p125
        $region18: #{kbrd_forward.3} parent=11 // pred_check_branch
          %203 = sbr.rel (%p201) target = $region20
        $region19: #{kbrd_forward.3} parent=11 // pred_region
          _
        $region20: #{kbrd_forward.3} parent=11 // pred_fallthru
          _
      $region12: #{kbrd_forward.3} parent=5 // pred_fallthru
        _
      %p204 = scmp.lt.s32.totalorder %s12, 2
      // Predicated region
      $region21: #{kbrd_forward.3} parent=5 // pred_check
        %p205 = pneg %p204
      $region22: #{kbrd_forward.3} parent=5 // pred_check_branch
        %207 = sbr.rel (%p205) target = $region24
      $region23: #{kbrd_forward.3} parent=5 // pred_region
        // Predicated region
        $region25: #{kbrd_forward.3} parent=23 // pred_check
          %p208 = pneg %p46
        $region26: #{kbrd_forward.3} parent=23 // pred_check_branch
          %210 = sbr.rel (%p208) target = $region28
        $region27: #{kbrd_forward.3} parent=23 // pred_region
          %s211 = sand.u32 %s36, 1
          %s212 = sand.u32 %s36, 1
          %s213 = smul.addr %s212, 1024
          %s214 = scalar_lea.vmem [#allocation3], %s213
          %s215 = smul.u32 64, %s19
          %s216 = smul.u32 4, %s20
          %s217 = smul.addr %s215, 8
          %s218 = sadd.s32 %s216, %s217
          %s219 = smul.addr %s218, 4
          %s220 = scalar_lea.vmem %s0, %s219
          // Predicated region
          $region29: #{kbrd_forward.3} parent=27 // pred_check
            _
          $region30: #{kbrd_forward.3} parent=27 // pred_check_branch
            %222 = sbr.rel (0) target = $region32
          $region31: #{kbrd_forward.3} parent=27 // pred_region
            // Predicated region
            $region33: #{kbrd_forward.3} parent=31 // pred_check
              _
            $region34: #{kbrd_forward.3} parent=31 // pred_check_branch
              %224 = sbr.rel (0) target = $region36
            $region35: #{kbrd_forward.3} parent=31 // pred_region
              loop: start=0, step=1, limit=1
              $region37: #{kbrd_forward.3} parent=35 // loop_pre_header
                _
              $region38: #{kbrd_forward.3} parent=35 // loop_header
                %s226 = sphi 0, %s230
                %p227 = scmp.ge.s32.totalorder %s226, 1
                %s231 = sphi %s220, %s220
                %s232 = sphi %s214, %s214
              $region39: #{kbrd_forward.3} parent=35 // loop_header_branch
                %229 = sbr.rel (%p227) target = $region43
              $region40: #{kbrd_forward.3} parent=35 // loop_body
                %v233 = vld [vmem:[%s231] sm:$0xff]
                %234 = vst [vmem:[%s232] sm:$0xff] %v233
                %v235 = vld [vmem:[%s231 + $0x8] sm:$0xff]
                %236 = vst [vmem:[%s232 + $0x8] sm:$0xff] %v235
                %v237 = vld [vmem:[%s231 + $0x20] sm:$0xff]
                %238 = vst [vmem:[%s232 + $0x10] sm:$0xff] %v237
                %v239 = vld [vmem:[%s231 + $0x28] sm:$0xff]
                %240 = vst [vmem:[%s232 + $0x18] sm:$0xff] %v239
                %v241 = vld [vmem:[%s231 + $0x40] sm:$0xff]
                %242 = vst [vmem:[%s232 + $0x20] sm:$0xff] %v241
                %v243 = vld [vmem:[%s231 + $0x48] sm:$0xff]
                %244 = vst [vmem:[%s232 + $0x28] sm:$0xff] %v243
                %v245 = vld [vmem:[%s231 + $0x60] sm:$0xff]
                %246 = vst [vmem:[%s232 + $0x30] sm:$0xff] %v245
                %v247 = vld [vmem:[%s231 + $0x68] sm:$0xff]
                %248 = vst [vmem:[%s232 + $0x38] sm:$0xff] %v247
                %v249 = vld [vmem:[%s231 + $0x80] sm:$0xff]
                %250 = vst [vmem:[%s232 + $0x40] sm:$0xff] %v249
                %v251 = vld [vmem:[%s231 + $0x88] sm:$0xff]
                %252 = vst [vmem:[%s232 + $0x48] sm:$0xff] %v251
                %v253 = vld [vmem:[%s231 + $0xa0] sm:$0xff]
                %254 = vst [vmem:[%s232 + $0x50] sm:$0xff] %v253
                %v255 = vld [vmem:[%s231 + $0xa8] sm:$0xff]
                %256 = vst [vmem:[%s232 + $0x58] sm:$0xff] %v255
                %v257 = vld [vmem:[%s231 + $0xc0] sm:$0xff]
                %258 = vst [vmem:[%s232 + $0x60] sm:$0xff] %v257
                %v259 = vld [vmem:[%s231 + $0xc8] sm:$0xff]
                %260 = vst [vmem:[%s232 + $0x68] sm:$0xff] %v259
                %v261 = vld [vmem:[%s231 + $0xe0] sm:$0xff]
                %262 = vst [vmem:[%s232 + $0x70] sm:$0xff] %v261
                %v263 = vld [vmem:[%s231 + $0xe8] sm:$0xff]
                %264 = vst [vmem:[%s232 + $0x78] sm:$0xff] %v263
                %v265 = vld [vmem:[%s231 + $0x100] sm:$0xff]
                %266 = vst [vmem:[%s232 + $0x80] sm:$0xff] %v265
                %v267 = vld [vmem:[%s231 + $0x108] sm:$0xff]
                %268 = vst [vmem:[%s232 + $0x88] sm:$0xff] %v267
                %v269 = vld [vmem:[%s231 + $0x120] sm:$0xff]
                %270 = vst [vmem:[%s232 + $0x90] sm:$0xff] %v269
                %v271 = vld [vmem:[%s231 + $0x128] sm:$0xff]
                %272 = vst [vmem:[%s232 + $0x98] sm:$0xff] %v271
                %v273 = vld [vmem:[%s231 + $0x140] sm:$0xff]
                %274 = vst [vmem:[%s232 + $0xa0] sm:$0xff] %v273
                %v275 = vld [vmem:[%s231 + $0x148] sm:$0xff]
                %276 = vst [vmem:[%s232 + $0xa8] sm:$0xff] %v275
                %v277 = vld [vmem:[%s231 + $0x160] sm:$0xff]
                %278 = vst [vmem:[%s232 + $0xb0] sm:$0xff] %v277
                %v279 = vld [vmem:[%s231 + $0x168] sm:$0xff]
                %280 = vst [vmem:[%s232 + $0xb8] sm:$0xff] %v279
                %v281 = vld [vmem:[%s231 + $0x180] sm:$0xff]
                %282 = vst [vmem:[%s232 + $0xc0] sm:$0xff] %v281
                %v283 = vld [vmem:[%s231 + $0x188] sm:$0xff]
                %284 = vst [vmem:[%s232 + $0xc8] sm:$0xff] %v283
                %v285 = vld [vmem:[%s231 + $0x1a0] sm:$0xff]
                %286 = vst [vmem:[%s232 + $0xd0] sm:$0xff] %v285
                %v287 = vld [vmem:[%s231 + $0x1a8] sm:$0xff]
                %288 = vst [vmem:[%s232 + $0xd8] sm:$0xff] %v287
                %v289 = vld [vmem:[%s231 + $0x1c0] sm:$0xff]
                %290 = vst [vmem:[%s232 + $0xe0] sm:$0xff] %v289
                %v291 = vld [vmem:[%s231 + $0x1c8] sm:$0xff]
                %292 = vst [vmem:[%s232 + $0xe8] sm:$0xff] %v291
                %v293 = vld [vmem:[%s231 + $0x1e0] sm:$0xff]
                %294 = vst [vmem:[%s232 + $0xf0] sm:$0xff] %v293
                %v295 = vld [vmem:[%s231 + $0x1e8] sm:$0xff]
                %296 = vst [vmem:[%s232 + $0xf8] sm:$0xff] %v295
                %v297 = vld [vmem:[%s231 + $0x200] sm:$0xff]
                %298 = vst [vmem:[%s232 + $0x100] sm:$0xff] %v297
                %v299 = vld [vmem:[%s231 + $0x208] sm:$0xff]
                %300 = vst [vmem:[%s232 + $0x108] sm:$0xff] %v299
                %v301 = vld [vmem:[%s231 + $0x220] sm:$0xff]
                %302 = vst [vmem:[%s232 + $0x110] sm:$0xff] %v301
                %v303 = vld [vmem:[%s231 + $0x228] sm:$0xff]
                %304 = vst [vmem:[%s232 + $0x118] sm:$0xff] %v303
                %v305 = vld [vmem:[%s231 + $0x240] sm:$0xff]
                %306 = vst [vmem:[%s232 + $0x120] sm:$0xff] %v305
                %v307 = vld [vmem:[%s231 + $0x248] sm:$0xff]
                %308 = vst [vmem:[%s232 + $0x128] sm:$0xff] %v307
                %v309 = vld [vmem:[%s231 + $0x260] sm:$0xff]
                %310 = vst [vmem:[%s232 + $0x130] sm:$0xff] %v309
                %v311 = vld [vmem:[%s231 + $0x268] sm:$0xff]
                %312 = vst [vmem:[%s232 + $0x138] sm:$0xff] %v311
                %v313 = vld [vmem:[%s231 + $0x280] sm:$0xff]
                %314 = vst [vmem:[%s232 + $0x140] sm:$0xff] %v313
                %v315 = vld [vmem:[%s231 + $0x288] sm:$0xff]
                %316 = vst [vmem:[%s232 + $0x148] sm:$0xff] %v315
                %v317 = vld [vmem:[%s231 + $0x2a0] sm:$0xff]
                %318 = vst [vmem:[%s232 + $0x150] sm:$0xff] %v317
                %v319 = vld [vmem:[%s231 + $0x2a8] sm:$0xff]
                %320 = vst [vmem:[%s232 + $0x158] sm:$0xff] %v319
                %v321 = vld [vmem:[%s231 + $0x2c0] sm:$0xff]
                %322 = vst [vmem:[%s232 + $0x160] sm:$0xff] %v321
                %v323 = vld [vmem:[%s231 + $0x2c8] sm:$0xff]
                %324 = vst [vmem:[%s232 + $0x168] sm:$0xff] %v323
                %v325 = vld [vmem:[%s231 + $0x2e0] sm:$0xff]
                %326 = vst [vmem:[%s232 + $0x170] sm:$0xff] %v325
                %v327 = vld [vmem:[%s231 + $0x2e8] sm:$0xff]
                %328 = vst [vmem:[%s232 + $0x178] sm:$0xff] %v327
                %v329 = vld [vmem:[%s231 + $0x300] sm:$0xff]
                %330 = vst [vmem:[%s232 + $0x180] sm:$0xff] %v329
                %v331 = vld [vmem:[%s231 + $0x308] sm:$0xff]
                %332 = vst [vmem:[%s232 + $0x188] sm:$0xff] %v331
                %v333 = vld [vmem:[%s231 + $0x320] sm:$0xff]
                %334 = vst [vmem:[%s232 + $0x190] sm:$0xff] %v333
                %v335 = vld [vmem:[%s231 + $0x328] sm:$0xff]
                %336 = vst [vmem:[%s232 + $0x198] sm:$0xff] %v335
                %v337 = vld [vmem:[%s231 + $0x340] sm:$0xff]
                %338 = vst [vmem:[%s232 + $0x1a0] sm:$0xff] %v337
                %v339 = vld [vmem:[%s231 + $0x348] sm:$0xff]
                %340 = vst [vmem:[%s232 + $0x1a8] sm:$0xff] %v339
                %v341 = vld [vmem:[%s231 + $0x360] sm:$0xff]
                %342 = vst [vmem:[%s232 + $0x1b0] sm:$0xff] %v341
                %v343 = vld [vmem:[%s231 + $0x368] sm:$0xff]
                %344 = vst [vmem:[%s232 + $0x1b8] sm:$0xff] %v343
                %v345 = vld [vmem:[%s231 + $0x380] sm:$0xff]
                %346 = vst [vmem:[%s232 + $0x1c0] sm:$0xff] %v345
                %v347 = vld [vmem:[%s231 + $0x388] sm:$0xff]
                %348 = vst [vmem:[%s232 + $0x1c8] sm:$0xff] %v347
                %v349 = vld [vmem:[%s231 + $0x3a0] sm:$0xff]
                %350 = vst [vmem:[%s232 + $0x1d0] sm:$0xff] %v349
                %v351 = vld [vmem:[%s231 + $0x3a8] sm:$0xff]
                %352 = vst [vmem:[%s232 + $0x1d8] sm:$0xff] %v351
                %v353 = vld [vmem:[%s231 + $0x3c0] sm:$0xff]
                %354 = vst [vmem:[%s232 + $0x1e0] sm:$0xff] %v353
                %v355 = vld [vmem:[%s231 + $0x3c8] sm:$0xff]
                %356 = vst [vmem:[%s232 + $0x1e8] sm:$0xff] %v355
                %v357 = vld [vmem:[%s231 + $0x3e0] sm:$0xff]
                %358 = vst [vmem:[%s232 + $0x1f0] sm:$0xff] %v357
                %v359 = vld [vmem:[%s231 + $0x3e8] sm:$0xff]
                %360 = vst [vmem:[%s232 + $0x1f8] sm:$0xff] %v359
                %v361 = vld [vmem:[%s231 + $0x400] sm:$0xff]
                %362 = vst [vmem:[%s232 + $0x200] sm:$0xff] %v361
                %v363 = vld [vmem:[%s231 + $0x408] sm:$0xff]
                %364 = vst [vmem:[%s232 + $0x208] sm:$0xff] %v363
                %v365 = vld [vmem:[%s231 + $0x420] sm:$0xff]
                %366 = vst [vmem:[%s232 + $0x210] sm:$0xff] %v365
                %v367 = vld [vmem:[%s231 + $0x428] sm:$0xff]
                %368 = vst [vmem:[%s232 + $0x218] sm:$0xff] %v367
                %v369 = vld [vmem:[%s231 + $0x440] sm:$0xff]
                %370 = vst [vmem:[%s232 + $0x220] sm:$0xff] %v369
                %v371 = vld [vmem:[%s231 + $0x448] sm:$0xff]
                %372 = vst [vmem:[%s232 + $0x228] sm:$0xff] %v371
                %v373 = vld [vmem:[%s231 + $0x460] sm:$0xff]
                %374 = vst [vmem:[%s232 + $0x230] sm:$0xff] %v373
                %v375 = vld [vmem:[%s231 + $0x468] sm:$0xff]
                %376 = vst [vmem:[%s232 + $0x238] sm:$0xff] %v375
                %v377 = vld [vmem:[%s231 + $0x480] sm:$0xff]
                %378 = vst [vmem:[%s232 + $0x240] sm:$0xff] %v377
                %v379 = vld [vmem:[%s231 + $0x488] sm:$0xff]
                %380 = vst [vmem:[%s232 + $0x248] sm:$0xff] %v379
                %v381 = vld [vmem:[%s231 + $0x4a0] sm:$0xff]
                %382 = vst [vmem:[%s232 + $0x250] sm:$0xff] %v381
                %v383 = vld [vmem:[%s231 + $0x4a8] sm:$0xff]
                %384 = vst [vmem:[%s232 + $0x258] sm:$0xff] %v383
                %v385 = vld [vmem:[%s231 + $0x4c0] sm:$0xff]
                %386 = vst [vmem:[%s232 + $0x260] sm:$0xff] %v385
                %v387 = vld [vmem:[%s231 + $0x4c8] sm:$0xff]
                %388 = vst [vmem:[%s232 + $0x268] sm:$0xff] %v387
                %v389 = vld [vmem:[%s231 + $0x4e0] sm:$0xff]
                %390 = vst [vmem:[%s232 + $0x270] sm:$0xff] %v389
                %v391 = vld [vmem:[%s231 + $0x4e8] sm:$0xff]
                %392 = vst [vmem:[%s232 + $0x278] sm:$0xff] %v391
                %v393 = vld [vmem:[%s231 + $0x500] sm:$0xff]
                %394 = vst [vmem:[%s232 + $0x280] sm:$0xff] %v393
                %v395 = vld [vmem:[%s231 + $0x508] sm:$0xff]
                %396 = vst [vmem:[%s232 + $0x288] sm:$0xff] %v395
                %v397 = vld [vmem:[%s231 + $0x520] sm:$0xff]
                %398 = vst [vmem:[%s232 + $0x290] sm:$0xff] %v397
                %v399 = vld [vmem:[%s231 + $0x528] sm:$0xff]
                %400 = vst [vmem:[%s232 + $0x298] sm:$0xff] %v399
                %v401 = vld [vmem:[%s231 + $0x540] sm:$0xff]
                %402 = vst [vmem:[%s232 + $0x2a0] sm:$0xff] %v401
                %v403 = vld [vmem:[%s231 + $0x548] sm:$0xff]
                %404 = vst [vmem:[%s232 + $0x2a8] sm:$0xff] %v403
                %v405 = vld [vmem:[%s231 + $0x560] sm:$0xff]
                %406 = vst [vmem:[%s232 + $0x2b0] sm:$0xff] %v405
                %v407 = vld [vmem:[%s231 + $0x568] sm:$0xff]
                %408 = vst [vmem:[%s232 + $0x2b8] sm:$0xff] %v407
                %v409 = vld [vmem:[%s231 + $0x580] sm:$0xff]
                %410 = vst [vmem:[%s232 + $0x2c0] sm:$0xff] %v409
                %v411 = vld [vmem:[%s231 + $0x588] sm:$0xff]
                %412 = vst [vmem:[%s232 + $0x2c8] sm:$0xff] %v411
                %v413 = vld [vmem:[%s231 + $0x5a0] sm:$0xff]
                %414 = vst [vmem:[%s232 + $0x2d0] sm:$0xff] %v413
                %v415 = vld [vmem:[%s231 + $0x5a8] sm:$0xff]
                %416 = vst [vmem:[%s232 + $0x2d8] sm:$0xff] %v415
                %v417 = vld [vmem:[%s231 + $0x5c0] sm:$0xff]
                %418 = vst [vmem:[%s232 + $0x2e0] sm:$0xff] %v417
                %v419 = vld [vmem:[%s231 + $0x5c8] sm:$0xff]
                %420 = vst [vmem:[%s232 + $0x2e8] sm:$0xff] %v419
                %v421 = vld [vmem:[%s231 + $0x5e0] sm:$0xff]
                %422 = vst [vmem:[%s232 + $0x2f0] sm:$0xff] %v421
                %v423 = vld [vmem:[%s231 + $0x5e8] sm:$0xff]
                %424 = vst [vmem:[%s232 + $0x2f8] sm:$0xff] %v423
                %v425 = vld [vmem:[%s231 + $0x600] sm:$0xff]
                %426 = vst [vmem:[%s232 + $0x300] sm:$0xff] %v425
                %v427 = vld [vmem:[%s231 + $0x608] sm:$0xff]
                %428 = vst [vmem:[%s232 + $0x308] sm:$0xff] %v427
                %v429 = vld [vmem:[%s231 + $0x620] sm:$0xff]
                %430 = vst [vmem:[%s232 + $0x310] sm:$0xff] %v429
                %v431 = vld [vmem:[%s231 + $0x628] sm:$0xff]
                %432 = vst [vmem:[%s232 + $0x318] sm:$0xff] %v431
                %v433 = vld [vmem:[%s231 + $0x640] sm:$0xff]
                %434 = vst [vmem:[%s232 + $0x320] sm:$0xff] %v433
                %v435 = vld [vmem:[%s231 + $0x648] sm:$0xff]
                %436 = vst [vmem:[%s232 + $0x328] sm:$0xff] %v435
                %v437 = vld [vmem:[%s231 + $0x660] sm:$0xff]
                %438 = vst [vmem:[%s232 + $0x330] sm:$0xff] %v437
                %v439 = vld [vmem:[%s231 + $0x668] sm:$0xff]
                %440 = vst [vmem:[%s232 + $0x338] sm:$0xff] %v439
                %v441 = vld [vmem:[%s231 + $0x680] sm:$0xff]
                %442 = vst [vmem:[%s232 + $0x340] sm:$0xff] %v441
                %v443 = vld [vmem:[%s231 + $0x688] sm:$0xff]
                %444 = vst [vmem:[%s232 + $0x348] sm:$0xff] %v443
                %v445 = vld [vmem:[%s231 + $0x6a0] sm:$0xff]
                %446 = vst [vmem:[%s232 + $0x350] sm:$0xff] %v445
                %v447 = vld [vmem:[%s231 + $0x6a8] sm:$0xff]
                %448 = vst [vmem:[%s232 + $0x358] sm:$0xff] %v447
                %v449 = vld [vmem:[%s231 + $0x6c0] sm:$0xff]
                %450 = vst [vmem:[%s232 + $0x360] sm:$0xff] %v449
                %v451 = vld [vmem:[%s231 + $0x6c8] sm:$0xff]
                %452 = vst [vmem:[%s232 + $0x368] sm:$0xff] %v451
                %v453 = vld [vmem:[%s231 + $0x6e0] sm:$0xff]
                %454 = vst [vmem:[%s232 + $0x370] sm:$0xff] %v453
                %v455 = vld [vmem:[%s231 + $0x6e8] sm:$0xff]
                %456 = vst [vmem:[%s232 + $0x378] sm:$0xff] %v455
                %v457 = vld [vmem:[%s231 + $0x700] sm:$0xff]
                %458 = vst [vmem:[%s232 + $0x380] sm:$0xff] %v457
                %v459 = vld [vmem:[%s231 + $0x708] sm:$0xff]
                %460 = vst [vmem:[%s232 + $0x388] sm:$0xff] %v459
                %v461 = vld [vmem:[%s231 + $0x720] sm:$0xff]
                %462 = vst [vmem:[%s232 + $0x390] sm:$0xff] %v461
                %v463 = vld [vmem:[%s231 + $0x728] sm:$0xff]
                %464 = vst [vmem:[%s232 + $0x398] sm:$0xff] %v463
                %v465 = vld [vmem:[%s231 + $0x740] sm:$0xff]
                %466 = vst [vmem:[%s232 + $0x3a0] sm:$0xff] %v465
                %v467 = vld [vmem:[%s231 + $0x748] sm:$0xff]
                %468 = vst [vmem:[%s232 + $0x3a8] sm:$0xff] %v467
                %v469 = vld [vmem:[%s231 + $0x760] sm:$0xff]
                %470 = vst [vmem:[%s232 + $0x3b0] sm:$0xff] %v469
                %v471 = vld [vmem:[%s231 + $0x768] sm:$0xff]
                %472 = vst [vmem:[%s232 + $0x3b8] sm:$0xff] %v471
                %v473 = vld [vmem:[%s231 + $0x780] sm:$0xff]
                %474 = vst [vmem:[%s232 + $0x3c0] sm:$0xff] %v473
                %v475 = vld [vmem:[%s231 + $0x788] sm:$0xff]
                %476 = vst [vmem:[%s232 + $0x3c8] sm:$0xff] %v475
                %v477 = vld [vmem:[%s231 + $0x7a0] sm:$0xff]
                %478 = vst [vmem:[%s232 + $0x3d0] sm:$0xff] %v477
                %v479 = vld [vmem:[%s231 + $0x7a8] sm:$0xff]
                %480 = vst [vmem:[%s232 + $0x3d8] sm:$0xff] %v479
                %v481 = vld [vmem:[%s231 + $0x7c0] sm:$0xff]
                %482 = vst [vmem:[%s232 + $0x3e0] sm:$0xff] %v481
                %v483 = vld [vmem:[%s231 + $0x7c8] sm:$0xff]
                %484 = vst [vmem:[%s232 + $0x3e8] sm:$0xff] %v483
                %v485 = vld [vmem:[%s231 + $0x7e0] sm:$0xff]
                %486 = vst [vmem:[%s232 + $0x3f0] sm:$0xff] %v485
                %v487 = vld [vmem:[%s231 + $0x7e8] sm:$0xff]
                %488 = vst [vmem:[%s232 + $0x3f8] sm:$0xff] %v487
              $region41: #{kbrd_forward.3} parent=35 // loop_footer
                %s230 = sadd.s32 1, %s226
              $region42: #{kbrd_forward.3} parent=35 // loop_footer_branch
                %225 = sbr.rel target = $region38
              $region43: #{kbrd_forward.3} parent=35 // loop_exit
                _
            $region36: #{kbrd_forward.3} parent=31 // pred_fallthru
              _
            // Predicated region
            $region44: #{kbrd_forward.3} parent=31 // pred_check
              _
            $region45: #{kbrd_forward.3} parent=31 // pred_check_branch
              %490 = sbr.rel target = $region47
            $region46: #{kbrd_forward.3} parent=31 // pred_region
              _
            $region47: #{kbrd_forward.3} parent=31 // pred_fallthru
              _
          $region32: #{kbrd_forward.3} parent=27 // pred_fallthru
            _
          %491 = vnop
        $region28: #{kbrd_forward.3} parent=23 // pred_fallthru
          _
        // Predicated region
        $region48: #{kbrd_forward.3} parent=23 // pred_check
          %p492 = pneg %p72
        $region49: #{kbrd_forward.3} parent=23 // pred_check_branch
          %494 = sbr.rel (%p492) target = $region51
        $region50: #{kbrd_forward.3} parent=23 // pred_region
          %s495 = smul.u32 64, %s20
          %p496 = scmp.lt.s32.totalorder %s495, 127
          %s497 = scalar_select %p496, %s495, 127
          %s498 = smul.addr %s497, 4
          %s499 = scalar_lea.vmem %s1, %s498
          %s500 = smul.u32 64, %s20
        $region51: #{kbrd_forward.3} parent=23 // pred_fallthru
          _
      $region24: #{kbrd_forward.3} parent=5 // pred_fallthru
        _
      %p501 = scmp.le.s32.totalorder 1, %s12
      %p502 = scmp.lt.s32.totalorder %s12, 3
      %p503 = pnand %p501, %p502
      %p504 = pneg %p503
      // Predicated region
      $region52: #{kbrd_forward.3} parent=5 // pred_check
        _
      $region53: #{kbrd_forward.3} parent=5 // pred_check_branch
        %506 = sbr.rel (%p503) target = $region55
      $region54: #{kbrd_forward.3} parent=5 // pred_region
        %s507 = ssub.s32 %s12, 1
        %s508 = sand.u32 %s39, 1
        %s509 = sand.u32 %s39, 1
        %s510 = smul.addr %s509, 1024
        %s511 = scalar_lea.vmem [#allocation3], %s510
        // Predicated region
        $region56: #{kbrd_forward.3} parent=54 // pred_check
          %p512 = pneg %p52
        $region57: #{kbrd_forward.3} parent=54 // pred_check_branch
          %514 = sbr.rel (%p512) target = $region59
        $region58: #{kbrd_forward.3} parent=54 // pred_region
          _
        $region59: #{kbrd_forward.3} parent=54 // pred_fallthru
          _
        %s515 = sand.u32 %s39, 1
        %s516 = sand.u32 %s39, 1
        %s517 = smul.addr %s516, 1024
        %s518 = scalar_lea.vmem [#allocation3], %s517
        %p519 = pneg %p52
        %p520 = pneg %p49
        %s521 = smul.u32 64, %s22
        %p522 = scmp.lt.s32.totalorder %s521, 127
        %s523 = scalar_select %p522, %s521, 127
        %s524 = smul.addr %s523, 4
        %s525 = scalar_lea.vmem %s1, %s524
        %p526 = pneg %p78
        %p527 = pneg %p75
        %s528 = smul.u32 64, %s21
        %p529 = scmp.lt.s32.totalorder %s528, 63
        %s530 = scalar_select %p529, %s528, 63
        %s531 = smul.addr %s530, 8
        %s532 = scalar_lea.vmem %s2, %s531
        %p533 = pneg %p104
        %p534 = pneg %p101
        %p535 = pneg %p125
        %p536 = pneg %p122
        %p537 = pneg %p151
        %p538 = pneg %p148
        %s539 = smul.u32 64, %s21
        %p540 = scmp.lt.s32.totalorder %s539, 63
        %s541 = scalar_select %p540, %s539, 63
        %s542 = smul.addr %s541, 8
        %s543 = scalar_lea.vmem %s4, %s542
        %p544 = pneg %p177
        %p545 = pneg %p174
        %s546 = smul.u32 64, %s21
        %p547 = scmp.lt.s32.totalorder %s546, 63
        %s548 = scalar_select %p547, %s546, 63
        %s549 = smul.addr %s548, 4
        %s550 = scalar_lea.vmem %s5, %s549
        %s551 = smul.u32 64, %s21
        %s552 = smul.u32 4, %s22
        %s553 = smul.u32 64, %s22
        %p554 = scmp.lt.s32.totalorder %s553, 127
        %s555 = scalar_select %p554, %s553, 127
        %s556 = smul.addr %s555, 4
        %s557 = scalar_lea.vmem %s1, %s556
        %s558 = smul.u32 64, %s22
        %s559 = smul.u32 64, %s21
        %p560 = scmp.lt.s32.totalorder %s559, 63
        %s561 = scalar_select %p560, %s559, 63
        %s562 = smul.addr %s561, 8
        %s563 = scalar_lea.vmem %s2, %s562
        %s564 = smul.u32 64, %s21
        %s565 = smul.u32 64, %s21
        %p566 = scmp.lt.s32.totalorder %s565, 63
        %s567 = scalar_select %p566, %s565, 63
        %s568 = smul.addr %s567, 8
        %s569 = scalar_lea.vmem %s4, %s568
        %s570 = smul.u32 64, %s21
        %s571 = smul.u32 64, %s21
        %p572 = scmp.lt.s32.totalorder %s571, 63
        %s573 = scalar_select %p572, %s571, 63
        %s574 = smul.addr %s573, 4
        %s575 = scalar_lea.vmem %s5, %s574
        %s576 = smul.u32 64, %s21
        %p578 = scmp.eq.s32.totalorder %s22, 0
        // Predicated region
        $region60: #{kbrd_forward.3} parent=54 // pred_check
          %p579 = pneg %p578
        $region61: #{kbrd_forward.3} parent=54 // pred_check_branch
          %581 = sbr.rel (%p579) target = $region63
        $region62: #{kbrd_forward.3} parent=54 // pred_region
          %582 = vst [vmem:[#allocation2] sm:$0xff] 0.0
          %583 = vst [vmem:[#allocation2 + $0x8] sm:$0xff] 0.0
          %584 = vst [vmem:[#allocation2 + $0x10] sm:$0xff] 0.0
          %585 = vst [vmem:[#allocation2 + $0x18] sm:$0xff] 0.0
          %586 = vst [vmem:[#allocation2 + $0x20] sm:$0xff] 0.0
          %587 = vst [vmem:[#allocation2 + $0x28] sm:$0xff] 0.0
          %588 = vst [vmem:[#allocation2 + $0x30] sm:$0xff] 0.0
          %589 = vst [vmem:[#allocation2 + $0x38] sm:$0xff] 0.0
          %590 = vst [vmem:[#allocation2 + $0x40] sm:$0xff] 0.0
          %591 = vst [vmem:[#allocation2 + $0x48] sm:$0xff] 0.0
          %592 = vst [vmem:[#allocation2 + $0x50] sm:$0xff] 0.0
          %593 = vst [vmem:[#allocation2 + $0x58] sm:$0xff] 0.0
          %594 = vst [vmem:[#allocation2 + $0x60] sm:$0xff] 0.0
          %595 = vst [vmem:[#allocation2 + $0x68] sm:$0xff] 0.0
          %596 = vst [vmem:[#allocation2 + $0x70] sm:$0xff] 0.0
          %597 = vst [vmem:[#allocation2 + $0x78] sm:$0xff] 0.0
          %598 = vst [vmem:[#allocation2 + $0x80] sm:$0xff] 0.0
          %599 = vst [vmem:[#allocation2 + $0x88] sm:$0xff] 0.0
          %600 = vst [vmem:[#allocation2 + $0x90] sm:$0xff] 0.0
          %601 = vst [vmem:[#allocation2 + $0x98] sm:$0xff] 0.0
          %602 = vst [vmem:[#allocation2 + $0xa0] sm:$0xff] 0.0
          %603 = vst [vmem:[#allocation2 + $0xa8] sm:$0xff] 0.0
          %604 = vst [vmem:[#allocation2 + $0xb0] sm:$0xff] 0.0
          %605 = vst [vmem:[#allocation2 + $0xb8] sm:$0xff] 0.0
          %606 = vst [vmem:[#allocation2 + $0xc0] sm:$0xff] 0.0
          %607 = vst [vmem:[#allocation2 + $0xc8] sm:$0xff] 0.0
          %608 = vst [vmem:[#allocation2 + $0xd0] sm:$0xff] 0.0
          %609 = vst [vmem:[#allocation2 + $0xd8] sm:$0xff] 0.0
          %610 = vst [vmem:[#allocation2 + $0xe0] sm:$0xff] 0.0
          %611 = vst [vmem:[#allocation2 + $0xe8] sm:$0xff] 0.0
          %612 = vst [vmem:[#allocation2 + $0xf0] sm:$0xff] 0.0
          %613 = vst [vmem:[#allocation2 + $0xf8] sm:$0xff] 0.0
          %614 = vst [vmem:[#allocation2 + $0x100] sm:$0xff] 0.0
          %615 = vst [vmem:[#allocation2 + $0x108] sm:$0xff] 0.0
          %616 = vst [vmem:[#allocation2 + $0x110] sm:$0xff] 0.0
          %617 = vst [vmem:[#allocation2 + $0x118] sm:$0xff] 0.0
          %618 = vst [vmem:[#allocation2 + $0x120] sm:$0xff] 0.0
          %619 = vst [vmem:[#allocation2 + $0x128] sm:$0xff] 0.0
          %620 = vst [vmem:[#allocation2 + $0x130] sm:$0xff] 0.0
          %621 = vst [vmem:[#allocation2 + $0x138] sm:$0xff] 0.0
          %622 = vst [vmem:[#allocation2 + $0x140] sm:$0xff] 0.0
          %623 = vst [vmem:[#allocation2 + $0x148] sm:$0xff] 0.0
          %624 = vst [vmem:[#allocation2 + $0x150] sm:$0xff] 0.0
          %625 = vst [vmem:[#allocation2 + $0x158] sm:$0xff] 0.0
          %626 = vst [vmem:[#allocation2 + $0x160] sm:$0xff] 0.0
          %627 = vst [vmem:[#allocation2 + $0x168] sm:$0xff] 0.0
          %628 = vst [vmem:[#allocation2 + $0x170] sm:$0xff] 0.0
          %629 = vst [vmem:[#allocation2 + $0x178] sm:$0xff] 0.0
          %630 = vst [vmem:[#allocation2 + $0x180] sm:$0xff] 0.0
          %631 = vst [vmem:[#allocation2 + $0x188] sm:$0xff] 0.0
          %632 = vst [vmem:[#allocation2 + $0x190] sm:$0xff] 0.0
          %633 = vst [vmem:[#allocation2 + $0x198] sm:$0xff] 0.0
          %634 = vst [vmem:[#allocation2 + $0x1a0] sm:$0xff] 0.0
          %635 = vst [vmem:[#allocation2 + $0x1a8] sm:$0xff] 0.0
          %636 = vst [vmem:[#allocation2 + $0x1b0] sm:$0xff] 0.0
          %637 = vst [vmem:[#allocation2 + $0x1b8] sm:$0xff] 0.0
          %638 = vst [vmem:[#allocation2 + $0x1c0] sm:$0xff] 0.0
          %639 = vst [vmem:[#allocation2 + $0x1c8] sm:$0xff] 0.0
          %640 = vst [vmem:[#allocation2 + $0x1d0] sm:$0xff] 0.0
          %641 = vst [vmem:[#allocation2 + $0x1d8] sm:$0xff] 0.0
          %642 = vst [vmem:[#allocation2 + $0x1e0] sm:$0xff] 0.0
          %643 = vst [vmem:[#allocation2 + $0x1e8] sm:$0xff] 0.0
          %644 = vst [vmem:[#allocation2 + $0x1f0] sm:$0xff] 0.0
          %645 = vst [vmem:[#allocation2 + $0x1f8] sm:$0xff] 0.0
        $region63: #{kbrd_forward.3} parent=54 // pred_fallthru
          _
        %v646 = vld [vmem:[#allocation2] sm:$0xff]
        %v647 = vld [vmem:[#allocation2 + $0x8] sm:$0xff]
        %v648 = vld [vmem:[#allocation2 + $0x10] sm:$0xff]
        %v649 = vld [vmem:[#allocation2 + $0x18] sm:$0xff]
        %v650 = vld [vmem:[#allocation2 + $0x20] sm:$0xff]
        %v651 = vld [vmem:[#allocation2 + $0x28] sm:$0xff]
        %v652 = vld [vmem:[#allocation2 + $0x30] sm:$0xff]
        %v653 = vld [vmem:[#allocation2 + $0x38] sm:$0xff]
        %v654 = vld [vmem:[#allocation2 + $0x40] sm:$0xff]
        %v655 = vld [vmem:[#allocation2 + $0x48] sm:$0xff]
        %v656 = vld [vmem:[#allocation2 + $0x50] sm:$0xff]
        %v657 = vld [vmem:[#allocation2 + $0x58] sm:$0xff]
        %v658 = vld [vmem:[#allocation2 + $0x60] sm:$0xff]
        %v659 = vld [vmem:[#allocation2 + $0x68] sm:$0xff]
        %v660 = vld [vmem:[#allocation2 + $0x70] sm:$0xff]
        %v661 = vld [vmem:[#allocation2 + $0x78] sm:$0xff]
        %v662 = vld [vmem:[#allocation2 + $0x80] sm:$0xff]
        %v663 = vld [vmem:[#allocation2 + $0x88] sm:$0xff]
        %v664 = vld [vmem:[#allocation2 + $0x90] sm:$0xff]
        %v665 = vld [vmem:[#allocation2 + $0x98] sm:$0xff]
        %v666 = vld [vmem:[#allocation2 + $0xa0] sm:$0xff]
        %v667 = vld [vmem:[#allocation2 + $0xa8] sm:$0xff]
        %v668 = vld [vmem:[#allocation2 + $0xb0] sm:$0xff]
        %v669 = vld [vmem:[#allocation2 + $0xb8] sm:$0xff]
        %v670 = vld [vmem:[#allocation2 + $0xc0] sm:$0xff]
        %v671 = vld [vmem:[#allocation2 + $0xc8] sm:$0xff]
        %v672 = vld [vmem:[#allocation2 + $0xd0] sm:$0xff]
        %v673 = vld [vmem:[#allocation2 + $0xd8] sm:$0xff]
        %v674 = vld [vmem:[#allocation2 + $0xe0] sm:$0xff]
        %v675 = vld [vmem:[#allocation2 + $0xe8] sm:$0xff]
        %v676 = vld [vmem:[#allocation2 + $0xf0] sm:$0xff]
        %v677 = vld [vmem:[#allocation2 + $0xf8] sm:$0xff]
        %v678 = vld [vmem:[#allocation2 + $0x100] sm:$0xff]
        %v679 = vld [vmem:[#allocation2 + $0x108] sm:$0xff]
        %v680 = vld [vmem:[#allocation2 + $0x110] sm:$0xff]
        %v681 = vld [vmem:[#allocation2 + $0x118] sm:$0xff]
        %v682 = vld [vmem:[#allocation2 + $0x120] sm:$0xff]
        %v683 = vld [vmem:[#allocation2 + $0x128] sm:$0xff]
        %v684 = vld [vmem:[#allocation2 + $0x130] sm:$0xff]
        %v685 = vld [vmem:[#allocation2 + $0x138] sm:$0xff]
        %v686 = vld [vmem:[#allocation2 + $0x140] sm:$0xff]
        %v687 = vld [vmem:[#allocation2 + $0x148] sm:$0xff]
        %v688 = vld [vmem:[#allocation2 + $0x150] sm:$0xff]
        %v689 = vld [vmem:[#allocation2 + $0x158] sm:$0xff]
        %v690 = vld [vmem:[#allocation2 + $0x160] sm:$0xff]
        %v691 = vld [vmem:[#allocation2 + $0x168] sm:$0xff]
        %v692 = vld [vmem:[#allocation2 + $0x170] sm:$0xff]
        %v693 = vld [vmem:[#allocation2 + $0x178] sm:$0xff]
        %v694 = vld [vmem:[#allocation2 + $0x180] sm:$0xff]
        %v695 = vld [vmem:[#allocation2 + $0x188] sm:$0xff]
        %v696 = vld [vmem:[#allocation2 + $0x190] sm:$0xff]
        %v697 = vld [vmem:[#allocation2 + $0x198] sm:$0xff]
        %v698 = vld [vmem:[#allocation2 + $0x1a0] sm:$0xff]
        %v699 = vld [vmem:[#allocation2 + $0x1a8] sm:$0xff]
        %v700 = vld [vmem:[#allocation2 + $0x1b0] sm:$0xff]
        %v701 = vld [vmem:[#allocation2 + $0x1b8] sm:$0xff]
        %v702 = vld [vmem:[#allocation2 + $0x1c0] sm:$0xff]
        %v703 = vld [vmem:[#allocation2 + $0x1c8] sm:$0xff]
        %v704 = vld [vmem:[#allocation2 + $0x1d0] sm:$0xff]
        %v705 = vld [vmem:[#allocation2 + $0x1d8] sm:$0xff]
        %v706 = vld [vmem:[#allocation2 + $0x1e0] sm:$0xff]
        %v707 = vld [vmem:[#allocation2 + $0x1e8] sm:$0xff]
        %v708 = vld [vmem:[#allocation2 + $0x1f0] sm:$0xff]
        %v709 = vld [vmem:[#allocation2 + $0x1f8] sm:$0xff]
        %v710 = vld [vmem:[%s511] sm:$0xff]
        %v711 = vld [vmem:[%s511 + $0x8] sm:$0xff]
        %v712 = vld [vmem:[%s511 + $0x10] sm:$0xff]
        %v713 = vld [vmem:[%s511 + $0x18] sm:$0xff]
        %v714 = vld [vmem:[%s511 + $0x20] sm:$0xff]
        %v715 = vld [vmem:[%s511 + $0x28] sm:$0xff]
        %v716 = vld [vmem:[%s511 + $0x30] sm:$0xff]
        %v717 = vld [vmem:[%s511 + $0x38] sm:$0xff]
        %v718 = vld [vmem:[%s511 + $0x40] sm:$0xff]
        %v719 = vld [vmem:[%s511 + $0x48] sm:$0xff]
        %v720 = vld [vmem:[%s511 + $0x50] sm:$0xff]
        %v721 = vld [vmem:[%s511 + $0x58] sm:$0xff]
        %v722 = vld [vmem:[%s511 + $0x60] sm:$0xff]
        %v723 = vld [vmem:[%s511 + $0x68] sm:$0xff]
        %v724 = vld [vmem:[%s511 + $0x70] sm:$0xff]
        %v725 = vld [vmem:[%s511 + $0x78] sm:$0xff]
        %v726 = vld [vmem:[%s511 + $0x80] sm:$0xff]
        %v727 = vld [vmem:[%s511 + $0x88] sm:$0xff]
        %v728 = vld [vmem:[%s511 + $0x90] sm:$0xff]
        %v729 = vld [vmem:[%s511 + $0x98] sm:$0xff]
        %v730 = vld [vmem:[%s511 + $0xa0] sm:$0xff]
        %v731 = vld [vmem:[%s511 + $0xa8] sm:$0xff]
        %v732 = vld [vmem:[%s511 + $0xb0] sm:$0xff]
        %v733 = vld [vmem:[%s511 + $0xb8] sm:$0xff]
        %v734 = vld [vmem:[%s511 + $0xc0] sm:$0xff]
        %v735 = vld [vmem:[%s511 + $0xc8] sm:$0xff]
        %v736 = vld [vmem:[%s511 + $0xd0] sm:$0xff]
        %v737 = vld [vmem:[%s511 + $0xd8] sm:$0xff]
        %v738 = vld [vmem:[%s511 + $0xe0] sm:$0xff]
        %v739 = vld [vmem:[%s511 + $0xe8] sm:$0xff]
        %v740 = vld [vmem:[%s511 + $0xf0] sm:$0xff]
        %v741 = vld [vmem:[%s511 + $0xf8] sm:$0xff]
        %v742 = vld [vmem:[%s511 + $0x100] sm:$0xff]
        %v743 = vld [vmem:[%s511 + $0x108] sm:$0xff]
        %v744 = vld [vmem:[%s511 + $0x110] sm:$0xff]
        %v745 = vld [vmem:[%s511 + $0x118] sm:$0xff]
        %v746 = vld [vmem:[%s511 + $0x120] sm:$0xff]
        %v747 = vld [vmem:[%s511 + $0x128] sm:$0xff]
        %v748 = vld [vmem:[%s511 + $0x130] sm:$0xff]
        %v749 = vld [vmem:[%s511 + $0x138] sm:$0xff]
        %v750 = vld [vmem:[%s511 + $0x140] sm:$0xff]
        %v751 = vld [vmem:[%s511 + $0x148] sm:$0xff]
        %v752 = vld [vmem:[%s511 + $0x150] sm:$0xff]
        %v753 = vld [vmem:[%s511 + $0x158] sm:$0xff]
        %v754 = vld [vmem:[%s511 + $0x160] sm:$0xff]
        %v755 = vld [vmem:[%s511 + $0x168] sm:$0xff]
        %v756 = vld [vmem:[%s511 + $0x170] sm:$0xff]
        %v757 = vld [vmem:[%s511 + $0x178] sm:$0xff]
        %v758 = vld [vmem:[%s511 + $0x180] sm:$0xff]
        %v759 = vld [vmem:[%s511 + $0x188] sm:$0xff]
        %v760 = vld [vmem:[%s511 + $0x190] sm:$0xff]
        %v761 = vld [vmem:[%s511 + $0x198] sm:$0xff]
        %v762 = vld [vmem:[%s511 + $0x1a0] sm:$0xff]
        %v763 = vld [vmem:[%s511 + $0x1a8] sm:$0xff]
        %v764 = vld [vmem:[%s511 + $0x1b0] sm:$0xff]
        %v765 = vld [vmem:[%s511 + $0x1b8] sm:$0xff]
        %v766 = vld [vmem:[%s511 + $0x1c0] sm:$0xff]
        %v767 = vld [vmem:[%s511 + $0x1c8] sm:$0xff]
        %v768 = vld [vmem:[%s511 + $0x1d0] sm:$0xff]
        %v769 = vld [vmem:[%s511 + $0x1d8] sm:$0xff]
        %v770 = vld [vmem:[%s511 + $0x1e0] sm:$0xff]
        %v771 = vld [vmem:[%s511 + $0x1e8] sm:$0xff]
        %v772 = vld [vmem:[%s511 + $0x1f0] sm:$0xff]
        %v773 = vld [vmem:[%s511 + $0x1f8] sm:$0xff]
        %v774 = vld [vmem:[%s511 + $0x200] sm:$0xff]
        %v775 = vld [vmem:[%s511 + $0x208] sm:$0xff]
        %v776 = vld [vmem:[%s511 + $0x210] sm:$0xff]
        %v777 = vld [vmem:[%s511 + $0x218] sm:$0xff]
        %v778 = vld [vmem:[%s511 + $0x220] sm:$0xff]
        %v779 = vld [vmem:[%s511 + $0x228] sm:$0xff]
        %v780 = vld [vmem:[%s511 + $0x230] sm:$0xff]
        %v781 = vld [vmem:[%s511 + $0x238] sm:$0xff]
        %v782 = vld [vmem:[%s511 + $0x240] sm:$0xff]
        %v783 = vld [vmem:[%s511 + $0x248] sm:$0xff]
        %v784 = vld [vmem:[%s511 + $0x250] sm:$0xff]
        %v785 = vld [vmem:[%s511 + $0x258] sm:$0xff]
        %v786 = vld [vmem:[%s511 + $0x260] sm:$0xff]
        %v787 = vld [vmem:[%s511 + $0x268] sm:$0xff]
        %v788 = vld [vmem:[%s511 + $0x270] sm:$0xff]
        %v789 = vld [vmem:[%s511 + $0x278] sm:$0xff]
        %v790 = vld [vmem:[%s511 + $0x280] sm:$0xff]
        %v791 = vld [vmem:[%s511 + $0x288] sm:$0xff]
        %v792 = vld [vmem:[%s511 + $0x290] sm:$0xff]
        %v793 = vld [vmem:[%s511 + $0x298] sm:$0xff]
        %v794 = vld [vmem:[%s511 + $0x2a0] sm:$0xff]
        %v795 = vld [vmem:[%s511 + $0x2a8] sm:$0xff]
        %v796 = vld [vmem:[%s511 + $0x2b0] sm:$0xff]
        %v797 = vld [vmem:[%s511 + $0x2b8] sm:$0xff]
        %v798 = vld [vmem:[%s511 + $0x2c0] sm:$0xff]
        %v799 = vld [vmem:[%s511 + $0x2c8] sm:$0xff]
        %v800 = vld [vmem:[%s511 + $0x2d0] sm:$0xff]
        %v801 = vld [vmem:[%s511 + $0x2d8] sm:$0xff]
        %v802 = vld [vmem:[%s511 + $0x2e0] sm:$0xff]
        %v803 = vld [vmem:[%s511 + $0x2e8] sm:$0xff]
        %v804 = vld [vmem:[%s511 + $0x2f0] sm:$0xff]
        %v805 = vld [vmem:[%s511 + $0x2f8] sm:$0xff]
        %v806 = vld [vmem:[%s511 + $0x300] sm:$0xff]
        %v807 = vld [vmem:[%s511 + $0x308] sm:$0xff]
        %v808 = vld [vmem:[%s511 + $0x310] sm:$0xff]
        %v809 = vld [vmem:[%s511 + $0x318] sm:$0xff]
        %v810 = vld [vmem:[%s511 + $0x320] sm:$0xff]
        %v811 = vld [vmem:[%s511 + $0x328] sm:$0xff]
        %v812 = vld [vmem:[%s511 + $0x330] sm:$0xff]
        %v813 = vld [vmem:[%s511 + $0x338] sm:$0xff]
        %v814 = vld [vmem:[%s511 + $0x340] sm:$0xff]
        %v815 = vld [vmem:[%s511 + $0x348] sm:$0xff]
        %v816 = vld [vmem:[%s511 + $0x350] sm:$0xff]
        %v817 = vld [vmem:[%s511 + $0x358] sm:$0xff]
        %v818 = vld [vmem:[%s511 + $0x360] sm:$0xff]
        %v819 = vld [vmem:[%s511 + $0x368] sm:$0xff]
        %v820 = vld [vmem:[%s511 + $0x370] sm:$0xff]
        %v821 = vld [vmem:[%s511 + $0x378] sm:$0xff]
        %v822 = vld [vmem:[%s511 + $0x380] sm:$0xff]
        %v823 = vld [vmem:[%s511 + $0x388] sm:$0xff]
        %v824 = vld [vmem:[%s511 + $0x390] sm:$0xff]
        %v825 = vld [vmem:[%s511 + $0x398] sm:$0xff]
        %v826 = vld [vmem:[%s511 + $0x3a0] sm:$0xff]
        %v827 = vld [vmem:[%s511 + $0x3a8] sm:$0xff]
        %v828 = vld [vmem:[%s511 + $0x3b0] sm:$0xff]
        %v829 = vld [vmem:[%s511 + $0x3b8] sm:$0xff]
        %v830 = vld [vmem:[%s511 + $0x3c0] sm:$0xff]
        %v831 = vld [vmem:[%s511 + $0x3c8] sm:$0xff]
        %v832 = vld [vmem:[%s511 + $0x3d0] sm:$0xff]
        %v833 = vld [vmem:[%s511 + $0x3d8] sm:$0xff]
        %v834 = vld [vmem:[%s511 + $0x3e0] sm:$0xff]
        %v835 = vld [vmem:[%s511 + $0x3e8] sm:$0xff]
        %v836 = vld [vmem:[%s511 + $0x3f0] sm:$0xff]
        %v837 = vld [vmem:[%s511 + $0x3f8] sm:$0xff]
        %v838 = vld [vmem:[%s557] sm:$0xf]
        %v839 = vld [vmem:[%s557 + $0x4] sm:$0xf]
        %v840 = vld [vmem:[%s557 + $0x8] sm:$0xf]
        %v841 = vld [vmem:[%s557 + $0xc] sm:$0xf]
        %v842 = vld [vmem:[%s557 + $0x10] sm:$0xf]
        %v843 = vld [vmem:[%s557 + $0x14] sm:$0xf]
        %v844 = vld [vmem:[%s557 + $0x18] sm:$0xf]
        %v845 = vld [vmem:[%s557 + $0x1c] sm:$0xf]
        %v846 = vld [vmem:[%s557 + $0x20] sm:$0xf]
        %v847 = vld [vmem:[%s557 + $0x24] sm:$0xf]
        %v848 = vld [vmem:[%s557 + $0x28] sm:$0xf]
        %v849 = vld [vmem:[%s557 + $0x2c] sm:$0xf]
        %v850 = vld [vmem:[%s557 + $0x30] sm:$0xf]
        %v851 = vld [vmem:[%s557 + $0x34] sm:$0xf]
        %v852 = vld [vmem:[%s557 + $0x38] sm:$0xf]
        %v853 = vld [vmem:[%s557 + $0x3c] sm:$0xf]
        %v854 = vld [vmem:[%s557 + $0x40] sm:$0xf]
        %v855 = vld [vmem:[%s557 + $0x44] sm:$0xf]
        %v856 = vld [vmem:[%s557 + $0x48] sm:$0xf]
        %v857 = vld [vmem:[%s557 + $0x4c] sm:$0xf]
        %v858 = vld [vmem:[%s557 + $0x50] sm:$0xf]
        %v859 = vld [vmem:[%s557 + $0x54] sm:$0xf]
        %v860 = vld [vmem:[%s557 + $0x58] sm:$0xf]
        %v861 = vld [vmem:[%s557 + $0x5c] sm:$0xf]
        %v862 = vld [vmem:[%s557 + $0x60] sm:$0xf]
        %v863 = vld [vmem:[%s557 + $0x64] sm:$0xf]
        %v864 = vld [vmem:[%s557 + $0x68] sm:$0xf]
        %v865 = vld [vmem:[%s557 + $0x6c] sm:$0xf]
        %v866 = vld [vmem:[%s557 + $0x70] sm:$0xf]
        %v867 = vld [vmem:[%s557 + $0x74] sm:$0xf]
        %v868 = vld [vmem:[%s557 + $0x78] sm:$0xf]
        %v869 = vld [vmem:[%s557 + $0x7c] sm:$0xf]
        %v870 = vld [vmem:[%s557 + $0x80] sm:$0xf]
        %v871 = vld [vmem:[%s557 + $0x84] sm:$0xf]
        %v872 = vld [vmem:[%s557 + $0x88] sm:$0xf]
        %v873 = vld [vmem:[%s557 + $0x8c] sm:$0xf]
        %v874 = vld [vmem:[%s557 + $0x90] sm:$0xf]
        %v875 = vld [vmem:[%s557 + $0x94] sm:$0xf]
        %v876 = vld [vmem:[%s557 + $0x98] sm:$0xf]
        %v877 = vld [vmem:[%s557 + $0x9c] sm:$0xf]
        %v878 = vld [vmem:[%s557 + $0xa0] sm:$0xf]
        %v879 = vld [vmem:[%s557 + $0xa4] sm:$0xf]
        %v880 = vld [vmem:[%s557 + $0xa8] sm:$0xf]
        %v881 = vld [vmem:[%s557 + $0xac] sm:$0xf]
        %v882 = vld [vmem:[%s557 + $0xb0] sm:$0xf]
        %v883 = vld [vmem:[%s557 + $0xb4] sm:$0xf]
        %v884 = vld [vmem:[%s557 + $0xb8] sm:$0xf]
        %v885 = vld [vmem:[%s557 + $0xbc] sm:$0xf]
        %v886 = vld [vmem:[%s557 + $0xc0] sm:$0xf]
        %v887 = vld [vmem:[%s557 + $0xc4] sm:$0xf]
        %v888 = vld [vmem:[%s557 + $0xc8] sm:$0xf]
        %v889 = vld [vmem:[%s557 + $0xcc] sm:$0xf]
        %v890 = vld [vmem:[%s557 + $0xd0] sm:$0xf]
        %v891 = vld [vmem:[%s557 + $0xd4] sm:$0xf]
        %v892 = vld [vmem:[%s557 + $0xd8] sm:$0xf]
        %v893 = vld [vmem:[%s557 + $0xdc] sm:$0xf]
        %v894 = vld [vmem:[%s557 + $0xe0] sm:$0xf]
        %v895 = vld [vmem:[%s557 + $0xe4] sm:$0xf]
        %v896 = vld [vmem:[%s557 + $0xe8] sm:$0xf]
        %v897 = vld [vmem:[%s557 + $0xec] sm:$0xf]
        %v898 = vld [vmem:[%s557 + $0xf0] sm:$0xf]
        %v899 = vld [vmem:[%s557 + $0xf4] sm:$0xf]
        %v900 = vld [vmem:[%s557 + $0xf8] sm:$0xf]
        %v901 = vld [vmem:[%s557 + $0xfc] sm:$0xf]
        %v1030 = vunpack.c.l.b16 %v710
        %v1031 = vunpack.c.h.b16 %v710
        %v1032 = vunpack.c.l.b16 %v711
        %v1033 = vunpack.c.h.b16 %v711
        %v1034 = vunpack.c.l.b16 %v712
        %v1035 = vunpack.c.h.b16 %v712
        %v1036 = vunpack.c.l.b16 %v713
        %v1037 = vunpack.c.h.b16 %v713
        %v1038 = vunpack.c.l.b16 %v714
        %v1039 = vunpack.c.h.b16 %v714
        %v1040 = vunpack.c.l.b16 %v715
        %v1041 = vunpack.c.h.b16 %v715
        %v1042 = vunpack.c.l.b16 %v716
        %v1043 = vunpack.c.h.b16 %v716
        %v1044 = vunpack.c.l.b16 %v717
        %v1045 = vunpack.c.h.b16 %v717
        %v1046 = vunpack.c.l.b16 %v718
        %v1047 = vunpack.c.h.b16 %v718
        %v1048 = vunpack.c.l.b16 %v719
        %v1049 = vunpack.c.h.b16 %v719
        %v1050 = vunpack.c.l.b16 %v720
        %v1051 = vunpack.c.h.b16 %v720
        %v1052 = vunpack.c.l.b16 %v721
        %v1053 = vunpack.c.h.b16 %v721
        %v1054 = vunpack.c.l.b16 %v722
        %v1055 = vunpack.c.h.b16 %v722
        %v1056 = vunpack.c.l.b16 %v723
        %v1057 = vunpack.c.h.b16 %v723
        %v1058 = vunpack.c.l.b16 %v724
        %v1059 = vunpack.c.h.b16 %v724
        %v1060 = vunpack.c.l.b16 %v725
        %v1061 = vunpack.c.h.b16 %v725
        %v1062 = vunpack.c.l.b16 %v726
        %v1063 = vunpack.c.h.b16 %v726
        %v1064 = vunpack.c.l.b16 %v727
        %v1065 = vunpack.c.h.b16 %v727
        %v1066 = vunpack.c.l.b16 %v728
        %v1067 = vunpack.c.h.b16 %v728
        %v1068 = vunpack.c.l.b16 %v729
        %v1069 = vunpack.c.h.b16 %v729
        %v1070 = vunpack.c.l.b16 %v730
        %v1071 = vunpack.c.h.b16 %v730
        %v1072 = vunpack.c.l.b16 %v731
        %v1073 = vunpack.c.h.b16 %v731
        %v1074 = vunpack.c.l.b16 %v732
        %v1075 = vunpack.c.h.b16 %v732
        %v1076 = vunpack.c.l.b16 %v733
        %v1077 = vunpack.c.h.b16 %v733
        %v1078 = vunpack.c.l.b16 %v734
        %v1079 = vunpack.c.h.b16 %v734
        %v1080 = vunpack.c.l.b16 %v735
        %v1081 = vunpack.c.h.b16 %v735
        %v1082 = vunpack.c.l.b16 %v736
        %v1083 = vunpack.c.h.b16 %v736
        %v1084 = vunpack.c.l.b16 %v737
        %v1085 = vunpack.c.h.b16 %v737
        %v1086 = vunpack.c.l.b16 %v738
        %v1087 = vunpack.c.h.b16 %v738
        %v1088 = vunpack.c.l.b16 %v739
        %v1089 = vunpack.c.h.b16 %v739
        %v1090 = vunpack.c.l.b16 %v740
        %v1091 = vunpack.c.h.b16 %v740
        %v1092 = vunpack.c.l.b16 %v741
        %v1093 = vunpack.c.h.b16 %v741
        %v1094 = vunpack.c.l.b16 %v742
        %v1095 = vunpack.c.h.b16 %v742
        %v1096 = vunpack.c.l.b16 %v743
        %v1097 = vunpack.c.h.b16 %v743
        %v1098 = vunpack.c.l.b16 %v744
        %v1099 = vunpack.c.h.b16 %v744
        %v1100 = vunpack.c.l.b16 %v745
        %v1101 = vunpack.c.h.b16 %v745
        %v1102 = vunpack.c.l.b16 %v746
        %v1103 = vunpack.c.h.b16 %v746
        %v1104 = vunpack.c.l.b16 %v747
        %v1105 = vunpack.c.h.b16 %v747
        %v1106 = vunpack.c.l.b16 %v748
        %v1107 = vunpack.c.h.b16 %v748
        %v1108 = vunpack.c.l.b16 %v749
        %v1109 = vunpack.c.h.b16 %v749
        %v1110 = vunpack.c.l.b16 %v750
        %v1111 = vunpack.c.h.b16 %v750
        %v1112 = vunpack.c.l.b16 %v751
        %v1113 = vunpack.c.h.b16 %v751
        %v1114 = vunpack.c.l.b16 %v752
        %v1115 = vunpack.c.h.b16 %v752
        %v1116 = vunpack.c.l.b16 %v753
        %v1117 = vunpack.c.h.b16 %v753
        %v1118 = vunpack.c.l.b16 %v754
        %v1119 = vunpack.c.h.b16 %v754
        %v1120 = vunpack.c.l.b16 %v755
        %v1121 = vunpack.c.h.b16 %v755
        %v1122 = vunpack.c.l.b16 %v756
        %v1123 = vunpack.c.h.b16 %v756
        %v1124 = vunpack.c.l.b16 %v757
        %v1125 = vunpack.c.h.b16 %v757
        %v1126 = vunpack.c.l.b16 %v758
        %v1127 = vunpack.c.h.b16 %v758
        %v1128 = vunpack.c.l.b16 %v759
        %v1129 = vunpack.c.h.b16 %v759
        %v1130 = vunpack.c.l.b16 %v760
        %v1131 = vunpack.c.h.b16 %v760
        %v1132 = vunpack.c.l.b16 %v761
        %v1133 = vunpack.c.h.b16 %v761
        %v1134 = vunpack.c.l.b16 %v762
        %v1135 = vunpack.c.h.b16 %v762
        %v1136 = vunpack.c.l.b16 %v763
        %v1137 = vunpack.c.h.b16 %v763
        %v1138 = vunpack.c.l.b16 %v764
        %v1139 = vunpack.c.h.b16 %v764
        %v1140 = vunpack.c.l.b16 %v765
        %v1141 = vunpack.c.h.b16 %v765
        %v1142 = vunpack.c.l.b16 %v766
        %v1143 = vunpack.c.h.b16 %v766
        %v1144 = vunpack.c.l.b16 %v767
        %v1145 = vunpack.c.h.b16 %v767
        %v1146 = vunpack.c.l.b16 %v768
        %v1147 = vunpack.c.h.b16 %v768
        %v1148 = vunpack.c.l.b16 %v769
        %v1149 = vunpack.c.h.b16 %v769
        %v1150 = vunpack.c.l.b16 %v770
        %v1151 = vunpack.c.h.b16 %v770
        %v1152 = vunpack.c.l.b16 %v771
        %v1153 = vunpack.c.h.b16 %v771
        %v1154 = vunpack.c.l.b16 %v772
        %v1155 = vunpack.c.h.b16 %v772
        %v1156 = vunpack.c.l.b16 %v773
        %v1157 = vunpack.c.h.b16 %v773
        %v1158 = vunpack.c.l.b16 %v774
        %v1159 = vunpack.c.h.b16 %v774
        %v1160 = vunpack.c.l.b16 %v775
        %v1161 = vunpack.c.h.b16 %v775
        %v1162 = vunpack.c.l.b16 %v776
        %v1163 = vunpack.c.h.b16 %v776
        %v1164 = vunpack.c.l.b16 %v777
        %v1165 = vunpack.c.h.b16 %v777
        %v1166 = vunpack.c.l.b16 %v778
        %v1167 = vunpack.c.h.b16 %v778
        %v1168 = vunpack.c.l.b16 %v779
        %v1169 = vunpack.c.h.b16 %v779
        %v1170 = vunpack.c.l.b16 %v780
        %v1171 = vunpack.c.h.b16 %v780
        %v1172 = vunpack.c.l.b16 %v781
        %v1173 = vunpack.c.h.b16 %v781
        %v1174 = vunpack.c.l.b16 %v782
        %v1175 = vunpack.c.h.b16 %v782
        %v1176 = vunpack.c.l.b16 %v783
        %v1177 = vunpack.c.h.b16 %v783
        %v1178 = vunpack.c.l.b16 %v784
        %v1179 = vunpack.c.h.b16 %v784
        %v1180 = vunpack.c.l.b16 %v785
        %v1181 = vunpack.c.h.b16 %v785
        %v1182 = vunpack.c.l.b16 %v786
        %v1183 = vunpack.c.h.b16 %v786
        %v1184 = vunpack.c.l.b16 %v787
        %v1185 = vunpack.c.h.b16 %v787
        %v1186 = vunpack.c.l.b16 %v788
        %v1187 = vunpack.c.h.b16 %v788
        %v1188 = vunpack.c.l.b16 %v789
        %v1189 = vunpack.c.h.b16 %v789
        %v1190 = vunpack.c.l.b16 %v790
        %v1191 = vunpack.c.h.b16 %v790
        %v1192 = vunpack.c.l.b16 %v791
        %v1193 = vunpack.c.h.b16 %v791
        %v1194 = vunpack.c.l.b16 %v792
        %v1195 = vunpack.c.h.b16 %v792
        %v1196 = vunpack.c.l.b16 %v793
        %v1197 = vunpack.c.h.b16 %v793
        %v1198 = vunpack.c.l.b16 %v794
        %v1199 = vunpack.c.h.b16 %v794
        %v1200 = vunpack.c.l.b16 %v795
        %v1201 = vunpack.c.h.b16 %v795
        %v1202 = vunpack.c.l.b16 %v796
        %v1203 = vunpack.c.h.b16 %v796
        %v1204 = vunpack.c.l.b16 %v797
        %v1205 = vunpack.c.h.b16 %v797
        %v1206 = vunpack.c.l.b16 %v798
        %v1207 = vunpack.c.h.b16 %v798
        %v1208 = vunpack.c.l.b16 %v799
        %v1209 = vunpack.c.h.b16 %v799
        %v1210 = vunpack.c.l.b16 %v800
        %v1211 = vunpack.c.h.b16 %v800
        %v1212 = vunpack.c.l.b16 %v801
        %v1213 = vunpack.c.h.b16 %v801
        %v1214 = vunpack.c.l.b16 %v802
        %v1215 = vunpack.c.h.b16 %v802
        %v1216 = vunpack.c.l.b16 %v803
        %v1217 = vunpack.c.h.b16 %v803
        %v1218 = vunpack.c.l.b16 %v804
        %v1219 = vunpack.c.h.b16 %v804
        %v1220 = vunpack.c.l.b16 %v805
        %v1221 = vunpack.c.h.b16 %v805
        %v1222 = vunpack.c.l.b16 %v806
        %v1223 = vunpack.c.h.b16 %v806
        %v1224 = vunpack.c.l.b16 %v807
        %v1225 = vunpack.c.h.b16 %v807
        %v1226 = vunpack.c.l.b16 %v808
        %v1227 = vunpack.c.h.b16 %v808
        %v1228 = vunpack.c.l.b16 %v809
        %v1229 = vunpack.c.h.b16 %v809
        %v1230 = vunpack.c.l.b16 %v810
        %v1231 = vunpack.c.h.b16 %v810
        %v1232 = vunpack.c.l.b16 %v811
        %v1233 = vunpack.c.h.b16 %v811
        %v1234 = vunpack.c.l.b16 %v812
        %v1235 = vunpack.c.h.b16 %v812
        %v1236 = vunpack.c.l.b16 %v813
        %v1237 = vunpack.c.h.b16 %v813
        %v1238 = vunpack.c.l.b16 %v814
        %v1239 = vunpack.c.h.b16 %v814
        %v1240 = vunpack.c.l.b16 %v815
        %v1241 = vunpack.c.h.b16 %v815
        %v1242 = vunpack.c.l.b16 %v816
        %v1243 = vunpack.c.h.b16 %v816
        %v1244 = vunpack.c.l.b16 %v817
        %v1245 = vunpack.c.h.b16 %v817
        %v1246 = vunpack.c.l.b16 %v818
        %v1247 = vunpack.c.h.b16 %v818
        %v1248 = vunpack.c.l.b16 %v819
        %v1249 = vunpack.c.h.b16 %v819
        %v1250 = vunpack.c.l.b16 %v820
        %v1251 = vunpack.c.h.b16 %v820
        %v1252 = vunpack.c.l.b16 %v821
        %v1253 = vunpack.c.h.b16 %v821
        %v1254 = vunpack.c.l.b16 %v822
        %v1255 = vunpack.c.h.b16 %v822
        %v1256 = vunpack.c.l.b16 %v823
        %v1257 = vunpack.c.h.b16 %v823
        %v1258 = vunpack.c.l.b16 %v824
        %v1259 = vunpack.c.h.b16 %v824
        %v1260 = vunpack.c.l.b16 %v825
        %v1261 = vunpack.c.h.b16 %v825
        %v1262 = vunpack.c.l.b16 %v826
        %v1263 = vunpack.c.h.b16 %v826
        %v1264 = vunpack.c.l.b16 %v827
        %v1265 = vunpack.c.h.b16 %v827
        %v1266 = vunpack.c.l.b16 %v828
        %v1267 = vunpack.c.h.b16 %v828
        %v1268 = vunpack.c.l.b16 %v829
        %v1269 = vunpack.c.h.b16 %v829
        %v1270 = vunpack.c.l.b16 %v830
        %v1271 = vunpack.c.h.b16 %v830
        %v1272 = vunpack.c.l.b16 %v831
        %v1273 = vunpack.c.h.b16 %v831
        %v1274 = vunpack.c.l.b16 %v832
        %v1275 = vunpack.c.h.b16 %v832
        %v1276 = vunpack.c.l.b16 %v833
        %v1277 = vunpack.c.h.b16 %v833
        %v1278 = vunpack.c.l.b16 %v834
        %v1279 = vunpack.c.h.b16 %v834
        %v1280 = vunpack.c.l.b16 %v835
        %v1281 = vunpack.c.h.b16 %v835
        %v1282 = vunpack.c.l.b16 %v836
        %v1283 = vunpack.c.h.b16 %v836
        %v1284 = vunpack.c.l.b16 %v837
        %v1285 = vunpack.c.h.b16 %v837
        %v1286 = vpack.c.b16 %v1034, %v1030
        %v1287 = vpack.c.b16 %v1035, %v1031
        %v1288 = vpack.c.b16 %v1036, %v1032
        %v1289 = vpack.c.b16 %v1037, %v1033
        %v1290 = vpack.c.b16 %v1042, %v1038
        %v1291 = vpack.c.b16 %v1043, %v1039
        %v1292 = vpack.c.b16 %v1044, %v1040
        %v1293 = vpack.c.b16 %v1045, %v1041
        %v1294 = vpack.c.b16 %v1050, %v1046
        %v1295 = vpack.c.b16 %v1051, %v1047
        %v1296 = vpack.c.b16 %v1052, %v1048
        %v1297 = vpack.c.b16 %v1053, %v1049
        %v1298 = vpack.c.b16 %v1058, %v1054
        %v1299 = vpack.c.b16 %v1059, %v1055
        %v1300 = vpack.c.b16 %v1060, %v1056
        %v1301 = vpack.c.b16 %v1061, %v1057
        %v1302 = vpack.c.b16 %v1066, %v1062
        %v1303 = vpack.c.b16 %v1067, %v1063
        %v1304 = vpack.c.b16 %v1068, %v1064
        %v1305 = vpack.c.b16 %v1069, %v1065
        %v1306 = vpack.c.b16 %v1074, %v1070
        %v1307 = vpack.c.b16 %v1075, %v1071
        %v1308 = vpack.c.b16 %v1076, %v1072
        %v1309 = vpack.c.b16 %v1077, %v1073
        %v1310 = vpack.c.b16 %v1082, %v1078
        %v1311 = vpack.c.b16 %v1083, %v1079
        %v1312 = vpack.c.b16 %v1084, %v1080
        %v1313 = vpack.c.b16 %v1085, %v1081
        %v1314 = vpack.c.b16 %v1090, %v1086
        %v1315 = vpack.c.b16 %v1091, %v1087
        %v1316 = vpack.c.b16 %v1092, %v1088
        %v1317 = vpack.c.b16 %v1093, %v1089
        %v1318 = vpack.c.b16 %v1098, %v1094
        %v1319 = vpack.c.b16 %v1099, %v1095
        %v1320 = vpack.c.b16 %v1100, %v1096
        %v1321 = vpack.c.b16 %v1101, %v1097
        %v1322 = vpack.c.b16 %v1106, %v1102
        %v1323 = vpack.c.b16 %v1107, %v1103
        %v1324 = vpack.c.b16 %v1108, %v1104
        %v1325 = vpack.c.b16 %v1109, %v1105
        %v1326 = vpack.c.b16 %v1114, %v1110
        %v1327 = vpack.c.b16 %v1115, %v1111
        %v1328 = vpack.c.b16 %v1116, %v1112
        %v1329 = vpack.c.b16 %v1117, %v1113
        %v1330 = vpack.c.b16 %v1122, %v1118
        %v1331 = vpack.c.b16 %v1123, %v1119
        %v1332 = vpack.c.b16 %v1124, %v1120
        %v1333 = vpack.c.b16 %v1125, %v1121
        %v1334 = vpack.c.b16 %v1130, %v1126
        %v1335 = vpack.c.b16 %v1131, %v1127
        %v1336 = vpack.c.b16 %v1132, %v1128
        %v1337 = vpack.c.b16 %v1133, %v1129
        %v1338 = vpack.c.b16 %v1138, %v1134
        %v1339 = vpack.c.b16 %v1139, %v1135
        %v1340 = vpack.c.b16 %v1140, %v1136
        %v1341 = vpack.c.b16 %v1141, %v1137
        %v1342 = vpack.c.b16 %v1146, %v1142
        %v1343 = vpack.c.b16 %v1147, %v1143
        %v1344 = vpack.c.b16 %v1148, %v1144
        %v1345 = vpack.c.b16 %v1149, %v1145
        %v1346 = vpack.c.b16 %v1154, %v1150
        %v1347 = vpack.c.b16 %v1155, %v1151
        %v1348 = vpack.c.b16 %v1156, %v1152
        %v1349 = vpack.c.b16 %v1157, %v1153
        %v1350 = vpack.c.b16 %v1162, %v1158
        %v1351 = vpack.c.b16 %v1163, %v1159
        %v1352 = vpack.c.b16 %v1164, %v1160
        %v1353 = vpack.c.b16 %v1165, %v1161
        %v1354 = vpack.c.b16 %v1170, %v1166
        %v1355 = vpack.c.b16 %v1171, %v1167
        %v1356 = vpack.c.b16 %v1172, %v1168
        %v1357 = vpack.c.b16 %v1173, %v1169
        %v1358 = vpack.c.b16 %v1178, %v1174
        %v1359 = vpack.c.b16 %v1179, %v1175
        %v1360 = vpack.c.b16 %v1180, %v1176
        %v1361 = vpack.c.b16 %v1181, %v1177
        %v1362 = vpack.c.b16 %v1186, %v1182
        %v1363 = vpack.c.b16 %v1187, %v1183
        %v1364 = vpack.c.b16 %v1188, %v1184
        %v1365 = vpack.c.b16 %v1189, %v1185
        %v1366 = vpack.c.b16 %v1194, %v1190
        %v1367 = vpack.c.b16 %v1195, %v1191
        %v1368 = vpack.c.b16 %v1196, %v1192
        %v1369 = vpack.c.b16 %v1197, %v1193
        %v1370 = vpack.c.b16 %v1202, %v1198
        %v1371 = vpack.c.b16 %v1203, %v1199
        %v1372 = vpack.c.b16 %v1204, %v1200
        %v1373 = vpack.c.b16 %v1205, %v1201
        %v1374 = vpack.c.b16 %v1210, %v1206
        %v1375 = vpack.c.b16 %v1211, %v1207
        %v1376 = vpack.c.b16 %v1212, %v1208
        %v1377 = vpack.c.b16 %v1213, %v1209
        %v1378 = vpack.c.b16 %v1218, %v1214
        %v1379 = vpack.c.b16 %v1219, %v1215
        %v1380 = vpack.c.b16 %v1220, %v1216
        %v1381 = vpack.c.b16 %v1221, %v1217
        %v1382 = vpack.c.b16 %v1226, %v1222
        %v1383 = vpack.c.b16 %v1227, %v1223
        %v1384 = vpack.c.b16 %v1228, %v1224
        %v1385 = vpack.c.b16 %v1229, %v1225
        %v1386 = vpack.c.b16 %v1234, %v1230
        %v1387 = vpack.c.b16 %v1235, %v1231
        %v1388 = vpack.c.b16 %v1236, %v1232
        %v1389 = vpack.c.b16 %v1237, %v1233
        %v1390 = vpack.c.b16 %v1242, %v1238
        %v1391 = vpack.c.b16 %v1243, %v1239
        %v1392 = vpack.c.b16 %v1244, %v1240
        %v1393 = vpack.c.b16 %v1245, %v1241
        %v1394 = vpack.c.b16 %v1250, %v1246
        %v1395 = vpack.c.b16 %v1251, %v1247
        %v1396 = vpack.c.b16 %v1252, %v1248
        %v1397 = vpack.c.b16 %v1253, %v1249
        %v1398 = vpack.c.b16 %v1258, %v1254
        %v1399 = vpack.c.b16 %v1259, %v1255
        %v1400 = vpack.c.b16 %v1260, %v1256
        %v1401 = vpack.c.b16 %v1261, %v1257
        %v1402 = vpack.c.b16 %v1266, %v1262
        %v1403 = vpack.c.b16 %v1267, %v1263
        %v1404 = vpack.c.b16 %v1268, %v1264
        %v1405 = vpack.c.b16 %v1269, %v1265
        %v1406 = vpack.c.b16 %v1274, %v1270
        %v1407 = vpack.c.b16 %v1275, %v1271
        %v1408 = vpack.c.b16 %v1276, %v1272
        %v1409 = vpack.c.b16 %v1277, %v1273
        %v1410 = vpack.c.b16 %v1282, %v1278
        %v1411 = vpack.c.b16 %v1283, %v1279
        %v1412 = vpack.c.b16 %v1284, %v1280
        %v1413 = vpack.c.b16 %v1285, %v1281
        %v1606 = vunpack.c.l.b16 %v838
        %v1607 = vunpack.c.l.b16 %v839
        %v1608 = vunpack.c.l.b16 %v840
        %v1609 = vunpack.c.l.b16 %v841
        %v1610 = vunpack.c.l.b16 %v842
        %v1611 = vunpack.c.l.b16 %v843
        %v1612 = vunpack.c.l.b16 %v844
        %v1613 = vunpack.c.l.b16 %v845
        %v1614 = vunpack.c.l.b16 %v846
        %v1615 = vunpack.c.l.b16 %v847
        %v1616 = vunpack.c.l.b16 %v848
        %v1617 = vunpack.c.l.b16 %v849
        %v1618 = vunpack.c.l.b16 %v850
        %v1619 = vunpack.c.l.b16 %v851
        %v1620 = vunpack.c.l.b16 %v852
        %v1621 = vunpack.c.l.b16 %v853
        %v1622 = vunpack.c.l.b16 %v854
        %v1623 = vunpack.c.l.b16 %v855
        %v1624 = vunpack.c.l.b16 %v856
        %v1625 = vunpack.c.l.b16 %v857
        %v1626 = vunpack.c.l.b16 %v858
        %v1627 = vunpack.c.l.b16 %v859
        %v1628 = vunpack.c.l.b16 %v860
        %v1629 = vunpack.c.l.b16 %v861
        %v1630 = vunpack.c.l.b16 %v862
        %v1631 = vunpack.c.l.b16 %v863
        %v1632 = vunpack.c.l.b16 %v864
        %v1633 = vunpack.c.l.b16 %v865
        %v1634 = vunpack.c.l.b16 %v866
        %v1635 = vunpack.c.l.b16 %v867
        %v1636 = vunpack.c.l.b16 %v868
        %v1637 = vunpack.c.l.b16 %v869
        %v1638 = vunpack.c.l.b16 %v870
        %v1639 = vunpack.c.l.b16 %v871
        %v1640 = vunpack.c.l.b16 %v872
        %v1641 = vunpack.c.l.b16 %v873
        %v1642 = vunpack.c.l.b16 %v874
        %v1643 = vunpack.c.l.b16 %v875
        %v1644 = vunpack.c.l.b16 %v876
        %v1645 = vunpack.c.l.b16 %v877
        %v1646 = vunpack.c.l.b16 %v878
        %v1647 = vunpack.c.l.b16 %v879
        %v1648 = vunpack.c.l.b16 %v880
        %v1649 = vunpack.c.l.b16 %v881
        %v1650 = vunpack.c.l.b16 %v882
        %v1651 = vunpack.c.l.b16 %v883
        %v1652 = vunpack.c.l.b16 %v884
        %v1653 = vunpack.c.l.b16 %v885
        %v1654 = vunpack.c.l.b16 %v886
        %v1655 = vunpack.c.l.b16 %v887
        %v1656 = vunpack.c.l.b16 %v888
        %v1657 = vunpack.c.l.b16 %v889
        %v1658 = vunpack.c.l.b16 %v890
        %v1659 = vunpack.c.l.b16 %v891
        %v1660 = vunpack.c.l.b16 %v892
        %v1661 = vunpack.c.l.b16 %v893
        %v1662 = vunpack.c.l.b16 %v894
        %v1663 = vunpack.c.l.b16 %v895
        %v1664 = vunpack.c.l.b16 %v896
        %v1665 = vunpack.c.l.b16 %v897
        %v1666 = vunpack.c.l.b16 %v898
        %v1667 = vunpack.c.l.b16 %v899
        %v1668 = vunpack.c.l.b16 %v900
        %v1669 = vunpack.c.l.b16 %v901
        %v1670 = vpack.c.b16 %v1607, %v1606
        %v1671 = vpack.c.b16 %v1609, %v1608
        %v1672 = vpack.c.b16 %v1611, %v1610
        %v1673 = vpack.c.b16 %v1613, %v1612
        %v1674 = vpack.c.b16 %v1615, %v1614
        %v1675 = vpack.c.b16 %v1617, %v1616
        %v1676 = vpack.c.b16 %v1619, %v1618
        %v1677 = vpack.c.b16 %v1621, %v1620
        %v1678 = vpack.c.b16 %v1623, %v1622
        %v1679 = vpack.c.b16 %v1625, %v1624
        %v1680 = vpack.c.b16 %v1627, %v1626
        %v1681 = vpack.c.b16 %v1629, %v1628
        %v1682 = vpack.c.b16 %v1631, %v1630
        %v1683 = vpack.c.b16 %v1633, %v1632
        %v1684 = vpack.c.b16 %v1635, %v1634
        %v1685 = vpack.c.b16 %v1637, %v1636
        %v1686 = vpack.c.b16 %v1639, %v1638
        %v1687 = vpack.c.b16 %v1641, %v1640
        %v1688 = vpack.c.b16 %v1643, %v1642
        %v1689 = vpack.c.b16 %v1645, %v1644
        %v1690 = vpack.c.b16 %v1647, %v1646
        %v1691 = vpack.c.b16 %v1649, %v1648
        %v1692 = vpack.c.b16 %v1651, %v1650
        %v1693 = vpack.c.b16 %v1653, %v1652
        %v1694 = vpack.c.b16 %v1655, %v1654
        %v1695 = vpack.c.b16 %v1657, %v1656
        %v1696 = vpack.c.b16 %v1659, %v1658
        %v1697 = vpack.c.b16 %v1661, %v1660
        %v1698 = vpack.c.b16 %v1663, %v1662
        %v1699 = vpack.c.b16 %v1665, %v1664
        %v1700 = vpack.c.b16 %v1667, %v1666
        %v1701 = vpack.c.b16 %v1669, %v1668
        %1734 = vmatprep.subr.bf16.mxu0 0
        %1735 = vmatpush1.bf16.msra.mxu0 %v1677
        %1736 = vmatprep.subr.bf16.mxu0 0
        %1737 = vmatpush1.bf16.msra.mxu0 %v1676
        %1738 = vmatprep.subr.bf16.mxu0 0
        %1739 = vmatpush1.bf16.msra.mxu0 %v1675
        %1740 = vmatprep.subr.bf16.mxu0 0
        %1741 = vmatpush1.bf16.msra.mxu0 %v1674
        %1742 = vmatprep.subr.bf16.mxu0 0
        %1743 = vmatpush1.bf16.msra.mxu0 %v1673
        %1744 = vmatprep.subr.bf16.mxu0 0
        %1745 = vmatpush1.bf16.msra.mxu0 %v1672
        %1746 = vmatprep.subr.bf16.mxu0 0
        %1747 = vmatpush1.bf16.msra.mxu0 %v1671
        %1748 = vmatprep.subr.bf16.mxu0 0
        %1749 = vmatpush1.bf16.msra.mxu0 %v1670
        %1750 = vmatprep.subr.bf16.mxu0 0
        %1751 = vmatpush2.bf16.msra.mxu0 %v1685
        %1752 = vmatprep.subr.bf16.mxu0 0
        %1753 = vmatpush2.bf16.msra.mxu0 %v1684
        %1754 = vmatprep.subr.bf16.mxu0 0
        %1755 = vmatpush2.bf16.msra.mxu0 %v1683
        %1756 = vmatprep.subr.bf16.mxu0 0
        %1757 = vmatpush2.bf16.msra.mxu0 %v1682
        %1758 = vmatprep.subr.bf16.mxu0 0
        %1759 = vmatpush2.bf16.msra.mxu0 %v1681
        %1760 = vmatprep.subr.bf16.mxu0 0
        %1761 = vmatpush2.bf16.msra.mxu0 %v1680
        %1762 = vmatprep.subr.bf16.mxu0 0
        %1763 = vmatpush2.bf16.msra.mxu0 %v1679
        %1764 = vmatprep.subr.bf16.mxu0 0
        %1765 = vmatpush2.bf16.msra.mxu0 %v1678
        %1766 = vmatprep.mubr.bf16.mxu0 %v1287
        %1767 = vmatmul.mubr.bf16.gmra.mxu0 %v1286
        %v1768 = vpop.f32.mrf.mxu0
        %v1769 = vadd.f32 0.0, %v1768
        %v1770 = vpop.f32.mrf.mxu0
        %v1771 = vpop.f32.mrf.mxu0
        %v1772 = vadd.f32 0.0, %v1771
        %v1773 = vpop.f32.mrf.mxu0
        %1774 = vmatprep.mubr.bf16.mxu0 %v1291
        %1775 = vmatmul.mubr.bf16.gmra.mxu0 %v1290
        %v1776 = vpop.f32.mrf.mxu0
        %v1777 = vadd.f32 0.0, %v1776
        %v1778 = vpop.f32.mrf.mxu0
        %v1779 = vpop.f32.mrf.mxu0
        %v1780 = vadd.f32 0.0, %v1779
        %v1781 = vpop.f32.mrf.mxu0
        %1782 = vmatprep.mubr.bf16.mxu0 %v1295
        %1783 = vmatmul.mubr.bf16.gmra.mxu0 %v1294
        %v1784 = vpop.f32.mrf.mxu0
        %v1785 = vadd.f32 0.0, %v1784
        %v1786 = vpop.f32.mrf.mxu0
        %v1787 = vpop.f32.mrf.mxu0
        %v1788 = vadd.f32 0.0, %v1787
        %v1789 = vpop.f32.mrf.mxu0
        %1790 = vmatprep.mubr.bf16.mxu0 %v1299
        %1791 = vmatmul.mubr.bf16.gmra.mxu0 %v1298
        %v1792 = vpop.f32.mrf.mxu0
        %v1793 = vadd.f32 0.0, %v1792
        %v1794 = vpop.f32.mrf.mxu0
        %v1795 = vpop.f32.mrf.mxu0
        %v1796 = vadd.f32 0.0, %v1795
        %v1797 = vpop.f32.mrf.mxu0
        %1798 = vmatprep.mubr.bf16.mxu0 %v1303
        %1799 = vmatmul.mubr.bf16.gmra.mxu0 %v1302
        %v1800 = vpop.f32.mrf.mxu0
        %v1801 = vadd.f32 0.0, %v1800
        %v1802 = vpop.f32.mrf.mxu0
        %v1803 = vpop.f32.mrf.mxu0
        %v1804 = vadd.f32 0.0, %v1803
        %v1805 = vpop.f32.mrf.mxu0
        %1806 = vmatprep.mubr.bf16.mxu0 %v1307
        %1807 = vmatmul.mubr.bf16.gmra.mxu0 %v1306
        %v1808 = vpop.f32.mrf.mxu0
        %v1809 = vadd.f32 0.0, %v1808
        %v1810 = vpop.f32.mrf.mxu0
        %v1811 = vpop.f32.mrf.mxu0
        %v1812 = vadd.f32 0.0, %v1811
        %v1813 = vpop.f32.mrf.mxu0
        %1814 = vmatprep.mubr.bf16.mxu0 %v1311
        %1815 = vmatmul.mubr.bf16.gmra.mxu0 %v1310
        %v1816 = vpop.f32.mrf.mxu0
        %v1817 = vadd.f32 0.0, %v1816
        %v1818 = vpop.f32.mrf.mxu0
        %v1819 = vpop.f32.mrf.mxu0
        %v1820 = vadd.f32 0.0, %v1819
        %v1821 = vpop.f32.mrf.mxu0
        %1822 = vmatprep.mubr.bf16.mxu0 %v1315
        %1823 = vmatmul.mubr.bf16.gmra.mxu0 %v1314
        %v1824 = vpop.f32.mrf.mxu0
        %v1825 = vadd.f32 0.0, %v1824
        %v1826 = vpop.f32.mrf.mxu0
        %v1827 = vpop.f32.mrf.mxu0
        %v1828 = vadd.f32 0.0, %v1827
        %v1829 = vpop.f32.mrf.mxu0
        %1830 = vmatprep.mubr.bf16.mxu0 %v1319
        %1831 = vmatmul.mubr.bf16.gmra.mxu0 %v1318
        %v1832 = vpop.f32.mrf.mxu0
        %v1833 = vadd.f32 0.0, %v1832
        %v1834 = vpop.f32.mrf.mxu0
        %v1835 = vpop.f32.mrf.mxu0
        %v1836 = vadd.f32 0.0, %v1835
        %v1837 = vpop.f32.mrf.mxu0
        %1838 = vmatprep.mubr.bf16.mxu0 %v1323
        %1839 = vmatmul.mubr.bf16.gmra.mxu0 %v1322
        %v1840 = vpop.f32.mrf.mxu0
        %v1841 = vadd.f32 0.0, %v1840
        %v1842 = vpop.f32.mrf.mxu0
        %v1843 = vpop.f32.mrf.mxu0
        %v1844 = vadd.f32 0.0, %v1843
        %v1845 = vpop.f32.mrf.mxu0
        %1846 = vmatprep.mubr.bf16.mxu0 %v1327
        %1847 = vmatmul.mubr.bf16.gmra.mxu0 %v1326
        %v1848 = vpop.f32.mrf.mxu0
        %v1849 = vadd.f32 0.0, %v1848
        %v1850 = vpop.f32.mrf.mxu0
        %v1851 = vpop.f32.mrf.mxu0
        %v1852 = vadd.f32 0.0, %v1851
        %v1853 = vpop.f32.mrf.mxu0
        %1854 = vmatprep.mubr.bf16.mxu0 %v1331
        %1855 = vmatmul.mubr.bf16.gmra.mxu0 %v1330
        %v1856 = vpop.f32.mrf.mxu0
        %v1857 = vadd.f32 0.0, %v1856
        %v1858 = vpop.f32.mrf.mxu0
        %v1859 = vpop.f32.mrf.mxu0
        %v1860 = vadd.f32 0.0, %v1859
        %v1861 = vpop.f32.mrf.mxu0
        %1862 = vmatprep.mubr.bf16.mxu0 %v1335
        %1863 = vmatmul.mubr.bf16.gmra.mxu0 %v1334
        %v1864 = vpop.f32.mrf.mxu0
        %v1865 = vadd.f32 0.0, %v1864
        %v1866 = vpop.f32.mrf.mxu0
        %v1867 = vpop.f32.mrf.mxu0
        %v1868 = vadd.f32 0.0, %v1867
        %v1869 = vpop.f32.mrf.mxu0
        %1870 = vmatprep.mubr.bf16.mxu0 %v1339
        %1871 = vmatmul.mubr.bf16.gmra.mxu0 %v1338
        %v1872 = vpop.f32.mrf.mxu0
        %v1873 = vadd.f32 0.0, %v1872
        %v1874 = vpop.f32.mrf.mxu0
        %v1875 = vpop.f32.mrf.mxu0
        %v1876 = vadd.f32 0.0, %v1875
        %v1877 = vpop.f32.mrf.mxu0
        %1878 = vmatprep.mubr.bf16.mxu0 %v1343
        %1879 = vmatmul.mubr.bf16.gmra.mxu0 %v1342
        %v1880 = vpop.f32.mrf.mxu0
        %v1881 = vadd.f32 0.0, %v1880
        %v1882 = vpop.f32.mrf.mxu0
        %v1883 = vpop.f32.mrf.mxu0
        %v1884 = vadd.f32 0.0, %v1883
        %v1885 = vpop.f32.mrf.mxu0
        %1886 = vmatprep.mubr.bf16.mxu0 %v1347
        %1887 = vmatmul.mubr.bf16.gmra.mxu0 %v1346
        %v1888 = vpop.f32.mrf.mxu0
        %v1889 = vadd.f32 0.0, %v1888
        %v1890 = vpop.f32.mrf.mxu0
        %v1891 = vpop.f32.mrf.mxu0
        %v1892 = vadd.f32 0.0, %v1891
        %v1893 = vpop.f32.mrf.mxu0
        %1894 = vmatprep.mubr.bf16.mxu0 %v1351
        %1895 = vmatmul.mubr.bf16.gmra.mxu0 %v1350
        %v1896 = vpop.f32.mrf.mxu0
        %v1897 = vadd.f32 0.0, %v1896
        %v1898 = vpop.f32.mrf.mxu0
        %v1899 = vpop.f32.mrf.mxu0
        %v1900 = vadd.f32 0.0, %v1899
        %v1901 = vpop.f32.mrf.mxu0
        %1902 = vmatprep.mubr.bf16.mxu0 %v1355
        %1903 = vmatmul.mubr.bf16.gmra.mxu0 %v1354
        %v1904 = vpop.f32.mrf.mxu0
        %v1905 = vadd.f32 0.0, %v1904
        %v1906 = vpop.f32.mrf.mxu0
        %v1907 = vpop.f32.mrf.mxu0
        %v1908 = vadd.f32 0.0, %v1907
        %v1909 = vpop.f32.mrf.mxu0
        %1910 = vmatprep.mubr.bf16.mxu0 %v1359
        %1911 = vmatmul.mubr.bf16.gmra.mxu0 %v1358
        %v1912 = vpop.f32.mrf.mxu0
        %v1913 = vadd.f32 0.0, %v1912
        %v1914 = vpop.f32.mrf.mxu0
        %v1915 = vpop.f32.mrf.mxu0
        %v1916 = vadd.f32 0.0, %v1915
        %v1917 = vpop.f32.mrf.mxu0
        %1918 = vmatprep.mubr.bf16.mxu0 %v1363
        %1919 = vmatmul.mubr.bf16.gmra.mxu0 %v1362
        %v1920 = vpop.f32.mrf.mxu0
        %v1921 = vadd.f32 0.0, %v1920
        %v1922 = vpop.f32.mrf.mxu0
        %v1923 = vpop.f32.mrf.mxu0
        %v1924 = vadd.f32 0.0, %v1923
        %v1925 = vpop.f32.mrf.mxu0
        %1926 = vmatprep.mubr.bf16.mxu0 %v1367
        %1927 = vmatmul.mubr.bf16.gmra.mxu0 %v1366
        %v1928 = vpop.f32.mrf.mxu0
        %v1929 = vadd.f32 0.0, %v1928
        %v1930 = vpop.f32.mrf.mxu0
        %v1931 = vpop.f32.mrf.mxu0
        %v1932 = vadd.f32 0.0, %v1931
        %v1933 = vpop.f32.mrf.mxu0
        %1934 = vmatprep.mubr.bf16.mxu0 %v1371
        %1935 = vmatmul.mubr.bf16.gmra.mxu0 %v1370
        %v1936 = vpop.f32.mrf.mxu0
        %v1937 = vadd.f32 0.0, %v1936
        %v1938 = vpop.f32.mrf.mxu0
        %v1939 = vpop.f32.mrf.mxu0
        %v1940 = vadd.f32 0.0, %v1939
        %v1941 = vpop.f32.mrf.mxu0
        %1942 = vmatprep.mubr.bf16.mxu0 %v1375
        %1943 = vmatmul.mubr.bf16.gmra.mxu0 %v1374
        %v1944 = vpop.f32.mrf.mxu0
        %v1945 = vadd.f32 0.0, %v1944
        %v1946 = vpop.f32.mrf.mxu0
        %v1947 = vpop.f32.mrf.mxu0
        %v1948 = vadd.f32 0.0, %v1947
        %v1949 = vpop.f32.mrf.mxu0
        %1950 = vmatprep.mubr.bf16.mxu0 %v1379
        %1951 = vmatmul.mubr.bf16.gmra.mxu0 %v1378
        %v1952 = vpop.f32.mrf.mxu0
        %v1953 = vadd.f32 0.0, %v1952
        %v1954 = vpop.f32.mrf.mxu0
        %v1955 = vpop.f32.mrf.mxu0
        %v1956 = vadd.f32 0.0, %v1955
        %v1957 = vpop.f32.mrf.mxu0
        %1958 = vmatprep.mubr.bf16.mxu0 %v1383
        %1959 = vmatmul.mubr.bf16.gmra.mxu0 %v1382
        %v1960 = vpop.f32.mrf.mxu0
        %v1961 = vadd.f32 0.0, %v1960
        %v1962 = vpop.f32.mrf.mxu0
        %v1963 = vpop.f32.mrf.mxu0
        %v1964 = vadd.f32 0.0, %v1963
        %v1965 = vpop.f32.mrf.mxu0
        %1966 = vmatprep.mubr.bf16.mxu0 %v1387
        %1967 = vmatmul.mubr.bf16.gmra.mxu0 %v1386
        %v1968 = vpop.f32.mrf.mxu0
        %v1969 = vadd.f32 0.0, %v1968
        %v1970 = vpop.f32.mrf.mxu0
        %v1971 = vpop.f32.mrf.mxu0
        %v1972 = vadd.f32 0.0, %v1971
        %v1973 = vpop.f32.mrf.mxu0
        %1974 = vmatprep.mubr.bf16.mxu0 %v1391
        %1975 = vmatmul.mubr.bf16.gmra.mxu0 %v1390
        %v1976 = vpop.f32.mrf.mxu0
        %v1977 = vadd.f32 0.0, %v1976
        %v1978 = vpop.f32.mrf.mxu0
        %v1979 = vpop.f32.mrf.mxu0
        %v1980 = vadd.f32 0.0, %v1979
        %v1981 = vpop.f32.mrf.mxu0
        %1982 = vmatprep.mubr.bf16.mxu0 %v1395
        %1983 = vmatmul.mubr.bf16.gmra.mxu0 %v1394
        %v1984 = vpop.f32.mrf.mxu0
        %v1985 = vadd.f32 0.0, %v1984
        %v1986 = vpop.f32.mrf.mxu0
        %v1987 = vpop.f32.mrf.mxu0
        %v1988 = vadd.f32 0.0, %v1987
        %v1989 = vpop.f32.mrf.mxu0
        %1990 = vmatprep.mubr.bf16.mxu0 %v1399
        %1991 = vmatmul.mubr.bf16.gmra.mxu0 %v1398
        %v1992 = vpop.f32.mrf.mxu0
        %v1993 = vadd.f32 0.0, %v1992
        %v1994 = vpop.f32.mrf.mxu0
        %v1995 = vpop.f32.mrf.mxu0
        %v1996 = vadd.f32 0.0, %v1995
        %v1997 = vpop.f32.mrf.mxu0
        %1998 = vmatprep.mubr.bf16.mxu0 %v1403
        %1999 = vmatmul.mubr.bf16.gmra.mxu0 %v1402
        %v2000 = vpop.f32.mrf.mxu0
        %v2001 = vadd.f32 0.0, %v2000
        %v2002 = vpop.f32.mrf.mxu0
        %v2003 = vpop.f32.mrf.mxu0
        %v2004 = vadd.f32 0.0, %v2003
        %v2005 = vpop.f32.mrf.mxu0
        %2006 = vmatprep.mubr.bf16.mxu0 %v1407
        %2007 = vmatmul.mubr.bf16.gmra.mxu0 %v1406
        %v2008 = vpop.f32.mrf.mxu0
        %v2009 = vadd.f32 0.0, %v2008
        %v2010 = vpop.f32.mrf.mxu0
        %v2011 = vpop.f32.mrf.mxu0
        %v2012 = vadd.f32 0.0, %v2011
        %v2013 = vpop.f32.mrf.mxu0
        %2014 = vmatprep.mubr.bf16.mxu0 %v1411
        %2015 = vmatmul.mubr.bf16.gmra.mxu0 %v1410
        %v2016 = vpop.f32.mrf.mxu0
        %v2017 = vadd.f32 0.0, %v2016
        %v2018 = vpop.f32.mrf.mxu0
        %v2019 = vpop.f32.mrf.mxu0
        %v2020 = vadd.f32 0.0, %v2019
        %v2021 = vpop.f32.mrf.mxu0
        %2022 = vdwg.mxu0
        %2023 = vmatprep.subr.bf16.mxu0 0
        %2024 = vmatpush1.bf16.msra.mxu0 %v1693
        %2025 = vmatprep.subr.bf16.mxu0 0
        %2026 = vmatpush1.bf16.msra.mxu0 %v1692
        %2027 = vmatprep.subr.bf16.mxu0 0
        %2028 = vmatpush1.bf16.msra.mxu0 %v1691
        %2029 = vmatprep.subr.bf16.mxu0 0
        %2030 = vmatpush1.bf16.msra.mxu0 %v1690
        %2031 = vmatprep.subr.bf16.mxu0 0
        %2032 = vmatpush1.bf16.msra.mxu0 %v1689
        %2033 = vmatprep.subr.bf16.mxu0 0
        %2034 = vmatpush1.bf16.msra.mxu0 %v1688
        %2035 = vmatprep.subr.bf16.mxu0 0
        %2036 = vmatpush1.bf16.msra.mxu0 %v1687
        %2037 = vmatprep.subr.bf16.mxu0 0
        %2038 = vmatpush1.bf16.msra.mxu0 %v1686
        %2039 = vmatprep.subr.bf16.mxu0 0
        %2040 = vmatpush2.bf16.msra.mxu0 %v1701
        %2041 = vmatprep.subr.bf16.mxu0 0
        %2042 = vmatpush2.bf16.msra.mxu0 %v1700
        %2043 = vmatprep.subr.bf16.mxu0 0
        %2044 = vmatpush2.bf16.msra.mxu0 %v1699
        %2045 = vmatprep.subr.bf16.mxu0 0
        %2046 = vmatpush2.bf16.msra.mxu0 %v1698
        %2047 = vmatprep.subr.bf16.mxu0 0
        %2048 = vmatpush2.bf16.msra.mxu0 %v1697
        %2049 = vmatprep.subr.bf16.mxu0 0
        %2050 = vmatpush2.bf16.msra.mxu0 %v1696
        %2051 = vmatprep.subr.bf16.mxu0 0
        %2052 = vmatpush2.bf16.msra.mxu0 %v1695
        %2053 = vmatprep.subr.bf16.mxu0 0
        %2054 = vmatpush2.bf16.msra.mxu0 %v1694
        %2055 = vmatprep.mubr.bf16.mxu0 %v1289
        %2056 = vmatmul.mubr.bf16.gmra.mxu0 %v1288
        %v2057 = vpop.f32.mrf.mxu0
        %v2058 = vadd.f32 %v1769, %v2057
        %v2059 = vpop.f32.mrf.mxu0
        %v2060 = vpop.f32.mrf.mxu0
        %v2061 = vadd.f32 %v1772, %v2060
        %v2062 = vpop.f32.mrf.mxu0
        %2063 = vmatprep.mubr.bf16.mxu0 %v1293
        %2064 = vmatmul.mubr.bf16.gmra.mxu0 %v1292
        %v2065 = vpop.f32.mrf.mxu0
        %v2066 = vadd.f32 %v1777, %v2065
        %v2067 = vpop.f32.mrf.mxu0
        %v2068 = vpop.f32.mrf.mxu0
        %v2069 = vadd.f32 %v1780, %v2068
        %v2070 = vpop.f32.mrf.mxu0
        %2071 = vmatprep.mubr.bf16.mxu0 %v1297
        %2072 = vmatmul.mubr.bf16.gmra.mxu0 %v1296
        %v2073 = vpop.f32.mrf.mxu0
        %v2074 = vadd.f32 %v1785, %v2073
        %v2075 = vpop.f32.mrf.mxu0
        %v2076 = vpop.f32.mrf.mxu0
        %v2077 = vadd.f32 %v1788, %v2076
        %v2078 = vpop.f32.mrf.mxu0
        %2079 = vmatprep.mubr.bf16.mxu0 %v1301
        %2080 = vmatmul.mubr.bf16.gmra.mxu0 %v1300
        %v2081 = vpop.f32.mrf.mxu0
        %v2082 = vadd.f32 %v1793, %v2081
        %v2083 = vpop.f32.mrf.mxu0
        %v2084 = vpop.f32.mrf.mxu0
        %v2085 = vadd.f32 %v1796, %v2084
        %v2086 = vpop.f32.mrf.mxu0
        %2087 = vmatprep.mubr.bf16.mxu0 %v1305
        %2088 = vmatmul.mubr.bf16.gmra.mxu0 %v1304
        %v2089 = vpop.f32.mrf.mxu0
        %v2090 = vadd.f32 %v1801, %v2089
        %v2091 = vpop.f32.mrf.mxu0
        %v2092 = vpop.f32.mrf.mxu0
        %v2093 = vadd.f32 %v1804, %v2092
        %v2094 = vpop.f32.mrf.mxu0
        %2095 = vmatprep.mubr.bf16.mxu0 %v1309
        %2096 = vmatmul.mubr.bf16.gmra.mxu0 %v1308
        %v2097 = vpop.f32.mrf.mxu0
        %v2098 = vadd.f32 %v1809, %v2097
        %v2099 = vpop.f32.mrf.mxu0
        %v2100 = vpop.f32.mrf.mxu0
        %v2101 = vadd.f32 %v1812, %v2100
        %v2102 = vpop.f32.mrf.mxu0
        %2103 = vmatprep.mubr.bf16.mxu0 %v1313
        %2104 = vmatmul.mubr.bf16.gmra.mxu0 %v1312
        %v2105 = vpop.f32.mrf.mxu0
        %v2106 = vadd.f32 %v1817, %v2105
        %v2107 = vpop.f32.mrf.mxu0
        %v2108 = vpop.f32.mrf.mxu0
        %v2109 = vadd.f32 %v1820, %v2108
        %v2110 = vpop.f32.mrf.mxu0
        %2111 = vmatprep.mubr.bf16.mxu0 %v1317
        %2112 = vmatmul.mubr.bf16.gmra.mxu0 %v1316
        %v2113 = vpop.f32.mrf.mxu0
        %v2114 = vadd.f32 %v1825, %v2113
        %v2115 = vpop.f32.mrf.mxu0
        %v2116 = vpop.f32.mrf.mxu0
        %v2117 = vadd.f32 %v1828, %v2116
        %v2118 = vpop.f32.mrf.mxu0
        %2119 = vmatprep.mubr.bf16.mxu0 %v1321
        %2120 = vmatmul.mubr.bf16.gmra.mxu0 %v1320
        %v2121 = vpop.f32.mrf.mxu0
        %v2122 = vadd.f32 %v1833, %v2121
        %v2123 = vpop.f32.mrf.mxu0
        %v2124 = vpop.f32.mrf.mxu0
        %v2125 = vadd.f32 %v1836, %v2124
        %v2126 = vpop.f32.mrf.mxu0
        %2127 = vmatprep.mubr.bf16.mxu0 %v1325
        %2128 = vmatmul.mubr.bf16.gmra.mxu0 %v1324
        %v2129 = vpop.f32.mrf.mxu0
        %v2130 = vadd.f32 %v1841, %v2129
        %v2131 = vpop.f32.mrf.mxu0
        %v2132 = vpop.f32.mrf.mxu0
        %v2133 = vadd.f32 %v1844, %v2132
        %v2134 = vpop.f32.mrf.mxu0
        %2135 = vmatprep.mubr.bf16.mxu0 %v1329
        %2136 = vmatmul.mubr.bf16.gmra.mxu0 %v1328
        %v2137 = vpop.f32.mrf.mxu0
        %v2138 = vadd.f32 %v1849, %v2137
        %v2139 = vpop.f32.mrf.mxu0
        %v2140 = vpop.f32.mrf.mxu0
        %v2141 = vadd.f32 %v1852, %v2140
        %v2142 = vpop.f32.mrf.mxu0
        %2143 = vmatprep.mubr.bf16.mxu0 %v1333
        %2144 = vmatmul.mubr.bf16.gmra.mxu0 %v1332
        %v2145 = vpop.f32.mrf.mxu0
        %v2146 = vadd.f32 %v1857, %v2145
        %v2147 = vpop.f32.mrf.mxu0
        %v2148 = vpop.f32.mrf.mxu0
        %v2149 = vadd.f32 %v1860, %v2148
        %v2150 = vpop.f32.mrf.mxu0
        %2151 = vmatprep.mubr.bf16.mxu0 %v1337
        %2152 = vmatmul.mubr.bf16.gmra.mxu0 %v1336
        %v2153 = vpop.f32.mrf.mxu0
        %v2154 = vadd.f32 %v1865, %v2153
        %v2155 = vpop.f32.mrf.mxu0
        %v2156 = vpop.f32.mrf.mxu0
        %v2157 = vadd.f32 %v1868, %v2156
        %v2158 = vpop.f32.mrf.mxu0
        %2159 = vmatprep.mubr.bf16.mxu0 %v1341
        %2160 = vmatmul.mubr.bf16.gmra.mxu0 %v1340
        %v2161 = vpop.f32.mrf.mxu0
        %v2162 = vadd.f32 %v1873, %v2161
        %v2163 = vpop.f32.mrf.mxu0
        %v2164 = vpop.f32.mrf.mxu0
        %v2165 = vadd.f32 %v1876, %v2164
        %v2166 = vpop.f32.mrf.mxu0
        %2167 = vmatprep.mubr.bf16.mxu0 %v1345
        %2168 = vmatmul.mubr.bf16.gmra.mxu0 %v1344
        %v2169 = vpop.f32.mrf.mxu0
        %v2170 = vadd.f32 %v1881, %v2169
        %v2171 = vpop.f32.mrf.mxu0
        %v2172 = vpop.f32.mrf.mxu0
        %v2173 = vadd.f32 %v1884, %v2172
        %v2174 = vpop.f32.mrf.mxu0
        %2175 = vmatprep.mubr.bf16.mxu0 %v1349
        %2176 = vmatmul.mubr.bf16.gmra.mxu0 %v1348
        %v2177 = vpop.f32.mrf.mxu0
        %v2178 = vadd.f32 %v1889, %v2177
        %v2179 = vpop.f32.mrf.mxu0
        %v2180 = vpop.f32.mrf.mxu0
        %v2181 = vadd.f32 %v1892, %v2180
        %v2182 = vpop.f32.mrf.mxu0
        %2183 = vmatprep.mubr.bf16.mxu0 %v1353
        %2184 = vmatmul.mubr.bf16.gmra.mxu0 %v1352
        %v2185 = vpop.f32.mrf.mxu0
        %v2186 = vadd.f32 %v1897, %v2185
        %v2187 = vpop.f32.mrf.mxu0
        %v2188 = vpop.f32.mrf.mxu0
        %v2189 = vadd.f32 %v1900, %v2188
        %v2190 = vpop.f32.mrf.mxu0
        %2191 = vmatprep.mubr.bf16.mxu0 %v1357
        %2192 = vmatmul.mubr.bf16.gmra.mxu0 %v1356
        %v2193 = vpop.f32.mrf.mxu0
        %v2194 = vadd.f32 %v1905, %v2193
        %v2195 = vpop.f32.mrf.mxu0
        %v2196 = vpop.f32.mrf.mxu0
        %v2197 = vadd.f32 %v1908, %v2196
        %v2198 = vpop.f32.mrf.mxu0
        %2199 = vmatprep.mubr.bf16.mxu0 %v1361
        %2200 = vmatmul.mubr.bf16.gmra.mxu0 %v1360
        %v2201 = vpop.f32.mrf.mxu0
        %v2202 = vadd.f32 %v1913, %v2201
        %v2203 = vpop.f32.mrf.mxu0
        %v2204 = vpop.f32.mrf.mxu0
        %v2205 = vadd.f32 %v1916, %v2204
        %v2206 = vpop.f32.mrf.mxu0
        %2207 = vmatprep.mubr.bf16.mxu0 %v1365
        %2208 = vmatmul.mubr.bf16.gmra.mxu0 %v1364
        %v2209 = vpop.f32.mrf.mxu0
        %v2210 = vadd.f32 %v1921, %v2209
        %v2211 = vpop.f32.mrf.mxu0
        %v2212 = vpop.f32.mrf.mxu0
        %v2213 = vadd.f32 %v1924, %v2212
        %v2214 = vpop.f32.mrf.mxu0
        %2215 = vmatprep.mubr.bf16.mxu0 %v1369
        %2216 = vmatmul.mubr.bf16.gmra.mxu0 %v1368
        %v2217 = vpop.f32.mrf.mxu0
        %v2218 = vadd.f32 %v1929, %v2217
        %v2219 = vpop.f32.mrf.mxu0
        %v2220 = vpop.f32.mrf.mxu0
        %v2221 = vadd.f32 %v1932, %v2220
        %v2222 = vpop.f32.mrf.mxu0
        %2223 = vmatprep.mubr.bf16.mxu0 %v1373
        %2224 = vmatmul.mubr.bf16.gmra.mxu0 %v1372
        %v2225 = vpop.f32.mrf.mxu0
        %v2226 = vadd.f32 %v1937, %v2225
        %v2227 = vpop.f32.mrf.mxu0
        %v2228 = vpop.f32.mrf.mxu0
        %v2229 = vadd.f32 %v1940, %v2228
        %v2230 = vpop.f32.mrf.mxu0
        %2231 = vmatprep.mubr.bf16.mxu0 %v1377
        %2232 = vmatmul.mubr.bf16.gmra.mxu0 %v1376
        %v2233 = vpop.f32.mrf.mxu0
        %v2234 = vadd.f32 %v1945, %v2233
        %v2235 = vpop.f32.mrf.mxu0
        %v2236 = vpop.f32.mrf.mxu0
        %v2237 = vadd.f32 %v1948, %v2236
        %v2238 = vpop.f32.mrf.mxu0
        %2239 = vmatprep.mubr.bf16.mxu0 %v1381
        %2240 = vmatmul.mubr.bf16.gmra.mxu0 %v1380
        %v2241 = vpop.f32.mrf.mxu0
        %v2242 = vadd.f32 %v1953, %v2241
        %v2243 = vpop.f32.mrf.mxu0
        %v2244 = vpop.f32.mrf.mxu0
        %v2245 = vadd.f32 %v1956, %v2244
        %v2246 = vpop.f32.mrf.mxu0
        %2247 = vmatprep.mubr.bf16.mxu0 %v1385
        %2248 = vmatmul.mubr.bf16.gmra.mxu0 %v1384
        %v2249 = vpop.f32.mrf.mxu0
        %v2250 = vadd.f32 %v1961, %v2249
        %v2251 = vpop.f32.mrf.mxu0
        %v2252 = vpop.f32.mrf.mxu0
        %v2253 = vadd.f32 %v1964, %v2252
        %v2254 = vpop.f32.mrf.mxu0
        %2255 = vmatprep.mubr.bf16.mxu0 %v1389
        %2256 = vmatmul.mubr.bf16.gmra.mxu0 %v1388
        %v2257 = vpop.f32.mrf.mxu0
        %v2258 = vadd.f32 %v1969, %v2257
        %v2259 = vpop.f32.mrf.mxu0
        %v2260 = vpop.f32.mrf.mxu0
        %v2261 = vadd.f32 %v1972, %v2260
        %v2262 = vpop.f32.mrf.mxu0
        %2263 = vmatprep.mubr.bf16.mxu0 %v1393
        %2264 = vmatmul.mubr.bf16.gmra.mxu0 %v1392
        %v2265 = vpop.f32.mrf.mxu0
        %v2266 = vadd.f32 %v1977, %v2265
        %v2267 = vpop.f32.mrf.mxu0
        %v2268 = vpop.f32.mrf.mxu0
        %v2269 = vadd.f32 %v1980, %v2268
        %v2270 = vpop.f32.mrf.mxu0
        %2271 = vmatprep.mubr.bf16.mxu0 %v1397
        %2272 = vmatmul.mubr.bf16.gmra.mxu0 %v1396
        %v2273 = vpop.f32.mrf.mxu0
        %v2274 = vadd.f32 %v1985, %v2273
        %v2275 = vpop.f32.mrf.mxu0
        %v2276 = vpop.f32.mrf.mxu0
        %v2277 = vadd.f32 %v1988, %v2276
        %v2278 = vpop.f32.mrf.mxu0
        %2279 = vmatprep.mubr.bf16.mxu0 %v1401
        %2280 = vmatmul.mubr.bf16.gmra.mxu0 %v1400
        %v2281 = vpop.f32.mrf.mxu0
        %v2282 = vadd.f32 %v1993, %v2281
        %v2283 = vpop.f32.mrf.mxu0
        %v2284 = vpop.f32.mrf.mxu0
        %v2285 = vadd.f32 %v1996, %v2284
        %v2286 = vpop.f32.mrf.mxu0
        %2287 = vmatprep.mubr.bf16.mxu0 %v1405
        %2288 = vmatmul.mubr.bf16.gmra.mxu0 %v1404
        %v2289 = vpop.f32.mrf.mxu0
        %v2290 = vadd.f32 %v2001, %v2289
        %v2291 = vpop.f32.mrf.mxu0
        %v2292 = vpop.f32.mrf.mxu0
        %v2293 = vadd.f32 %v2004, %v2292
        %v2294 = vpop.f32.mrf.mxu0
        %2295 = vmatprep.mubr.bf16.mxu0 %v1409
        %2296 = vmatmul.mubr.bf16.gmra.mxu0 %v1408
        %v2297 = vpop.f32.mrf.mxu0
        %v2298 = vadd.f32 %v2009, %v2297
        %v2299 = vpop.f32.mrf.mxu0
        %v2300 = vpop.f32.mrf.mxu0
        %v2301 = vadd.f32 %v2012, %v2300
        %v2302 = vpop.f32.mrf.mxu0
        %2303 = vmatprep.mubr.bf16.mxu0 %v1413
        %2304 = vmatmul.mubr.bf16.gmra.mxu0 %v1412
        %v2305 = vpop.f32.mrf.mxu0
        %v2306 = vadd.f32 %v2017, %v2305
        %v2307 = vpop.f32.mrf.mxu0
        %v2308 = vpop.f32.mrf.mxu0
        %v2309 = vadd.f32 %v2020, %v2308
        %v2310 = vpop.f32.mrf.mxu0
        %2311 = vdwg.mxu0
        %v2312 = vadd.f32 %v646, %v2058
        %v2313 = vadd.f32 %v647, %v2061
        %v2314 = vadd.f32 %v648, %v2066
        %v2315 = vadd.f32 %v649, %v2069
        %v2316 = vadd.f32 %v650, %v2074
        %v2317 = vadd.f32 %v651, %v2077
        %v2318 = vadd.f32 %v652, %v2082
        %v2319 = vadd.f32 %v653, %v2085
        %v2320 = vadd.f32 %v654, %v2090
        %v2321 = vadd.f32 %v655, %v2093
        %v2322 = vadd.f32 %v656, %v2098
        %v2323 = vadd.f32 %v657, %v2101
        %v2324 = vadd.f32 %v658, %v2106
        %v2325 = vadd.f32 %v659, %v2109
        %v2326 = vadd.f32 %v660, %v2114
        %v2327 = vadd.f32 %v661, %v2117
        %v2328 = vadd.f32 %v662, %v2122
        %v2329 = vadd.f32 %v663, %v2125
        %v2330 = vadd.f32 %v664, %v2130
        %v2331 = vadd.f32 %v665, %v2133
        %v2332 = vadd.f32 %v666, %v2138
        %v2333 = vadd.f32 %v667, %v2141
        %v2334 = vadd.f32 %v668, %v2146
        %v2335 = vadd.f32 %v669, %v2149
        %v2336 = vadd.f32 %v670, %v2154
        %v2337 = vadd.f32 %v671, %v2157
        %v2338 = vadd.f32 %v672, %v2162
        %v2339 = vadd.f32 %v673, %v2165
        %v2340 = vadd.f32 %v674, %v2170
        %v2341 = vadd.f32 %v675, %v2173
        %v2342 = vadd.f32 %v676, %v2178
        %v2343 = vadd.f32 %v677, %v2181
        %v2344 = vadd.f32 %v678, %v2186
        %v2345 = vadd.f32 %v679, %v2189
        %v2346 = vadd.f32 %v680, %v2194
        %v2347 = vadd.f32 %v681, %v2197
        %v2348 = vadd.f32 %v682, %v2202
        %v2349 = vadd.f32 %v683, %v2205
        %v2350 = vadd.f32 %v684, %v2210
        %v2351 = vadd.f32 %v685, %v2213
        %v2352 = vadd.f32 %v686, %v2218
        %v2353 = vadd.f32 %v687, %v2221
        %v2354 = vadd.f32 %v688, %v2226
        %v2355 = vadd.f32 %v689, %v2229
        %v2356 = vadd.f32 %v690, %v2234
        %v2357 = vadd.f32 %v691, %v2237
        %v2358 = vadd.f32 %v692, %v2242
        %v2359 = vadd.f32 %v693, %v2245
        %v2360 = vadd.f32 %v694, %v2250
        %v2361 = vadd.f32 %v695, %v2253
        %v2362 = vadd.f32 %v696, %v2258
        %v2363 = vadd.f32 %v697, %v2261
        %v2364 = vadd.f32 %v698, %v2266
        %v2365 = vadd.f32 %v699, %v2269
        %v2366 = vadd.f32 %v700, %v2274
        %v2367 = vadd.f32 %v701, %v2277
        %v2368 = vadd.f32 %v702, %v2282
        %v2369 = vadd.f32 %v703, %v2285
        %v2370 = vadd.f32 %v704, %v2290
        %v2371 = vadd.f32 %v705, %v2293
        %v2372 = vadd.f32 %v706, %v2298
        %v2373 = vadd.f32 %v707, %v2301
        %v2374 = vadd.f32 %v708, %v2306
        %v2375 = vadd.f32 %v709, %v2309
        %2376 = vst [vmem:[#allocation2] sm:$0xff] %v2312
        %2377 = vst [vmem:[#allocation2 + $0x8] sm:$0xff] %v2313
        %2378 = vst [vmem:[#allocation2 + $0x10] sm:$0xff] %v2314
        %2379 = vst [vmem:[#allocation2 + $0x18] sm:$0xff] %v2315
        %2380 = vst [vmem:[#allocation2 + $0x20] sm:$0xff] %v2316
        %2381 = vst [vmem:[#allocation2 + $0x28] sm:$0xff] %v2317
        %2382 = vst [vmem:[#allocation2 + $0x30] sm:$0xff] %v2318
        %2383 = vst [vmem:[#allocation2 + $0x38] sm:$0xff] %v2319
        %2384 = vst [vmem:[#allocation2 + $0x40] sm:$0xff] %v2320
        %2385 = vst [vmem:[#allocation2 + $0x48] sm:$0xff] %v2321
        %2386 = vst [vmem:[#allocation2 + $0x50] sm:$0xff] %v2322
        %2387 = vst [vmem:[#allocation2 + $0x58] sm:$0xff] %v2323
        %2388 = vst [vmem:[#allocation2 + $0x60] sm:$0xff] %v2324
        %2389 = vst [vmem:[#allocation2 + $0x68] sm:$0xff] %v2325
        %2390 = vst [vmem:[#allocation2 + $0x70] sm:$0xff] %v2326
        %2391 = vst [vmem:[#allocation2 + $0x78] sm:$0xff] %v2327
        %2392 = vst [vmem:[#allocation2 + $0x80] sm:$0xff] %v2328
        %2393 = vst [vmem:[#allocation2 + $0x88] sm:$0xff] %v2329
        %2394 = vst [vmem:[#allocation2 + $0x90] sm:$0xff] %v2330
        %2395 = vst [vmem:[#allocation2 + $0x98] sm:$0xff] %v2331
        %2396 = vst [vmem:[#allocation2 + $0xa0] sm:$0xff] %v2332
        %2397 = vst [vmem:[#allocation2 + $0xa8] sm:$0xff] %v2333
        %2398 = vst [vmem:[#allocation2 + $0xb0] sm:$0xff] %v2334
        %2399 = vst [vmem:[#allocation2 + $0xb8] sm:$0xff] %v2335
        %2400 = vst [vmem:[#allocation2 + $0xc0] sm:$0xff] %v2336
        %2401 = vst [vmem:[#allocation2 + $0xc8] sm:$0xff] %v2337
        %2402 = vst [vmem:[#allocation2 + $0xd0] sm:$0xff] %v2338
        %2403 = vst [vmem:[#allocation2 + $0xd8] sm:$0xff] %v2339
        %2404 = vst [vmem:[#allocation2 + $0xe0] sm:$0xff] %v2340
        %2405 = vst [vmem:[#allocation2 + $0xe8] sm:$0xff] %v2341
        %2406 = vst [vmem:[#allocation2 + $0xf0] sm:$0xff] %v2342
        %2407 = vst [vmem:[#allocation2 + $0xf8] sm:$0xff] %v2343
        %2408 = vst [vmem:[#allocation2 + $0x100] sm:$0xff] %v2344
        %2409 = vst [vmem:[#allocation2 + $0x108] sm:$0xff] %v2345
        %2410 = vst [vmem:[#allocation2 + $0x110] sm:$0xff] %v2346
        %2411 = vst [vmem:[#allocation2 + $0x118] sm:$0xff] %v2347
        %2412 = vst [vmem:[#allocation2 + $0x120] sm:$0xff] %v2348
        %2413 = vst [vmem:[#allocation2 + $0x128] sm:$0xff] %v2349
        %2414 = vst [vmem:[#allocation2 + $0x130] sm:$0xff] %v2350
        %2415 = vst [vmem:[#allocation2 + $0x138] sm:$0xff] %v2351
        %2416 = vst [vmem:[#allocation2 + $0x140] sm:$0xff] %v2352
        %2417 = vst [vmem:[#allocation2 + $0x148] sm:$0xff] %v2353
        %2418 = vst [vmem:[#allocation2 + $0x150] sm:$0xff] %v2354
        %2419 = vst [vmem:[#allocation2 + $0x158] sm:$0xff] %v2355
        %2420 = vst [vmem:[#allocation2 + $0x160] sm:$0xff] %v2356
        %2421 = vst [vmem:[#allocation2 + $0x168] sm:$0xff] %v2357
        %2422 = vst [vmem:[#allocation2 + $0x170] sm:$0xff] %v2358
        %2423 = vst [vmem:[#allocation2 + $0x178] sm:$0xff] %v2359
        %2424 = vst [vmem:[#allocation2 + $0x180] sm:$0xff] %v2360
        %2425 = vst [vmem:[#allocation2 + $0x188] sm:$0xff] %v2361
        %2426 = vst [vmem:[#allocation2 + $0x190] sm:$0xff] %v2362
        %2427 = vst [vmem:[#allocation2 + $0x198] sm:$0xff] %v2363
        %2428 = vst [vmem:[#allocation2 + $0x1a0] sm:$0xff] %v2364
        %2429 = vst [vmem:[#allocation2 + $0x1a8] sm:$0xff] %v2365
        %2430 = vst [vmem:[#allocation2 + $0x1b0] sm:$0xff] %v2366
        %2431 = vst [vmem:[#allocation2 + $0x1b8] sm:$0xff] %v2367
        %2432 = vst [vmem:[#allocation2 + $0x1c0] sm:$0xff] %v2368
        %2433 = vst [vmem:[#allocation2 + $0x1c8] sm:$0xff] %v2369
        %2434 = vst [vmem:[#allocation2 + $0x1d0] sm:$0xff] %v2370
        %2435 = vst [vmem:[#allocation2 + $0x1d8] sm:$0xff] %v2371
        %2436 = vst [vmem:[#allocation2 + $0x1e0] sm:$0xff] %v2372
        %2437 = vst [vmem:[#allocation2 + $0x1e8] sm:$0xff] %v2373
        %2438 = vst [vmem:[#allocation2 + $0x1f0] sm:$0xff] %v2374
        %2439 = vst [vmem:[#allocation2 + $0x1f8] sm:$0xff] %v2375
        %p2440 = scmp.eq.s32.totalorder %s22, 1
        // Predicated region
        $region64: #{kbrd_forward.3} parent=54 // pred_check
          %p2441 = pneg %p2440
        $region65: #{kbrd_forward.3} parent=54 // pred_check_branch
          %2443 = sbr.rel (%p2441) target = $region67
        $region66: #{kbrd_forward.3} parent=54 // pred_region
          %v2444 = vld [vmem:[#allocation2] sm:$0xff]
          %v2445 = vld [vmem:[#allocation2 + $0x8] sm:$0xff]
          %v2446 = vld [vmem:[#allocation2 + $0x10] sm:$0xff]
          %v2447 = vld [vmem:[#allocation2 + $0x18] sm:$0xff]
          %v2448 = vld [vmem:[#allocation2 + $0x20] sm:$0xff]
          %v2449 = vld [vmem:[#allocation2 + $0x28] sm:$0xff]
          %v2450 = vld [vmem:[#allocation2 + $0x30] sm:$0xff]
          %v2451 = vld [vmem:[#allocation2 + $0x38] sm:$0xff]
          %v2452 = vld [vmem:[#allocation2 + $0x40] sm:$0xff]
          %v2453 = vld [vmem:[#allocation2 + $0x48] sm:$0xff]
          %v2454 = vld [vmem:[#allocation2 + $0x50] sm:$0xff]
          %v2455 = vld [vmem:[#allocation2 + $0x58] sm:$0xff]
          %v2456 = vld [vmem:[#allocation2 + $0x60] sm:$0xff]
          %v2457 = vld [vmem:[#allocation2 + $0x68] sm:$0xff]
          %v2458 = vld [vmem:[#allocation2 + $0x70] sm:$0xff]
          %v2459 = vld [vmem:[#allocation2 + $0x78] sm:$0xff]
          %v2460 = vld [vmem:[#allocation2 + $0x80] sm:$0xff]
          %v2461 = vld [vmem:[#allocation2 + $0x88] sm:$0xff]
          %v2462 = vld [vmem:[#allocation2 + $0x90] sm:$0xff]
          %v2463 = vld [vmem:[#allocation2 + $0x98] sm:$0xff]
          %v2464 = vld [vmem:[#allocation2 + $0xa0] sm:$0xff]
          %v2465 = vld [vmem:[#allocation2 + $0xa8] sm:$0xff]
          %v2466 = vld [vmem:[#allocation2 + $0xb0] sm:$0xff]
          %v2467 = vld [vmem:[#allocation2 + $0xb8] sm:$0xff]
          %v2468 = vld [vmem:[#allocation2 + $0xc0] sm:$0xff]
          %v2469 = vld [vmem:[#allocation2 + $0xc8] sm:$0xff]
          %v2470 = vld [vmem:[#allocation2 + $0xd0] sm:$0xff]
          %v2471 = vld [vmem:[#allocation2 + $0xd8] sm:$0xff]
          %v2472 = vld [vmem:[#allocation2 + $0xe0] sm:$0xff]
          %v2473 = vld [vmem:[#allocation2 + $0xe8] sm:$0xff]
          %v2474 = vld [vmem:[#allocation2 + $0xf0] sm:$0xff]
          %v2475 = vld [vmem:[#allocation2 + $0xf8] sm:$0xff]
          %v2476 = vld [vmem:[#allocation2 + $0x100] sm:$0xff]
          %v2477 = vld [vmem:[#allocation2 + $0x108] sm:$0xff]
          %v2478 = vld [vmem:[#allocation2 + $0x110] sm:$0xff]
          %v2479 = vld [vmem:[#allocation2 + $0x118] sm:$0xff]
          %v2480 = vld [vmem:[#allocation2 + $0x120] sm:$0xff]
          %v2481 = vld [vmem:[#allocation2 + $0x128] sm:$0xff]
          %v2482 = vld [vmem:[#allocation2 + $0x130] sm:$0xff]
          %v2483 = vld [vmem:[#allocation2 + $0x138] sm:$0xff]
          %v2484 = vld [vmem:[#allocation2 + $0x140] sm:$0xff]
          %v2485 = vld [vmem:[#allocation2 + $0x148] sm:$0xff]
          %v2486 = vld [vmem:[#allocation2 + $0x150] sm:$0xff]
          %v2487 = vld [vmem:[#allocation2 + $0x158] sm:$0xff]
          %v2488 = vld [vmem:[#allocation2 + $0x160] sm:$0xff]
          %v2489 = vld [vmem:[#allocation2 + $0x168] sm:$0xff]
          %v2490 = vld [vmem:[#allocation2 + $0x170] sm:$0xff]
          %v2491 = vld [vmem:[#allocation2 + $0x178] sm:$0xff]
          %v2492 = vld [vmem:[#allocation2 + $0x180] sm:$0xff]
          %v2493 = vld [vmem:[#allocation2 + $0x188] sm:$0xff]
          %v2494 = vld [vmem:[#allocation2 + $0x190] sm:$0xff]
          %v2495 = vld [vmem:[#allocation2 + $0x198] sm:$0xff]
          %v2496 = vld [vmem:[#allocation2 + $0x1a0] sm:$0xff]
          %v2497 = vld [vmem:[#allocation2 + $0x1a8] sm:$0xff]
          %v2498 = vld [vmem:[#allocation2 + $0x1b0] sm:$0xff]
          %v2499 = vld [vmem:[#allocation2 + $0x1b8] sm:$0xff]
          %v2500 = vld [vmem:[#allocation2 + $0x1c0] sm:$0xff]
          %v2501 = vld [vmem:[#allocation2 + $0x1c8] sm:$0xff]
          %v2502 = vld [vmem:[#allocation2 + $0x1d0] sm:$0xff]
          %v2503 = vld [vmem:[#allocation2 + $0x1d8] sm:$0xff]
          %v2504 = vld [vmem:[#allocation2 + $0x1e0] sm:$0xff]
          %v2505 = vld [vmem:[#allocation2 + $0x1e8] sm:$0xff]
          %v2506 = vld [vmem:[#allocation2 + $0x1f0] sm:$0xff]
          %v2507 = vld [vmem:[#allocation2 + $0x1f8] sm:$0xff]
          %v2508 = vld [vmem:[%s563] sm:$0xff]
          %v2509 = vld [vmem:[%s563 + $0x8] sm:$0xff]
          %v2510 = vld [vmem:[%s563 + $0x10] sm:$0xff]
          %v2511 = vld [vmem:[%s563 + $0x18] sm:$0xff]
          %v2512 = vld [vmem:[%s563 + $0x20] sm:$0xff]
          %v2513 = vld [vmem:[%s563 + $0x28] sm:$0xff]
          %v2514 = vld [vmem:[%s563 + $0x30] sm:$0xff]
          %v2515 = vld [vmem:[%s563 + $0x38] sm:$0xff]
          %v2516 = vld [vmem:[%s563 + $0x40] sm:$0xff]
          %v2517 = vld [vmem:[%s563 + $0x48] sm:$0xff]
          %v2518 = vld [vmem:[%s563 + $0x50] sm:$0xff]
          %v2519 = vld [vmem:[%s563 + $0x58] sm:$0xff]
          %v2520 = vld [vmem:[%s563 + $0x60] sm:$0xff]
          %v2521 = vld [vmem:[%s563 + $0x68] sm:$0xff]
          %v2522 = vld [vmem:[%s563 + $0x70] sm:$0xff]
          %v2523 = vld [vmem:[%s563 + $0x78] sm:$0xff]
          %v2524 = vld [vmem:[%s563 + $0x80] sm:$0xff]
          %v2525 = vld [vmem:[%s563 + $0x88] sm:$0xff]
          %v2526 = vld [vmem:[%s563 + $0x90] sm:$0xff]
          %v2527 = vld [vmem:[%s563 + $0x98] sm:$0xff]
          %v2528 = vld [vmem:[%s563 + $0xa0] sm:$0xff]
          %v2529 = vld [vmem:[%s563 + $0xa8] sm:$0xff]
          %v2530 = vld [vmem:[%s563 + $0xb0] sm:$0xff]
          %v2531 = vld [vmem:[%s563 + $0xb8] sm:$0xff]
          %v2532 = vld [vmem:[%s563 + $0xc0] sm:$0xff]
          %v2533 = vld [vmem:[%s563 + $0xc8] sm:$0xff]
          %v2534 = vld [vmem:[%s563 + $0xd0] sm:$0xff]
          %v2535 = vld [vmem:[%s563 + $0xd8] sm:$0xff]
          %v2536 = vld [vmem:[%s563 + $0xe0] sm:$0xff]
          %v2537 = vld [vmem:[%s563 + $0xe8] sm:$0xff]
          %v2538 = vld [vmem:[%s563 + $0xf0] sm:$0xff]
          %v2539 = vld [vmem:[%s563 + $0xf8] sm:$0xff]
          %v2540 = vld [vmem:[%s563 + $0x100] sm:$0xff]
          %v2541 = vld [vmem:[%s563 + $0x108] sm:$0xff]
          %v2542 = vld [vmem:[%s563 + $0x110] sm:$0xff]
          %v2543 = vld [vmem:[%s563 + $0x118] sm:$0xff]
          %v2544 = vld [vmem:[%s563 + $0x120] sm:$0xff]
          %v2545 = vld [vmem:[%s563 + $0x128] sm:$0xff]
          %v2546 = vld [vmem:[%s563 + $0x130] sm:$0xff]
          %v2547 = vld [vmem:[%s563 + $0x138] sm:$0xff]
          %v2548 = vld [vmem:[%s563 + $0x140] sm:$0xff]
          %v2549 = vld [vmem:[%s563 + $0x148] sm:$0xff]
          %v2550 = vld [vmem:[%s563 + $0x150] sm:$0xff]
          %v2551 = vld [vmem:[%s563 + $0x158] sm:$0xff]
          %v2552 = vld [vmem:[%s563 + $0x160] sm:$0xff]
          %v2553 = vld [vmem:[%s563 + $0x168] sm:$0xff]
          %v2554 = vld [vmem:[%s563 + $0x170] sm:$0xff]
          %v2555 = vld [vmem:[%s563 + $0x178] sm:$0xff]
          %v2556 = vld [vmem:[%s563 + $0x180] sm:$0xff]
          %v2557 = vld [vmem:[%s563 + $0x188] sm:$0xff]
          %v2558 = vld [vmem:[%s563 + $0x190] sm:$0xff]
          %v2559 = vld [vmem:[%s563 + $0x198] sm:$0xff]
          %v2560 = vld [vmem:[%s563 + $0x1a0] sm:$0xff]
          %v2561 = vld [vmem:[%s563 + $0x1a8] sm:$0xff]
          %v2562 = vld [vmem:[%s563 + $0x1b0] sm:$0xff]
          %v2563 = vld [vmem:[%s563 + $0x1b8] sm:$0xff]
          %v2564 = vld [vmem:[%s563 + $0x1c0] sm:$0xff]
          %v2565 = vld [vmem:[%s563 + $0x1c8] sm:$0xff]
          %v2566 = vld [vmem:[%s563 + $0x1d0] sm:$0xff]
          %v2567 = vld [vmem:[%s563 + $0x1d8] sm:$0xff]
          %v2568 = vld [vmem:[%s563 + $0x1e0] sm:$0xff]
          %v2569 = vld [vmem:[%s563 + $0x1e8] sm:$0xff]
          %v2570 = vld [vmem:[%s563 + $0x1f0] sm:$0xff]
          %v2571 = vld [vmem:[%s563 + $0x1f8] sm:$0xff]
          %v2572 = vadd.f32 %v2444, %v2508
          %v2573 = vadd.f32 %v2445, %v2509
          %v2574 = vadd.f32 %v2446, %v2510
          %v2575 = vadd.f32 %v2447, %v2511
          %v2576 = vadd.f32 %v2448, %v2512
          %v2577 = vadd.f32 %v2449, %v2513
          %v2578 = vadd.f32 %v2450, %v2514
          %v2579 = vadd.f32 %v2451, %v2515
          %v2580 = vadd.f32 %v2452, %v2516
          %v2581 = vadd.f32 %v2453, %v2517
          %v2582 = vadd.f32 %v2454, %v2518
          %v2583 = vadd.f32 %v2455, %v2519
          %v2584 = vadd.f32 %v2456, %v2520
          %v2585 = vadd.f32 %v2457, %v2521
          %v2586 = vadd.f32 %v2458, %v2522
          %v2587 = vadd.f32 %v2459, %v2523
          %v2588 = vadd.f32 %v2460, %v2524
          %v2589 = vadd.f32 %v2461, %v2525
          %v2590 = vadd.f32 %v2462, %v2526
          %v2591 = vadd.f32 %v2463, %v2527
          %v2592 = vadd.f32 %v2464, %v2528
          %v2593 = vadd.f32 %v2465, %v2529
          %v2594 = vadd.f32 %v2466, %v2530
          %v2595 = vadd.f32 %v2467, %v2531
          %v2596 = vadd.f32 %v2468, %v2532
          %v2597 = vadd.f32 %v2469, %v2533
          %v2598 = vadd.f32 %v2470, %v2534
          %v2599 = vadd.f32 %v2471, %v2535
          %v2600 = vadd.f32 %v2472, %v2536
          %v2601 = vadd.f32 %v2473, %v2537
          %v2602 = vadd.f32 %v2474, %v2538
          %v2603 = vadd.f32 %v2475, %v2539
          %v2604 = vadd.f32 %v2476, %v2540
          %v2605 = vadd.f32 %v2477, %v2541
          %v2606 = vadd.f32 %v2478, %v2542
          %v2607 = vadd.f32 %v2479, %v2543
          %v2608 = vadd.f32 %v2480, %v2544
          %v2609 = vadd.f32 %v2481, %v2545
          %v2610 = vadd.f32 %v2482, %v2546
          %v2611 = vadd.f32 %v2483, %v2547
          %v2612 = vadd.f32 %v2484, %v2548
          %v2613 = vadd.f32 %v2485, %v2549
          %v2614 = vadd.f32 %v2486, %v2550
          %v2615 = vadd.f32 %v2487, %v2551
          %v2616 = vadd.f32 %v2488, %v2552
          %v2617 = vadd.f32 %v2489, %v2553
          %v2618 = vadd.f32 %v2490, %v2554
          %v2619 = vadd.f32 %v2491, %v2555
          %v2620 = vadd.f32 %v2492, %v2556
          %v2621 = vadd.f32 %v2493, %v2557
          %v2622 = vadd.f32 %v2494, %v2558
          %v2623 = vadd.f32 %v2495, %v2559
          %v2624 = vadd.f32 %v2496, %v2560
          %v2625 = vadd.f32 %v2497, %v2561
          %v2626 = vadd.f32 %v2498, %v2562
          %v2627 = vadd.f32 %v2499, %v2563
          %v2628 = vadd.f32 %v2500, %v2564
          %v2629 = vadd.f32 %v2501, %v2565
          %v2630 = vadd.f32 %v2502, %v2566
          %v2631 = vadd.f32 %v2503, %v2567
          %v2632 = vadd.f32 %v2504, %v2568
          %v2633 = vadd.f32 %v2505, %v2569
          %v2634 = vadd.f32 %v2506, %v2570
          %v2635 = vadd.f32 %v2507, %v2571
          %v2636 = vld [vmem:[%s3] sm:$0x1]
          %v2638 = vlaneseq
          %v2639 = vshrl.u32 %v2638, 7
          %v2640 = vsub.s32 0, %v2639
          %v2641 = vrot.slane %v2636, %v2640
          %v2643 = vadd.f32 %v2572, %v2641
          %v2644 = vadd.f32 %v2573, %v2641
          %v2645 = vadd.f32 %v2574, %v2641
          %v2646 = vadd.f32 %v2575, %v2641
          %v2647 = vadd.f32 %v2576, %v2641
          %v2648 = vadd.f32 %v2577, %v2641
          %v2649 = vadd.f32 %v2578, %v2641
          %v2650 = vadd.f32 %v2579, %v2641
          %v2651 = vadd.f32 %v2580, %v2641
          %v2652 = vadd.f32 %v2581, %v2641
          %v2653 = vadd.f32 %v2582, %v2641
          %v2654 = vadd.f32 %v2583, %v2641
          %v2655 = vadd.f32 %v2584, %v2641
          %v2656 = vadd.f32 %v2585, %v2641
          %v2657 = vadd.f32 %v2586, %v2641
          %v2658 = vadd.f32 %v2587, %v2641
          %v2659 = vadd.f32 %v2588, %v2641
          %v2660 = vadd.f32 %v2589, %v2641
          %v2661 = vadd.f32 %v2590, %v2641
          %v2662 = vadd.f32 %v2591, %v2641
          %v2663 = vadd.f32 %v2592, %v2641
          %v2664 = vadd.f32 %v2593, %v2641
          %v2665 = vadd.f32 %v2594, %v2641
          %v2666 = vadd.f32 %v2595, %v2641
          %v2667 = vadd.f32 %v2596, %v2641
          %v2668 = vadd.f32 %v2597, %v2641
          %v2669 = vadd.f32 %v2598, %v2641
          %v2670 = vadd.f32 %v2599, %v2641
          %v2671 = vadd.f32 %v2600, %v2641
          %v2672 = vadd.f32 %v2601, %v2641
          %v2673 = vadd.f32 %v2602, %v2641
          %v2674 = vadd.f32 %v2603, %v2641
          %v2675 = vadd.f32 %v2604, %v2641
          %v2676 = vadd.f32 %v2605, %v2641
          %v2677 = vadd.f32 %v2606, %v2641
          %v2678 = vadd.f32 %v2607, %v2641
          %v2679 = vadd.f32 %v2608, %v2641
          %v2680 = vadd.f32 %v2609, %v2641
          %v2681 = vadd.f32 %v2610, %v2641
          %v2682 = vadd.f32 %v2611, %v2641
          %v2683 = vadd.f32 %v2612, %v2641
          %v2684 = vadd.f32 %v2613, %v2641
          %v2685 = vadd.f32 %v2614, %v2641
          %v2686 = vadd.f32 %v2615, %v2641
          %v2687 = vadd.f32 %v2616, %v2641
          %v2688 = vadd.f32 %v2617, %v2641
          %v2689 = vadd.f32 %v2618, %v2641
          %v2690 = vadd.f32 %v2619, %v2641
          %v2691 = vadd.f32 %v2620, %v2641
          %v2692 = vadd.f32 %v2621, %v2641
          %v2693 = vadd.f32 %v2622, %v2641
          %v2694 = vadd.f32 %v2623, %v2641
          %v2695 = vadd.f32 %v2624, %v2641
          %v2696 = vadd.f32 %v2625, %v2641
          %v2697 = vadd.f32 %v2626, %v2641
          %v2698 = vadd.f32 %v2627, %v2641
          %v2699 = vadd.f32 %v2628, %v2641
          %v2700 = vadd.f32 %v2629, %v2641
          %v2701 = vadd.f32 %v2630, %v2641
          %v2702 = vadd.f32 %v2631, %v2641
          %v2703 = vadd.f32 %v2632, %v2641
          %v2704 = vadd.f32 %v2633, %v2641
          %v2705 = vadd.f32 %v2634, %v2641
          %v2706 = vadd.f32 %v2635, %v2641
          %2707 = vst [vmem:[%s569] sm:$0xff] %v2643
          %2708 = vst [vmem:[%s569 + $0x8] sm:$0xff] %v2644
          %2709 = vst [vmem:[%s569 + $0x10] sm:$0xff] %v2645
          %2710 = vst [vmem:[%s569 + $0x18] sm:$0xff] %v2646
          %2711 = vst [vmem:[%s569 + $0x20] sm:$0xff] %v2647
          %2712 = vst [vmem:[%s569 + $0x28] sm:$0xff] %v2648
          %2713 = vst [vmem:[%s569 + $0x30] sm:$0xff] %v2649
          %2714 = vst [vmem:[%s569 + $0x38] sm:$0xff] %v2650
          %2715 = vst [vmem:[%s569 + $0x40] sm:$0xff] %v2651
          %2716 = vst [vmem:[%s569 + $0x48] sm:$0xff] %v2652
          %2717 = vst [vmem:[%s569 + $0x50] sm:$0xff] %v2653
          %2718 = vst [vmem:[%s569 + $0x58] sm:$0xff] %v2654
          %2719 = vst [vmem:[%s569 + $0x60] sm:$0xff] %v2655
          %2720 = vst [vmem:[%s569 + $0x68] sm:$0xff] %v2656
          %2721 = vst [vmem:[%s569 + $0x70] sm:$0xff] %v2657
          %2722 = vst [vmem:[%s569 + $0x78] sm:$0xff] %v2658
          %2723 = vst [vmem:[%s569 + $0x80] sm:$0xff] %v2659
          %2724 = vst [vmem:[%s569 + $0x88] sm:$0xff] %v2660
          %2725 = vst [vmem:[%s569 + $0x90] sm:$0xff] %v2661
          %2726 = vst [vmem:[%s569 + $0x98] sm:$0xff] %v2662
          %2727 = vst [vmem:[%s569 + $0xa0] sm:$0xff] %v2663
          %2728 = vst [vmem:[%s569 + $0xa8] sm:$0xff] %v2664
          %2729 = vst [vmem:[%s569 + $0xb0] sm:$0xff] %v2665
          %2730 = vst [vmem:[%s569 + $0xb8] sm:$0xff] %v2666
          %2731 = vst [vmem:[%s569 + $0xc0] sm:$0xff] %v2667
          %2732 = vst [vmem:[%s569 + $0xc8] sm:$0xff] %v2668
          %2733 = vst [vmem:[%s569 + $0xd0] sm:$0xff] %v2669
          %2734 = vst [vmem:[%s569 + $0xd8] sm:$0xff] %v2670
          %2735 = vst [vmem:[%s569 + $0xe0] sm:$0xff] %v2671
          %2736 = vst [vmem:[%s569 + $0xe8] sm:$0xff] %v2672
          %2737 = vst [vmem:[%s569 + $0xf0] sm:$0xff] %v2673
          %2738 = vst [vmem:[%s569 + $0xf8] sm:$0xff] %v2674
          %2739 = vst [vmem:[%s569 + $0x100] sm:$0xff] %v2675
          %2740 = vst [vmem:[%s569 + $0x108] sm:$0xff] %v2676
          %2741 = vst [vmem:[%s569 + $0x110] sm:$0xff] %v2677
          %2742 = vst [vmem:[%s569 + $0x118] sm:$0xff] %v2678
          %2743 = vst [vmem:[%s569 + $0x120] sm:$0xff] %v2679
          %2744 = vst [vmem:[%s569 + $0x128] sm:$0xff] %v2680
          %2745 = vst [vmem:[%s569 + $0x130] sm:$0xff] %v2681
          %2746 = vst [vmem:[%s569 + $0x138] sm:$0xff] %v2682
          %2747 = vst [vmem:[%s569 + $0x140] sm:$0xff] %v2683
          %2748 = vst [vmem:[%s569 + $0x148] sm:$0xff] %v2684
          %2749 = vst [vmem:[%s569 + $0x150] sm:$0xff] %v2685
          %2750 = vst [vmem:[%s569 + $0x158] sm:$0xff] %v2686
          %2751 = vst [vmem:[%s569 + $0x160] sm:$0xff] %v2687
          %2752 = vst [vmem:[%s569 + $0x168] sm:$0xff] %v2688
          %2753 = vst [vmem:[%s569 + $0x170] sm:$0xff] %v2689
          %2754 = vst [vmem:[%s569 + $0x178] sm:$0xff] %v2690
          %2755 = vst [vmem:[%s569 + $0x180] sm:$0xff] %v2691
          %2756 = vst [vmem:[%s569 + $0x188] sm:$0xff] %v2692
          %2757 = vst [vmem:[%s569 + $0x190] sm:$0xff] %v2693
          %2758 = vst [vmem:[%s569 + $0x198] sm:$0xff] %v2694
          %2759 = vst [vmem:[%s569 + $0x1a0] sm:$0xff] %v2695
          %2760 = vst [vmem:[%s569 + $0x1a8] sm:$0xff] %v2696
          %2761 = vst [vmem:[%s569 + $0x1b0] sm:$0xff] %v2697
          %2762 = vst [vmem:[%s569 + $0x1b8] sm:$0xff] %v2698
          %2763 = vst [vmem:[%s569 + $0x1c0] sm:$0xff] %v2699
          %2764 = vst [vmem:[%s569 + $0x1c8] sm:$0xff] %v2700
          %2765 = vst [vmem:[%s569 + $0x1d0] sm:$0xff] %v2701
          %2766 = vst [vmem:[%s569 + $0x1d8] sm:$0xff] %v2702
          %2767 = vst [vmem:[%s569 + $0x1e0] sm:$0xff] %v2703
          %2768 = vst [vmem:[%s569 + $0x1e8] sm:$0xff] %v2704
          %2769 = vst [vmem:[%s569 + $0x1f0] sm:$0xff] %v2705
          %2770 = vst [vmem:[%s569 + $0x1f8] sm:$0xff] %v2706
          %v2771 = vpack.c.bf16 %v2644, %v2643
          %v2772 = vpack.c.bf16 %v2646, %v2645
          %v2773 = vpack.c.bf16 %v2648, %v2647
          %v2774 = vpack.c.bf16 %v2650, %v2649
          %v2775 = vpack.c.bf16 %v2652, %v2651
          %v2776 = vpack.c.bf16 %v2654, %v2653
          %v2777 = vpack.c.bf16 %v2656, %v2655
          %v2778 = vpack.c.bf16 %v2658, %v2657
          %v2779 = vpack.c.bf16 %v2660, %v2659
          %v2780 = vpack.c.bf16 %v2662, %v2661
          %v2781 = vpack.c.bf16 %v2664, %v2663
          %v2782 = vpack.c.bf16 %v2666, %v2665
          %v2783 = vpack.c.bf16 %v2668, %v2667
          %v2784 = vpack.c.bf16 %v2670, %v2669
          %v2785 = vpack.c.bf16 %v2672, %v2671
          %v2786 = vpack.c.bf16 %v2674, %v2673
          %v2787 = vpack.c.bf16 %v2676, %v2675
          %v2788 = vpack.c.bf16 %v2678, %v2677
          %v2789 = vpack.c.bf16 %v2680, %v2679
          %v2790 = vpack.c.bf16 %v2682, %v2681
          %v2791 = vpack.c.bf16 %v2684, %v2683
          %v2792 = vpack.c.bf16 %v2686, %v2685
          %v2793 = vpack.c.bf16 %v2688, %v2687
          %v2794 = vpack.c.bf16 %v2690, %v2689
          %v2795 = vpack.c.bf16 %v2692, %v2691
          %v2796 = vpack.c.bf16 %v2694, %v2693
          %v2797 = vpack.c.bf16 %v2696, %v2695
          %v2798 = vpack.c.bf16 %v2698, %v2697
          %v2799 = vpack.c.bf16 %v2700, %v2699
          %v2800 = vpack.c.bf16 %v2702, %v2701
          %v2801 = vpack.c.bf16 %v2704, %v2703
          %v2802 = vpack.c.bf16 %v2706, %v2705
          %v2835 = vunpack.c.l.b16 %v2771
          %v2836 = vunpack.c.h.b16 %v2771
          %v2837 = vunpack.c.l.b16 %v2772
          %v2838 = vunpack.c.h.b16 %v2772
          %v2839 = vunpack.c.l.b16 %v2773
          %v2840 = vunpack.c.h.b16 %v2773
          %v2841 = vunpack.c.l.b16 %v2774
          %v2842 = vunpack.c.h.b16 %v2774
          %v2843 = vunpack.c.l.b16 %v2775
          %v2844 = vunpack.c.h.b16 %v2775
          %v2845 = vunpack.c.l.b16 %v2776
          %v2846 = vunpack.c.h.b16 %v2776
          %v2847 = vunpack.c.l.b16 %v2777
          %v2848 = vunpack.c.h.b16 %v2777
          %v2849 = vunpack.c.l.b16 %v2778
          %v2850 = vunpack.c.h.b16 %v2778
          %v2851 = vunpack.c.l.b16 %v2779
          %v2852 = vunpack.c.h.b16 %v2779
          %v2853 = vunpack.c.l.b16 %v2780
          %v2854 = vunpack.c.h.b16 %v2780
          %v2855 = vunpack.c.l.b16 %v2781
          %v2856 = vunpack.c.h.b16 %v2781
          %v2857 = vunpack.c.l.b16 %v2782
          %v2858 = vunpack.c.h.b16 %v2782
          %v2859 = vunpack.c.l.b16 %v2783
          %v2860 = vunpack.c.h.b16 %v2783
          %v2861 = vunpack.c.l.b16 %v2784
          %v2862 = vunpack.c.h.b16 %v2784
          %v2863 = vunpack.c.l.b16 %v2785
          %v2864 = vunpack.c.h.b16 %v2785
          %v2865 = vunpack.c.l.b16 %v2786
          %v2866 = vunpack.c.h.b16 %v2786
          %v2867 = vunpack.c.l.b16 %v2787
          %v2868 = vunpack.c.h.b16 %v2787
          %v2869 = vunpack.c.l.b16 %v2788
          %v2870 = vunpack.c.h.b16 %v2788
          %v2871 = vunpack.c.l.b16 %v2789
          %v2872 = vunpack.c.h.b16 %v2789
          %v2873 = vunpack.c.l.b16 %v2790
          %v2874 = vunpack.c.h.b16 %v2790
          %v2875 = vunpack.c.l.b16 %v2791
          %v2876 = vunpack.c.h.b16 %v2791
          %v2877 = vunpack.c.l.b16 %v2792
          %v2878 = vunpack.c.h.b16 %v2792
          %v2879 = vunpack.c.l.b16 %v2793
          %v2880 = vunpack.c.h.b16 %v2793
          %v2881 = vunpack.c.l.b16 %v2794
          %v2882 = vunpack.c.h.b16 %v2794
          %v2883 = vunpack.c.l.b16 %v2795
          %v2884 = vunpack.c.h.b16 %v2795
          %v2885 = vunpack.c.l.b16 %v2796
          %v2886 = vunpack.c.h.b16 %v2796
          %v2887 = vunpack.c.l.b16 %v2797
          %v2888 = vunpack.c.h.b16 %v2797
          %v2889 = vunpack.c.l.b16 %v2798
          %v2890 = vunpack.c.h.b16 %v2798
          %v2891 = vunpack.c.l.b16 %v2799
          %v2892 = vunpack.c.h.b16 %v2799
          %v2893 = vunpack.c.l.b16 %v2800
          %v2894 = vunpack.c.h.b16 %v2800
          %v2895 = vunpack.c.l.b16 %v2801
          %v2896 = vunpack.c.h.b16 %v2801
          %v2897 = vunpack.c.l.b16 %v2802
          %v2898 = vunpack.c.h.b16 %v2802
          %v2899 = vpack.c.b16 %v2835, %v2835
          %v2900 = vpack.c.b16 %v2836, %v2836
          %v2901 = vpack.c.b16 %v2837, %v2837
          %v2902 = vpack.c.b16 %v2838, %v2838
          %v2903 = vpack.c.b16 %v2839, %v2839
          %v2904 = vpack.c.b16 %v2840, %v2840
          %v2905 = vpack.c.b16 %v2841, %v2841
          %v2906 = vpack.c.b16 %v2842, %v2842
          %v2907 = vpack.c.b16 %v2843, %v2843
          %v2908 = vpack.c.b16 %v2844, %v2844
          %v2909 = vpack.c.b16 %v2845, %v2845
          %v2910 = vpack.c.b16 %v2846, %v2846
          %v2911 = vpack.c.b16 %v2847, %v2847
          %v2912 = vpack.c.b16 %v2848, %v2848
          %v2913 = vpack.c.b16 %v2849, %v2849
          %v2914 = vpack.c.b16 %v2850, %v2850
          %v2915 = vpack.c.b16 %v2851, %v2851
          %v2916 = vpack.c.b16 %v2852, %v2852
          %v2917 = vpack.c.b16 %v2853, %v2853
          %v2918 = vpack.c.b16 %v2854, %v2854
          %v2919 = vpack.c.b16 %v2855, %v2855
          %v2920 = vpack.c.b16 %v2856, %v2856
          %v2921 = vpack.c.b16 %v2857, %v2857
          %v2922 = vpack.c.b16 %v2858, %v2858
          %v2923 = vpack.c.b16 %v2859, %v2859
          %v2924 = vpack.c.b16 %v2860, %v2860
          %v2925 = vpack.c.b16 %v2861, %v2861
          %v2926 = vpack.c.b16 %v2862, %v2862
          %v2927 = vpack.c.b16 %v2863, %v2863
          %v2928 = vpack.c.b16 %v2864, %v2864
          %v2929 = vpack.c.b16 %v2865, %v2865
          %v2930 = vpack.c.b16 %v2866, %v2866
          %v2931 = vpack.c.b16 %v2867, %v2867
          %v2932 = vpack.c.b16 %v2868, %v2868
          %v2933 = vpack.c.b16 %v2869, %v2869
          %v2934 = vpack.c.b16 %v2870, %v2870
          %v2935 = vpack.c.b16 %v2871, %v2871
          %v2936 = vpack.c.b16 %v2872, %v2872
          %v2937 = vpack.c.b16 %v2873, %v2873
          %v2938 = vpack.c.b16 %v2874, %v2874
          %v2939 = vpack.c.b16 %v2875, %v2875
          %v2940 = vpack.c.b16 %v2876, %v2876
          %v2941 = vpack.c.b16 %v2877, %v2877
          %v2942 = vpack.c.b16 %v2878, %v2878
          %v2943 = vpack.c.b16 %v2879, %v2879
          %v2944 = vpack.c.b16 %v2880, %v2880
          %v2945 = vpack.c.b16 %v2881, %v2881
          %v2946 = vpack.c.b16 %v2882, %v2882
          %v2947 = vpack.c.b16 %v2883, %v2883
          %v2948 = vpack.c.b16 %v2884, %v2884
          %v2949 = vpack.c.b16 %v2885, %v2885
          %v2950 = vpack.c.b16 %v2886, %v2886
          %v2951 = vpack.c.b16 %v2887, %v2887
          %v2952 = vpack.c.b16 %v2888, %v2888
          %v2953 = vpack.c.b16 %v2889, %v2889
          %v2954 = vpack.c.b16 %v2890, %v2890
          %v2955 = vpack.c.b16 %v2891, %v2891
          %v2956 = vpack.c.b16 %v2892, %v2892
          %v2957 = vpack.c.b16 %v2893, %v2893
          %v2958 = vpack.c.b16 %v2894, %v2894
          %v2959 = vpack.c.b16 %v2895, %v2895
          %v2960 = vpack.c.b16 %v2896, %v2896
          %v2961 = vpack.c.b16 %v2897, %v2897
          %v2962 = vpack.c.b16 %v2898, %v2898
          %3027 = vst [vmem:[%s575] sm:$0xf] %v2899
          %3028 = vst [vmem:[%s575 + $0x4] sm:$0xf] %v2900
          %3029 = vst [vmem:[%s575 + $0x8] sm:$0xf] %v2901
          %3030 = vst [vmem:[%s575 + $0xc] sm:$0xf] %v2902
          %3031 = vst [vmem:[%s575 + $0x10] sm:$0xf] %v2903
          %3032 = vst [vmem:[%s575 + $0x14] sm:$0xf] %v2904
          %3033 = vst [vmem:[%s575 + $0x18] sm:$0xf] %v2905
          %3034 = vst [vmem:[%s575 + $0x1c] sm:$0xf] %v2906
          %3035 = vst [vmem:[%s575 + $0x20] sm:$0xf] %v2907
          %3036 = vst [vmem:[%s575 + $0x24] sm:$0xf] %v2908
          %3037 = vst [vmem:[%s575 + $0x28] sm:$0xf] %v2909
          %3038 = vst [vmem:[%s575 + $0x2c] sm:$0xf] %v2910
          %3039 = vst [vmem:[%s575 + $0x30] sm:$0xf] %v2911
          %3040 = vst [vmem:[%s575 + $0x34] sm:$0xf] %v2912
          %3041 = vst [vmem:[%s575 + $0x38] sm:$0xf] %v2913
          %3042 = vst [vmem:[%s575 + $0x3c] sm:$0xf] %v2914
          %3043 = vst [vmem:[%s575 + $0x40] sm:$0xf] %v2915
          %3044 = vst [vmem:[%s575 + $0x44] sm:$0xf] %v2916
          %3045 = vst [vmem:[%s575 + $0x48] sm:$0xf] %v2917
          %3046 = vst [vmem:[%s575 + $0x4c] sm:$0xf] %v2918
          %3047 = vst [vmem:[%s575 + $0x50] sm:$0xf] %v2919
          %3048 = vst [vmem:[%s575 + $0x54] sm:$0xf] %v2920
          %3049 = vst [vmem:[%s575 + $0x58] sm:$0xf] %v2921
          %3050 = vst [vmem:[%s575 + $0x5c] sm:$0xf] %v2922
          %3051 = vst [vmem:[%s575 + $0x60] sm:$0xf] %v2923
          %3052 = vst [vmem:[%s575 + $0x64] sm:$0xf] %v2924
          %3053 = vst [vmem:[%s575 + $0x68] sm:$0xf] %v2925
          %3054 = vst [vmem:[%s575 + $0x6c] sm:$0xf] %v2926
          %3055 = vst [vmem:[%s575 + $0x70] sm:$0xf] %v2927
          %3056 = vst [vmem:[%s575 + $0x74] sm:$0xf] %v2928
          %3057 = vst [vmem:[%s575 + $0x78] sm:$0xf] %v2929
          %3058 = vst [vmem:[%s575 + $0x7c] sm:$0xf] %v2930
          %3059 = vst [vmem:[%s575 + $0x80] sm:$0xf] %v2931
          %3060 = vst [vmem:[%s575 + $0x84] sm:$0xf] %v2932
          %3061 = vst [vmem:[%s575 + $0x88] sm:$0xf] %v2933
          %3062 = vst [vmem:[%s575 + $0x8c] sm:$0xf] %v2934
          %3063 = vst [vmem:[%s575 + $0x90] sm:$0xf] %v2935
          %3064 = vst [vmem:[%s575 + $0x94] sm:$0xf] %v2936
          %3065 = vst [vmem:[%s575 + $0x98] sm:$0xf] %v2937
          %3066 = vst [vmem:[%s575 + $0x9c] sm:$0xf] %v2938
          %3067 = vst [vmem:[%s575 + $0xa0] sm:$0xf] %v2939
          %3068 = vst [vmem:[%s575 + $0xa4] sm:$0xf] %v2940
          %3069 = vst [vmem:[%s575 + $0xa8] sm:$0xf] %v2941
          %3070 = vst [vmem:[%s575 + $0xac] sm:$0xf] %v2942
          %3071 = vst [vmem:[%s575 + $0xb0] sm:$0xf] %v2943
          %3072 = vst [vmem:[%s575 + $0xb4] sm:$0xf] %v2944
          %3073 = vst [vmem:[%s575 + $0xb8] sm:$0xf] %v2945
          %3074 = vst [vmem:[%s575 + $0xbc] sm:$0xf] %v2946
          %3075 = vst [vmem:[%s575 + $0xc0] sm:$0xf] %v2947
          %3076 = vst [vmem:[%s575 + $0xc4] sm:$0xf] %v2948
          %3077 = vst [vmem:[%s575 + $0xc8] sm:$0xf] %v2949
          %3078 = vst [vmem:[%s575 + $0xcc] sm:$0xf] %v2950
          %3079 = vst [vmem:[%s575 + $0xd0] sm:$0xf] %v2951
          %3080 = vst [vmem:[%s575 + $0xd4] sm:$0xf] %v2952
          %3081 = vst [vmem:[%s575 + $0xd8] sm:$0xf] %v2953
          %3082 = vst [vmem:[%s575 + $0xdc] sm:$0xf] %v2954
          %3083 = vst [vmem:[%s575 + $0xe0] sm:$0xf] %v2955
          %3084 = vst [vmem:[%s575 + $0xe4] sm:$0xf] %v2956
          %3085 = vst [vmem:[%s575 + $0xe8] sm:$0xf] %v2957
          %3086 = vst [vmem:[%s575 + $0xec] sm:$0xf] %v2958
          %3087 = vst [vmem:[%s575 + $0xf0] sm:$0xf] %v2959
          %3088 = vst [vmem:[%s575 + $0xf4] sm:$0xf] %v2960
          %3089 = vst [vmem:[%s575 + $0xf8] sm:$0xf] %v2961
          %3090 = vst [vmem:[%s575 + $0xfc] sm:$0xf] %v2962
        $region67: #{kbrd_forward.3} parent=54 // pred_fallthru
          _
        %s3091 = smul.u32 64, %s21
        %p3092 = scmp.lt.s32.totalorder %s3091, 63
        %s3093 = scalar_select %p3092, %s3091, 63
        %s3094 = smul.addr %s3093, 8
        %s3095 = scalar_lea.vmem %s4, %s3094
        %s3096 = smul.u32 64, %s21
        %p3097 = scmp.lt.s32.totalorder %s3096, 63
        %s3098 = scalar_select %p3097, %s3096, 63
        %s3099 = smul.addr %s3098, 4
        %s3100 = scalar_lea.vmem %s5, %s3099
        // Predicated region
        $region68: #{kbrd_forward.3} parent=54 // pred_check
          %p3101 = pneg %p148
        $region69: #{kbrd_forward.3} parent=54 // pred_check_branch
          %3103 = sbr.rel (%p3101) target = $region71
        $region70: #{kbrd_forward.3} parent=54 // pred_region
          %s3104 = smul.u32 64, %s21
        $region71: #{kbrd_forward.3} parent=54 // pred_fallthru
          _
        // Predicated region
        $region72: #{kbrd_forward.3} parent=54 // pred_check
          %p3105 = pneg %p174
        $region73: #{kbrd_forward.3} parent=54 // pred_check_branch
          %3107 = sbr.rel (%p3105) target = $region75
        $region74: #{kbrd_forward.3} parent=54 // pred_region
          %s3108 = smul.u32 64, %s21
        $region75: #{kbrd_forward.3} parent=54 // pred_fallthru
          _
        // Predicated region
        $region76: #{kbrd_forward.3} parent=54 // pred_check
          %p3109 = pneg %p148
        $region77: #{kbrd_forward.3} parent=54 // pred_check_branch
          %3111 = sbr.rel (%p3109) target = $region79
        $region78: #{kbrd_forward.3} parent=54 // pred_region
          %s3112 = smul.u32 64, %s21
          %p3113 = scmp.lt.s32.totalorder %s3112, 63
          %s3114 = scalar_select %p3113, %s3112, 63
          %s3115 = smul.addr %s3114, 8
          %s3116 = scalar_lea.vmem %s4, %s3115
        $region79: #{kbrd_forward.3} parent=54 // pred_fallthru
          _
        // Predicated region
        $region80: #{kbrd_forward.3} parent=54 // pred_check
          %p3117 = pneg %p174
        $region81: #{kbrd_forward.3} parent=54 // pred_check_branch
          %3119 = sbr.rel (%p3117) target = $region83
        $region82: #{kbrd_forward.3} parent=54 // pred_region
          %s3120 = smul.u32 64, %s21
          %p3121 = scmp.lt.s32.totalorder %s3120, 63
          %s3122 = scalar_select %p3121, %s3120, 63
          %s3123 = smul.addr %s3122, 4
          %s3124 = scalar_lea.vmem %s5, %s3123
        $region83: #{kbrd_forward.3} parent=54 // pred_fallthru
          _
      $region55: #{kbrd_forward.3} parent=5 // pred_fallthru
        _
      %p3125 = scmp.le.s32.totalorder 2, %s12
      // Predicated region
      $region84: #{kbrd_forward.3} parent=5 // pred_check
        %p3126 = pneg %p3125
      $region85: #{kbrd_forward.3} parent=5 // pred_check_branch
        %3128 = sbr.rel (%p3126) target = $region87
      $region86: #{kbrd_forward.3} parent=5 // pred_region
        %s3129 = ssub.s32 %s12, 2
      $region87: #{kbrd_forward.3} parent=5 // pred_fallthru
        _
    $region6: #{kbrd_forward.3} parent=1 // loop_footer
      %s16 = sadd.s32 1, %s12
    $region7: #{kbrd_forward.3} parent=1 // loop_footer_branch
      %11 = sbr.rel target = $region3
    $region8: #{kbrd_forward.3} parent=1 // loop_exit
      _

// kernel: kbrd_forward.4
$region0: #{kbrd_forward.4}
  #allocation0 [shape = 'u32[]', space=smem, size = 0x4, offset = 0x4, fixed_abs, tag = 'smem constant byte address 0x4 - core index']
  #allocation1 [shape = 'u32[144,128]{1,0:T(1,128)}', space=vmem, size = 0x12000, scoped, tag = 'internal scratch']
  #allocation2 [shape = 'f32[16,128]{1,0:T(8,128)}', space=vmem, size = 0x2000, scoped, tag = 'scratch operand']
  #allocation3 [shape = 's32[16]{0}', space=sflag, size = 0x40, scoped, tag = 'scratch operand']
  #allocation4 [shape = 'f32[1,1]{1,0:T(1,128)S(1)}', space=vmem, size = 0x200, scoped, tag = 'scoped memory for kbrd_forward.4']
  #allocation9 [shape = 's32[]', space=sflag, size = 0x4, offset = 0, fixed_abs, tag = 'sflag constant byte address 0x0 - dummy sync flag']
  #allocation10 [shape = 's32[]', space=sflag, size = 0x4, offset = 0, fixed_abs, tag = 'sflag constant byte address 0x0 - dummy sync flag']
  #allocation11 [shape = 's32[]', space=sflag, size = 0x4, offset = 0, fixed_abs, tag = 'sflag constant byte address 0x0 - dummy sync flag']
  #allocation12 [shape = 's32[]', space=sflag, size = 0x4, offset = 0, fixed_abs, tag = 'sflag constant byte address 0x0 - dummy sync flag']
  #allocation13 [shape = 's32[]', space=sflag, size = 0x4, offset = 0, fixed_abs, tag = 'sflag constant byte address 0x0 - dummy sync flag']
  #allocation14 [shape = 's32[]', space=sflag, size = 0x4, offset = 0, fixed_abs, tag = 'sflag constant byte address 0x0 - dummy sync flag']
  #allocation15 [shape = 's32[]', space=sflag, size = 0x4, offset = 0, fixed_abs, tag = 'sflag constant byte address 0x0 - dummy sync flag']
  #allocation16 [shape = 's32[]', space=sflag, size = 0x4, offset = 0, fixed_abs, tag = 'sflag constant byte address 0x0 - dummy sync flag']
  #allocation17 [shape = 's32[]', space=sflag, size = 0x4, offset = 0, fixed_abs, tag = 'sflag constant byte address 0x0 - dummy sync flag']
  #allocation18 [shape = 's32[]', space=sflag, size = 0x4, offset = 0, fixed_abs, tag = 'sflag constant byte address 0x0 - dummy sync flag']
  #allocation19 [shape = 's32[]', space=sflag, size = 0x4, offset = 0, fixed_abs, tag = 'sflag constant byte address 0x0 - dummy sync flag']
  #allocation20 [shape = 's32[]', space=sflag, size = 0x4, offset = 0, fixed_abs, tag = 'sflag constant byte address 0x0 - dummy sync flag']
  #allocation21 [shape = 's32[]', space=sflag, size = 0x4, offset = 0, fixed_abs, tag = 'sflag constant byte address 0x0 - dummy sync flag']
  #allocation22 [shape = 's32[]', space=sflag, size = 0x4, offset = 0, fixed_abs, tag = 'sflag constant byte address 0x0 - dummy sync flag']
  #allocation23 [shape = 's32[]', space=sflag, size = 0x4, offset = 0, fixed_abs, tag = 'sflag constant byte address 0x0 - dummy sync flag']
  #allocation24 [shape = 's32[]', space=sflag, size = 0x4, offset = 0, fixed_abs, tag = 'sflag constant byte address 0x0 - dummy sync flag']
  %s0 = inlined_call_operand.vmem [shape: s32[16], index: 0, kind: input, shape index: {}]
  %s1 = inlined_call_operand.vmem [shape: f32[2,8], index: 1, kind: input, shape index: {}]
  %s2 = inlined_call_operand.vmem [shape: f32[2,256], index: 2, kind: input, shape index: {}]
  %s3 = inlined_call_operand.vmem [shape: f32[512,128], index: 3, kind: input, shape index: {}]
  %s4 = inlined_call_operand.vmem [shape: bf16[128,128], index: 4, kind: input, shape index: {}]
  %s5 = inlined_call_operand.vmem [shape: f32[1,128], index: 5, kind: input, shape index: {}]
  %s6 = inlined_call_operand.vmem [shape: bf16[256,128], index: 6, kind: input, shape index: {}]
  %s7 = inlined_call_operand.vmem [shape: f32[1,128], index: 7, kind: input, shape index: {}]
  %s8 = inlined_call_operand.vmem [shape: bf16[128,256], index: 8, kind: input, shape index: {}]
  %s9 = inlined_call_operand.vmem [shape: f32[1,256], index: 9, kind: input, shape index: {}]
  %s10 = inlined_call_operand.vmem [shape: f32[1,256], index: 10, kind: input, shape index: {}]
  %s11 = inlined_call_operand.vmem [shape: f32[1,256], index: 11, kind: input, shape index: {}]
  %s12 = inlined_call_operand.<no memory space> [shape: f32[1,1], index: 12, kind: input, shape index: {}]
  %s13 = inlined_call_operand.vmem [shape: bf16[256,128], index: 13, kind: input, shape index: {}]
  %s14 = inlined_call_operand.vmem [shape: f32[1,128], index: 14, kind: input, shape index: {}]
  %s15 = inlined_call_operand.vmem [shape: bf16[128,128], index: 15, kind: input, shape index: {}]
  %s16 = inlined_call_operand.vmem [shape: bf16[128,128], index: 16, kind: input, shape index: {}]
  %s17 = inlined_call_operand.vmem [shape: f32[1,128], index: 17, kind: input, shape index: {}]
  %s18 = inlined_call_operand.hbm [shape: f32[2,128], index: 18, kind: output, shape index: {0}]
  %s19 = inlined_call_operand.vmem [shape: bf16[2,128], index: 19, kind: output, shape index: {1}]
  %20 = xla_tuple %s18, %s19
  %s21 = sld [smem:[#allocation0]]
  $region570: #{kbrd_forward.4} parent=0
    _
  %s23 = ssub.s32 1, %s21
  %s24 = scalar_select 0, %s23, %s21
  %v25 = vstv %s12
  %26 = vst [vmem:[#allocation4] sm:$0x1] %v25
  $region1: #{kbrd_forward.4} parent=0
    #allocation5 [shape = 'u8[512]{0}', space=smem, size = 0x200, scoped, tag = 'input window, operand 0, single buffered']
    #allocation6 [shape = 's32[1]{0}', space=sflag, size = 0x4, scoped, tag = 'scoped memory for kbrd_forward.4']
    #allocation7 [shape = 's32[1]{0}', space=sflag, size = 0x4, scoped, tag = 'scoped memory for kbrd_forward.4']
    #allocation8 [shape = 'u8[1024]{0}', space=vmem, size = 0x400, scoped, tag = 'output window, operand 0, single buffered']
    %27 = vsyncpa [#allocation7], 0
    %28 = vsyncpa [#allocation6], 0
    // Predicated region
    $region2: #{kbrd_forward.4} parent=1 // pred_check
      _
    $region3: #{kbrd_forward.4} parent=1 // pred_check_branch
      %30 = sbr.rel (0) target = $region5
    $region4: #{kbrd_forward.4} parent=1 // pred_region
      %s32 = ssub.s32 16, 16
      %33 = vsyncadd [#allocation7], %s32
      %s35 = sshll.u32 %s0, 4
      %s36 = int_to_ptr.vmem [resolvable:$true] %s35
      %38 = dma.vmem_to_smem %s36, 16, [#allocation5], [#allocation7]
    $region5: #{kbrd_forward.4} parent=1 // pred_fallthru
      _
    // Predicated region
    $region6: #{kbrd_forward.4} parent=1 // pred_check
      _
    $region7: #{kbrd_forward.4} parent=1 // pred_check_branch
      %40 = sbr.rel (0) target = $region9
    $region8: #{kbrd_forward.4} parent=1 // pred_region
      _
    $region9: #{kbrd_forward.4} parent=1 // pred_fallthru
      _
    // Predicated region
    $region10: #{kbrd_forward.4} parent=1 // pred_check
      _
    $region11: #{kbrd_forward.4} parent=1 // pred_check_branch
      %42 = sbr.rel (0) target = $region13
    $region12: #{kbrd_forward.4} parent=1 // pred_region
      _
    $region13: #{kbrd_forward.4} parent=1 // pred_fallthru
      _
    // Predicated region
    $region14: #{kbrd_forward.4} parent=1 // pred_check
      _
    $region15: #{kbrd_forward.4} parent=1 // pred_check_branch
      %44 = sbr.rel (0) target = $region17
    $region16: #{kbrd_forward.4} parent=1 // pred_region
      _
    $region17: #{kbrd_forward.4} parent=1 // pred_fallthru
      _
    // Predicated region
    $region18: #{kbrd_forward.4} parent=1 // pred_check
      _
    $region19: #{kbrd_forward.4} parent=1 // pred_check_branch
      %46 = sbr.rel (0) target = $region21
    $region20: #{kbrd_forward.4} parent=1 // pred_region
      _
    $region21: #{kbrd_forward.4} parent=1 // pred_fallthru
      _
    // Predicated region
    $region22: #{kbrd_forward.4} parent=1 // pred_check
      _
    $region23: #{kbrd_forward.4} parent=1 // pred_check_branch
      %48 = sbr.rel (0) target = $region25
    $region24: #{kbrd_forward.4} parent=1 // pred_region
      _
    $region25: #{kbrd_forward.4} parent=1 // pred_fallthru
      _
    // Predicated region
    $region26: #{kbrd_forward.4} parent=1 // pred_check
      _
    $region27: #{kbrd_forward.4} parent=1 // pred_check_branch
      %50 = sbr.rel (0) target = $region29
    $region28: #{kbrd_forward.4} parent=1 // pred_region
      _
    $region29: #{kbrd_forward.4} parent=1 // pred_fallthru
      _
    // Predicated region
    $region30: #{kbrd_forward.4} parent=1 // pred_check
      _
    $region31: #{kbrd_forward.4} parent=1 // pred_check_branch
      %52 = sbr.rel (0) target = $region33
    $region32: #{kbrd_forward.4} parent=1 // pred_region
      _
    $region33: #{kbrd_forward.4} parent=1 // pred_fallthru
      _
    // Predicated region
    $region34: #{kbrd_forward.4} parent=1 // pred_check
      _
    $region35: #{kbrd_forward.4} parent=1 // pred_check_branch
      %54 = sbr.rel (0) target = $region37
    $region36: #{kbrd_forward.4} parent=1 // pred_region
      _
    $region37: #{kbrd_forward.4} parent=1 // pred_fallthru
      _
    // Predicated region
    $region38: #{kbrd_forward.4} parent=1 // pred_check
      _
    $region39: #{kbrd_forward.4} parent=1 // pred_check_branch
      %56 = sbr.rel (0) target = $region41
    $region40: #{kbrd_forward.4} parent=1 // pred_region
      _
    $region41: #{kbrd_forward.4} parent=1 // pred_fallthru
      _
    // Predicated region
    $region42: #{kbrd_forward.4} parent=1 // pred_check
      _
    $region43: #{kbrd_forward.4} parent=1 // pred_check_branch
      %58 = sbr.rel (0) target = $region45
    $region44: #{kbrd_forward.4} parent=1 // pred_region
      _
    $region45: #{kbrd_forward.4} parent=1 // pred_fallthru
      _
    // Predicated region
    $region46: #{kbrd_forward.4} parent=1 // pred_check
      _
    $region47: #{kbrd_forward.4} parent=1 // pred_check_branch
      %60 = sbr.rel (0) target = $region49
    $region48: #{kbrd_forward.4} parent=1 // pred_region
      _
    $region49: #{kbrd_forward.4} parent=1 // pred_fallthru
      _
    // Predicated region
    $region50: #{kbrd_forward.4} parent=1 // pred_check
      _
    $region51: #{kbrd_forward.4} parent=1 // pred_check_branch
      %62 = sbr.rel (0) target = $region53
    $region52: #{kbrd_forward.4} parent=1 // pred_region
      _
    $region53: #{kbrd_forward.4} parent=1 // pred_fallthru
      _
    // Predicated region
    $region54: #{kbrd_forward.4} parent=1 // pred_check
      _
    $region55: #{kbrd_forward.4} parent=1 // pred_check_branch
      %64 = sbr.rel (0) target = $region57
    $region56: #{kbrd_forward.4} parent=1 // pred_region
      _
    $region57: #{kbrd_forward.4} parent=1 // pred_fallthru
      _
    // Predicated region
    $region58: #{kbrd_forward.4} parent=1 // pred_check
      _
    $region59: #{kbrd_forward.4} parent=1 // pred_check_branch
      %66 = sbr.rel (0) target = $region61
    $region60: #{kbrd_forward.4} parent=1 // pred_region
      _
    $region61: #{kbrd_forward.4} parent=1 // pred_fallthru
      _
    // Predicated region
    $region62: #{kbrd_forward.4} parent=1 // pred_check
      _
    $region63: #{kbrd_forward.4} parent=1 // pred_check_branch
      %68 = sbr.rel (0) target = $region65
    $region64: #{kbrd_forward.4} parent=1 // pred_region
      _
    $region65: #{kbrd_forward.4} parent=1 // pred_fallthru
      _
    // Predicated region
    $region66: #{kbrd_forward.4} parent=1 // pred_check
      _
    $region67: #{kbrd_forward.4} parent=1 // pred_check_branch
      %70 = sbr.rel (0) target = $region69
    $region68: #{kbrd_forward.4} parent=1 // pred_region
      _
    $region69: #{kbrd_forward.4} parent=1 // pred_fallthru
      _
    // Predicated region
    $region70: #{kbrd_forward.4} parent=1 // pred_check
      _
    $region71: #{kbrd_forward.4} parent=1 // pred_check_branch
      %72 = sbr.rel (0) target = $region73
    $region72: #{kbrd_forward.4} parent=1 // pred_region
      %73 = dma.done [#allocation7], 16
    $region73: #{kbrd_forward.4} parent=1 // pred_fallthru
      _
    %74 = sfence
    %s76 = sld [smem:[#allocation5]]
    %s77 = scalar_lea.vmem %s3, %s76
    %p79 = scmp.lt.u32.totalorder 1, 8
    %p80 = pneg %p79
    // Predicated region
    $region74: #{kbrd_forward.4} parent=1 // pred_check
      _
    $region75: #{kbrd_forward.4} parent=1 // pred_check_branch
      %82 = sbr.rel (%p79) target = $region77
    $region76: #{kbrd_forward.4} parent=1 // pred_region
      %s98 = sand.u32 1, 7
      %p99 = scmp.eq.s32.totalorder %s98, 0
      %p100 = pneg %p99
      // Predicated region
      $region89: #{kbrd_forward.4} parent=76 // pred_check
        _
      $region90: #{kbrd_forward.4} parent=76 // pred_check_branch
        %102 = sbr.rel (%p99) target = $region92
      $region91: #{kbrd_forward.4} parent=76 // pred_region
        %s103 = sand.u32 1, 7
        %s104 = ssub.s32 1, %s103
        %s105 = scalar_lea.vmem %s77, %s104
        %s106 = ssub.s32 1, %s103
        %s107 = scalar_lea.vmem [#allocation2], %s106
        %s108 = sshll.u32 1, %s103
        %s109 = ssub.s32 %s108, 1
        loop: start=0, step=1, limit=1
        $region93: #{kbrd_forward.4} parent=91 // loop_pre_header
          _
        $region94: #{kbrd_forward.4} parent=91 // loop_header
          %s111 = sphi 0, %s115
          %p112 = scmp.ge.s32.totalorder %s111, 1
          %s116 = sphi %s105, %s105
          %s117 = sphi %s107, %s107
        $region95: #{kbrd_forward.4} parent=91 // loop_header_branch
          %114 = sbr.rel (%p112) target = $region99
        $region96: #{kbrd_forward.4} parent=91 // loop_body
          %v118 = vld [vmem:[%s116] sm:%s109]
          %119 = vst [vmem:[%s117] sm:%s109] %v118
        $region97: #{kbrd_forward.4} parent=91 // loop_footer
          %s115 = sadd.s32 1, %s111
        $region98: #{kbrd_forward.4} parent=91 // loop_footer_branch
          %110 = sbr.rel target = $region94
        $region99: #{kbrd_forward.4} parent=91 // loop_exit
          _
      $region92: #{kbrd_forward.4} parent=76 // pred_fallthru
        _
    $region77: #{kbrd_forward.4} parent=1 // pred_fallthru
      _
    // Predicated region
    $region78: #{kbrd_forward.4} parent=1 // pred_check
      %p83 = pneg %p79
    $region79: #{kbrd_forward.4} parent=1 // pred_check_branch
      %85 = sbr.rel (%p83) target = $region81
    $region80: #{kbrd_forward.4} parent=1 // pred_region
      %s86 = sshll.u32 1, 1
      %s87 = ssub.s32 %s86, 1
      loop: start=0, step=1, limit=1
      $region82: #{kbrd_forward.4} parent=80 // loop_pre_header
        _
      $region83: #{kbrd_forward.4} parent=80 // loop_header
        %s89 = sphi 0, %s93
        %p90 = scmp.ge.s32.totalorder %s89, 1
        %s94 = sphi %s77, %s77
        %s95 = sphi [#allocation2], [#allocation2]
      $region84: #{kbrd_forward.4} parent=80 // loop_header_branch
        %92 = sbr.rel (%p90) target = $region88
      $region85: #{kbrd_forward.4} parent=80 // loop_body
        %v96 = vld [vmem:[%s94] sm:%s87]
        %97 = vst [vmem:[%s95] sm:%s87] %v96
      $region86: #{kbrd_forward.4} parent=80 // loop_footer
        %s93 = sadd.s32 1, %s89
      $region87: #{kbrd_forward.4} parent=80 // loop_footer_branch
        %88 = sbr.rel target = $region83
      $region88: #{kbrd_forward.4} parent=80 // loop_exit
        _
    $region81: #{kbrd_forward.4} parent=1 // pred_fallthru
      _
    // Predicated region
    $region100: #{kbrd_forward.4} parent=1 // pred_check
      _
    $region101: #{kbrd_forward.4} parent=1 // pred_check_branch
      %122 = sbr.rel (0) target = $region103
    $region102: #{kbrd_forward.4} parent=1 // pred_region
      %123 = vsyncadd [#allocation3], 16
    $region103: #{kbrd_forward.4} parent=1 // pred_fallthru
      _
    %s124 = sld [smem:[#allocation5 + $0x1]]
    %s125 = scalar_lea.vmem %s3, %s124
    %s126 = scalar_lea.vmem [#allocation2], 1
    %s127 = scalar_lea.sflag [#allocation3], 1
    %p129 = scmp.lt.u32.totalorder 1, 8
    %p130 = pneg %p129
    // Predicated region
    $region104: #{kbrd_forward.4} parent=1 // pred_check
      _
    $region105: #{kbrd_forward.4} parent=1 // pred_check_branch
      %132 = sbr.rel (%p129) target = $region107
    $region106: #{kbrd_forward.4} parent=1 // pred_region
      %s148 = sand.u32 1, 7
      %p149 = scmp.eq.s32.totalorder %s148, 0
      %p150 = pneg %p149
      // Predicated region
      $region119: #{kbrd_forward.4} parent=106 // pred_check
        _
      $region120: #{kbrd_forward.4} parent=106 // pred_check_branch
        %152 = sbr.rel (%p149) target = $region122
      $region121: #{kbrd_forward.4} parent=106 // pred_region
        %s153 = sand.u32 1, 7
        %s154 = ssub.s32 1, %s153
        %s155 = scalar_lea.vmem %s125, %s154
        %s156 = ssub.s32 1, %s153
        %s157 = scalar_lea.vmem %s126, %s156 [#allocation2]
        %s158 = sshll.u32 1, %s153
        %s159 = ssub.s32 %s158, 1
        loop: start=0, step=1, limit=1
        $region123: #{kbrd_forward.4} parent=121 // loop_pre_header
          _
        $region124: #{kbrd_forward.4} parent=121 // loop_header
          %s161 = sphi 0, %s165
          %p162 = scmp.ge.s32.totalorder %s161, 1
          %s166 = sphi %s155, %s155
          %s167 = sphi %s157, %s157
        $region125: #{kbrd_forward.4} parent=121 // loop_header_branch
          %164 = sbr.rel (%p162) target = $region129
        $region126: #{kbrd_forward.4} parent=121 // loop_body
          %v168 = vld [vmem:[%s166] sm:%s159]
          %169 = vst [vmem:[%s167] sm:%s159] %v168
        $region127: #{kbrd_forward.4} parent=121 // loop_footer
          %s165 = sadd.s32 1, %s161
        $region128: #{kbrd_forward.4} parent=121 // loop_footer_branch
          %160 = sbr.rel target = $region124
        $region129: #{kbrd_forward.4} parent=121 // loop_exit
          _
      $region122: #{kbrd_forward.4} parent=106 // pred_fallthru
        _
    $region107: #{kbrd_forward.4} parent=1 // pred_fallthru
      _
    // Predicated region
    $region108: #{kbrd_forward.4} parent=1 // pred_check
      %p133 = pneg %p129
    $region109: #{kbrd_forward.4} parent=1 // pred_check_branch
      %135 = sbr.rel (%p133) target = $region111
    $region110: #{kbrd_forward.4} parent=1 // pred_region
      %s136 = sshll.u32 1, 1
      %s137 = ssub.s32 %s136, 1
      loop: start=0, step=1, limit=1
      $region112: #{kbrd_forward.4} parent=110 // loop_pre_header
        _
      $region113: #{kbrd_forward.4} parent=110 // loop_header
        %s139 = sphi 0, %s143
        %p140 = scmp.ge.s32.totalorder %s139, 1
        %s144 = sphi %s125, %s125
        %s145 = sphi %s126, %s126
      $region114: #{kbrd_forward.4} parent=110 // loop_header_branch
        %142 = sbr.rel (%p140) target = $region118
      $region115: #{kbrd_forward.4} parent=110 // loop_body
        %v146 = vld [vmem:[%s144] sm:%s137]
        %147 = vst [vmem:[%s145] sm:%s137] %v146
      $region116: #{kbrd_forward.4} parent=110 // loop_footer
        %s143 = sadd.s32 1, %s139
      $region117: #{kbrd_forward.4} parent=110 // loop_footer_branch
        %138 = sbr.rel target = $region113
      $region118: #{kbrd_forward.4} parent=110 // loop_exit
        _
    $region111: #{kbrd_forward.4} parent=1 // pred_fallthru
      _
    // Predicated region
    $region130: #{kbrd_forward.4} parent=1 // pred_check
      _
    $region131: #{kbrd_forward.4} parent=1 // pred_check_branch
      %172 = sbr.rel (0) target = $region133
    $region132: #{kbrd_forward.4} parent=1 // pred_region
      %173 = vsyncadd %s127, 16
    $region133: #{kbrd_forward.4} parent=1 // pred_fallthru
      _
    %s174 = sld [smem:[#allocation5 + $0x2]]
    %s175 = scalar_lea.vmem %s3, %s174
    %s176 = scalar_lea.vmem [#allocation2], 2
    %s177 = scalar_lea.sflag [#allocation3], 2
    %p179 = scmp.lt.u32.totalorder 1, 8
    %p180 = pneg %p179
    // Predicated region
    $region134: #{kbrd_forward.4} parent=1 // pred_check
      _
    $region135: #{kbrd_forward.4} parent=1 // pred_check_branch
      %182 = sbr.rel (%p179) target = $region137
    $region136: #{kbrd_forward.4} parent=1 // pred_region
      %s198 = sand.u32 1, 7
      %p199 = scmp.eq.s32.totalorder %s198, 0
      %p200 = pneg %p199
      // Predicated region
      $region149: #{kbrd_forward.4} parent=136 // pred_check
        _
      $region150: #{kbrd_forward.4} parent=136 // pred_check_branch
        %202 = sbr.rel (%p199) target = $region152
      $region151: #{kbrd_forward.4} parent=136 // pred_region
        %s203 = sand.u32 1, 7
        %s204 = ssub.s32 1, %s203
        %s205 = scalar_lea.vmem %s175, %s204
        %s206 = ssub.s32 1, %s203
        %s207 = scalar_lea.vmem %s176, %s206 [#allocation2]
        %s208 = sshll.u32 1, %s203
        %s209 = ssub.s32 %s208, 1
        loop: start=0, step=1, limit=1
        $region153: #{kbrd_forward.4} parent=151 // loop_pre_header
          _
        $region154: #{kbrd_forward.4} parent=151 // loop_header
          %s211 = sphi 0, %s215
          %p212 = scmp.ge.s32.totalorder %s211, 1
          %s216 = sphi %s205, %s205
          %s217 = sphi %s207, %s207
        $region155: #{kbrd_forward.4} parent=151 // loop_header_branch
          %214 = sbr.rel (%p212) target = $region159
        $region156: #{kbrd_forward.4} parent=151 // loop_body
          %v218 = vld [vmem:[%s216] sm:%s209]
          %219 = vst [vmem:[%s217] sm:%s209] %v218
        $region157: #{kbrd_forward.4} parent=151 // loop_footer
          %s215 = sadd.s32 1, %s211
        $region158: #{kbrd_forward.4} parent=151 // loop_footer_branch
          %210 = sbr.rel target = $region154
        $region159: #{kbrd_forward.4} parent=151 // loop_exit
          _
      $region152: #{kbrd_forward.4} parent=136 // pred_fallthru
        _
    $region137: #{kbrd_forward.4} parent=1 // pred_fallthru
      _
    // Predicated region
    $region138: #{kbrd_forward.4} parent=1 // pred_check
      %p183 = pneg %p179
    $region139: #{kbrd_forward.4} parent=1 // pred_check_branch
      %185 = sbr.rel (%p183) target = $region141
    $region140: #{kbrd_forward.4} parent=1 // pred_region
      %s186 = sshll.u32 1, 1
      %s187 = ssub.s32 %s186, 1
      loop: start=0, step=1, limit=1
      $region142: #{kbrd_forward.4} parent=140 // loop_pre_header
        _
      $region143: #{kbrd_forward.4} parent=140 // loop_header
        %s189 = sphi 0, %s193
        %p190 = scmp.ge.s32.totalorder %s189, 1
        %s194 = sphi %s175, %s175
        %s195 = sphi %s176, %s176
      $region144: #{kbrd_forward.4} parent=140 // loop_header_branch
        %192 = sbr.rel (%p190) target = $region148
      $region145: #{kbrd_forward.4} parent=140 // loop_body
        %v196 = vld [vmem:[%s194] sm:%s187]
        %197 = vst [vmem:[%s195] sm:%s187] %v196
      $region146: #{kbrd_forward.4} parent=140 // loop_footer
        %s193 = sadd.s32 1, %s189
      $region147: #{kbrd_forward.4} parent=140 // loop_footer_branch
        %188 = sbr.rel target = $region143
      $region148: #{kbrd_forward.4} parent=140 // loop_exit
        _
    $region141: #{kbrd_forward.4} parent=1 // pred_fallthru
      _
    // Predicated region
    $region160: #{kbrd_forward.4} parent=1 // pred_check
      _
    $region161: #{kbrd_forward.4} parent=1 // pred_check_branch
      %222 = sbr.rel (0) target = $region163
    $region162: #{kbrd_forward.4} parent=1 // pred_region
      %223 = vsyncadd %s177, 16
    $region163: #{kbrd_forward.4} parent=1 // pred_fallthru
      _
    %s224 = sld [smem:[#allocation5 + $0x3]]
    %s225 = scalar_lea.vmem %s3, %s224
    %s226 = scalar_lea.vmem [#allocation2], 3
    %s227 = scalar_lea.sflag [#allocation3], 3
    %p229 = scmp.lt.u32.totalorder 1, 8
    %p230 = pneg %p229
    // Predicated region
    $region164: #{kbrd_forward.4} parent=1 // pred_check
      _
    $region165: #{kbrd_forward.4} parent=1 // pred_check_branch
      %232 = sbr.rel (%p229) target = $region167
    $region166: #{kbrd_forward.4} parent=1 // pred_region
      %s248 = sand.u32 1, 7
      %p249 = scmp.eq.s32.totalorder %s248, 0
      %p250 = pneg %p249
      // Predicated region
      $region179: #{kbrd_forward.4} parent=166 // pred_check
        _
      $region180: #{kbrd_forward.4} parent=166 // pred_check_branch
        %252 = sbr.rel (%p249) target = $region182
      $region181: #{kbrd_forward.4} parent=166 // pred_region
        %s253 = sand.u32 1, 7
        %s254 = ssub.s32 1, %s253
        %s255 = scalar_lea.vmem %s225, %s254
        %s256 = ssub.s32 1, %s253
        %s257 = scalar_lea.vmem %s226, %s256 [#allocation2]
        %s258 = sshll.u32 1, %s253
        %s259 = ssub.s32 %s258, 1
        loop: start=0, step=1, limit=1
        $region183: #{kbrd_forward.4} parent=181 // loop_pre_header
          _
        $region184: #{kbrd_forward.4} parent=181 // loop_header
          %s261 = sphi 0, %s265
          %p262 = scmp.ge.s32.totalorder %s261, 1
          %s266 = sphi %s255, %s255
          %s267 = sphi %s257, %s257
        $region185: #{kbrd_forward.4} parent=181 // loop_header_branch
          %264 = sbr.rel (%p262) target = $region189
        $region186: #{kbrd_forward.4} parent=181 // loop_body
          %v268 = vld [vmem:[%s266] sm:%s259]
          %269 = vst [vmem:[%s267] sm:%s259] %v268
        $region187: #{kbrd_forward.4} parent=181 // loop_footer
          %s265 = sadd.s32 1, %s261
        $region188: #{kbrd_forward.4} parent=181 // loop_footer_branch
          %260 = sbr.rel target = $region184
        $region189: #{kbrd_forward.4} parent=181 // loop_exit
          _
      $region182: #{kbrd_forward.4} parent=166 // pred_fallthru
        _
    $region167: #{kbrd_forward.4} parent=1 // pred_fallthru
      _
    // Predicated region
    $region168: #{kbrd_forward.4} parent=1 // pred_check
      %p233 = pneg %p229
    $region169: #{kbrd_forward.4} parent=1 // pred_check_branch
      %235 = sbr.rel (%p233) target = $region171
    $region170: #{kbrd_forward.4} parent=1 // pred_region
      %s236 = sshll.u32 1, 1
      %s237 = ssub.s32 %s236, 1
      loop: start=0, step=1, limit=1
      $region172: #{kbrd_forward.4} parent=170 // loop_pre_header
        _
      $region173: #{kbrd_forward.4} parent=170 // loop_header
        %s239 = sphi 0, %s243
        %p240 = scmp.ge.s32.totalorder %s239, 1
        %s244 = sphi %s225, %s225
        %s245 = sphi %s226, %s226
      $region174: #{kbrd_forward.4} parent=170 // loop_header_branch
        %242 = sbr.rel (%p240) target = $region178
      $region175: #{kbrd_forward.4} parent=170 // loop_body
        %v246 = vld [vmem:[%s244] sm:%s237]
        %247 = vst [vmem:[%s245] sm:%s237] %v246
      $region176: #{kbrd_forward.4} parent=170 // loop_footer
        %s243 = sadd.s32 1, %s239
      $region177: #{kbrd_forward.4} parent=170 // loop_footer_branch
        %238 = sbr.rel target = $region173
      $region178: #{kbrd_forward.4} parent=170 // loop_exit
        _
    $region171: #{kbrd_forward.4} parent=1 // pred_fallthru
      _
    // Predicated region
    $region190: #{kbrd_forward.4} parent=1 // pred_check
      _
    $region191: #{kbrd_forward.4} parent=1 // pred_check_branch
      %272 = sbr.rel (0) target = $region193
    $region192: #{kbrd_forward.4} parent=1 // pred_region
      %273 = vsyncadd %s227, 16
    $region193: #{kbrd_forward.4} parent=1 // pred_fallthru
      _
    %s274 = sld [smem:[#allocation5 + $0x4]]
    %s275 = scalar_lea.vmem %s3, %s274
    %s276 = scalar_lea.vmem [#allocation2], 4
    %s277 = scalar_lea.sflag [#allocation3], 4
    %p279 = scmp.lt.u32.totalorder 1, 8
    %p280 = pneg %p279
    // Predicated region
    $region194: #{kbrd_forward.4} parent=1 // pred_check
      _
    $region195: #{kbrd_forward.4} parent=1 // pred_check_branch
      %282 = sbr.rel (%p279) target = $region197
    $region196: #{kbrd_forward.4} parent=1 // pred_region
      %s298 = sand.u32 1, 7
      %p299 = scmp.eq.s32.totalorder %s298, 0
      %p300 = pneg %p299
      // Predicated region
      $region209: #{kbrd_forward.4} parent=196 // pred_check
        _
      $region210: #{kbrd_forward.4} parent=196 // pred_check_branch
        %302 = sbr.rel (%p299) target = $region212
      $region211: #{kbrd_forward.4} parent=196 // pred_region
        %s303 = sand.u32 1, 7
        %s304 = ssub.s32 1, %s303
        %s305 = scalar_lea.vmem %s275, %s304
        %s306 = ssub.s32 1, %s303
        %s307 = scalar_lea.vmem %s276, %s306 [#allocation2]
        %s308 = sshll.u32 1, %s303
        %s309 = ssub.s32 %s308, 1
        loop: start=0, step=1, limit=1
        $region213: #{kbrd_forward.4} parent=211 // loop_pre_header
          _
        $region214: #{kbrd_forward.4} parent=211 // loop_header
          %s311 = sphi 0, %s315
          %p312 = scmp.ge.s32.totalorder %s311, 1
          %s316 = sphi %s305, %s305
          %s317 = sphi %s307, %s307
        $region215: #{kbrd_forward.4} parent=211 // loop_header_branch
          %314 = sbr.rel (%p312) target = $region219
        $region216: #{kbrd_forward.4} parent=211 // loop_body
          %v318 = vld [vmem:[%s316] sm:%s309]
          %319 = vst [vmem:[%s317] sm:%s309] %v318
        $region217: #{kbrd_forward.4} parent=211 // loop_footer
          %s315 = sadd.s32 1, %s311
        $region218: #{kbrd_forward.4} parent=211 // loop_footer_branch
          %310 = sbr.rel target = $region214
        $region219: #{kbrd_forward.4} parent=211 // loop_exit
          _
      $region212: #{kbrd_forward.4} parent=196 // pred_fallthru
        _
    $region197: #{kbrd_forward.4} parent=1 // pred_fallthru
      _
    // Predicated region
    $region198: #{kbrd_forward.4} parent=1 // pred_check
      %p283 = pneg %p279
    $region199: #{kbrd_forward.4} parent=1 // pred_check_branch
      %285 = sbr.rel (%p283) target = $region201
    $region200: #{kbrd_forward.4} parent=1 // pred_region
      %s286 = sshll.u32 1, 1
      %s287 = ssub.s32 %s286, 1
      loop: start=0, step=1, limit=1
      $region202: #{kbrd_forward.4} parent=200 // loop_pre_header
        _
      $region203: #{kbrd_forward.4} parent=200 // loop_header
        %s289 = sphi 0, %s293
        %p290 = scmp.ge.s32.totalorder %s289, 1
        %s294 = sphi %s275, %s275
        %s295 = sphi %s276, %s276
      $region204: #{kbrd_forward.4} parent=200 // loop_header_branch
        %292 = sbr.rel (%p290) target = $region208
      $region205: #{kbrd_forward.4} parent=200 // loop_body
        %v296 = vld [vmem:[%s294] sm:%s287]
        %297 = vst [vmem:[%s295] sm:%s287] %v296
      $region206: #{kbrd_forward.4} parent=200 // loop_footer
        %s293 = sadd.s32 1, %s289
      $region207: #{kbrd_forward.4} parent=200 // loop_footer_branch
        %288 = sbr.rel target = $region203
      $region208: #{kbrd_forward.4} parent=200 // loop_exit
        _
    $region201: #{kbrd_forward.4} parent=1 // pred_fallthru
      _
    // Predicated region
    $region220: #{kbrd_forward.4} parent=1 // pred_check
      _
    $region221: #{kbrd_forward.4} parent=1 // pred_check_branch
      %322 = sbr.rel (0) target = $region223
    $region222: #{kbrd_forward.4} parent=1 // pred_region
      %323 = vsyncadd %s277, 16
    $region223: #{kbrd_forward.4} parent=1 // pred_fallthru
      _
    %s324 = sld [smem:[#allocation5 + $0x5]]
    %s325 = scalar_lea.vmem %s3, %s324
    %s326 = scalar_lea.vmem [#allocation2], 5
    %s327 = scalar_lea.sflag [#allocation3], 5
    %p329 = scmp.lt.u32.totalorder 1, 8
    %p330 = pneg %p329
    // Predicated region
    $region224: #{kbrd_forward.4} parent=1 // pred_check
      _
    $region225: #{kbrd_forward.4} parent=1 // pred_check_branch
      %332 = sbr.rel (%p329) target = $region227
    $region226: #{kbrd_forward.4} parent=1 // pred_region
      %s348 = sand.u32 1, 7
      %p349 = scmp.eq.s32.totalorder %s348, 0
      %p350 = pneg %p349
      // Predicated region
      $region239: #{kbrd_forward.4} parent=226 // pred_check
        _
      $region240: #{kbrd_forward.4} parent=226 // pred_check_branch
        %352 = sbr.rel (%p349) target = $region242
      $region241: #{kbrd_forward.4} parent=226 // pred_region
        %s353 = sand.u32 1, 7
        %s354 = ssub.s32 1, %s353
        %s355 = scalar_lea.vmem %s325, %s354
        %s356 = ssub.s32 1, %s353
        %s357 = scalar_lea.vmem %s326, %s356 [#allocation2]
        %s358 = sshll.u32 1, %s353
        %s359 = ssub.s32 %s358, 1
        loop: start=0, step=1, limit=1
        $region243: #{kbrd_forward.4} parent=241 // loop_pre_header
          _
        $region244: #{kbrd_forward.4} parent=241 // loop_header
          %s361 = sphi 0, %s365
          %p362 = scmp.ge.s32.totalorder %s361, 1
          %s366 = sphi %s355, %s355
          %s367 = sphi %s357, %s357
        $region245: #{kbrd_forward.4} parent=241 // loop_header_branch
          %364 = sbr.rel (%p362) target = $region249
        $region246: #{kbrd_forward.4} parent=241 // loop_body
          %v368 = vld [vmem:[%s366] sm:%s359]
          %369 = vst [vmem:[%s367] sm:%s359] %v368
        $region247: #{kbrd_forward.4} parent=241 // loop_footer
          %s365 = sadd.s32 1, %s361
        $region248: #{kbrd_forward.4} parent=241 // loop_footer_branch
          %360 = sbr.rel target = $region244
        $region249: #{kbrd_forward.4} parent=241 // loop_exit
          _
      $region242: #{kbrd_forward.4} parent=226 // pred_fallthru
        _
    $region227: #{kbrd_forward.4} parent=1 // pred_fallthru
      _
    // Predicated region
    $region228: #{kbrd_forward.4} parent=1 // pred_check
      %p333 = pneg %p329
    $region229: #{kbrd_forward.4} parent=1 // pred_check_branch
      %335 = sbr.rel (%p333) target = $region231
    $region230: #{kbrd_forward.4} parent=1 // pred_region
      %s336 = sshll.u32 1, 1
      %s337 = ssub.s32 %s336, 1
      loop: start=0, step=1, limit=1
      $region232: #{kbrd_forward.4} parent=230 // loop_pre_header
        _
      $region233: #{kbrd_forward.4} parent=230 // loop_header
        %s339 = sphi 0, %s343
        %p340 = scmp.ge.s32.totalorder %s339, 1
        %s344 = sphi %s325, %s325
        %s345 = sphi %s326, %s326
      $region234: #{kbrd_forward.4} parent=230 // loop_header_branch
        %342 = sbr.rel (%p340) target = $region238
      $region235: #{kbrd_forward.4} parent=230 // loop_body
        %v346 = vld [vmem:[%s344] sm:%s337]
        %347 = vst [vmem:[%s345] sm:%s337] %v346
      $region236: #{kbrd_forward.4} parent=230 // loop_footer
        %s343 = sadd.s32 1, %s339
      $region237: #{kbrd_forward.4} parent=230 // loop_footer_branch
        %338 = sbr.rel target = $region233
      $region238: #{kbrd_forward.4} parent=230 // loop_exit
        _
    $region231: #{kbrd_forward.4} parent=1 // pred_fallthru
      _
    // Predicated region
    $region250: #{kbrd_forward.4} parent=1 // pred_check
      _
    $region251: #{kbrd_forward.4} parent=1 // pred_check_branch
      %372 = sbr.rel (0) target = $region253
    $region252: #{kbrd_forward.4} parent=1 // pred_region
      %373 = vsyncadd %s327, 16
    $region253: #{kbrd_forward.4} parent=1 // pred_fallthru
      _
    %s374 = sld [smem:[#allocation5 + $0x6]]
    %s375 = scalar_lea.vmem %s3, %s374
    %s376 = scalar_lea.vmem [#allocation2], 6
    %s377 = scalar_lea.sflag [#allocation3], 6
    %p379 = scmp.lt.u32.totalorder 1, 8
    %p380 = pneg %p379
    // Predicated region
    $region254: #{kbrd_forward.4} parent=1 // pred_check
      _
    $region255: #{kbrd_forward.4} parent=1 // pred_check_branch
      %382 = sbr.rel (%p379) target = $region257
    $region256: #{kbrd_forward.4} parent=1 // pred_region
      %s398 = sand.u32 1, 7
      %p399 = scmp.eq.s32.totalorder %s398, 0
      %p400 = pneg %p399
      // Predicated region
      $region269: #{kbrd_forward.4} parent=256 // pred_check
        _
      $region270: #{kbrd_forward.4} parent=256 // pred_check_branch
        %402 = sbr.rel (%p399) target = $region272
      $region271: #{kbrd_forward.4} parent=256 // pred_region
        %s403 = sand.u32 1, 7
        %s404 = ssub.s32 1, %s403
        %s405 = scalar_lea.vmem %s375, %s404
        %s406 = ssub.s32 1, %s403
        %s407 = scalar_lea.vmem %s376, %s406 [#allocation2]
        %s408 = sshll.u32 1, %s403
        %s409 = ssub.s32 %s408, 1
        loop: start=0, step=1, limit=1
        $region273: #{kbrd_forward.4} parent=271 // loop_pre_header
          _
        $region274: #{kbrd_forward.4} parent=271 // loop_header
          %s411 = sphi 0, %s415
          %p412 = scmp.ge.s32.totalorder %s411, 1
          %s416 = sphi %s405, %s405
          %s417 = sphi %s407, %s407
        $region275: #{kbrd_forward.4} parent=271 // loop_header_branch
          %414 = sbr.rel (%p412) target = $region279
        $region276: #{kbrd_forward.4} parent=271 // loop_body
          %v418 = vld [vmem:[%s416] sm:%s409]
          %419 = vst [vmem:[%s417] sm:%s409] %v418
        $region277: #{kbrd_forward.4} parent=271 // loop_footer
          %s415 = sadd.s32 1, %s411
        $region278: #{kbrd_forward.4} parent=271 // loop_footer_branch
          %410 = sbr.rel target = $region274
        $region279: #{kbrd_forward.4} parent=271 // loop_exit
          _
      $region272: #{kbrd_forward.4} parent=256 // pred_fallthru
        _
    $region257: #{kbrd_forward.4} parent=1 // pred_fallthru
      _
    // Predicated region
    $region258: #{kbrd_forward.4} parent=1 // pred_check
      %p383 = pneg %p379
    $region259: #{kbrd_forward.4} parent=1 // pred_check_branch
      %385 = sbr.rel (%p383) target = $region261
    $region260: #{kbrd_forward.4} parent=1 // pred_region
      %s386 = sshll.u32 1, 1
      %s387 = ssub.s32 %s386, 1
      loop: start=0, step=1, limit=1
      $region262: #{kbrd_forward.4} parent=260 // loop_pre_header
        _
      $region263: #{kbrd_forward.4} parent=260 // loop_header
        %s389 = sphi 0, %s393
        %p390 = scmp.ge.s32.totalorder %s389, 1
        %s394 = sphi %s375, %s375
        %s395 = sphi %s376, %s376
      $region264: #{kbrd_forward.4} parent=260 // loop_header_branch
        %392 = sbr.rel (%p390) target = $region268
      $region265: #{kbrd_forward.4} parent=260 // loop_body
        %v396 = vld [vmem:[%s394] sm:%s387]
        %397 = vst [vmem:[%s395] sm:%s387] %v396
      $region266: #{kbrd_forward.4} parent=260 // loop_footer
        %s393 = sadd.s32 1, %s389
      $region267: #{kbrd_forward.4} parent=260 // loop_footer_branch
        %388 = sbr.rel target = $region263
      $region268: #{kbrd_forward.4} parent=260 // loop_exit
        _
    $region261: #{kbrd_forward.4} parent=1 // pred_fallthru
      _
    // Predicated region
    $region280: #{kbrd_forward.4} parent=1 // pred_check
      _
    $region281: #{kbrd_forward.4} parent=1 // pred_check_branch
      %422 = sbr.rel (0) target = $region283
    $region282: #{kbrd_forward.4} parent=1 // pred_region
      %423 = vsyncadd %s377, 16
    $region283: #{kbrd_forward.4} parent=1 // pred_fallthru
      _
    %s424 = sld [smem:[#allocation5 + $0x7]]
    %s425 = scalar_lea.vmem %s3, %s424
    %s426 = scalar_lea.vmem [#allocation2], 7
    %s427 = scalar_lea.sflag [#allocation3], 7
    %p429 = scmp.lt.u32.totalorder 1, 8
    %p430 = pneg %p429
    // Predicated region
    $region284: #{kbrd_forward.4} parent=1 // pred_check
      _
    $region285: #{kbrd_forward.4} parent=1 // pred_check_branch
      %432 = sbr.rel (%p429) target = $region287
    $region286: #{kbrd_forward.4} parent=1 // pred_region
      %s448 = sand.u32 1, 7
      %p449 = scmp.eq.s32.totalorder %s448, 0
      %p450 = pneg %p449
      // Predicated region
      $region299: #{kbrd_forward.4} parent=286 // pred_check
        _
      $region300: #{kbrd_forward.4} parent=286 // pred_check_branch
        %452 = sbr.rel (%p449) target = $region302
      $region301: #{kbrd_forward.4} parent=286 // pred_region
        %s453 = sand.u32 1, 7
        %s454 = ssub.s32 1, %s453
        %s455 = scalar_lea.vmem %s425, %s454
        %s456 = ssub.s32 1, %s453
        %s457 = scalar_lea.vmem %s426, %s456 [#allocation2]
        %s458 = sshll.u32 1, %s453
        %s459 = ssub.s32 %s458, 1
        loop: start=0, step=1, limit=1
        $region303: #{kbrd_forward.4} parent=301 // loop_pre_header
          _
        $region304: #{kbrd_forward.4} parent=301 // loop_header
          %s461 = sphi 0, %s465
          %p462 = scmp.ge.s32.totalorder %s461, 1
          %s466 = sphi %s455, %s455
          %s467 = sphi %s457, %s457
        $region305: #{kbrd_forward.4} parent=301 // loop_header_branch
          %464 = sbr.rel (%p462) target = $region309
        $region306: #{kbrd_forward.4} parent=301 // loop_body
          %v468 = vld [vmem:[%s466] sm:%s459]
          %469 = vst [vmem:[%s467] sm:%s459] %v468
        $region307: #{kbrd_forward.4} parent=301 // loop_footer
          %s465 = sadd.s32 1, %s461
        $region308: #{kbrd_forward.4} parent=301 // loop_footer_branch
          %460 = sbr.rel target = $region304
        $region309: #{kbrd_forward.4} parent=301 // loop_exit
          _
      $region302: #{kbrd_forward.4} parent=286 // pred_fallthru
        _
    $region287: #{kbrd_forward.4} parent=1 // pred_fallthru
      _
    // Predicated region
    $region288: #{kbrd_forward.4} parent=1 // pred_check
      %p433 = pneg %p429
    $region289: #{kbrd_forward.4} parent=1 // pred_check_branch
      %435 = sbr.rel (%p433) target = $region291
    $region290: #{kbrd_forward.4} parent=1 // pred_region
      %s436 = sshll.u32 1, 1
      %s437 = ssub.s32 %s436, 1
      loop: start=0, step=1, limit=1
      $region292: #{kbrd_forward.4} parent=290 // loop_pre_header
        _
      $region293: #{kbrd_forward.4} parent=290 // loop_header
        %s439 = sphi 0, %s443
        %p440 = scmp.ge.s32.totalorder %s439, 1
        %s444 = sphi %s425, %s425
        %s445 = sphi %s426, %s426
      $region294: #{kbrd_forward.4} parent=290 // loop_header_branch
        %442 = sbr.rel (%p440) target = $region298
      $region295: #{kbrd_forward.4} parent=290 // loop_body
        %v446 = vld [vmem:[%s444] sm:%s437]
        %447 = vst [vmem:[%s445] sm:%s437] %v446
      $region296: #{kbrd_forward.4} parent=290 // loop_footer
        %s443 = sadd.s32 1, %s439
      $region297: #{kbrd_forward.4} parent=290 // loop_footer_branch
        %438 = sbr.rel target = $region293
      $region298: #{kbrd_forward.4} parent=290 // loop_exit
        _
    $region291: #{kbrd_forward.4} parent=1 // pred_fallthru
      _
    // Predicated region
    $region310: #{kbrd_forward.4} parent=1 // pred_check
      _
    $region311: #{kbrd_forward.4} parent=1 // pred_check_branch
      %472 = sbr.rel (0) target = $region313
    $region312: #{kbrd_forward.4} parent=1 // pred_region
      %473 = vsyncadd %s427, 16
    $region313: #{kbrd_forward.4} parent=1 // pred_fallthru
      _
    %s474 = sld [smem:[#allocation5 + $0x8]]
    %s475 = scalar_lea.vmem %s3, %s474
    %s476 = scalar_lea.vmem [#allocation2], 8
    %s477 = scalar_lea.sflag [#allocation3], 8
    %p479 = scmp.lt.u32.totalorder 1, 8
    %p480 = pneg %p479
    // Predicated region
    $region314: #{kbrd_forward.4} parent=1 // pred_check
      _
    $region315: #{kbrd_forward.4} parent=1 // pred_check_branch
      %482 = sbr.rel (%p479) target = $region317
    $region316: #{kbrd_forward.4} parent=1 // pred_region
      %s498 = sand.u32 1, 7
      %p499 = scmp.eq.s32.totalorder %s498, 0
      %p500 = pneg %p499
      // Predicated region
      $region329: #{kbrd_forward.4} parent=316 // pred_check
        _
      $region330: #{kbrd_forward.4} parent=316 // pred_check_branch
        %502 = sbr.rel (%p499) target = $region332
      $region331: #{kbrd_forward.4} parent=316 // pred_region
        %s503 = sand.u32 1, 7
        %s504 = ssub.s32 1, %s503
        %s505 = scalar_lea.vmem %s475, %s504
        %s506 = ssub.s32 1, %s503
        %s507 = scalar_lea.vmem %s476, %s506 [#allocation2]
        %s508 = sshll.u32 1, %s503
        %s509 = ssub.s32 %s508, 1
        loop: start=0, step=1, limit=1
        $region333: #{kbrd_forward.4} parent=331 // loop_pre_header
          _
        $region334: #{kbrd_forward.4} parent=331 // loop_header
          %s511 = sphi 0, %s515
          %p512 = scmp.ge.s32.totalorder %s511, 1
          %s516 = sphi %s505, %s505
          %s517 = sphi %s507, %s507
        $region335: #{kbrd_forward.4} parent=331 // loop_header_branch
          %514 = sbr.rel (%p512) target = $region339
        $region336: #{kbrd_forward.4} parent=331 // loop_body
          %v518 = vld [vmem:[%s516] sm:%s509]
          %519 = vst [vmem:[%s517] sm:%s509] %v518
        $region337: #{kbrd_forward.4} parent=331 // loop_footer
          %s515 = sadd.s32 1, %s511
        $region338: #{kbrd_forward.4} parent=331 // loop_footer_branch
          %510 = sbr.rel target = $region334
        $region339: #{kbrd_forward.4} parent=331 // loop_exit
          _
      $region332: #{kbrd_forward.4} parent=316 // pred_fallthru
        _
    $region317: #{kbrd_forward.4} parent=1 // pred_fallthru
      _
    // Predicated region
    $region318: #{kbrd_forward.4} parent=1 // pred_check
      %p483 = pneg %p479
    $region319: #{kbrd_forward.4} parent=1 // pred_check_branch
      %485 = sbr.rel (%p483) target = $region321
    $region320: #{kbrd_forward.4} parent=1 // pred_region
      %s486 = sshll.u32 1, 1
      %s487 = ssub.s32 %s486, 1
      loop: start=0, step=1, limit=1
      $region322: #{kbrd_forward.4} parent=320 // loop_pre_header
        _
      $region323: #{kbrd_forward.4} parent=320 // loop_header
        %s489 = sphi 0, %s493
        %p490 = scmp.ge.s32.totalorder %s489, 1
        %s494 = sphi %s475, %s475
        %s495 = sphi %s476, %s476
      $region324: #{kbrd_forward.4} parent=320 // loop_header_branch
        %492 = sbr.rel (%p490) target = $region328
      $region325: #{kbrd_forward.4} parent=320 // loop_body
        %v496 = vld [vmem:[%s494] sm:%s487]
        %497 = vst [vmem:[%s495] sm:%s487] %v496
      $region326: #{kbrd_forward.4} parent=320 // loop_footer
        %s493 = sadd.s32 1, %s489
      $region327: #{kbrd_forward.4} parent=320 // loop_footer_branch
        %488 = sbr.rel target = $region323
      $region328: #{kbrd_forward.4} parent=320 // loop_exit
        _
    $region321: #{kbrd_forward.4} parent=1 // pred_fallthru
      _
    // Predicated region
    $region340: #{kbrd_forward.4} parent=1 // pred_check
      _
    $region341: #{kbrd_forward.4} parent=1 // pred_check_branch
      %522 = sbr.rel (0) target = $region343
    $region342: #{kbrd_forward.4} parent=1 // pred_region
      %523 = vsyncadd %s477, 16
    $region343: #{kbrd_forward.4} parent=1 // pred_fallthru
      _
    %s524 = sld [smem:[#allocation5 + $0x9]]
    %s525 = scalar_lea.vmem %s3, %s524
    %s526 = scalar_lea.vmem [#allocation2], 9
    %s527 = scalar_lea.sflag [#allocation3], 9
    %p529 = scmp.lt.u32.totalorder 1, 8
    %p530 = pneg %p529
    // Predicated region
    $region344: #{kbrd_forward.4} parent=1 // pred_check
      _
    $region345: #{kbrd_forward.4} parent=1 // pred_check_branch
      %532 = sbr.rel (%p529) target = $region347
    $region346: #{kbrd_forward.4} parent=1 // pred_region
      %s548 = sand.u32 1, 7
      %p549 = scmp.eq.s32.totalorder %s548, 0
      %p550 = pneg %p549
      // Predicated region
      $region359: #{kbrd_forward.4} parent=346 // pred_check
        _
      $region360: #{kbrd_forward.4} parent=346 // pred_check_branch
        %552 = sbr.rel (%p549) target = $region362
      $region361: #{kbrd_forward.4} parent=346 // pred_region
        %s553 = sand.u32 1, 7
        %s554 = ssub.s32 1, %s553
        %s555 = scalar_lea.vmem %s525, %s554
        %s556 = ssub.s32 1, %s553
        %s557 = scalar_lea.vmem %s526, %s556 [#allocation2]
        %s558 = sshll.u32 1, %s553
        %s559 = ssub.s32 %s558, 1
        loop: start=0, step=1, limit=1
        $region363: #{kbrd_forward.4} parent=361 // loop_pre_header
          _
        $region364: #{kbrd_forward.4} parent=361 // loop_header
          %s561 = sphi 0, %s565
          %p562 = scmp.ge.s32.totalorder %s561, 1
          %s566 = sphi %s555, %s555
          %s567 = sphi %s557, %s557
        $region365: #{kbrd_forward.4} parent=361 // loop_header_branch
          %564 = sbr.rel (%p562) target = $region369
        $region366: #{kbrd_forward.4} parent=361 // loop_body
          %v568 = vld [vmem:[%s566] sm:%s559]
          %569 = vst [vmem:[%s567] sm:%s559] %v568
        $region367: #{kbrd_forward.4} parent=361 // loop_footer
          %s565 = sadd.s32 1, %s561
        $region368: #{kbrd_forward.4} parent=361 // loop_footer_branch
          %560 = sbr.rel target = $region364
        $region369: #{kbrd_forward.4} parent=361 // loop_exit
          _
      $region362: #{kbrd_forward.4} parent=346 // pred_fallthru
        _
    $region347: #{kbrd_forward.4} parent=1 // pred_fallthru
      _
    // Predicated region
    $region348: #{kbrd_forward.4} parent=1 // pred_check
      %p533 = pneg %p529
    $region349: #{kbrd_forward.4} parent=1 // pred_check_branch
      %535 = sbr.rel (%p533) target = $region351
    $region350: #{kbrd_forward.4} parent=1 // pred_region
      %s536 = sshll.u32 1, 1
      %s537 = ssub.s32 %s536, 1
      loop: start=0, step=1, limit=1
      $region352: #{kbrd_forward.4} parent=350 // loop_pre_header
        _
      $region353: #{kbrd_forward.4} parent=350 // loop_header
        %s539 = sphi 0, %s543
        %p540 = scmp.ge.s32.totalorder %s539, 1
        %s544 = sphi %s525, %s525
        %s545 = sphi %s526, %s526
      $region354: #{kbrd_forward.4} parent=350 // loop_header_branch
        %542 = sbr.rel (%p540) target = $region358
      $region355: #{kbrd_forward.4} parent=350 // loop_body
        %v546 = vld [vmem:[%s544] sm:%s537]
        %547 = vst [vmem:[%s545] sm:%s537] %v546
      $region356: #{kbrd_forward.4} parent=350 // loop_footer
        %s543 = sadd.s32 1, %s539
      $region357: #{kbrd_forward.4} parent=350 // loop_footer_branch
        %538 = sbr.rel target = $region353
      $region358: #{kbrd_forward.4} parent=350 // loop_exit
        _
    $region351: #{kbrd_forward.4} parent=1 // pred_fallthru
      _
    // Predicated region
    $region370: #{kbrd_forward.4} parent=1 // pred_check
      _
    $region371: #{kbrd_forward.4} parent=1 // pred_check_branch
      %572 = sbr.rel (0) target = $region373
    $region372: #{kbrd_forward.4} parent=1 // pred_region
      %573 = vsyncadd %s527, 16
    $region373: #{kbrd_forward.4} parent=1 // pred_fallthru
      _
    %s574 = sld [smem:[#allocation5 + $0xa]]
    %s575 = scalar_lea.vmem %s3, %s574
    %s576 = scalar_lea.vmem [#allocation2], 10
    %s577 = scalar_lea.sflag [#allocation3], 10
    %p579 = scmp.lt.u32.totalorder 1, 8
    %p580 = pneg %p579
    // Predicated region
    $region374: #{kbrd_forward.4} parent=1 // pred_check
      _
    $region375: #{kbrd_forward.4} parent=1 // pred_check_branch
      %582 = sbr.rel (%p579) target = $region377
    $region376: #{kbrd_forward.4} parent=1 // pred_region
      %s598 = sand.u32 1, 7
      %p599 = scmp.eq.s32.totalorder %s598, 0
      %p600 = pneg %p599
      // Predicated region
      $region389: #{kbrd_forward.4} parent=376 // pred_check
        _
      $region390: #{kbrd_forward.4} parent=376 // pred_check_branch
        %602 = sbr.rel (%p599) target = $region392
      $region391: #{kbrd_forward.4} parent=376 // pred_region
        %s603 = sand.u32 1, 7
        %s604 = ssub.s32 1, %s603
        %s605 = scalar_lea.vmem %s575, %s604
        %s606 = ssub.s32 1, %s603
        %s607 = scalar_lea.vmem %s576, %s606 [#allocation2]
        %s608 = sshll.u32 1, %s603
        %s609 = ssub.s32 %s608, 1
        loop: start=0, step=1, limit=1
        $region393: #{kbrd_forward.4} parent=391 // loop_pre_header
          _
        $region394: #{kbrd_forward.4} parent=391 // loop_header
          %s611 = sphi 0, %s615
          %p612 = scmp.ge.s32.totalorder %s611, 1
          %s616 = sphi %s605, %s605
          %s617 = sphi %s607, %s607
        $region395: #{kbrd_forward.4} parent=391 // loop_header_branch
          %614 = sbr.rel (%p612) target = $region399
        $region396: #{kbrd_forward.4} parent=391 // loop_body
          %v618 = vld [vmem:[%s616] sm:%s609]
          %619 = vst [vmem:[%s617] sm:%s609] %v618
        $region397: #{kbrd_forward.4} parent=391 // loop_footer
          %s615 = sadd.s32 1, %s611
        $region398: #{kbrd_forward.4} parent=391 // loop_footer_branch
          %610 = sbr.rel target = $region394
        $region399: #{kbrd_forward.4} parent=391 // loop_exit
          _
      $region392: #{kbrd_forward.4} parent=376 // pred_fallthru
        _
    $region377: #{kbrd_forward.4} parent=1 // pred_fallthru
      _
    // Predicated region
    $region378: #{kbrd_forward.4} parent=1 // pred_check
      %p583 = pneg %p579
    $region379: #{kbrd_forward.4} parent=1 // pred_check_branch
      %585 = sbr.rel (%p583) target = $region381
    $region380: #{kbrd_forward.4} parent=1 // pred_region
      %s586 = sshll.u32 1, 1
      %s587 = ssub.s32 %s586, 1
      loop: start=0, step=1, limit=1
      $region382: #{kbrd_forward.4} parent=380 // loop_pre_header
        _
      $region383: #{kbrd_forward.4} parent=380 // loop_header
        %s589 = sphi 0, %s593
        %p590 = scmp.ge.s32.totalorder %s589, 1
        %s594 = sphi %s575, %s575
        %s595 = sphi %s576, %s576
      $region384: #{kbrd_forward.4} parent=380 // loop_header_branch
        %592 = sbr.rel (%p590) target = $region388
      $region385: #{kbrd_forward.4} parent=380 // loop_body
        %v596 = vld [vmem:[%s594] sm:%s587]
        %597 = vst [vmem:[%s595] sm:%s587] %v596
      $region386: #{kbrd_forward.4} parent=380 // loop_footer
        %s593 = sadd.s32 1, %s589
      $region387: #{kbrd_forward.4} parent=380 // loop_footer_branch
        %588 = sbr.rel target = $region383
      $region388: #{kbrd_forward.4} parent=380 // loop_exit
        _
    $region381: #{kbrd_forward.4} parent=1 // pred_fallthru
      _
    // Predicated region
    $region400: #{kbrd_forward.4} parent=1 // pred_check
      _
    $region401: #{kbrd_forward.4} parent=1 // pred_check_branch
      %622 = sbr.rel (0) target = $region403
    $region402: #{kbrd_forward.4} parent=1 // pred_region
      %623 = vsyncadd %s577, 16
    $region403: #{kbrd_forward.4} parent=1 // pred_fallthru
      _
    %s624 = sld [smem:[#allocation5 + $0xb]]
    %s625 = scalar_lea.vmem %s3, %s624
    %s626 = scalar_lea.vmem [#allocation2], 11
    %s627 = scalar_lea.sflag [#allocation3], 11
    %p629 = scmp.lt.u32.totalorder 1, 8
    %p630 = pneg %p629
    // Predicated region
    $region404: #{kbrd_forward.4} parent=1 // pred_check
      _
    $region405: #{kbrd_forward.4} parent=1 // pred_check_branch
      %632 = sbr.rel (%p629) target = $region407
    $region406: #{kbrd_forward.4} parent=1 // pred_region
      %s648 = sand.u32 1, 7
      %p649 = scmp.eq.s32.totalorder %s648, 0
      %p650 = pneg %p649
      // Predicated region
      $region419: #{kbrd_forward.4} parent=406 // pred_check
        _
      $region420: #{kbrd_forward.4} parent=406 // pred_check_branch
        %652 = sbr.rel (%p649) target = $region422
      $region421: #{kbrd_forward.4} parent=406 // pred_region
        %s653 = sand.u32 1, 7
        %s654 = ssub.s32 1, %s653
        %s655 = scalar_lea.vmem %s625, %s654
        %s656 = ssub.s32 1, %s653
        %s657 = scalar_lea.vmem %s626, %s656 [#allocation2]
        %s658 = sshll.u32 1, %s653
        %s659 = ssub.s32 %s658, 1
        loop: start=0, step=1, limit=1
        $region423: #{kbrd_forward.4} parent=421 // loop_pre_header
          _
        $region424: #{kbrd_forward.4} parent=421 // loop_header
          %s661 = sphi 0, %s665
          %p662 = scmp.ge.s32.totalorder %s661, 1
          %s666 = sphi %s655, %s655
          %s667 = sphi %s657, %s657
        $region425: #{kbrd_forward.4} parent=421 // loop_header_branch
          %664 = sbr.rel (%p662) target = $region429
        $region426: #{kbrd_forward.4} parent=421 // loop_body
          %v668 = vld [vmem:[%s666] sm:%s659]
          %669 = vst [vmem:[%s667] sm:%s659] %v668
        $region427: #{kbrd_forward.4} parent=421 // loop_footer
          %s665 = sadd.s32 1, %s661
        $region428: #{kbrd_forward.4} parent=421 // loop_footer_branch
          %660 = sbr.rel target = $region424
        $region429: #{kbrd_forward.4} parent=421 // loop_exit
          _
      $region422: #{kbrd_forward.4} parent=406 // pred_fallthru
        _
    $region407: #{kbrd_forward.4} parent=1 // pred_fallthru
      _
    // Predicated region
    $region408: #{kbrd_forward.4} parent=1 // pred_check
      %p633 = pneg %p629
    $region409: #{kbrd_forward.4} parent=1 // pred_check_branch
      %635 = sbr.rel (%p633) target = $region411
    $region410: #{kbrd_forward.4} parent=1 // pred_region
      %s636 = sshll.u32 1, 1
      %s637 = ssub.s32 %s636, 1
      loop: start=0, step=1, limit=1
      $region412: #{kbrd_forward.4} parent=410 // loop_pre_header
        _
      $region413: #{kbrd_forward.4} parent=410 // loop_header
        %s639 = sphi 0, %s643
        %p640 = scmp.ge.s32.totalorder %s639, 1
        %s644 = sphi %s625, %s625
        %s645 = sphi %s626, %s626
      $region414: #{kbrd_forward.4} parent=410 // loop_header_branch
        %642 = sbr.rel (%p640) target = $region418
      $region415: #{kbrd_forward.4} parent=410 // loop_body
        %v646 = vld [vmem:[%s644] sm:%s637]
        %647 = vst [vmem:[%s645] sm:%s637] %v646
      $region416: #{kbrd_forward.4} parent=410 // loop_footer
        %s643 = sadd.s32 1, %s639
      $region417: #{kbrd_forward.4} parent=410 // loop_footer_branch
        %638 = sbr.rel target = $region413
      $region418: #{kbrd_forward.4} parent=410 // loop_exit
        _
    $region411: #{kbrd_forward.4} parent=1 // pred_fallthru
      _
    // Predicated region
    $region430: #{kbrd_forward.4} parent=1 // pred_check
      _
    $region431: #{kbrd_forward.4} parent=1 // pred_check_branch
      %672 = sbr.rel (0) target = $region433
    $region432: #{kbrd_forward.4} parent=1 // pred_region
      %673 = vsyncadd %s627, 16
    $region433: #{kbrd_forward.4} parent=1 // pred_fallthru
      _
    %s674 = sld [smem:[#allocation5 + $0xc]]
    %s675 = scalar_lea.vmem %s3, %s674
    %s676 = scalar_lea.vmem [#allocation2], 12
    %s677 = scalar_lea.sflag [#allocation3], 12
    %p679 = scmp.lt.u32.totalorder 1, 8
    %p680 = pneg %p679
    // Predicated region
    $region434: #{kbrd_forward.4} parent=1 // pred_check
      _
    $region435: #{kbrd_forward.4} parent=1 // pred_check_branch
      %682 = sbr.rel (%p679) target = $region437
    $region436: #{kbrd_forward.4} parent=1 // pred_region
      %s698 = sand.u32 1, 7
      %p699 = scmp.eq.s32.totalorder %s698, 0
      %p700 = pneg %p699
      // Predicated region
      $region449: #{kbrd_forward.4} parent=436 // pred_check
        _
      $region450: #{kbrd_forward.4} parent=436 // pred_check_branch
        %702 = sbr.rel (%p699) target = $region452
      $region451: #{kbrd_forward.4} parent=436 // pred_region
        %s703 = sand.u32 1, 7
        %s704 = ssub.s32 1, %s703
        %s705 = scalar_lea.vmem %s675, %s704
        %s706 = ssub.s32 1, %s703
        %s707 = scalar_lea.vmem %s676, %s706 [#allocation2]
        %s708 = sshll.u32 1, %s703
        %s709 = ssub.s32 %s708, 1
        loop: start=0, step=1, limit=1
        $region453: #{kbrd_forward.4} parent=451 // loop_pre_header
          _
        $region454: #{kbrd_forward.4} parent=451 // loop_header
          %s711 = sphi 0, %s715
          %p712 = scmp.ge.s32.totalorder %s711, 1
          %s716 = sphi %s705, %s705
          %s717 = sphi %s707, %s707
        $region455: #{kbrd_forward.4} parent=451 // loop_header_branch
          %714 = sbr.rel (%p712) target = $region459
        $region456: #{kbrd_forward.4} parent=451 // loop_body
          %v718 = vld [vmem:[%s716] sm:%s709]
          %719 = vst [vmem:[%s717] sm:%s709] %v718
        $region457: #{kbrd_forward.4} parent=451 // loop_footer
          %s715 = sadd.s32 1, %s711
        $region458: #{kbrd_forward.4} parent=451 // loop_footer_branch
          %710 = sbr.rel target = $region454
        $region459: #{kbrd_forward.4} parent=451 // loop_exit
          _
      $region452: #{kbrd_forward.4} parent=436 // pred_fallthru
        _
    $region437: #{kbrd_forward.4} parent=1 // pred_fallthru
      _
    // Predicated region
    $region438: #{kbrd_forward.4} parent=1 // pred_check
      %p683 = pneg %p679
    $region439: #{kbrd_forward.4} parent=1 // pred_check_branch
      %685 = sbr.rel (%p683) target = $region441
    $region440: #{kbrd_forward.4} parent=1 // pred_region
      %s686 = sshll.u32 1, 1
      %s687 = ssub.s32 %s686, 1
      loop: start=0, step=1, limit=1
      $region442: #{kbrd_forward.4} parent=440 // loop_pre_header
        _
      $region443: #{kbrd_forward.4} parent=440 // loop_header
        %s689 = sphi 0, %s693
        %p690 = scmp.ge.s32.totalorder %s689, 1
        %s694 = sphi %s675, %s675
        %s695 = sphi %s676, %s676
      $region444: #{kbrd_forward.4} parent=440 // loop_header_branch
        %692 = sbr.rel (%p690) target = $region448
      $region445: #{kbrd_forward.4} parent=440 // loop_body
        %v696 = vld [vmem:[%s694] sm:%s687]
        %697 = vst [vmem:[%s695] sm:%s687] %v696
      $region446: #{kbrd_forward.4} parent=440 // loop_footer
        %s693 = sadd.s32 1, %s689
      $region447: #{kbrd_forward.4} parent=440 // loop_footer_branch
        %688 = sbr.rel target = $region443
      $region448: #{kbrd_forward.4} parent=440 // loop_exit
        _
    $region441: #{kbrd_forward.4} parent=1 // pred_fallthru
      _
    // Predicated region
    $region460: #{kbrd_forward.4} parent=1 // pred_check
      _
    $region461: #{kbrd_forward.4} parent=1 // pred_check_branch
      %722 = sbr.rel (0) target = $region463
    $region462: #{kbrd_forward.4} parent=1 // pred_region
      %723 = vsyncadd %s677, 16
    $region463: #{kbrd_forward.4} parent=1 // pred_fallthru
      _
    %s724 = sld [smem:[#allocation5 + $0xd]]
    %s725 = scalar_lea.vmem %s3, %s724
    %s726 = scalar_lea.vmem [#allocation2], 13
    %s727 = scalar_lea.sflag [#allocation3], 13
    %p729 = scmp.lt.u32.totalorder 1, 8
    %p730 = pneg %p729
    // Predicated region
    $region464: #{kbrd_forward.4} parent=1 // pred_check
      _
    $region465: #{kbrd_forward.4} parent=1 // pred_check_branch
      %732 = sbr.rel (%p729) target = $region467
    $region466: #{kbrd_forward.4} parent=1 // pred_region
      %s748 = sand.u32 1, 7
      %p749 = scmp.eq.s32.totalorder %s748, 0
      %p750 = pneg %p749
      // Predicated region
      $region479: #{kbrd_forward.4} parent=466 // pred_check
        _
      $region480: #{kbrd_forward.4} parent=466 // pred_check_branch
        %752 = sbr.rel (%p749) target = $region482
      $region481: #{kbrd_forward.4} parent=466 // pred_region
        %s753 = sand.u32 1, 7
        %s754 = ssub.s32 1, %s753
        %s755 = scalar_lea.vmem %s725, %s754
        %s756 = ssub.s32 1, %s753
        %s757 = scalar_lea.vmem %s726, %s756 [#allocation2]
        %s758 = sshll.u32 1, %s753
        %s759 = ssub.s32 %s758, 1
        loop: start=0, step=1, limit=1
        $region483: #{kbrd_forward.4} parent=481 // loop_pre_header
          _
        $region484: #{kbrd_forward.4} parent=481 // loop_header
          %s761 = sphi 0, %s765
          %p762 = scmp.ge.s32.totalorder %s761, 1
          %s766 = sphi %s755, %s755
          %s767 = sphi %s757, %s757
        $region485: #{kbrd_forward.4} parent=481 // loop_header_branch
          %764 = sbr.rel (%p762) target = $region489
        $region486: #{kbrd_forward.4} parent=481 // loop_body
          %v768 = vld [vmem:[%s766] sm:%s759]
          %769 = vst [vmem:[%s767] sm:%s759] %v768
        $region487: #{kbrd_forward.4} parent=481 // loop_footer
          %s765 = sadd.s32 1, %s761
        $region488: #{kbrd_forward.4} parent=481 // loop_footer_branch
          %760 = sbr.rel target = $region484
        $region489: #{kbrd_forward.4} parent=481 // loop_exit
          _
      $region482: #{kbrd_forward.4} parent=466 // pred_fallthru
        _
    $region467: #{kbrd_forward.4} parent=1 // pred_fallthru
      _
    // Predicated region
    $region468: #{kbrd_forward.4} parent=1 // pred_check
      %p733 = pneg %p729
    $region469: #{kbrd_forward.4} parent=1 // pred_check_branch
      %735 = sbr.rel (%p733) target = $region471
    $region470: #{kbrd_forward.4} parent=1 // pred_region
      %s736 = sshll.u32 1, 1
      %s737 = ssub.s32 %s736, 1
      loop: start=0, step=1, limit=1
      $region472: #{kbrd_forward.4} parent=470 // loop_pre_header
        _
      $region473: #{kbrd_forward.4} parent=470 // loop_header
        %s739 = sphi 0, %s743
        %p740 = scmp.ge.s32.totalorder %s739, 1
        %s744 = sphi %s725, %s725
        %s745 = sphi %s726, %s726
      $region474: #{kbrd_forward.4} parent=470 // loop_header_branch
        %742 = sbr.rel (%p740) target = $region478
      $region475: #{kbrd_forward.4} parent=470 // loop_body
        %v746 = vld [vmem:[%s744] sm:%s737]
        %747 = vst [vmem:[%s745] sm:%s737] %v746
      $region476: #{kbrd_forward.4} parent=470 // loop_footer
        %s743 = sadd.s32 1, %s739
      $region477: #{kbrd_forward.4} parent=470 // loop_footer_branch
        %738 = sbr.rel target = $region473
      $region478: #{kbrd_forward.4} parent=470 // loop_exit
        _
    $region471: #{kbrd_forward.4} parent=1 // pred_fallthru
      _
    // Predicated region
    $region490: #{kbrd_forward.4} parent=1 // pred_check
      _
    $region491: #{kbrd_forward.4} parent=1 // pred_check_branch
      %772 = sbr.rel (0) target = $region493
    $region492: #{kbrd_forward.4} parent=1 // pred_region
      %773 = vsyncadd %s727, 16
    $region493: #{kbrd_forward.4} parent=1 // pred_fallthru
      _
    %s774 = sld [smem:[#allocation5 + $0xe]]
    %s775 = scalar_lea.vmem %s3, %s774
    %s776 = scalar_lea.vmem [#allocation2], 14
    %s777 = scalar_lea.sflag [#allocation3], 14
    %p779 = scmp.lt.u32.totalorder 1, 8
    %p780 = pneg %p779
    // Predicated region
    $region494: #{kbrd_forward.4} parent=1 // pred_check
      _
    $region495: #{kbrd_forward.4} parent=1 // pred_check_branch
      %782 = sbr.rel (%p779) target = $region497
    $region496: #{kbrd_forward.4} parent=1 // pred_region
      %s798 = sand.u32 1, 7
      %p799 = scmp.eq.s32.totalorder %s798, 0
      %p800 = pneg %p799
      // Predicated region
      $region509: #{kbrd_forward.4} parent=496 // pred_check
        _
      $region510: #{kbrd_forward.4} parent=496 // pred_check_branch
        %802 = sbr.rel (%p799) target = $region512
      $region511: #{kbrd_forward.4} parent=496 // pred_region
        %s803 = sand.u32 1, 7
        %s804 = ssub.s32 1, %s803
        %s805 = scalar_lea.vmem %s775, %s804
        %s806 = ssub.s32 1, %s803
        %s807 = scalar_lea.vmem %s776, %s806 [#allocation2]
        %s808 = sshll.u32 1, %s803
        %s809 = ssub.s32 %s808, 1
        loop: start=0, step=1, limit=1
        $region513: #{kbrd_forward.4} parent=511 // loop_pre_header
          _
        $region514: #{kbrd_forward.4} parent=511 // loop_header
          %s811 = sphi 0, %s815
          %p812 = scmp.ge.s32.totalorder %s811, 1
          %s816 = sphi %s805, %s805
          %s817 = sphi %s807, %s807
        $region515: #{kbrd_forward.4} parent=511 // loop_header_branch
          %814 = sbr.rel (%p812) target = $region519
        $region516: #{kbrd_forward.4} parent=511 // loop_body
          %v818 = vld [vmem:[%s816] sm:%s809]
          %819 = vst [vmem:[%s817] sm:%s809] %v818
        $region517: #{kbrd_forward.4} parent=511 // loop_footer
          %s815 = sadd.s32 1, %s811
        $region518: #{kbrd_forward.4} parent=511 // loop_footer_branch
          %810 = sbr.rel target = $region514
        $region519: #{kbrd_forward.4} parent=511 // loop_exit
          _
      $region512: #{kbrd_forward.4} parent=496 // pred_fallthru
        _
    $region497: #{kbrd_forward.4} parent=1 // pred_fallthru
      _
    // Predicated region
    $region498: #{kbrd_forward.4} parent=1 // pred_check
      %p783 = pneg %p779
    $region499: #{kbrd_forward.4} parent=1 // pred_check_branch
      %785 = sbr.rel (%p783) target = $region501
    $region500: #{kbrd_forward.4} parent=1 // pred_region
      %s786 = sshll.u32 1, 1
      %s787 = ssub.s32 %s786, 1
      loop: start=0, step=1, limit=1
      $region502: #{kbrd_forward.4} parent=500 // loop_pre_header
        _
      $region503: #{kbrd_forward.4} parent=500 // loop_header
        %s789 = sphi 0, %s793
        %p790 = scmp.ge.s32.totalorder %s789, 1
        %s794 = sphi %s775, %s775
        %s795 = sphi %s776, %s776
      $region504: #{kbrd_forward.4} parent=500 // loop_header_branch
        %792 = sbr.rel (%p790) target = $region508
      $region505: #{kbrd_forward.4} parent=500 // loop_body
        %v796 = vld [vmem:[%s794] sm:%s787]
        %797 = vst [vmem:[%s795] sm:%s787] %v796
      $region506: #{kbrd_forward.4} parent=500 // loop_footer
        %s793 = sadd.s32 1, %s789
      $region507: #{kbrd_forward.4} parent=500 // loop_footer_branch
        %788 = sbr.rel target = $region503
      $region508: #{kbrd_forward.4} parent=500 // loop_exit
        _
    $region501: #{kbrd_forward.4} parent=1 // pred_fallthru
      _
    // Predicated region
    $region520: #{kbrd_forward.4} parent=1 // pred_check
      _
    $region521: #{kbrd_forward.4} parent=1 // pred_check_branch
      %822 = sbr.rel (0) target = $region523
    $region522: #{kbrd_forward.4} parent=1 // pred_region
      %823 = vsyncadd %s777, 16
    $region523: #{kbrd_forward.4} parent=1 // pred_fallthru
      _
    %s824 = sld [smem:[#allocation5 + $0xf]]
    %s825 = scalar_lea.vmem %s3, %s824
    %s826 = scalar_lea.vmem [#allocation2], 15
    %s827 = scalar_lea.sflag [#allocation3], 15
    %p829 = scmp.lt.u32.totalorder 1, 8
    %p830 = pneg %p829
    // Predicated region
    $region524: #{kbrd_forward.4} parent=1 // pred_check
      _
    $region525: #{kbrd_forward.4} parent=1 // pred_check_branch
      %832 = sbr.rel (%p829) target = $region527
    $region526: #{kbrd_forward.4} parent=1 // pred_region
      %s848 = sand.u32 1, 7
      %p849 = scmp.eq.s32.totalorder %s848, 0
      %p850 = pneg %p849
      // Predicated region
      $region539: #{kbrd_forward.4} parent=526 // pred_check
        _
      $region540: #{kbrd_forward.4} parent=526 // pred_check_branch
        %852 = sbr.rel (%p849) target = $region542
      $region541: #{kbrd_forward.4} parent=526 // pred_region
        %s853 = sand.u32 1, 7
        %s854 = ssub.s32 1, %s853
        %s855 = scalar_lea.vmem %s825, %s854
        %s856 = ssub.s32 1, %s853
        %s857 = scalar_lea.vmem %s826, %s856 [#allocation2]
        %s858 = sshll.u32 1, %s853
        %s859 = ssub.s32 %s858, 1
        loop: start=0, step=1, limit=1
        $region543: #{kbrd_forward.4} parent=541 // loop_pre_header
          _
        $region544: #{kbrd_forward.4} parent=541 // loop_header
          %s861 = sphi 0, %s865
          %p862 = scmp.ge.s32.totalorder %s861, 1
          %s866 = sphi %s855, %s855
          %s867 = sphi %s857, %s857
        $region545: #{kbrd_forward.4} parent=541 // loop_header_branch
          %864 = sbr.rel (%p862) target = $region549
        $region546: #{kbrd_forward.4} parent=541 // loop_body
          %v868 = vld [vmem:[%s866] sm:%s859]
          %869 = vst [vmem:[%s867] sm:%s859] %v868
        $region547: #{kbrd_forward.4} parent=541 // loop_footer
          %s865 = sadd.s32 1, %s861
        $region548: #{kbrd_forward.4} parent=541 // loop_footer_branch
          %860 = sbr.rel target = $region544
        $region549: #{kbrd_forward.4} parent=541 // loop_exit
          _
      $region542: #{kbrd_forward.4} parent=526 // pred_fallthru
        _
    $region527: #{kbrd_forward.4} parent=1 // pred_fallthru
      _
    // Predicated region
    $region528: #{kbrd_forward.4} parent=1 // pred_check
      %p833 = pneg %p829
    $region529: #{kbrd_forward.4} parent=1 // pred_check_branch
      %835 = sbr.rel (%p833) target = $region531
    $region530: #{kbrd_forward.4} parent=1 // pred_region
      %s836 = sshll.u32 1, 1
      %s837 = ssub.s32 %s836, 1
      loop: start=0, step=1, limit=1
      $region532: #{kbrd_forward.4} parent=530 // loop_pre_header
        _
      $region533: #{kbrd_forward.4} parent=530 // loop_header
        %s839 = sphi 0, %s843
        %p840 = scmp.ge.s32.totalorder %s839, 1
        %s844 = sphi %s825, %s825
        %s845 = sphi %s826, %s826
      $region534: #{kbrd_forward.4} parent=530 // loop_header_branch
        %842 = sbr.rel (%p840) target = $region538
      $region535: #{kbrd_forward.4} parent=530 // loop_body
        %v846 = vld [vmem:[%s844] sm:%s837]
        %847 = vst [vmem:[%s845] sm:%s837] %v846
      $region536: #{kbrd_forward.4} parent=530 // loop_footer
        %s843 = sadd.s32 1, %s839
      $region537: #{kbrd_forward.4} parent=530 // loop_footer_branch
        %838 = sbr.rel target = $region533
      $region538: #{kbrd_forward.4} parent=530 // loop_exit
        _
    $region531: #{kbrd_forward.4} parent=1 // pred_fallthru
      _
    // Predicated region
    $region550: #{kbrd_forward.4} parent=1 // pred_check
      _
    $region551: #{kbrd_forward.4} parent=1 // pred_check_branch
      %872 = sbr.rel (0) target = $region553
    $region552: #{kbrd_forward.4} parent=1 // pred_region
      %873 = vsyncadd %s827, 16
    $region553: #{kbrd_forward.4} parent=1 // pred_fallthru
      _
    %s874 = smul.u32 1, 1
    %s875 = sshll.u32 %s874, 4
    %876 = dma.done [#allocation3], %s875
    %s877 = sshll.u32 %s874, 4
    %878 = dma.done %s127, %s877
    %s879 = sshll.u32 %s874, 4
    %880 = dma.done %s177, %s879
    %s881 = sshll.u32 %s874, 4
    %882 = dma.done %s227, %s881
    %s883 = sshll.u32 %s874, 4
    %884 = dma.done %s277, %s883
    %s885 = sshll.u32 %s874, 4
    %886 = dma.done %s327, %s885
    %s887 = sshll.u32 %s874, 4
    %888 = dma.done %s377, %s887
    %s889 = sshll.u32 %s874, 4
    %890 = dma.done %s427, %s889
    %s891 = sshll.u32 %s874, 4
    %892 = dma.done %s477, %s891
    %s893 = sshll.u32 %s874, 4
    %894 = dma.done %s527, %s893
    %s895 = sshll.u32 %s874, 4
    %896 = dma.done %s577, %s895
    %s897 = sshll.u32 %s874, 4
    %898 = dma.done %s627, %s897
    %s899 = sshll.u32 %s874, 4
    %900 = dma.done %s677, %s899
    %s901 = sshll.u32 %s874, 4
    %902 = dma.done %s727, %s901
    %s903 = sshll.u32 %s874, 4
    %904 = dma.done %s777, %s903
    %s905 = sshll.u32 %s874, 4
    %906 = dma.done %s827, %s905
    %v907 = vld [vmem:[#allocation2] sm:$0xff]
    %v908 = vld [vmem:[#allocation2 + $0x8] sm:$0xff]
    %v909 = vpack.c.bf16 %v908, %v907
    %v910 = vld [vmem:[%s4] sm:$0xf]
    %v911 = vld [vmem:[%s4 + $0x4] sm:$0xf]
    %v912 = vld [vmem:[%s4 + $0x8] sm:$0xf]
    %v913 = vld [vmem:[%s4 + $0xc] sm:$0xf]
    %v914 = vld [vmem:[%s4 + $0x10] sm:$0xf]
    %v915 = vld [vmem:[%s4 + $0x14] sm:$0xf]
    %v916 = vld [vmem:[%s4 + $0x18] sm:$0xf]
    %v917 = vld [vmem:[%s4 + $0x1c] sm:$0xf]
    %v918 = vld [vmem:[%s4 + $0x20] sm:$0xf]
    %v919 = vld [vmem:[%s4 + $0x24] sm:$0xf]
    %v920 = vld [vmem:[%s4 + $0x28] sm:$0xf]
    %v921 = vld [vmem:[%s4 + $0x2c] sm:$0xf]
    %v922 = vld [vmem:[%s4 + $0x30] sm:$0xf]
    %v923 = vld [vmem:[%s4 + $0x34] sm:$0xf]
    %v924 = vld [vmem:[%s4 + $0x38] sm:$0xf]
    %v925 = vld [vmem:[%s4 + $0x3c] sm:$0xf]
    %v942 = vunpack.c.l.b16 %v910
    %v943 = vunpack.c.l.b16 %v911
    %v944 = vunpack.c.l.b16 %v912
    %v945 = vunpack.c.l.b16 %v913
    %v946 = vunpack.c.l.b16 %v914
    %v947 = vunpack.c.l.b16 %v915
    %v948 = vunpack.c.l.b16 %v916
    %v949 = vunpack.c.l.b16 %v917
    %v950 = vunpack.c.l.b16 %v918
    %v951 = vunpack.c.l.b16 %v919
    %v952 = vunpack.c.l.b16 %v920
    %v953 = vunpack.c.l.b16 %v921
    %v954 = vunpack.c.l.b16 %v922
    %v955 = vunpack.c.l.b16 %v923
    %v956 = vunpack.c.l.b16 %v924
    %v957 = vunpack.c.l.b16 %v925
    %v958 = vpack.c.b16 %v943, %v942
    %v959 = vpack.c.b16 %v945, %v944
    %v960 = vpack.c.b16 %v947, %v946
    %v961 = vpack.c.b16 %v949, %v948
    %v962 = vpack.c.b16 %v951, %v950
    %v963 = vpack.c.b16 %v953, %v952
    %v964 = vpack.c.b16 %v955, %v954
    %v965 = vpack.c.b16 %v957, %v956
    %974 = vmatprep.subr.bf16.mxu0 0
    %975 = vmatpush1.bf16.msra.mxu0 %v965
    %976 = vmatprep.subr.bf16.mxu0 0
    %977 = vmatpush1.bf16.msra.mxu0 %v964
    %978 = vmatprep.subr.bf16.mxu0 0
    %979 = vmatpush1.bf16.msra.mxu0 %v963
    %980 = vmatprep.subr.bf16.mxu0 0
    %981 = vmatpush1.bf16.msra.mxu0 %v962
    %982 = vmatprep.subr.bf16.mxu0 0
    %983 = vmatpush1.bf16.msra.mxu0 %v961
    %984 = vmatprep.subr.bf16.mxu0 0
    %985 = vmatpush1.bf16.msra.mxu0 %v960
    %986 = vmatprep.subr.bf16.mxu0 0
    %987 = vmatpush1.bf16.msra.mxu0 %v959
    %988 = vmatprep.subr.bf16.mxu0 0
    %989 = vmatpush1.bf16.msra.mxu0 %v958
    %990 = vmatprep.subr.bf16.mxu0 0
    %991 = vmatpush2.bf16.msra.mxu0 0
    %992 = vmatprep.subr.bf16.mxu0 0
    %993 = vmatpush2.bf16.msra.mxu0 0
    %994 = vmatprep.subr.bf16.mxu0 0
    %995 = vmatpush2.bf16.msra.mxu0 0
    %996 = vmatprep.subr.bf16.mxu0 0
    %997 = vmatpush2.bf16.msra.mxu0 0
    %998 = vmatprep.subr.bf16.mxu0 0
    %999 = vmatpush2.bf16.msra.mxu0 0
    %1000 = vmatprep.subr.bf16.mxu0 0
    %1001 = vmatpush2.bf16.msra.mxu0 0
    %1002 = vmatprep.subr.bf16.mxu0 0
    %1003 = vmatpush2.bf16.msra.mxu0 0
    %1004 = vmatprep.subr.bf16.mxu0 0
    %1005 = vmatpush2.bf16.msra.mxu0 0
    %1006 = vmatprep.mubr.bf16.mxu0 0
    %1007 = vmatmul.mubr.bf16.gmra.mxu0 %v909
    %v1008 = vpop.f32.mrf.mxu0
    %v1009 = vadd.f32 0.0, %v1008
    %v1010 = vpop.f32.mrf.mxu0
    %v1011 = vpop.f32.mrf.mxu0
    %v1012 = vadd.f32 0.0, %v1011
    %v1013 = vpop.f32.mrf.mxu0
    %1014 = vdwg.mxu0
    %v1015 = vtanh.pop %v1009
    %v1016 = vtanh.pop %v1012
    %v1017 = vld [vmem:[%s5] sm:$0x1]
    %v1019 = vlaneseq
    %v1020 = vshrl.u32 %v1019, 7
    %v1021 = vsub.s32 0, %v1020
    %v1022 = vrot.slane %v1017, %v1021
    %v1024 = vmul.f32 %v1015, %v1022
    %v1025 = vmul.f32 %v1016, %v1022
    %1026 = vadd.xlane.f32.xlu0 %v1024
    %v1027 = vpop.xlane.xlu0 %1026
    %1028 = vadd.xlane.f32.xlu0 %v1025
    %v1029 = vpop.xlane.xlu0 %1028
    %v1030 = vld [vmem:[%s1] sm:$0x3]
    %vm1031 = vcmp.gt.f32.partialorder %v1030, 0.0
    %v1034 = vlaneseq
    %v1035 = vand.u32 %v1034, 127
    %v1036 = vlaneseq
    %v1037 = vshrl.u32 %v1036, 7
    %v1038 = vsub.s32 %v1035, %v1037
    %v1039 = vrot.slane %v1027, %v1038
    %v1040 = vlaneseq
    %v1041 = vshrl.u32 %v1040, 7
    %v1042 = vsub.s32 %v1035, %v1041
    %v1043 = vrot.slane %v1029, %v1042
    %vm1044 = vcmask 1041409
    %v1045 = vsel %vm1044, %v1043, %v1039
    %v1047 = vsel %vm1031, %v1045, -1e+09
    %vm1048 = vcmask 58368
    %v1049 = vsel %vm1048, %v1047, -inf
    %1050 = vmax.xlane.f32.xlu0 %v1049
    %v1051 = vpop.xlane.xlu0 %1050
    %v1052 = vsub.f32 %v1047, %v1051
    %v1053 = vmul.f32 %v1052, 1.442695
    %v1054 = vpow.pop %v1053
    %v1055 = vsel %vm1048, %v1054, 0.0
    %1056 = vadd.xlane.f32.xlu0 %v1055
    %v1057 = vpop.xlane.xlu0 %1056
    %v1058 = vrcp.pop %v1057
    %v1059 = vmul.f32 %v1054, %v1058
    %v1060 = vlaneseq
    %v1061 = vshrl.u32 %v1060, 7
    %v1062 = vsub.s32 0, %v1061
    %v1063 = vrot.slane %v1059, %v1062
    %1065 = vbcast.lane.b32.xlu0 %v1063, 256
    %v1066 = vpop.permute.xlu0 %1065
    %v1067 = vlaneseq
    %v1068 = vshrl.u32 %v1067, 7
    %v1069 = vsub.s32 1, %v1068
    %v1070 = vrot.slane %v1059, %v1069
    %1072 = vbcast.lane.b32.xlu0 %v1070, 256
    %v1073 = vpop.permute.xlu0 %1072
    %v1074 = vmul.f32 %v1066, %v907
    %v1075 = vmul.f32 %v1073, %v908
    %v1076 = vrot.slane %v1074, 4
    %v1077 = vadd.f32 %v1074, %v1076
    %v1078 = vrot.slane %v1077, 2
    %v1079 = vadd.f32 %v1077, %v1078
    %v1080 = vrot.slane %v1079, 1
    %v1081 = vadd.f32 %v1079, %v1080
    %v1082 = vrot.slane %v1075, 4
    %v1083 = vadd.f32 %v1075, %v1082
    %v1084 = vrot.slane %v1083, 2
    %v1085 = vadd.f32 %v1083, %v1084
    %v1086 = vrot.slane %v1085, 1
    %v1087 = vadd.f32 %v1085, %v1086
    %v1088 = vsel %vm1048, %v1030, 0.0
    %1089 = vadd.xlane.f32.xlu0 %v1088
    %v1090 = vpop.xlane.xlu0 %1089
    %vm1091 = vcmp.gt.f32.partialorder %v1090, 0.0
    %v1092 = vsel %vm1091, 1, 0
    %v1093 = vcvt.s32.f32 %v1092
    %v1095 = vrot.slane %v1093, 1
    %v1098 = vmul.f32 %v1081, %v1093
    %v1099 = vmul.f32 %v1087, %v1095
    %v1100 = vld [vmem:[%s2] sm:$0xf]
    %v1103 = vunpack.c.l.s4 1983009808
    %v1104 = vunpack.c.0.s8 %v1103
    %v1105 = vlaneseq
    %v1106 = vshrl.u32 %v1105, 7
    %v1107 = vsub.s32 %v1104, %v1106
    %v1108 = vrot.slane %v1100, %v1107
    %v1109 = vcombine.high %v1108, %v1108
    %v1112 = vpack.c.bf16 %v1108, %v1108
    %v1113 = vpack.c.bf16 %v1109, %v1109
    %v1114 = vld [vmem:[%s6] sm:$0xf]
    %v1115 = vld [vmem:[%s6 + $0x4] sm:$0xf]
    %v1116 = vld [vmem:[%s6 + $0x8] sm:$0xf]
    %v1117 = vld [vmem:[%s6 + $0xc] sm:$0xf]
    %v1118 = vld [vmem:[%s6 + $0x10] sm:$0xf]
    %v1119 = vld [vmem:[%s6 + $0x14] sm:$0xf]
    %v1120 = vld [vmem:[%s6 + $0x18] sm:$0xf]
    %v1121 = vld [vmem:[%s6 + $0x1c] sm:$0xf]
    %v1122 = vld [vmem:[%s6 + $0x20] sm:$0xf]
    %v1123 = vld [vmem:[%s6 + $0x24] sm:$0xf]
    %v1124 = vld [vmem:[%s6 + $0x28] sm:$0xf]
    %v1125 = vld [vmem:[%s6 + $0x2c] sm:$0xf]
    %v1126 = vld [vmem:[%s6 + $0x30] sm:$0xf]
    %v1127 = vld [vmem:[%s6 + $0x34] sm:$0xf]
    %v1128 = vld [vmem:[%s6 + $0x38] sm:$0xf]
    %v1129 = vld [vmem:[%s6 + $0x3c] sm:$0xf]
    %v1130 = vld [vmem:[%s6 + $0x40] sm:$0xf]
    %v1131 = vld [vmem:[%s6 + $0x44] sm:$0xf]
    %v1132 = vld [vmem:[%s6 + $0x48] sm:$0xf]
    %v1133 = vld [vmem:[%s6 + $0x4c] sm:$0xf]
    %v1134 = vld [vmem:[%s6 + $0x50] sm:$0xf]
    %v1135 = vld [vmem:[%s6 + $0x54] sm:$0xf]
    %v1136 = vld [vmem:[%s6 + $0x58] sm:$0xf]
    %v1137 = vld [vmem:[%s6 + $0x5c] sm:$0xf]
    %v1138 = vld [vmem:[%s6 + $0x60] sm:$0xf]
    %v1139 = vld [vmem:[%s6 + $0x64] sm:$0xf]
    %v1140 = vld [vmem:[%s6 + $0x68] sm:$0xf]
    %v1141 = vld [vmem:[%s6 + $0x6c] sm:$0xf]
    %v1142 = vld [vmem:[%s6 + $0x70] sm:$0xf]
    %v1143 = vld [vmem:[%s6 + $0x74] sm:$0xf]
    %v1144 = vld [vmem:[%s6 + $0x78] sm:$0xf]
    %v1145 = vld [vmem:[%s6 + $0x7c] sm:$0xf]
    %v1146 = vld [vmem:[%s7] sm:$0x1]
    %v1148 = vlaneseq
    %v1149 = vshrl.u32 %v1148, 7
    %v1150 = vsub.s32 0, %v1149
    %v1151 = vrot.slane %v1146, %v1150
    %v1185 = vunpack.c.l.b16 %v1114
    %v1186 = vunpack.c.l.b16 %v1115
    %v1187 = vunpack.c.l.b16 %v1116
    %v1188 = vunpack.c.l.b16 %v1117
    %v1189 = vunpack.c.l.b16 %v1118
    %v1190 = vunpack.c.l.b16 %v1119
    %v1191 = vunpack.c.l.b16 %v1120
    %v1192 = vunpack.c.l.b16 %v1121
    %v1193 = vunpack.c.l.b16 %v1122
    %v1194 = vunpack.c.l.b16 %v1123
    %v1195 = vunpack.c.l.b16 %v1124
    %v1196 = vunpack.c.l.b16 %v1125
    %v1197 = vunpack.c.l.b16 %v1126
    %v1198 = vunpack.c.l.b16 %v1127
    %v1199 = vunpack.c.l.b16 %v1128
    %v1200 = vunpack.c.l.b16 %v1129
    %v1201 = vunpack.c.l.b16 %v1130
    %v1202 = vunpack.c.l.b16 %v1131
    %v1203 = vunpack.c.l.b16 %v1132
    %v1204 = vunpack.c.l.b16 %v1133
    %v1205 = vunpack.c.l.b16 %v1134
    %v1206 = vunpack.c.l.b16 %v1135
    %v1207 = vunpack.c.l.b16 %v1136
    %v1208 = vunpack.c.l.b16 %v1137
    %v1209 = vunpack.c.l.b16 %v1138
    %v1210 = vunpack.c.l.b16 %v1139
    %v1211 = vunpack.c.l.b16 %v1140
    %v1212 = vunpack.c.l.b16 %v1141
    %v1213 = vunpack.c.l.b16 %v1142
    %v1214 = vunpack.c.l.b16 %v1143
    %v1215 = vunpack.c.l.b16 %v1144
    %v1216 = vunpack.c.l.b16 %v1145
    %v1217 = vpack.c.b16 %v1186, %v1185
    %v1218 = vpack.c.b16 %v1188, %v1187
    %v1219 = vpack.c.b16 %v1190, %v1189
    %v1220 = vpack.c.b16 %v1192, %v1191
    %v1221 = vpack.c.b16 %v1194, %v1193
    %v1222 = vpack.c.b16 %v1196, %v1195
    %v1223 = vpack.c.b16 %v1198, %v1197
    %v1224 = vpack.c.b16 %v1200, %v1199
    %v1225 = vpack.c.b16 %v1202, %v1201
    %v1226 = vpack.c.b16 %v1204, %v1203
    %v1227 = vpack.c.b16 %v1206, %v1205
    %v1228 = vpack.c.b16 %v1208, %v1207
    %v1229 = vpack.c.b16 %v1210, %v1209
    %v1230 = vpack.c.b16 %v1212, %v1211
    %v1231 = vpack.c.b16 %v1214, %v1213
    %v1232 = vpack.c.b16 %v1216, %v1215
    %1249 = vmatprep.subr.bf16.mxu0 0
    %1250 = vmatpush1.bf16.msra.mxu0 %v1224
    %1251 = vmatprep.subr.bf16.mxu0 0
    %1252 = vmatpush1.bf16.msra.mxu0 %v1223
    %1253 = vmatprep.subr.bf16.mxu0 0
    %1254 = vmatpush1.bf16.msra.mxu0 %v1222
    %1255 = vmatprep.subr.bf16.mxu0 0
    %1256 = vmatpush1.bf16.msra.mxu0 %v1221
    %1257 = vmatprep.subr.bf16.mxu0 0
    %1258 = vmatpush1.bf16.msra.mxu0 %v1220
    %1259 = vmatprep.subr.bf16.mxu0 0
    %1260 = vmatpush1.bf16.msra.mxu0 %v1219
    %1261 = vmatprep.subr.bf16.mxu0 0
    %1262 = vmatpush1.bf16.msra.mxu0 %v1218
    %1263 = vmatprep.subr.bf16.mxu0 0
    %1264 = vmatpush1.bf16.msra.mxu0 %v1217
    %1265 = vmatprep.subr.bf16.mxu0 0
    %1266 = vmatpush2.bf16.msra.mxu0 %v1232
    %1267 = vmatprep.subr.bf16.mxu0 0
    %1268 = vmatpush2.bf16.msra.mxu0 %v1231
    %1269 = vmatprep.subr.bf16.mxu0 0
    %1270 = vmatpush2.bf16.msra.mxu0 %v1230
    %1271 = vmatprep.subr.bf16.mxu0 0
    %1272 = vmatpush2.bf16.msra.mxu0 %v1229
    %1273 = vmatprep.subr.bf16.mxu0 0
    %1274 = vmatpush2.bf16.msra.mxu0 %v1228
    %1275 = vmatprep.subr.bf16.mxu0 0
    %1276 = vmatpush2.bf16.msra.mxu0 %v1227
    %1277 = vmatprep.subr.bf16.mxu0 0
    %1278 = vmatpush2.bf16.msra.mxu0 %v1226
    %1279 = vmatprep.subr.bf16.mxu0 0
    %1280 = vmatpush2.bf16.msra.mxu0 %v1225
    %1281 = vmatprep.mubr.bf16.mxu0 %v1113
    %1282 = vmatmul.mubr.bf16.gmra.mxu0 %v1112
    %v1283 = vpop.f32.mrf.mxu0
    %v1284 = vadd.f32 %v1151, %v1283
    %v1285 = vpop.f32.mrf.mxu0
    %v1286 = vpop.f32.mrf.mxu0
    %v1287 = vpop.f32.mrf.mxu0
    %1288 = vdwg.mxu0
    %v1289 = vmax.f32 %v1284, 0.0
    %v1290 = vpack.c.bf16 %v1289, %v1289
    %v1291 = vld [vmem:[%s8] sm:$0xff]
    %v1292 = vld [vmem:[%s8 + $0x8] sm:$0xff]
    %v1293 = vld [vmem:[%s8 + $0x10] sm:$0xff]
    %v1294 = vld [vmem:[%s8 + $0x18] sm:$0xff]
    %v1295 = vld [vmem:[%s8 + $0x20] sm:$0xff]
    %v1296 = vld [vmem:[%s8 + $0x28] sm:$0xff]
    %v1297 = vld [vmem:[%s8 + $0x30] sm:$0xff]
    %v1298 = vld [vmem:[%s8 + $0x38] sm:$0xff]
    %v1299 = vld [vmem:[%s8 + $0x40] sm:$0xff]
    %v1300 = vld [vmem:[%s8 + $0x48] sm:$0xff]
    %v1301 = vld [vmem:[%s8 + $0x50] sm:$0xff]
    %v1302 = vld [vmem:[%s8 + $0x58] sm:$0xff]
    %v1303 = vld [vmem:[%s8 + $0x60] sm:$0xff]
    %v1304 = vld [vmem:[%s8 + $0x68] sm:$0xff]
    %v1305 = vld [vmem:[%s8 + $0x70] sm:$0xff]
    %v1306 = vld [vmem:[%s8 + $0x78] sm:$0xff]
    %v1307 = vld [vmem:[%s9] sm:$0x3]
    %v1309 = vlaneseq
    %v1310 = vshrl.u32 %v1309, 7
    %v1311 = vsub.s32 0, %v1310
    %v1312 = vrot.slane %v1307, %v1311
    %v1313 = vlaneseq
    %v1314 = vshrl.u32 %v1313, 7
    %v1315 = vsub.s32 1, %v1314
    %v1316 = vrot.slane %v1307, %v1315
    %v1335 = vunpack.c.l.b16 %v1291
    %v1336 = vunpack.c.h.b16 %v1291
    %v1337 = vunpack.c.l.b16 %v1292
    %v1338 = vunpack.c.h.b16 %v1292
    %v1339 = vunpack.c.l.b16 %v1293
    %v1340 = vunpack.c.h.b16 %v1293
    %v1341 = vunpack.c.l.b16 %v1294
    %v1342 = vunpack.c.h.b16 %v1294
    %v1343 = vunpack.c.l.b16 %v1295
    %v1344 = vunpack.c.h.b16 %v1295
    %v1345 = vunpack.c.l.b16 %v1296
    %v1346 = vunpack.c.h.b16 %v1296
    %v1347 = vunpack.c.l.b16 %v1297
    %v1348 = vunpack.c.h.b16 %v1297
    %v1349 = vunpack.c.l.b16 %v1298
    %v1350 = vunpack.c.h.b16 %v1298
    %v1351 = vunpack.c.l.b16 %v1299
    %v1352 = vunpack.c.h.b16 %v1299
    %v1353 = vunpack.c.l.b16 %v1300
    %v1354 = vunpack.c.h.b16 %v1300
    %v1355 = vunpack.c.l.b16 %v1301
    %v1356 = vunpack.c.h.b16 %v1301
    %v1357 = vunpack.c.l.b16 %v1302
    %v1358 = vunpack.c.h.b16 %v1302
    %v1359 = vunpack.c.l.b16 %v1303
    %v1360 = vunpack.c.h.b16 %v1303
    %v1361 = vunpack.c.l.b16 %v1304
    %v1362 = vunpack.c.h.b16 %v1304
    %v1363 = vunpack.c.l.b16 %v1305
    %v1364 = vunpack.c.h.b16 %v1305
    %v1365 = vunpack.c.l.b16 %v1306
    %v1366 = vunpack.c.h.b16 %v1306
    %v1367 = vpack.c.b16 %v1337, %v1335
    %v1368 = vpack.c.b16 %v1338, %v1336
    %v1369 = vpack.c.b16 %v1341, %v1339
    %v1370 = vpack.c.b16 %v1342, %v1340
    %v1371 = vpack.c.b16 %v1345, %v1343
    %v1372 = vpack.c.b16 %v1346, %v1344
    %v1373 = vpack.c.b16 %v1349, %v1347
    %v1374 = vpack.c.b16 %v1350, %v1348
    %v1375 = vpack.c.b16 %v1353, %v1351
    %v1376 = vpack.c.b16 %v1354, %v1352
    %v1377 = vpack.c.b16 %v1357, %v1355
    %v1378 = vpack.c.b16 %v1358, %v1356
    %v1379 = vpack.c.b16 %v1361, %v1359
    %v1380 = vpack.c.b16 %v1362, %v1360
    %v1381 = vpack.c.b16 %v1365, %v1363
    %v1382 = vpack.c.b16 %v1366, %v1364
    %1399 = vmatprep.subr.bf16.mxu0 %v1382
    %1400 = vmatpush1.bf16.msra.mxu0 %v1381
    %1401 = vmatprep.subr.bf16.mxu0 %v1380
    %1402 = vmatpush1.bf16.msra.mxu0 %v1379
    %1403 = vmatprep.subr.bf16.mxu0 %v1378
    %1404 = vmatpush1.bf16.msra.mxu0 %v1377
    %1405 = vmatprep.subr.bf16.mxu0 %v1376
    %1406 = vmatpush1.bf16.msra.mxu0 %v1375
    %1407 = vmatprep.subr.bf16.mxu0 %v1374
    %1408 = vmatpush1.bf16.msra.mxu0 %v1373
    %1409 = vmatprep.subr.bf16.mxu0 %v1372
    %1410 = vmatpush1.bf16.msra.mxu0 %v1371
    %1411 = vmatprep.subr.bf16.mxu0 %v1370
    %1412 = vmatpush1.bf16.msra.mxu0 %v1369
    %1413 = vmatprep.subr.bf16.mxu0 %v1368
    %1414 = vmatpush1.bf16.msra.mxu0 %v1367
    %1415 = vmatprep.subr.bf16.mxu0 0
    %1416 = vmatpush2.bf16.msra.mxu0 0
    %1417 = vmatprep.subr.bf16.mxu0 0
    %1418 = vmatpush2.bf16.msra.mxu0 0
    %1419 = vmatprep.subr.bf16.mxu0 0
    %1420 = vmatpush2.bf16.msra.mxu0 0
    %1421 = vmatprep.subr.bf16.mxu0 0
    %1422 = vmatpush2.bf16.msra.mxu0 0
    %1423 = vmatprep.subr.bf16.mxu0 0
    %1424 = vmatpush2.bf16.msra.mxu0 0
    %1425 = vmatprep.subr.bf16.mxu0 0
    %1426 = vmatpush2.bf16.msra.mxu0 0
    %1427 = vmatprep.subr.bf16.mxu0 0
    %1428 = vmatpush2.bf16.msra.mxu0 0
    %1429 = vmatprep.subr.bf16.mxu0 0
    %1430 = vmatpush2.bf16.msra.mxu0 0
    %1431 = vmatprep.mubr.bf16.mxu0 0
    %1432 = vmatmul.mubr.bf16.gmra.mxu0 %v1290
    %v1433 = vpop.f32.mrf.mxu0
    %v1434 = vadd.f32 %v1312, %v1433
    %v1435 = vpop.f32.mrf.mxu0
    %v1436 = vadd.f32 %v1316, %v1435
    %v1437 = vpop.f32.mrf.mxu0
    %v1438 = vpop.f32.mrf.mxu0
    %1439 = vdwg.mxu0
    %v1440 = vld [vmem:[%s10] sm:$0x3]
    %v1442 = vlaneseq
    %v1443 = vshrl.u32 %v1442, 7
    %v1444 = vsub.s32 0, %v1443
    %v1445 = vrot.slane %v1440, %v1444
    %v1446 = vlaneseq
    %v1447 = vshrl.u32 %v1446, 7
    %v1448 = vsub.s32 1, %v1447
    %v1449 = vrot.slane %v1440, %v1448
    %v1452 = vmul.f32 %v1434, %v1445
    %v1453 = vmul.f32 %v1436, %v1449
    %vm1454 = vcmask 1041408
    %v1455 = vsel %vm1454, %v1452, 0.0
    %v1456 = vsel %vm1454, %v1453, 0.0
    %v1457 = vadd.f32 %v1455, %v1456
    %1458 = vadd.xlane.f32.xlu0 %v1457
    %v1459 = vpop.xlane.xlu0 %1458
    %v1460 = vld [vmem:[%s11] sm:$0x3]
    %v1462 = vlaneseq
    %v1463 = vshrl.u32 %v1462, 7
    %v1464 = vsub.s32 0, %v1463
    %v1465 = vrot.slane %v1460, %v1464
    %v1466 = vlaneseq
    %v1467 = vshrl.u32 %v1466, 7
    %v1468 = vsub.s32 1, %v1467
    %v1469 = vrot.slane %v1460, %v1468
    %v1470 = vcombine.low %v1465, %v1469
    %v1472 = vunpack.c.l.s4 1983009808
    %v1473 = vunpack.c.0.s8 %v1472
    %v1474 = vlaneseq
    %v1475 = vshrl.u32 %v1474, 7
    %v1476 = vsub.s32 %v1473, %v1475
    %v1477 = vrot.slane %v1470, %v1476
    %v1479 = vmul.f32 %v1100, %v1477
    %v1482 = vunpack.c.l.s4 1983009808
    %v1483 = vunpack.c.0.s8 %v1482
    %v1484 = vlaneseq
    %v1485 = vshrl.u32 %v1484, 7
    %v1486 = vsub.s32 %v1483, %v1485
    %v1487 = vrot.slane %v1479, %v1486
    %v1488 = vcombine.high %v1487, %v1487
    %v1491 = vsel %vm1454, %v1487, 0.0
    %v1492 = vsel %vm1454, %v1488, 0.0
    %v1493 = vadd.f32 %v1491, %v1492
    %1494 = vadd.xlane.f32.xlu0 %v1493
    %v1495 = vpop.xlane.xlu0 %1494
    %v1496 = vadd.f32 %v1459, %v1495
    %v1497 = vld [vmem:[#allocation4] sm:$0x1]
    %v1499 = vlaneseq
    %v1500 = vshrl.u32 %v1499, 7
    %v1501 = vsub.s32 0, %v1500
    %v1502 = vrot.slane %v1497, %v1501
    %v1504 = vadd.f32 %v1496, %v1502
    %v1505 = vxor.u32 %v1504, 2147483648
    %v1506 = vmul.f32 %v1505, 1.442695
    %v1507 = vpow.pop %v1506
    %v1508 = vadd.f32 %v1507, 1.0
    %v1509 = vrcp.pop %v1508
    %v1510 = vmul.f32 1.0, %v1509
    %1512 = vset.pattern.permute.xlu0 0
    %1513 = vperm.xlu0 %1512, %v1510
    %v1514 = vpop.permute.xlu0 %1513
    %v1516 = vmul.f32 %v1514, %v1434
    %v1517 = vmul.f32 %v1514, %v1436
    %v1518 = vsub.f32 1.0, %v1510
    %1520 = vset.pattern.permute.xlu0 0
    %1521 = vperm.xlu0 %1520, %v1518
    %v1522 = vpop.permute.xlu0 %1521
    %v1524 = vmul.f32 %v1522, %v1108
    %v1525 = vmul.f32 %v1522, %v1109
    %v1526 = vadd.f32 %v1516, %v1524
    %v1527 = vadd.f32 %v1517, %v1525
    %v1528 = vpack.c.bf16 %v1526, %v1526
    %v1529 = vpack.c.bf16 %v1527, %v1527
    %v1530 = vld [vmem:[%s13] sm:$0xf]
    %v1531 = vld [vmem:[%s13 + $0x4] sm:$0xf]
    %v1532 = vld [vmem:[%s13 + $0x8] sm:$0xf]
    %v1533 = vld [vmem:[%s13 + $0xc] sm:$0xf]
    %v1534 = vld [vmem:[%s13 + $0x10] sm:$0xf]
    %v1535 = vld [vmem:[%s13 + $0x14] sm:$0xf]
    %v1536 = vld [vmem:[%s13 + $0x18] sm:$0xf]
    %v1537 = vld [vmem:[%s13 + $0x1c] sm:$0xf]
    %v1538 = vld [vmem:[%s13 + $0x20] sm:$0xf]
    %v1539 = vld [vmem:[%s13 + $0x24] sm:$0xf]
    %v1540 = vld [vmem:[%s13 + $0x28] sm:$0xf]
    %v1541 = vld [vmem:[%s13 + $0x2c] sm:$0xf]
    %v1542 = vld [vmem:[%s13 + $0x30] sm:$0xf]
    %v1543 = vld [vmem:[%s13 + $0x34] sm:$0xf]
    %v1544 = vld [vmem:[%s13 + $0x38] sm:$0xf]
    %v1545 = vld [vmem:[%s13 + $0x3c] sm:$0xf]
    %v1546 = vld [vmem:[%s13 + $0x40] sm:$0xf]
    %v1547 = vld [vmem:[%s13 + $0x44] sm:$0xf]
    %v1548 = vld [vmem:[%s13 + $0x48] sm:$0xf]
    %v1549 = vld [vmem:[%s13 + $0x4c] sm:$0xf]
    %v1550 = vld [vmem:[%s13 + $0x50] sm:$0xf]
    %v1551 = vld [vmem:[%s13 + $0x54] sm:$0xf]
    %v1552 = vld [vmem:[%s13 + $0x58] sm:$0xf]
    %v1553 = vld [vmem:[%s13 + $0x5c] sm:$0xf]
    %v1554 = vld [vmem:[%s13 + $0x60] sm:$0xf]
    %v1555 = vld [vmem:[%s13 + $0x64] sm:$0xf]
    %v1556 = vld [vmem:[%s13 + $0x68] sm:$0xf]
    %v1557 = vld [vmem:[%s13 + $0x6c] sm:$0xf]
    %v1558 = vld [vmem:[%s13 + $0x70] sm:$0xf]
    %v1559 = vld [vmem:[%s13 + $0x74] sm:$0xf]
    %v1560 = vld [vmem:[%s13 + $0x78] sm:$0xf]
    %v1561 = vld [vmem:[%s13 + $0x7c] sm:$0xf]
    %v1562 = vld [vmem:[%s14] sm:$0x1]
    %v1564 = vlaneseq
    %v1565 = vshrl.u32 %v1564, 7
    %v1566 = vsub.s32 0, %v1565
    %v1567 = vrot.slane %v1562, %v1566
    %v1601 = vunpack.c.l.b16 %v1530
    %v1602 = vunpack.c.l.b16 %v1531
    %v1603 = vunpack.c.l.b16 %v1532
    %v1604 = vunpack.c.l.b16 %v1533
    %v1605 = vunpack.c.l.b16 %v1534
    %v1606 = vunpack.c.l.b16 %v1535
    %v1607 = vunpack.c.l.b16 %v1536
    %v1608 = vunpack.c.l.b16 %v1537
    %v1609 = vunpack.c.l.b16 %v1538
    %v1610 = vunpack.c.l.b16 %v1539
    %v1611 = vunpack.c.l.b16 %v1540
    %v1612 = vunpack.c.l.b16 %v1541
    %v1613 = vunpack.c.l.b16 %v1542
    %v1614 = vunpack.c.l.b16 %v1543
    %v1615 = vunpack.c.l.b16 %v1544
    %v1616 = vunpack.c.l.b16 %v1545
    %v1617 = vunpack.c.l.b16 %v1546
    %v1618 = vunpack.c.l.b16 %v1547
    %v1619 = vunpack.c.l.b16 %v1548
    %v1620 = vunpack.c.l.b16 %v1549
    %v1621 = vunpack.c.l.b16 %v1550
    %v1622 = vunpack.c.l.b16 %v1551
    %v1623 = vunpack.c.l.b16 %v1552
    %v1624 = vunpack.c.l.b16 %v1553
    %v1625 = vunpack.c.l.b16 %v1554
    %v1626 = vunpack.c.l.b16 %v1555
    %v1627 = vunpack.c.l.b16 %v1556
    %v1628 = vunpack.c.l.b16 %v1557
    %v1629 = vunpack.c.l.b16 %v1558
    %v1630 = vunpack.c.l.b16 %v1559
    %v1631 = vunpack.c.l.b16 %v1560
    %v1632 = vunpack.c.l.b16 %v1561
    %v1633 = vpack.c.b16 %v1602, %v1601
    %v1634 = vpack.c.b16 %v1604, %v1603
    %v1635 = vpack.c.b16 %v1606, %v1605
    %v1636 = vpack.c.b16 %v1608, %v1607
    %v1637 = vpack.c.b16 %v1610, %v1609
    %v1638 = vpack.c.b16 %v1612, %v1611
    %v1639 = vpack.c.b16 %v1614, %v1613
    %v1640 = vpack.c.b16 %v1616, %v1615
    %v1641 = vpack.c.b16 %v1618, %v1617
    %v1642 = vpack.c.b16 %v1620, %v1619
    %v1643 = vpack.c.b16 %v1622, %v1621
    %v1644 = vpack.c.b16 %v1624, %v1623
    %v1645 = vpack.c.b16 %v1626, %v1625
    %v1646 = vpack.c.b16 %v1628, %v1627
    %v1647 = vpack.c.b16 %v1630, %v1629
    %v1648 = vpack.c.b16 %v1632, %v1631
    %1665 = vmatprep.subr.bf16.mxu0 0
    %1666 = vmatpush1.bf16.msra.mxu0 %v1640
    %1667 = vmatprep.subr.bf16.mxu0 0
    %1668 = vmatpush1.bf16.msra.mxu0 %v1639
    %1669 = vmatprep.subr.bf16.mxu0 0
    %1670 = vmatpush1.bf16.msra.mxu0 %v1638
    %1671 = vmatprep.subr.bf16.mxu0 0
    %1672 = vmatpush1.bf16.msra.mxu0 %v1637
    %1673 = vmatprep.subr.bf16.mxu0 0
    %1674 = vmatpush1.bf16.msra.mxu0 %v1636
    %1675 = vmatprep.subr.bf16.mxu0 0
    %1676 = vmatpush1.bf16.msra.mxu0 %v1635
    %1677 = vmatprep.subr.bf16.mxu0 0
    %1678 = vmatpush1.bf16.msra.mxu0 %v1634
    %1679 = vmatprep.subr.bf16.mxu0 0
    %1680 = vmatpush1.bf16.msra.mxu0 %v1633
    %1681 = vmatprep.subr.bf16.mxu0 0
    %1682 = vmatpush2.bf16.msra.mxu0 %v1648
    %1683 = vmatprep.subr.bf16.mxu0 0
    %1684 = vmatpush2.bf16.msra.mxu0 %v1647
    %1685 = vmatprep.subr.bf16.mxu0 0
    %1686 = vmatpush2.bf16.msra.mxu0 %v1646
    %1687 = vmatprep.subr.bf16.mxu0 0
    %1688 = vmatpush2.bf16.msra.mxu0 %v1645
    %1689 = vmatprep.subr.bf16.mxu0 0
    %1690 = vmatpush2.bf16.msra.mxu0 %v1644
    %1691 = vmatprep.subr.bf16.mxu0 0
    %1692 = vmatpush2.bf16.msra.mxu0 %v1643
    %1693 = vmatprep.subr.bf16.mxu0 0
    %1694 = vmatpush2.bf16.msra.mxu0 %v1642
    %1695 = vmatprep.subr.bf16.mxu0 0
    %1696 = vmatpush2.bf16.msra.mxu0 %v1641
    %1697 = vmatprep.mubr.bf16.mxu0 %v1529
    %1698 = vmatmul.mubr.bf16.gmra.mxu0 %v1528
    %v1699 = vpop.f32.mrf.mxu0
    %v1700 = vadd.f32 %v1567, %v1699
    %v1701 = vpop.f32.mrf.mxu0
    %v1702 = vpop.f32.mrf.mxu0
    %v1703 = vpop.f32.mrf.mxu0
    %1704 = vdwg.mxu0
    %v1705 = vpack.c.bf16 %v1098, %v1098
    %v1706 = vpack.c.bf16 %v1099, %v1099
    %v1707 = vld [vmem:[%s15] sm:$0xf]
    %v1708 = vld [vmem:[%s15 + $0x4] sm:$0xf]
    %v1709 = vld [vmem:[%s15 + $0x8] sm:$0xf]
    %v1710 = vld [vmem:[%s15 + $0xc] sm:$0xf]
    %v1711 = vld [vmem:[%s15 + $0x10] sm:$0xf]
    %v1712 = vld [vmem:[%s15 + $0x14] sm:$0xf]
    %v1713 = vld [vmem:[%s15 + $0x18] sm:$0xf]
    %v1714 = vld [vmem:[%s15 + $0x1c] sm:$0xf]
    %v1715 = vld [vmem:[%s15 + $0x20] sm:$0xf]
    %v1716 = vld [vmem:[%s15 + $0x24] sm:$0xf]
    %v1717 = vld [vmem:[%s15 + $0x28] sm:$0xf]
    %v1718 = vld [vmem:[%s15 + $0x2c] sm:$0xf]
    %v1719 = vld [vmem:[%s15 + $0x30] sm:$0xf]
    %v1720 = vld [vmem:[%s15 + $0x34] sm:$0xf]
    %v1721 = vld [vmem:[%s15 + $0x38] sm:$0xf]
    %v1722 = vld [vmem:[%s15 + $0x3c] sm:$0xf]
    %v1723 = vpack.c.bf16 %v1700, %v1700
    %v1724 = vld [vmem:[%s16] sm:$0xf]
    %v1725 = vld [vmem:[%s16 + $0x4] sm:$0xf]
    %v1726 = vld [vmem:[%s16 + $0x8] sm:$0xf]
    %v1727 = vld [vmem:[%s16 + $0xc] sm:$0xf]
    %v1728 = vld [vmem:[%s16 + $0x10] sm:$0xf]
    %v1729 = vld [vmem:[%s16 + $0x14] sm:$0xf]
    %v1730 = vld [vmem:[%s16 + $0x18] sm:$0xf]
    %v1731 = vld [vmem:[%s16 + $0x1c] sm:$0xf]
    %v1732 = vld [vmem:[%s16 + $0x20] sm:$0xf]
    %v1733 = vld [vmem:[%s16 + $0x24] sm:$0xf]
    %v1734 = vld [vmem:[%s16 + $0x28] sm:$0xf]
    %v1735 = vld [vmem:[%s16 + $0x2c] sm:$0xf]
    %v1736 = vld [vmem:[%s16 + $0x30] sm:$0xf]
    %v1737 = vld [vmem:[%s16 + $0x34] sm:$0xf]
    %v1738 = vld [vmem:[%s16 + $0x38] sm:$0xf]
    %v1739 = vld [vmem:[%s16 + $0x3c] sm:$0xf]
    %v1756 = vunpack.c.l.b16 %v1724
    %v1757 = vunpack.c.l.b16 %v1725
    %v1758 = vunpack.c.l.b16 %v1726
    %v1759 = vunpack.c.l.b16 %v1727
    %v1760 = vunpack.c.l.b16 %v1728
    %v1761 = vunpack.c.l.b16 %v1729
    %v1762 = vunpack.c.l.b16 %v1730
    %v1763 = vunpack.c.l.b16 %v1731
    %v1764 = vunpack.c.l.b16 %v1732
    %v1765 = vunpack.c.l.b16 %v1733
    %v1766 = vunpack.c.l.b16 %v1734
    %v1767 = vunpack.c.l.b16 %v1735
    %v1768 = vunpack.c.l.b16 %v1736
    %v1769 = vunpack.c.l.b16 %v1737
    %v1770 = vunpack.c.l.b16 %v1738
    %v1771 = vunpack.c.l.b16 %v1739
    %v1772 = vpack.c.b16 %v1757, %v1756
    %v1773 = vpack.c.b16 %v1759, %v1758
    %v1774 = vpack.c.b16 %v1761, %v1760
    %v1775 = vpack.c.b16 %v1763, %v1762
    %v1776 = vpack.c.b16 %v1765, %v1764
    %v1777 = vpack.c.b16 %v1767, %v1766
    %v1778 = vpack.c.b16 %v1769, %v1768
    %v1779 = vpack.c.b16 %v1771, %v1770
    %1788 = vmatprep.subr.bf16.mxu0 0
    %1789 = vmatpush1.bf16.msra.mxu0 %v1779
    %1790 = vmatprep.subr.bf16.mxu0 0
    %1791 = vmatpush1.bf16.msra.mxu0 %v1778
    %1792 = vmatprep.subr.bf16.mxu0 0
    %1793 = vmatpush1.bf16.msra.mxu0 %v1777
    %1794 = vmatprep.subr.bf16.mxu0 0
    %1795 = vmatpush1.bf16.msra.mxu0 %v1776
    %1796 = vmatprep.subr.bf16.mxu0 0
    %1797 = vmatpush1.bf16.msra.mxu0 %v1775
    %1798 = vmatprep.subr.bf16.mxu0 0
    %1799 = vmatpush1.bf16.msra.mxu0 %v1774
    %1800 = vmatprep.subr.bf16.mxu0 0
    %1801 = vmatpush1.bf16.msra.mxu0 %v1773
    %1802 = vmatprep.subr.bf16.mxu0 0
    %1803 = vmatpush1.bf16.msra.mxu0 %v1772
    %1804 = vmatprep.subr.bf16.mxu0 0
    %1805 = vmatpush2.bf16.msra.mxu0 0
    %1806 = vmatprep.subr.bf16.mxu0 0
    %1807 = vmatpush2.bf16.msra.mxu0 0
    %1808 = vmatprep.subr.bf16.mxu0 0
    %1809 = vmatpush2.bf16.msra.mxu0 0
    %1810 = vmatprep.subr.bf16.mxu0 0
    %1811 = vmatpush2.bf16.msra.mxu0 0
    %1812 = vmatprep.subr.bf16.mxu0 0
    %1813 = vmatpush2.bf16.msra.mxu0 0
    %1814 = vmatprep.subr.bf16.mxu0 0
    %1815 = vmatpush2.bf16.msra.mxu0 0
    %1816 = vmatprep.subr.bf16.mxu0 0
    %1817 = vmatpush2.bf16.msra.mxu0 0
    %1818 = vmatprep.subr.bf16.mxu0 0
    %1819 = vmatpush2.bf16.msra.mxu0 0
    %1820 = vmatprep.mubr.bf16.mxu0 0
    %1821 = vmatmul.mubr.bf16.gmra.mxu0 %v1723
    %v1822 = vpop.f32.mrf.mxu0
    %v1823 = vadd.f32 0.0, %v1822
    %v1824 = vpop.f32.mrf.mxu0
    %v1825 = vpop.f32.mrf.mxu0
    %v1826 = vpop.f32.mrf.mxu0
    %1827 = vdwg.mxu0
    %v1830 = vunpack.c.l.b16 %v1705
    %v1831 = vunpack.c.l.b16 %v1706
    %v1832 = vrot.slane %v1831, 7
    %v1833 = vsel %vm1044, %v1832, %v1830
    %v1834 = vpack.c.b16 %v1833, %v1833
    %v1852 = vunpack.c.l.b16 %v1707
    %v1853 = vunpack.c.l.b16 %v1708
    %v1854 = vunpack.c.l.b16 %v1709
    %v1855 = vunpack.c.l.b16 %v1710
    %v1856 = vunpack.c.l.b16 %v1711
    %v1857 = vunpack.c.l.b16 %v1712
    %v1858 = vunpack.c.l.b16 %v1713
    %v1859 = vunpack.c.l.b16 %v1714
    %v1860 = vunpack.c.l.b16 %v1715
    %v1861 = vunpack.c.l.b16 %v1716
    %v1862 = vunpack.c.l.b16 %v1717
    %v1863 = vunpack.c.l.b16 %v1718
    %v1864 = vunpack.c.l.b16 %v1719
    %v1865 = vunpack.c.l.b16 %v1720
    %v1866 = vunpack.c.l.b16 %v1721
    %v1867 = vunpack.c.l.b16 %v1722
    %v1868 = vpack.c.b16 %v1853, %v1852
    %v1869 = vpack.c.b16 %v1855, %v1854
    %v1870 = vpack.c.b16 %v1857, %v1856
    %v1871 = vpack.c.b16 %v1859, %v1858
    %v1872 = vpack.c.b16 %v1861, %v1860
    %v1873 = vpack.c.b16 %v1863, %v1862
    %v1874 = vpack.c.b16 %v1865, %v1864
    %v1875 = vpack.c.b16 %v1867, %v1866
    %1884 = vmatprep.subr.bf16.mxu0 0
    %1885 = vmatpush1.bf16.msra.mxu0 %v1875
    %1886 = vmatprep.subr.bf16.mxu0 0
    %1887 = vmatpush1.bf16.msra.mxu0 %v1874
    %1888 = vmatprep.subr.bf16.mxu0 0
    %1889 = vmatpush1.bf16.msra.mxu0 %v1873
    %1890 = vmatprep.subr.bf16.mxu0 0
    %1891 = vmatpush1.bf16.msra.mxu0 %v1872
    %1892 = vmatprep.subr.bf16.mxu0 0
    %1893 = vmatpush1.bf16.msra.mxu0 %v1871
    %1894 = vmatprep.subr.bf16.mxu0 0
    %1895 = vmatpush1.bf16.msra.mxu0 %v1870
    %1896 = vmatprep.subr.bf16.mxu0 0
    %1897 = vmatpush1.bf16.msra.mxu0 %v1869
    %1898 = vmatprep.subr.bf16.mxu0 0
    %1899 = vmatpush1.bf16.msra.mxu0 %v1868
    %1900 = vmatprep.subr.bf16.mxu0 0
    %1901 = vmatpush2.bf16.msra.mxu0 0
    %1902 = vmatprep.subr.bf16.mxu0 0
    %1903 = vmatpush2.bf16.msra.mxu0 0
    %1904 = vmatprep.subr.bf16.mxu0 0
    %1905 = vmatpush2.bf16.msra.mxu0 0
    %1906 = vmatprep.subr.bf16.mxu0 0
    %1907 = vmatpush2.bf16.msra.mxu0 0
    %1908 = vmatprep.subr.bf16.mxu0 0
    %1909 = vmatpush2.bf16.msra.mxu0 0
    %1910 = vmatprep.subr.bf16.mxu0 0
    %1911 = vmatpush2.bf16.msra.mxu0 0
    %1912 = vmatprep.subr.bf16.mxu0 0
    %1913 = vmatpush2.bf16.msra.mxu0 0
    %1914 = vmatprep.subr.bf16.mxu0 0
    %1915 = vmatpush2.bf16.msra.mxu0 0
    %1916 = vmatprep.mubr.bf16.mxu0 0
    %1917 = vmatmul.mubr.bf16.gmra.mxu0 %v1834
    %v1918 = vpop.f32.mrf.mxu0
    %v1919 = vadd.f32 %v1823, %v1918
    %v1920 = vpop.f32.mrf.mxu0
    %v1921 = vpop.f32.mrf.mxu0
    %v1922 = vpop.f32.mrf.mxu0
    %1923 = vdwg.mxu0
    %v1924 = vld [vmem:[%s17] sm:$0x1]
    %v1926 = vlaneseq
    %v1927 = vshrl.u32 %v1926, 7
    %v1928 = vsub.s32 0, %v1927
    %v1929 = vrot.slane %v1924, %v1928
    %v1931 = vadd.f32 %v1919, %v1929
    %v1932 = vxor.u32 %v1931, 2147483648
    %v1933 = vmul.f32 %v1932, 1.442695
    %v1934 = vpow.pop %v1933
    %v1935 = vadd.f32 %v1934, 1.0
    %v1936 = vrcp.pop %v1935
    %v1937 = vmul.f32 1.0, %v1936
    %v1940 = vrot.slane %v1099, 7
    %v1941 = vsel %vm1044, %v1940, %v1098
    %v1943 = vmul.f32 %v1937, %v1941
    %v1944 = vsub.f32 1.0, %v1937
    %v1945 = vmul.f32 %v1944, %v1700
    %v1946 = vadd.f32 %v1943, %v1945
    %1947 = vst [vmem:[#allocation8] sm:$0x3] %v1946
    %v1948 = vpack.c.bf16 %v1946, %v1946
    %1949 = vst [vmem:[%s19] sm:$0x1] %v1948
    // Predicated region
    $region554: #{kbrd_forward.4} parent=1 // pred_check
      _
    $region555: #{kbrd_forward.4} parent=1 // pred_check_branch
      %1951 = sbr.rel (0) target = $region557
    $region556: #{kbrd_forward.4} parent=1 // pred_region
      %s1953 = ssub.s32 32, 32
      %1954 = vsyncadd [#allocation6], %s1953
      %s1956 = sshll.u32 [#allocation8], 4
      %s1957 = int_to_ptr.vmem [resolvable:$true] %s1956
      %1959 = dma.vmem_to_hbm [thread:$0]  %s1957, 32, %s18, [#allocation6]
    $region557: #{kbrd_forward.4} parent=1 // pred_fallthru
      _
    // Predicated region
    $region558: #{kbrd_forward.4} parent=1 // pred_check
      _
    $region559: #{kbrd_forward.4} parent=1 // pred_check_branch
      %1961 = sbr.rel (0) target = $region561
    $region560: #{kbrd_forward.4} parent=1 // pred_region
      _
    $region561: #{kbrd_forward.4} parent=1 // pred_fallthru
      _
    // Predicated region
    $region562: #{kbrd_forward.4} parent=1 // pred_check
      _
    $region563: #{kbrd_forward.4} parent=1 // pred_check_branch
      %1963 = sbr.rel (0) target = $region565
    $region564: #{kbrd_forward.4} parent=1 // pred_region
      %1964 = dma.done [#allocation6], 32
    $region565: #{kbrd_forward.4} parent=1 // pred_fallthru
      _
    // Predicated region
    $region566: #{kbrd_forward.4} parent=1 // pred_check
      _
    $region567: #{kbrd_forward.4} parent=1 // pred_check_branch
      %1966 = sbr.rel (0) target = $region569
    $region568: #{kbrd_forward.4} parent=1 // pred_region
      _
    $region569: #{kbrd_forward.4} parent=1 // pred_fallthru
      _
    %1967 = vsyncpa [#allocation6], 1
    %1968 = vsyncpa [#allocation7], 1
  %1969 = vsyncmov [#allocation3]
  %s1970 = vpop.sfrf %1969
  %p1971 = scmp.eq.s32.totalorder %s1970, 0
  %p1972 = pneg %p1971
  %1974 = shalt.err (%p1972)
  %s1975 = scalar_lea.sflag [#allocation3], 1
  %1976 = vsyncmov %s1975
  %s1977 = vpop.sfrf %1976
  %p1978 = scmp.eq.s32.totalorder %s1977, 0
  %p1979 = pneg %p1978
  %1981 = shalt.err (%p1979)
  %s1982 = scalar_lea.sflag [#allocation3], 2
  %1983 = vsyncmov %s1982
  %s1984 = vpop.sfrf %1983
  %p1985 = scmp.eq.s32.totalorder %s1984, 0
  %p1986 = pneg %p1985
  %1988 = shalt.err (%p1986)
  %s1989 = scalar_lea.sflag [#allocation3], 3
  %1990 = vsyncmov %s1989
  %s1991 = vpop.sfrf %1990
  %p1992 = scmp.eq.s32.totalorder %s1991, 0
  %p1993 = pneg %p1992
  %1995 = shalt.err (%p1993)
  %s1996 = scalar_lea.sflag [#allocation3], 4
  %1997 = vsyncmov %s1996
  %s1998 = vpop.sfrf %1997
  %p1999 = scmp.eq.s32.totalorder %s1998, 0
  %p2000 = pneg %p1999
  %2002 = shalt.err (%p2000)
  %s2003 = scalar_lea.sflag [#allocation3], 5
  %2004 = vsyncmov %s2003
  %s2005 = vpop.sfrf %2004
  %p2006 = scmp.eq.s32.totalorder %s2005, 0
  %p2007 = pneg %p2006
  %2009 = shalt.err (%p2007)
  %s2010 = scalar_lea.sflag [#allocation3], 6
  %2011 = vsyncmov %s2010
  %s2012 = vpop.sfrf %2011
  %p2013 = scmp.eq.s32.totalorder %s2012, 0
  %p2014 = pneg %p2013
  %2016 = shalt.err (%p2014)
  %s2017 = scalar_lea.sflag [#allocation3], 7
  %2018 = vsyncmov %s2017
  %s2019 = vpop.sfrf %2018
  %p2020 = scmp.eq.s32.totalorder %s2019, 0
  %p2021 = pneg %p2020
  %2023 = shalt.err (%p2021)
  %s2024 = scalar_lea.sflag [#allocation3], 8
  %2025 = vsyncmov %s2024
  %s2026 = vpop.sfrf %2025
  %p2027 = scmp.eq.s32.totalorder %s2026, 0
  %p2028 = pneg %p2027
  %2030 = shalt.err (%p2028)
  %s2031 = scalar_lea.sflag [#allocation3], 9
  %2032 = vsyncmov %s2031
  %s2033 = vpop.sfrf %2032
  %p2034 = scmp.eq.s32.totalorder %s2033, 0
  %p2035 = pneg %p2034
  %2037 = shalt.err (%p2035)
  %s2038 = scalar_lea.sflag [#allocation3], 10
  %2039 = vsyncmov %s2038
  %s2040 = vpop.sfrf %2039
  %p2041 = scmp.eq.s32.totalorder %s2040, 0
  %p2042 = pneg %p2041
  %2044 = shalt.err (%p2042)
  %s2045 = scalar_lea.sflag [#allocation3], 11
  %2046 = vsyncmov %s2045
  %s2047 = vpop.sfrf %2046
  %p2048 = scmp.eq.s32.totalorder %s2047, 0
  %p2049 = pneg %p2048
  %2051 = shalt.err (%p2049)
  %s2052 = scalar_lea.sflag [#allocation3], 12
  %2053 = vsyncmov %s2052
  %s2054 = vpop.sfrf %2053
  %p2055 = scmp.eq.s32.totalorder %s2054, 0
  %p2056 = pneg %p2055
  %2058 = shalt.err (%p2056)
  %s2059 = scalar_lea.sflag [#allocation3], 13
  %2060 = vsyncmov %s2059
  %s2061 = vpop.sfrf %2060
  %p2062 = scmp.eq.s32.totalorder %s2061, 0
  %p2063 = pneg %p2062
  %2065 = shalt.err (%p2063)
  %s2066 = scalar_lea.sflag [#allocation3], 14
  %2067 = vsyncmov %s2066
  %s2068 = vpop.sfrf %2067
  %p2069 = scmp.eq.s32.totalorder %s2068, 0
  %p2070 = pneg %p2069
  %2072 = shalt.err (%p2070)
  %s2073 = scalar_lea.sflag [#allocation3], 15
  %2074 = vsyncmov %s2073
  %s2075 = vpop.sfrf %2074
  %p2076 = scmp.eq.s32.totalorder %s2075, 0
  %p2077 = pneg %p2076
  %2079 = shalt.err (%p2077)

// kernel: kbrd_forward.5
$region0: #{kbrd_forward.5}
  #allocation0 [shape = 'u32[]', space=smem, size = 0x4, offset = 0x4, fixed_abs, tag = 'smem constant byte address 0x4 - core index']
  #allocation1 [shape = 'u32[144,128]{1,0:T(1,128)}', space=vmem, size = 0x12000, scoped, tag = 'internal scratch']
  %s0 = inlined_call_operand.vmem [shape: bf16[2,128], index: 0, kind: input, shape index: {}]
  %s1 = inlined_call_operand.vmem [shape: bf16[128,512], index: 1, kind: input, shape index: {}]
  %s2 = inlined_call_operand.vmem [shape: f32[1,512], index: 2, kind: input, shape index: {}]
  %s3 = inlined_call_operand.hbm [shape: f32[2,512], index: 3, kind: output, shape index: {}]
  %s4 = sld [smem:[#allocation0]]
  $region22: #{kbrd_forward.5} parent=0
    _
  %s6 = ssub.s32 1, %s4
  %s7 = scalar_select 0, %s6, %s4
  $region1: #{kbrd_forward.5} parent=0
    #allocation2 [shape = 'u8[4096]{0}', space=vmem, size = 0x1000, scoped, tag = 'output window, operand 0, single buffered']
    #allocation3 [shape = 's32[1]{0}', space=sflag, size = 0x4, scoped, tag = 'scoped memory for kbrd_forward.5']
    %8 = vsyncpa [#allocation3], 0
    // Predicated region
    $region2: #{kbrd_forward.5} parent=1 // pred_check
      _
    $region3: #{kbrd_forward.5} parent=1 // pred_check_branch
      %10 = sbr.rel (0) target = $region5
    $region4: #{kbrd_forward.5} parent=1 // pred_region
      _
    $region5: #{kbrd_forward.5} parent=1 // pred_fallthru
      _
    // Predicated region
    $region6: #{kbrd_forward.5} parent=1 // pred_check
      _
    $region7: #{kbrd_forward.5} parent=1 // pred_check_branch
      %12 = sbr.rel (0) target = $region9
    $region8: #{kbrd_forward.5} parent=1 // pred_region
      _
    $region9: #{kbrd_forward.5} parent=1 // pred_fallthru
      _
    // Predicated region
    $region10: #{kbrd_forward.5} parent=1 // pred_check
      _
    $region11: #{kbrd_forward.5} parent=1 // pred_check_branch
      %14 = sbr.rel (0) target = $region13
    $region12: #{kbrd_forward.5} parent=1 // pred_region
      _
    $region13: #{kbrd_forward.5} parent=1 // pred_fallthru
      _
    %v16 = vld [vmem:[%s0] sm:$0x1]
    %v17 = vld [vmem:[%s1] sm:$0xff]
    %v18 = vld [vmem:[%s1 + $0x8] sm:$0xff]
    %v19 = vld [vmem:[%s1 + $0x10] sm:$0xff]
    %v20 = vld [vmem:[%s1 + $0x18] sm:$0xff]
    %v21 = vld [vmem:[%s1 + $0x20] sm:$0xff]
    %v22 = vld [vmem:[%s1 + $0x28] sm:$0xff]
    %v23 = vld [vmem:[%s1 + $0x30] sm:$0xff]
    %v24 = vld [vmem:[%s1 + $0x38] sm:$0xff]
    %v25 = vld [vmem:[%s1 + $0x40] sm:$0xff]
    %v26 = vld [vmem:[%s1 + $0x48] sm:$0xff]
    %v27 = vld [vmem:[%s1 + $0x50] sm:$0xff]
    %v28 = vld [vmem:[%s1 + $0x58] sm:$0xff]
    %v29 = vld [vmem:[%s1 + $0x60] sm:$0xff]
    %v30 = vld [vmem:[%s1 + $0x68] sm:$0xff]
    %v31 = vld [vmem:[%s1 + $0x70] sm:$0xff]
    %v32 = vld [vmem:[%s1 + $0x78] sm:$0xff]
    %v33 = vld [vmem:[%s1 + $0x80] sm:$0xff]
    %v34 = vld [vmem:[%s1 + $0x88] sm:$0xff]
    %v35 = vld [vmem:[%s1 + $0x90] sm:$0xff]
    %v36 = vld [vmem:[%s1 + $0x98] sm:$0xff]
    %v37 = vld [vmem:[%s1 + $0xa0] sm:$0xff]
    %v38 = vld [vmem:[%s1 + $0xa8] sm:$0xff]
    %v39 = vld [vmem:[%s1 + $0xb0] sm:$0xff]
    %v40 = vld [vmem:[%s1 + $0xb8] sm:$0xff]
    %v41 = vld [vmem:[%s1 + $0xc0] sm:$0xff]
    %v42 = vld [vmem:[%s1 + $0xc8] sm:$0xff]
    %v43 = vld [vmem:[%s1 + $0xd0] sm:$0xff]
    %v44 = vld [vmem:[%s1 + $0xd8] sm:$0xff]
    %v45 = vld [vmem:[%s1 + $0xe0] sm:$0xff]
    %v46 = vld [vmem:[%s1 + $0xe8] sm:$0xff]
    %v47 = vld [vmem:[%s1 + $0xf0] sm:$0xff]
    %v48 = vld [vmem:[%s1 + $0xf8] sm:$0xff]
    %v49 = vld [vmem:[%s2] sm:$0xf]
    %v51 = vlaneseq
    %v52 = vshrl.u32 %v51, 7
    %v53 = vsub.s32 0, %v52
    %v54 = vrot.slane %v49, %v53
    %v55 = vlaneseq
    %v56 = vshrl.u32 %v55, 7
    %v57 = vsub.s32 1, %v56
    %v58 = vrot.slane %v49, %v57
    %v59 = vlaneseq
    %v60 = vshrl.u32 %v59, 7
    %v61 = vsub.s32 2, %v60
    %v62 = vrot.slane %v49, %v61
    %v63 = vlaneseq
    %v64 = vshrl.u32 %v63, 7
    %v65 = vsub.s32 3, %v64
    %v66 = vrot.slane %v49, %v65
    %v103 = vunpack.c.l.b16 %v17
    %v104 = vunpack.c.h.b16 %v17
    %v105 = vunpack.c.l.b16 %v18
    %v106 = vunpack.c.h.b16 %v18
    %v107 = vunpack.c.l.b16 %v19
    %v108 = vunpack.c.h.b16 %v19
    %v109 = vunpack.c.l.b16 %v20
    %v110 = vunpack.c.h.b16 %v20
    %v111 = vunpack.c.l.b16 %v21
    %v112 = vunpack.c.h.b16 %v21
    %v113 = vunpack.c.l.b16 %v22
    %v114 = vunpack.c.h.b16 %v22
    %v115 = vunpack.c.l.b16 %v23
    %v116 = vunpack.c.h.b16 %v23
    %v117 = vunpack.c.l.b16 %v24
    %v118 = vunpack.c.h.b16 %v24
    %v119 = vunpack.c.l.b16 %v25
    %v120 = vunpack.c.h.b16 %v25
    %v121 = vunpack.c.l.b16 %v26
    %v122 = vunpack.c.h.b16 %v26
    %v123 = vunpack.c.l.b16 %v27
    %v124 = vunpack.c.h.b16 %v27
    %v125 = vunpack.c.l.b16 %v28
    %v126 = vunpack.c.h.b16 %v28
    %v127 = vunpack.c.l.b16 %v29
    %v128 = vunpack.c.h.b16 %v29
    %v129 = vunpack.c.l.b16 %v30
    %v130 = vunpack.c.h.b16 %v30
    %v131 = vunpack.c.l.b16 %v31
    %v132 = vunpack.c.h.b16 %v31
    %v133 = vunpack.c.l.b16 %v32
    %v134 = vunpack.c.h.b16 %v32
    %v135 = vunpack.c.l.b16 %v33
    %v136 = vunpack.c.h.b16 %v33
    %v137 = vunpack.c.l.b16 %v34
    %v138 = vunpack.c.h.b16 %v34
    %v139 = vunpack.c.l.b16 %v35
    %v140 = vunpack.c.h.b16 %v35
    %v141 = vunpack.c.l.b16 %v36
    %v142 = vunpack.c.h.b16 %v36
    %v143 = vunpack.c.l.b16 %v37
    %v144 = vunpack.c.h.b16 %v37
    %v145 = vunpack.c.l.b16 %v38
    %v146 = vunpack.c.h.b16 %v38
    %v147 = vunpack.c.l.b16 %v39
    %v148 = vunpack.c.h.b16 %v39
    %v149 = vunpack.c.l.b16 %v40
    %v150 = vunpack.c.h.b16 %v40
    %v151 = vunpack.c.l.b16 %v41
    %v152 = vunpack.c.h.b16 %v41
    %v153 = vunpack.c.l.b16 %v42
    %v154 = vunpack.c.h.b16 %v42
    %v155 = vunpack.c.l.b16 %v43
    %v156 = vunpack.c.h.b16 %v43
    %v157 = vunpack.c.l.b16 %v44
    %v158 = vunpack.c.h.b16 %v44
    %v159 = vunpack.c.l.b16 %v45
    %v160 = vunpack.c.h.b16 %v45
    %v161 = vunpack.c.l.b16 %v46
    %v162 = vunpack.c.h.b16 %v46
    %v163 = vunpack.c.l.b16 %v47
    %v164 = vunpack.c.h.b16 %v47
    %v165 = vunpack.c.l.b16 %v48
    %v166 = vunpack.c.h.b16 %v48
    %v167 = vpack.c.b16 %v107, %v103
    %v168 = vpack.c.b16 %v108, %v104
    %v169 = vpack.c.b16 %v109, %v105
    %v170 = vpack.c.b16 %v110, %v106
    %v171 = vpack.c.b16 %v115, %v111
    %v172 = vpack.c.b16 %v116, %v112
    %v173 = vpack.c.b16 %v117, %v113
    %v174 = vpack.c.b16 %v118, %v114
    %v175 = vpack.c.b16 %v123, %v119
    %v176 = vpack.c.b16 %v124, %v120
    %v177 = vpack.c.b16 %v125, %v121
    %v178 = vpack.c.b16 %v126, %v122
    %v179 = vpack.c.b16 %v131, %v127
    %v180 = vpack.c.b16 %v132, %v128
    %v181 = vpack.c.b16 %v133, %v129
    %v182 = vpack.c.b16 %v134, %v130
    %v183 = vpack.c.b16 %v139, %v135
    %v184 = vpack.c.b16 %v140, %v136
    %v185 = vpack.c.b16 %v141, %v137
    %v186 = vpack.c.b16 %v142, %v138
    %v187 = vpack.c.b16 %v147, %v143
    %v188 = vpack.c.b16 %v148, %v144
    %v189 = vpack.c.b16 %v149, %v145
    %v190 = vpack.c.b16 %v150, %v146
    %v191 = vpack.c.b16 %v155, %v151
    %v192 = vpack.c.b16 %v156, %v152
    %v193 = vpack.c.b16 %v157, %v153
    %v194 = vpack.c.b16 %v158, %v154
    %v195 = vpack.c.b16 %v163, %v159
    %v196 = vpack.c.b16 %v164, %v160
    %v197 = vpack.c.b16 %v165, %v161
    %v198 = vpack.c.b16 %v166, %v162
    %231 = vmatprep.subr.bf16.mxu0 %v196
    %232 = vmatpush1.bf16.msra.mxu0 %v195
    %233 = vmatprep.subr.bf16.mxu0 %v192
    %234 = vmatpush1.bf16.msra.mxu0 %v191
    %235 = vmatprep.subr.bf16.mxu0 %v188
    %236 = vmatpush1.bf16.msra.mxu0 %v187
    %237 = vmatprep.subr.bf16.mxu0 %v184
    %238 = vmatpush1.bf16.msra.mxu0 %v183
    %239 = vmatprep.subr.bf16.mxu0 %v180
    %240 = vmatpush1.bf16.msra.mxu0 %v179
    %241 = vmatprep.subr.bf16.mxu0 %v176
    %242 = vmatpush1.bf16.msra.mxu0 %v175
    %243 = vmatprep.subr.bf16.mxu0 %v172
    %244 = vmatpush1.bf16.msra.mxu0 %v171
    %245 = vmatprep.subr.bf16.mxu0 %v168
    %246 = vmatpush1.bf16.msra.mxu0 %v167
    %247 = vmatprep.subr.bf16.mxu0 0
    %248 = vmatpush2.bf16.msra.mxu0 0
    %249 = vmatprep.subr.bf16.mxu0 0
    %250 = vmatpush2.bf16.msra.mxu0 0
    %251 = vmatprep.subr.bf16.mxu0 0
    %252 = vmatpush2.bf16.msra.mxu0 0
    %253 = vmatprep.subr.bf16.mxu0 0
    %254 = vmatpush2.bf16.msra.mxu0 0
    %255 = vmatprep.subr.bf16.mxu0 0
    %256 = vmatpush2.bf16.msra.mxu0 0
    %257 = vmatprep.subr.bf16.mxu0 0
    %258 = vmatpush2.bf16.msra.mxu0 0
    %259 = vmatprep.subr.bf16.mxu0 0
    %260 = vmatpush2.bf16.msra.mxu0 0
    %261 = vmatprep.subr.bf16.mxu0 0
    %262 = vmatpush2.bf16.msra.mxu0 0
    %263 = vmatprep.mubr.bf16.mxu0 0
    %264 = vmatmul.mubr.bf16.gmra.mxu0 %v16
    %v265 = vpop.f32.mrf.mxu0
    %v266 = vadd.f32 %v54, %v265
    %v267 = vpop.f32.mrf.mxu0
    %v268 = vadd.f32 %v58, %v267
    %v269 = vpop.f32.mrf.mxu0
    %v270 = vpop.f32.mrf.mxu0
    %271 = vdwg.mxu0
    %272 = vmatprep.subr.bf16.mxu0 %v198
    %273 = vmatpush1.bf16.msra.mxu0 %v197
    %274 = vmatprep.subr.bf16.mxu0 %v194
    %275 = vmatpush1.bf16.msra.mxu0 %v193
    %276 = vmatprep.subr.bf16.mxu0 %v190
    %277 = vmatpush1.bf16.msra.mxu0 %v189
    %278 = vmatprep.subr.bf16.mxu0 %v186
    %279 = vmatpush1.bf16.msra.mxu0 %v185
    %280 = vmatprep.subr.bf16.mxu0 %v182
    %281 = vmatpush1.bf16.msra.mxu0 %v181
    %282 = vmatprep.subr.bf16.mxu0 %v178
    %283 = vmatpush1.bf16.msra.mxu0 %v177
    %284 = vmatprep.subr.bf16.mxu0 %v174
    %285 = vmatpush1.bf16.msra.mxu0 %v173
    %286 = vmatprep.subr.bf16.mxu0 %v170
    %287 = vmatpush1.bf16.msra.mxu0 %v169
    %288 = vmatprep.subr.bf16.mxu0 0
    %289 = vmatpush2.bf16.msra.mxu0 0
    %290 = vmatprep.subr.bf16.mxu0 0
    %291 = vmatpush2.bf16.msra.mxu0 0
    %292 = vmatprep.subr.bf16.mxu0 0
    %293 = vmatpush2.bf16.msra.mxu0 0
    %294 = vmatprep.subr.bf16.mxu0 0
    %295 = vmatpush2.bf16.msra.mxu0 0
    %296 = vmatprep.subr.bf16.mxu0 0
    %297 = vmatpush2.bf16.msra.mxu0 0
    %298 = vmatprep.subr.bf16.mxu0 0
    %299 = vmatpush2.bf16.msra.mxu0 0
    %300 = vmatprep.subr.bf16.mxu0 0
    %301 = vmatpush2.bf16.msra.mxu0 0
    %302 = vmatprep.subr.bf16.mxu0 0
    %303 = vmatpush2.bf16.msra.mxu0 0
    %304 = vmatprep.mubr.bf16.mxu0 0
    %305 = vmatmul.mubr.bf16.gmra.mxu0 %v16
    %v306 = vpop.f32.mrf.mxu0
    %v307 = vadd.f32 %v62, %v306
    %v308 = vpop.f32.mrf.mxu0
    %v309 = vadd.f32 %v66, %v308
    %v310 = vpop.f32.mrf.mxu0
    %v311 = vpop.f32.mrf.mxu0
    %312 = vdwg.mxu0
    %v317 = vcombine.low %v266, %v268
    %v318 = vcombine.low %v307, %v309
    %v320 = vunpack.c.l.s4 1983009808
    %v321 = vunpack.c.0.s8 %v320
    %v322 = vlaneseq
    %v323 = vshrl.u32 %v322, 7
    %v324 = vsub.s32 %v321, %v323
    %v325 = vrot.slane %v317, %v324
    %v327 = vunpack.c.l.s4 1983009808
    %v328 = vunpack.c.0.s8 %v327
    %v329 = vlaneseq
    %v330 = vshrl.u32 %v329, 7
    %v331 = vsub.s32 %v328, %v330
    %v332 = vrot.slane %v318, %v331
    %v333 = vcombine.low %v325, %v332
    %335 = vst [vmem:[#allocation2] sm:$0xff] %v333
    // Predicated region
    $region14: #{kbrd_forward.5} parent=1 // pred_check
      _
    $region15: #{kbrd_forward.5} parent=1 // pred_check_branch
      %337 = sbr.rel (0) target = $region17
    $region16: #{kbrd_forward.5} parent=1 // pred_region
      %s339 = ssub.s32 128, 128
      %340 = vsyncadd [#allocation3], %s339
      %s342 = sshll.u32 [#allocation2], 4
      %s343 = int_to_ptr.vmem [resolvable:$true] %s342
      %345 = dma.vmem_to_hbm [thread:$0]  %s343, 128, %s3, [#allocation3]
    $region17: #{kbrd_forward.5} parent=1 // pred_fallthru
      _
    // Predicated region
    $region18: #{kbrd_forward.5} parent=1 // pred_check
      _
    $region19: #{kbrd_forward.5} parent=1 // pred_check_branch
      %347 = sbr.rel (0) target = $region21
    $region20: #{kbrd_forward.5} parent=1 // pred_region
      %348 = dma.done [#allocation3], 128
    $region21: #{kbrd_forward.5} parent=1 // pred_fallthru
      _
    %349 = vsyncpa [#allocation3], 1

</llo_original>
